<compile_context>
chip_gen: v5e
topology: v5e:2x2
jax: 0.10.0
libtpu: 0.0.40
codegen_flags: <defaults>
</compile_context>

<pallas_src>
import functools

import jax
import jax.numpy as jnp
from jax.experimental import pallas as pl
from jax.experimental.pallas import tpu as pltpu

LEAK = 0.2
BN_EPS = 1e-5


# ---------------------------------------------------------------------------
# Fused Pallas kernel:  pre-activation (BN fold + LReLU/ReLU on the patch tile)
#                       -> MXU matmul -> bias (+ optional tanh)
#                       -> per-(phase, tile) partial BN statistics.
# ---------------------------------------------------------------------------
def _fused_matmul_kernel(*refs, pre_act, out_act, with_stats):
    if pre_act is not None:
        x_ref, w_ref, scale_ref, shift_ref, bias_ref = refs[:5]
        out_refs = refs[5:]
    else:
        x_ref, w_ref, bias_ref = refs[:3]
        out_refs = refs[3:]

    x = x_ref[0]                                   # (tm, k)
    if pre_act is not None:
        x = x * scale_ref[...] + shift_ref[...]    # folded BN of the producer
        if pre_act == "leaky":
            x = jnp.where(x >= 0, x, LEAK * x)
        else:                                      # "relu"
            x = jnp.maximum(x, 0.0)

    y = jnp.dot(x, w_ref[0], preferred_element_type=jnp.float32) + bias_ref[...]
    if out_act == "tanh":
        y = jnp.tanh(y)

    if with_stats:
        y_ref, sum_ref, ssq_ref = out_refs
    else:
        (y_ref,) = out_refs
    y_ref[0] = y

    if with_stats:
        cp = y.shape[1]
        rows = jax.lax.broadcasted_iota(jnp.int32, (8, cp), 0)
        psum = jnp.sum(y, axis=0, keepdims=True)
        pssq = jnp.sum(y * y, axis=0, keepdims=True)
        # Partial stats for THIS (phase, tile) only -> no cross-step accumulation -> both grid
        # axes are race-free under "parallel" semantics; wrapper reduces the tiny partials.
        sum_ref[...] = jnp.where(rows == 0, psum, 0.0)
        ssq_ref[...] = jnp.where(rows == 0, pssq, 0.0)


# ---------------------------------------------------------------------------
# pallas_call wrapper
# ---------------------------------------------------------------------------
def _pick_tm(m, k, cout, budget_bytes=8 << 20, row_cap=1024):
    """Byte-budgeted row-tile: double-buffered (x tile + w + y tile) under budget_bytes."""
    fixed = 2 * 4 * k * cout                # double-buffered weight block
    per_row = 2 * 4 * (k + cout)            # double-buffered x row + y row
    tm_budget = max(8, (budget_bytes - fixed) // per_row)
    tm_max = min(row_cap, tm_budget)
    if m <= tm_max:
        return m
    t = (tm_max // 8) * 8
    while t >= 8:
        if m % t == 0:
            return t
        t -= 8
    return m  # fallback (not hit for power-of-two pixel counts)


def _fused_matmul(x3, w3, scale_k, shift_k, bias, *, pre_act, out_act, with_stats):
    """x3: (P, M, K) patches, w3: (P, K, Cout).  Returns (y3 (P,M,Cout_pad), sum, ssq)."""
    p, m, k = x3.shape
    cout = w3.shape[2]
    cp = max(128, ((cout + 127) // 128) * 128)       # lane-dense output (unmasked stores)
    if cp != cout:
        w3 = jnp.pad(w3, ((0, 0), (0, 0), (0, cp - cout)))
        bias = jnp.pad(bias, (0, cp - cout))
    tm = _pick_tm(m, k, cp)
    nt = m // tm

    args = [x3, w3]
    in_specs = [pl.BlockSpec((1, tm, k), lambda ph, i: (ph, i, 0)),
                pl.BlockSpec((1, k, cp), lambda ph, i: (ph, 0, 0))]
    if pre_act is not None:
        args += [scale_k.reshape(1, k).astype(jnp.float32),
                 shift_k.reshape(1, k).astype(jnp.float32)]
        in_specs += [pl.BlockSpec((1, k), lambda ph, i: (0, 0)),
                     pl.BlockSpec((1, k), lambda ph, i: (0, 0))]
    args.append(bias.reshape(1, cp).astype(jnp.float32))
    in_specs.append(pl.BlockSpec((1, cp), lambda ph, i: (0, 0)))

    out_shapes = [jax.ShapeDtypeStruct((p, m, cp), jnp.float32)]
    out_specs = [pl.BlockSpec((1, tm, cp), lambda ph, i: (ph, i, 0))]
    if with_stats:
        stat_spec = pl.BlockSpec((8, cp), lambda ph, i: (ph * nt + i, 0))
        out_shapes += [jax.ShapeDtypeStruct((p * nt * 8, cp), jnp.float32)] * 2
        out_specs += [stat_spec, stat_spec]

    outs = pl.pallas_call(
        functools.partial(_fused_matmul_kernel, pre_act=pre_act, out_act=out_act,
                          with_stats=with_stats),
        out_shape=tuple(out_shapes),
        grid_spec=pltpu.PrefetchScalarGridSpec(
            num_scalar_prefetch=0,
            grid=(p, nt),
            in_specs=in_specs,
            out_specs=tuple(out_specs)),
        compiler_params=pltpu.CompilerParams(
            dimension_semantics=("parallel", "parallel"),
            vmem_limit_bytes=32 * 1024 * 1024),
    )(*args)

    y3 = outs[0]
    if with_stats:
        return y3, jnp.sum(outs[1], axis=0)[:cout], jnp.sum(outs[2], axis=0)[:cout]
    return y3, None, None


# ---------------------------------------------------------------------------
# im2col / layout helpers (wrapper-side; XLA fuses the slices/pads)
# ---------------------------------------------------------------------------
def _pad_value(scale, shift):
    """Per-channel raw-input value that the fused affine maps to exactly 0 (so act(0)=0)."""
    s = jnp.where(jnp.abs(scale) < 1e-20, 1.0, scale)
    return -shift / s


def _extract_patches(x, ksize, stride, pad_y, pad_x, pad_value=None):
    """x: (N,H,W,C) -> patches (N,OH,OW,k*k*C); column order (tap_y, tap_x, c)."""
    n, h, w, c = x.shape
    pads = ((0, 0), pad_y, pad_x, (0, 0))
    if pad_value is None:
        xp = jnp.pad(x, pads)
    else:
        xp = jnp.pad(x - pad_value, pads) + pad_value   # border == pad_value, interior == x
    oh = (h + pad_y[0] + pad_y[1] - ksize) // stride + 1
    ow = (w + pad_x[0] + pad_x[1] - ksize) // stride + 1
    cols = [xp[:, di:di + stride * oh:stride, dj:dj + stride * ow:stride, :]
            for di in range(ksize) for dj in range(ksize)]
    return jnp.concatenate(cols, axis=-1), oh, ow


def _conv_down(x, w, scale=None, shift=None, pre_act=None, bias=None, with_stats=True):
    """4x4 stride-2 pad-1 Conv2d on the RAW producer output; the producer's BN fold +
    activation is applied inside the kernel.  x: (N,H,W,Cin), w: (Cout,Cin,4,4)."""
    n, h, w_sp, cin = x.shape
    cout = w.shape[0]
    wmat = jnp.transpose(w, (2, 3, 1, 0)).reshape(16 * cin, cout)[None]     # (1,16Cin,Cout)
    pad_val = _pad_value(scale, shift) if pre_act is not None else None
    patches, oh, ow = _extract_patches(x, 4, 2, (1, 1), (1, 1), pad_val)
    x3 = patches.reshape(1, n * oh * ow, 16 * cin)
    scale_k = jnp.tile(scale, 16) if pre_act is not None else None
    shift_k = jnp.tile(shift, 16) if pre_act is not None else None
    b = bias if bias is not None else jnp.zeros((cout,), jnp.float32)
    y3, s, ss = _fused_matmul(x3, wmat, scale_k, shift_k, b,
                              pre_act=pre_act, out_act=None, with_stats=with_stats)
    y = y3[0].reshape(n, oh, ow, -1)[..., :cout]
    return y, s, ss


def _conv_up(x, w_t, scale, shift, pre_act="relu", bias=None, out_act=None, with_stats=True):
    """4x4 stride-2 pad-1 ConvTranspose2d via 4-phase output-parity decomposition:
    each output parity (py,px) is a 2x2-tap conv (K = 4*Cin).  x: (N,H,W,Cin) raw,
    w_t: (Cin,Cout,4,4).  All 4 phases run in ONE pallas_call (phase = outer grid axis)."""
    n, h, w_sp, cin = x.shape
    cout = w_t.shape[1]
    pad_val = _pad_value(scale, shift) if pre_act is not None else None

    pats, wms = [], []
    for py in (0, 1):
        for px in (0, 1):
            ky = [3, 1] if py == 0 else [2, 0]          # kernel rows hit by this parity
            kx = [3, 1] if px == 0 else [2, 0]
            wsub = w_t[:, :, ky, :][:, :, :, kx]        # (Cin,Cout,2,2)
            wms.append(jnp.transpose(wsub, (2, 3, 0, 1)).reshape(4 * cin, cout))
            pad_y = (1, 0) if py == 0 else (0, 1)
            pad_x = (1, 0) if px == 0 else (0, 1)
            p_, oh, ow = _extract_patches(x, 2, 1, pad_y, pad_x, pad_val)
            pats.append(p_.reshape(n * oh * ow, 4 * cin))

    x3 = jnp.stack(pats, axis=0)                        # (4, N*H*W, 4Cin)
    w3 = jnp.stack(wms, axis=0)                         # (4, 4Cin, Cout)
    scale_k = jnp.tile(scale, 4) if pre_act is not None else None
    shift_k = jnp.tile(shift, 4) if pre_act is not None else None
    b = bias if bias is not None else jnp.zeros((cout,), jnp.float32)
    y3, s, ss = _fused_matmul(x3, w3, scale_k, shift_k, b,
                              pre_act=pre_act, out_act=out_act, with_stats=with_stats)
    cp = y3.shape[-1]
    y = (y3.reshape(2, 2, n, h, w_sp, cp)
            .transpose(2, 3, 0, 4, 1, 5)                # interleave the 4 parities
            .reshape(n, 2 * h, 2 * w_sp, cp)[..., :cout])
    return y, s, ss


def _bn_fold(s, ss, count, gamma, beta):
    """Fold training-mode BatchNorm2d (batch mean / biased var) into per-channel scale/shift."""
    mean = s / count
    var = jnp.maximum(ss / count - mean * mean, 0.0)
    inv = 1.0 / jnp.sqrt(var + BN_EPS)
    scale = gamma * inv
    shift = beta - mean * scale
    return scale, shift


def _npix(t):
    return t.shape[0] * t.shape[1] * t.shape[2]


# ---------------------------------------------------------------------------
# UnetGenerator forward (num_downs=5), Pallas path
# ---------------------------------------------------------------------------
def unet_generator_pallas(x_nchw, p):
    x = jnp.transpose(x_nchw, (0, 2, 3, 1)).astype(jnp.float32)            # NHWC
    ngf = p["w_d1"].shape[0]
    one = lambda c: jnp.ones((c,), jnp.float32)
    zero = lambda c: jnp.zeros((c,), jnp.float32)

    # ----------------------------- encoder -----------------------------
    d1, _, _ = _conv_down(x, p["w_d1"], pre_act=None, with_stats=False)     # raw conv, no BN

    d2, s, ss = _conv_down(d1, p["w_d2"], one(ngf), zero(ngf), pre_act="leaky")
    sc_d2, sh_d2 = _bn_fold(s, ss, _npix(d2), p["g_d2"], p["b_d2"])

    d3, s, ss = _conv_down(d2, p["w_d3"], sc_d2, sh_d2, pre_act="leaky")
    sc_d3, sh_d3 = _bn_fold(s, ss, _npix(d3), p["g_d3"], p["b_d3"])

    d4, s, ss = _conv_down(d3, p["w_d4"], sc_d3, sh_d3, pre_act="leaky")
    sc_d4, sh_d4 = _bn_fold(s, ss, _npix(d4), p["g_d4"], p["b_d4"])

    d5, _, _ = _conv_down(d4, p["w_d5"], sc_d4, sh_d4, pre_act="leaky",
                          with_stats=False)                                 # innermost, no BN

    # ----------------------------- decoder -----------------------------
    c8 = d5.shape[-1]
    u5, s, ss = _conv_up(d5, p["w_u5"], one(c8), zero(c8), pre_act="relu")
    sc_u5, sh_u5 = _bn_fold(s, ss, _npix(u5), p["g_u5"], p["b_u5"])

    xc = jnp.concatenate([d4, u5], axis=-1)
    u4, s, ss = _conv_up(xc, p["w_u4"],
                         jnp.concatenate([sc_d4, sc_u5]),
                         jnp.concatenate([sh_d4, sh_u5]), pre_act="relu")
    sc_u4, sh_u4 = _bn_fold(s, ss, _npix(u4), p["g_u4"], p["b_u4"])

    xc = jnp.concatenate([d3, u4], axis=-1)
    u3, s, ss = _conv_up(xc, p["w_u3"],
                         jnp.concatenate([sc_d3, sc_u4]),
                         jnp.concatenate([sh_d3, sh_u4]), pre_act="relu")
    sc_u3, sh_u3 = _bn_fold(s, ss, _npix(u3), p["g_u3"], p["b_u3"])

    xc = jnp.concatenate([d2, u3], axis=-1)
    u2, s, ss = _conv_up(xc, p["w_u2"],
                         jnp.concatenate([sc_d2, sc_u3]),
                         jnp.concatenate([sh_d2, sh_u3]), pre_act="relu")
    sc_u2, sh_u2 = _bn_fold(s, ss, _npix(u2), p["g_u2"], p["b_u2"])

    xc = jnp.concatenate([d1, u2], axis=-1)                                 # d1 has no BN
    out, _, _ = _conv_up(xc, p["w_u1"],
                         jnp.concatenate([one(ngf), sc_u2]),
                         jnp.concatenate([zero(ngf), sh_u2]),
                         pre_act="relu", bias=p["b_u1"], out_act="tanh",
                         with_stats=False)                                  # bias + Tanh, no BN
    return jnp.transpose(out, (0, 3, 1, 2))                                 # back to NCHW


# ---------------------------------------------------------------------------
# Pure-JAX reference (lax conv, training-mode BatchNorm) matching the PyTorch forward
# ---------------------------------------------------------------------------
def _lrelu(x):
    return jnp.where(x >= 0, x, LEAK * x)


def _conv_down_ref(x, w):
    return jax.lax.conv_general_dilated(
        x, jnp.transpose(w, (2, 3, 1, 0)),
        window_strides=(2, 2), padding=((1, 1), (1, 1)),
        dimension_numbers=("NHWC", "HWIO", "NHWC"),
        precision=jax.lax.Precision.HIGHEST)


def _conv_up_ref(x, w_t):
    rhs = jnp.transpose(w_t[:, :, ::-1, ::-1], (2, 3, 0, 1))
    return jax.lax.conv_general_dilated(
        x, rhs, window_strides=(1, 1), padding=((2, 2), (2, 2)),
        lhs_dilation=(2, 2),
        dimension_numbers=("NHWC", "HWIO", "NHWC"),
        precision=jax.lax.Precision.HIGHEST)


def _bn_ref(x, gamma, beta):
    mean = jnp.mean(x, axis=(0, 1, 2), keepdims=True)
    var = jnp.mean((x - mean) ** 2, axis=(0, 1, 2), keepdims=True)
    return (x - mean) / jnp.sqrt(var + BN_EPS) * gamma + beta


def unet_generator_ref(x_nchw, p):
    x = jnp.transpose(x_nchw, (0, 2, 3, 1))
    d1 = _conv_down_ref(x, p["w_d1"])
    d2 = _bn_ref(_conv_down_ref(_lrelu(d1), p["w_d2"]), p["g_d2"], p["b_d2"])
    d3 = _bn_ref(_conv_down_ref(_lrelu(d2), p["w_d3"]), p["g_d3"], p["b_d3"])
    d4 = _bn_ref(_conv_down_ref(_lrelu(d3), p["w_d4"]), p["g_d4"], p["b_d4"])
    d5 = _conv_down_ref(_lrelu(d4), p["w_d5"])
    u5 = _bn_ref(_conv_up_ref(jax.nn.relu(d5), p["w_u5"]), p["g_u5"], p["b_u5"])
    u4 = _bn_ref(_conv_up_ref(jax.nn.relu(jnp.concatenate([d4, u5], -1)), p["w_u4"]),
                 p["g_u4"], p["b_u4"])
    u3 = _bn_ref(_conv_up_ref(jax.nn.relu(jnp.concatenate([d3, u4], -1)), p["w_u3"]),
                 p["g_u3"], p["b_u3"])
    u2 = _bn_ref(_conv_up_ref(jax.nn.relu(jnp.concatenate([d2, u3], -1)), p["w_u2"]),
                 p["g_u2"], p["b_u2"])
    out = jnp.tanh(_conv_up_ref(jax.nn.relu(jnp.concatenate([d1, u2], -1)), p["w_u1"])
                   + p["b_u1"])
    return jnp.transpose(out, (0, 3, 1, 2))


# ---------------------------------------------------------------------------
# Parameters (PyTorch layouts: Conv2d (Cout,Cin,4,4), ConvTranspose2d (Cin,Cout,4,4))
# ---------------------------------------------------------------------------
def init_params(key, input_nc, output_nc, ngf):
    ks = jax.random.split(key, 16)
    cw = lambda k, cout, cin: jax.random.normal(k, (cout, cin, 4, 4), jnp.float32) * 0.1
    tw = lambda k, cin, cout: jax.random.normal(k, (cin, cout, 4, 4), jnp.float32) * 0.1
    bn = lambda k, c: (1.0 + 0.1 * jax.random.normal(k, (c,), jnp.float32),
                       0.1 * jax.random.normal(jax.random.fold_in(k, 1), (c,), jnp.float32))
    p = {}
    p["w_d1"] = cw(ks[0], ngf, input_nc)
    p["w_d2"] = cw(ks[1], ngf * 2, ngf);        p["g_d2"], p["b_d2"] = bn(ks[2], ngf * 2)
    p["w_d3"] = cw(ks[3], ngf * 4, ngf * 2);    p["g_d3"], p["b_d3"] = bn(ks[4], ngf * 4)
    p["w_d4"] = cw(ks[5], ngf * 8, ngf * 4);    p["g_d4"], p["b_d4"] = bn(ks[6], ngf * 8)
    p["w_d5"] = cw(ks[7], ngf * 8, ngf * 8)
    p["w_u5"] = tw(ks[8], ngf * 8, ngf * 8);    p["g_u5"], p["b_u5"] = bn(ks[9], ngf * 8)
    p["w_u4"] = tw(ks[10], ngf * 16, ngf * 4);  p["g_u4"], p["b_u4"] = bn(ks[11], ngf * 4)
    p["w_u3"] = tw(ks[12], ngf * 8, ngf * 2);   p["g_u3"], p["b_u3"] = bn(ks[13], ngf * 2)
    p["w_u2"] = tw(ks[14], ngf * 4, ngf);       p["g_u2"], p["b_u2"] = bn(ks[15], ngf)
    p["w_u1"] = tw(jax.random.fold_in(key, 100), ngf * 2, output_nc)
    p["b_u1"] = 0.1 * jax.random.normal(jax.random.fold_in(key, 101), (output_nc,), jnp.float32)
    return p


if __name__ == "__main__":
    # num_downs=5 -> 32x32 input reaches the 1x1 bottleneck the module implies.
    N, input_nc, output_nc, ngf, H, W = 2, 3, 3, 16, 32, 32
    key = jax.random.PRNGKey(0)
    kx, kp = jax.random.split(key)
    x = jax.random.normal(kx, (N, input_nc, H, W), jnp.float32)
    params = init_params(kp, input_nc, output_nc, ngf)

    out = jax.block_until_ready(jax.jit(unet_generator_pallas)(x, params))
    ref = jax.block_until_ready(jax.jit(unet_generator_ref)(x, params))

    assert out.shape == (N, output_nc, H, W), out.shape
    err = float(jnp.max(jnp.abs(out - ref)))
    assert err < 3e-3, err
    print("KERNEL_OK")
</pallas_src>

<mosaic_0001>
module attributes {stable_mosaic.version = 11 : i64} {
  func.func @_fused_matmul_kernel(%arg0: i32, %arg1: i32, %arg2: memref<1x512x48xf32, #tpu.memory_space<vmem>>, %arg3: memref<1x48x128xf32, #tpu.memory_space<vmem>>, %arg4: memref<1x128xf32, #tpu.memory_space<vmem>>, %arg5: memref<1x512x128xf32, #tpu.memory_space<vmem>>) attributes {dimension_semantics = [#tpu.dimension_semantics<parallel>, #tpu.dimension_semantics<parallel>], iteration_bounds = array<i64: 1, 1>, scalar_prefetch = 0 : i64, scratch_operands = 0 : i64, tpu.core_type = #tpu.core_type<tc>, window_params = [{transform_indices = @transform_0, window_bounds = array<i64: 1, 512, 48>}, {transform_indices = @transform_1, window_bounds = array<i64: 1, 48, 128>}, {pipeline_mode = #tpu.pipeline_mode<synchronous>, transform_indices = @transform_2, window_bounds = array<i64: 1, 128>}, {transform_indices = @transform_3, window_bounds = array<i64: 1, 512, 128>}]} {
    %c0 = arith.constant 0 : index
    %c0_0 = arith.constant 0 : index
    %c0_1 = arith.constant 0 : index
    %0 = vector.load %arg2[%c0, %c0_0, %c0_1] : memref<1x512x48xf32, #tpu.memory_space<vmem>>, vector<1x512x48xf32>
    %1 = vector.shape_cast %0 : vector<1x512x48xf32> to vector<512x48xf32>
    %c0_2 = arith.constant 0 : index
    %c0_3 = arith.constant 0 : index
    %c0_4 = arith.constant 0 : index
    %2 = vector.load %arg3[%c0_2, %c0_3, %c0_4] : memref<1x48x128xf32, #tpu.memory_space<vmem>>, vector<1x48x128xf32>
    %3 = vector.shape_cast %2 : vector<1x48x128xf32> to vector<48x128xf32>
    %cst = arith.constant dense<0.000000e+00> : vector<512x128xf32>
    %4 = tpu.matmul %1, %3, %cst {dimension_numbers = #tpu.dot_dimension_numbers<[1], [0], [0], [1], [0, 0, 1, 1], [], []>} : vector<512x48xf32>, vector<48x128xf32>, vector<512x128xf32> -> vector<512x128xf32>
    %c0_5 = arith.constant 0 : index
    %c0_6 = arith.constant 0 : index
    %5 = vector.load %arg4[%c0_5, %c0_6] : memref<1x128xf32, #tpu.memory_space<vmem>>, vector<1x128xf32>
    %6 = vector.broadcast %5 : vector<1x128xf32> to vector<512x128xf32>
    %7 = arith.addf %4, %6 : vector<512x128xf32>
    %c0_7 = arith.constant 0 : index
    %c0_8 = arith.constant 0 : index
    %c0_9 = arith.constant 0 : index
    %8 = vector.load %arg5[%c0_7, %c0_8, %c0_9] : memref<1x512x128xf32, #tpu.memory_space<vmem>>, vector<1x512x128xf32>
    %9 = vector.shape_cast %8 : vector<1x512x128xf32> to vector<512x128xf32>
    %10 = vector.shape_cast %7 : vector<512x128xf32> to vector<1x512x128xf32>
    tpu.vector_store %arg5[%c0_7, %c0_8, %c0_9], %10 {strides = array<i32>} : memref<1x512x128xf32, #tpu.memory_space<vmem>>, vector<1x512x128xf32>,
    return
  }
  func.func @transform_0(%arg0: i32, %arg1: i32) -> (i32, i32, i32) {
    %c0_i32 = arith.constant 0 : i32
    %c0_i32_0 = arith.constant 0 : i32
    return %arg0, %arg1, %c0_i32 : i32, i32, i32
  }
  func.func @transform_1(%arg0: i32, %arg1: i32) -> (i32, i32, i32) {
    %c0_i32 = arith.constant 0 : i32
    %c0_i32_0 = arith.constant 0 : i32
    %c0_i32_1 = arith.constant 0 : i32
    return %arg0, %c0_i32, %c0_i32_0 : i32, i32, i32
  }
  func.func @transform_2(%arg0: i32, %arg1: i32) -> (i32, i32) {
    %c0_i32 = arith.constant 0 : i32
    %c0_i32_0 = arith.constant 0 : i32
    %c0_i32_1 = arith.constant 0 : i32
    return %c0_i32, %c0_i32_0 : i32, i32
  }
  func.func @transform_3(%arg0: i32, %arg1: i32) -> (i32, i32, i32) {
    %c0_i32 = arith.constant 0 : i32
    %c0_i32_0 = arith.constant 0 : i32
    return %arg0, %arg1, %c0_i32 : i32, i32, i32
  }
}

module attributes {stable_mosaic.version = 11 : i64} {
  func.func @_fused_matmul_kernel(%arg0: i32, %arg1: i32, %arg2: memref<1x128x256xf32, #tpu.memory_space<vmem>>, %arg3: memref<1x256x128xf32, #tpu.memory_space<vmem>>, %arg4: memref<1x256xf32, #tpu.memory_space<vmem>>, %arg5: memref<1x256xf32, #tpu.memory_space<vmem>>, %arg6: memref<1x128xf32, #tpu.memory_space<vmem>>, %arg7: memref<1x128x128xf32, #tpu.memory_space<vmem>>, %arg8: memref<8x128xf32, #tpu.memory_space<vmem>>, %arg9: memref<8x128xf32, #tpu.memory_space<vmem>>) attributes {dimension_semantics = [#tpu.dimension_semantics<parallel>, #tpu.dimension_semantics<parallel>], iteration_bounds = array<i64: 1, 1>, scalar_prefetch = 0 : i64, scratch_operands = 0 : i64, tpu.core_type = #tpu.core_type<tc>, window_params = [{transform_indices = @transform_0, window_bounds = array<i64: 1, 128, 256>}, {transform_indices = @transform_1, window_bounds = array<i64: 1, 256, 128>}, {pipeline_mode = #tpu.pipeline_mode<synchronous>, transform_indices = @transform_2, window_bounds = array<i64: 1, 256>}, {pipeline_mode = #tpu.pipeline_mode<synchronous>, transform_indices = @transform_3, window_bounds = array<i64: 1, 256>}, {pipeline_mode = #tpu.pipeline_mode<synchronous>, transform_indices = @transform_4, window_bounds = array<i64: 1, 128>}, {transform_indices = @transform_5, window_bounds = array<i64: 1, 128, 128>}, {transform_indices = @transform_6, window_bounds = array<i64: 8, 128>}, {transform_indices = @transform_7, window_bounds = array<i64: 8, 128>}]} {
    %c0 = arith.constant 0 : index
    %c0_0 = arith.constant 0 : index
    %c0_1 = arith.constant 0 : index
    %0 = vector.load %arg2[%c0, %c0_0, %c0_1] : memref<1x128x256xf32, #tpu.memory_space<vmem>>, vector<1x128x256xf32>
    %1 = vector.shape_cast %0 : vector<1x128x256xf32> to vector<128x256xf32>
    %c0_2 = arith.constant 0 : index
    %c0_3 = arith.constant 0 : index
    %2 = vector.load %arg4[%c0_2, %c0_3] : memref<1x256xf32, #tpu.memory_space<vmem>>, vector<1x256xf32>
    %3 = vector.broadcast %2 : vector<1x256xf32> to vector<128x256xf32>
    %4 = arith.mulf %1, %3 : vector<128x256xf32>
    %c0_4 = arith.constant 0 : index
    %c0_5 = arith.constant 0 : index
    %5 = vector.load %arg5[%c0_4, %c0_5] : memref<1x256xf32, #tpu.memory_space<vmem>>, vector<1x256xf32>
    %6 = vector.broadcast %5 : vector<1x256xf32> to vector<128x256xf32>
    %7 = arith.addf %4, %6 : vector<128x256xf32>
    %cst = arith.constant 0.000000e+00 : f32
    %8 = vector.broadcast %cst : f32 to vector<128x256xf32>
    %9 = arith.cmpf oge, %7, %8 : vector<128x256xf32>
    %cst_6 = arith.constant 2.000000e-01 : f32
    %10 = vector.broadcast %cst_6 : f32 to vector<128x256xf32>
    %11 = arith.mulf %10, %7 : vector<128x256xf32>
    %12 = arith.select %9, %7, %11 : vector<128x256xi1>, vector<128x256xf32>
    %c0_7 = arith.constant 0 : index
    %c0_8 = arith.constant 0 : index
    %c0_9 = arith.constant 0 : index
    %13 = vector.load %arg3[%c0_7, %c0_8, %c0_9] : memref<1x256x128xf32, #tpu.memory_space<vmem>>, vector<1x256x128xf32>
    %14 = vector.shape_cast %13 : vector<1x256x128xf32> to vector<256x128xf32>
    %cst_10 = arith.constant dense<0.000000e+00> : vector<128x128xf32>
    %15 = tpu.matmul %12, %14, %cst_10 {dimension_numbers = #tpu.dot_dimension_numbers<[1], [0], [0], [1], [0, 0, 1, 1], [], []>} : vector<128x256xf32>, vector<256x128xf32>, vector<128x128xf32> -> vector<128x128xf32>
    %c0_11 = arith.constant 0 : index
    %c0_12 = arith.constant 0 : index
    %16 = vector.load %arg6[%c0_11, %c0_12] : memref<1x128xf32, #tpu.memory_space<vmem>>, vector<1x128xf32>
    %17 = vector.broadcast %16 : vector<1x128xf32> to vector<128x128xf32>
    %18 = arith.addf %15, %17 : vector<128x128xf32>
    %c0_13 = arith.constant 0 : index
    %c0_14 = arith.constant 0 : index
    %c0_15 = arith.constant 0 : index
    %19 = vector.load %arg7[%c0_13, %c0_14, %c0_15] : memref<1x128x128xf32, #tpu.memory_space<vmem>>, vector<1x128x128xf32>
    %20 = vector.shape_cast %19 : vector<1x128x128xf32> to vector<128x128xf32>
    %21 = vector.shape_cast %18 : vector<128x128xf32> to vector<1x128x128xf32>
    tpu.vector_store %arg7[%c0_13, %c0_14, %c0_15], %21 {strides = array<i32>} : memref<1x128x128xf32, #tpu.memory_space<vmem>>, vector<1x128x128xf32>,
    %22 = tpu.iota {dimensions = array<i32: 0>} : vector<8x128xi32>
    %cst_16 = arith.constant dense<0.000000e+00> : vector<128xf32>
    %23 = vector.multi_reduction <add>, %18, %cst_16 [0] : vector<128x128xf32> to vector<128xf32>
    %24 = vector.shape_cast %23 : vector<128xf32> to vector<1x128xf32>
    %25 = arith.mulf %18, %18 : vector<128x128xf32>
    %cst_17 = arith.constant dense<0.000000e+00> : vector<128xf32>
    %26 = vector.multi_reduction <add>, %25, %cst_17 [0] : vector<128x128xf32> to vector<128xf32>
    %27 = vector.shape_cast %26 : vector<128xf32> to vector<1x128xf32>
    %c0_i32 = arith.constant 0 : i32
    %28 = vector.broadcast %c0_i32 : i32 to vector<8x128xi32>
    %29 = arith.cmpi eq, %22, %28 : vector<8x128xi32>
    %cst_18 = arith.constant 0.000000e+00 : f32
    %30 = vector.shape_cast %24 : vector<1x128xf32> to vector<1x128xf32>
    %31 = vector.broadcast %30 : vector<1x128xf32> to vector<8x128xf32>
    %32 = vector.broadcast %cst_18 : f32 to vector<8x128xf32>
    %33 = arith.select %29, %31, %32 : vector<8x128xi1>, vector<8x128xf32>
    %c0_19 = arith.constant 0 : index
    %c0_20 = arith.constant 0 : index
    %34 = vector.load %arg8[%c0_19, %c0_20] : memref<8x128xf32, #tpu.memory_space<vmem>>, vector<8x128xf32>
    tpu.vector_store %arg8[%c0_19, %c0_20], %33 {strides = array<i32>} : memref<8x128xf32, #tpu.memory_space<vmem>>, vector<8x128xf32>,
    %c0_i32_21 = arith.constant 0 : i32
    %35 = vector.broadcast %c0_i32_21 : i32 to vector<8x128xi32>
    %36 = arith.cmpi eq, %22, %35 : vector<8x128xi32>
    %cst_22 = arith.constant 0.000000e+00 : f32
    %37 = vector.shape_cast %27 : vector<1x128xf32> to vector<1x128xf32>
    %38 = vector.broadcast %37 : vector<1x128xf32> to vector<8x128xf32>
    %39 = vector.broadcast %cst_22 : f32 to vector<8x128xf32>
    %40 = arith.select %36, %38, %39 : vector<8x128xi1>, vector<8x128xf32>
    %c0_23 = arith.constant 0 : index
    %c0_24 = arith.constant 0 : index
    %41 = vector.load %arg9[%c0_23, %c0_24] : memref<8x128xf32, #tpu.memory_space<vmem>>, vector<8x128xf32>
    tpu.vector_store %arg9[%c0_23, %c0_24], %40 {strides = array<i32>} : memref<8x128xf32, #tpu.memory_space<vmem>>, vector<8x128xf32>,
    return
  }
  func.func @transform_0(%arg0: i32, %arg1: i32) -> (i32, i32, i32) {
    %c0_i32 = arith.constant 0 : i32
    %c0_i32_0 = arith.constant 0 : i32
    return %arg0, %arg1, %c0_i32 : i32, i32, i32
  }
  func.func @transform_1(%arg0: i32, %arg1: i32) -> (i32, i32, i32) {
    %c0_i32 = arith.constant 0 : i32
    %c0_i32_0 = arith.constant 0 : i32
    %c0_i32_1 = arith.constant 0 : i32
    return %arg0, %c0_i32, %c0_i32_0 : i32, i32, i32
  }
  func.func @transform_2(%arg0: i32, %arg1: i32) -> (i32, i32) {
    %c0_i32 = arith.constant 0 : i32
    %c0_i32_0 = arith.constant 0 : i32
    %c0_i32_1 = arith.constant 0 : i32
    return %c0_i32, %c0_i32_0 : i32, i32
  }
  func.func @transform_3(%arg0: i32, %arg1: i32) -> (i32, i32) {
    %c0_i32 = arith.constant 0 : i32
    %c0_i32_0 = arith.constant 0 : i32
    %c0_i32_1 = arith.constant 0 : i32
    return %c0_i32, %c0_i32_0 : i32, i32
  }
  func.func @transform_4(%arg0: i32, %arg1: i32) -> (i32, i32) {
    %c0_i32 = arith.constant 0 : i32
    %c0_i32_0 = arith.constant 0 : i32
    %c0_i32_1 = arith.constant 0 : i32
    return %c0_i32, %c0_i32_0 : i32, i32
  }
  func.func @transform_5(%arg0: i32, %arg1: i32) -> (i32, i32, i32) {
    %c0_i32 = arith.constant 0 : i32
    %c0_i32_0 = arith.constant 0 : i32
    return %arg0, %arg1, %c0_i32 : i32, i32, i32
  }
  func.func @transform_6(%arg0: i32, %arg1: i32) -> (i32, i32) {
    %c1_i32 = arith.constant 1 : i32
    %0 = arith.muli %arg0, %c1_i32 : i32
    %1 = arith.addi %0, %arg1 : i32
    %c0_i32 = arith.constant 0 : i32
    %c0_i32_0 = arith.constant 0 : i32
    return %1, %c0_i32 : i32, i32
  }
  func.func @transform_7(%arg0: i32, %arg1: i32) -> (i32, i32) {
    %c1_i32 = arith.constant 1 : i32
    %0 = arith.muli %arg0, %c1_i32 : i32
    %1 = arith.addi %0, %arg1 : i32
    %c0_i32 = arith.constant 0 : i32
    %c0_i32_0 = arith.constant 0 : i32
    return %1, %c0_i32 : i32, i32
  }
}

module attributes {stable_mosaic.version = 11 : i64} {
  func.func @_fused_matmul_kernel(%arg0: i32, %arg1: i32, %arg2: memref<1x32x512xf32, #tpu.memory_space<vmem>>, %arg3: memref<1x512x128xf32, #tpu.memory_space<vmem>>, %arg4: memref<1x512xf32, #tpu.memory_space<vmem>>, %arg5: memref<1x512xf32, #tpu.memory_space<vmem>>, %arg6: memref<1x128xf32, #tpu.memory_space<vmem>>, %arg7: memref<1x32x128xf32, #tpu.memory_space<vmem>>, %arg8: memref<8x128xf32, #tpu.memory_space<vmem>>, %arg9: memref<8x128xf32, #tpu.memory_space<vmem>>) attributes {dimension_semantics = [#tpu.dimension_semantics<parallel>, #tpu.dimension_semantics<parallel>], iteration_bounds = array<i64: 1, 1>, scalar_prefetch = 0 : i64, scratch_operands = 0 : i64, tpu.core_type = #tpu.core_type<tc>, window_params = [{transform_indices = @transform_0, window_bounds = array<i64: 1, 32, 512>}, {transform_indices = @transform_1, window_bounds = array<i64: 1, 512, 128>}, {pipeline_mode = #tpu.pipeline_mode<synchronous>, transform_indices = @transform_2, window_bounds = array<i64: 1, 512>}, {pipeline_mode = #tpu.pipeline_mode<synchronous>, transform_indices = @transform_3, window_bounds = array<i64: 1, 512>}, {pipeline_mode = #tpu.pipeline_mode<synchronous>, transform_indices = @transform_4, window_bounds = array<i64: 1, 128>}, {transform_indices = @transform_5, window_bounds = array<i64: 1, 32, 128>}, {transform_indices = @transform_6, window_bounds = array<i64: 8, 128>}, {transform_indices = @transform_7, window_bounds = array<i64: 8, 128>}]} {
    %c0 = arith.constant 0 : index
    %c0_0 = arith.constant 0 : index
    %c0_1 = arith.constant 0 : index
    %0 = vector.load %arg2[%c0, %c0_0, %c0_1] : memref<1x32x512xf32, #tpu.memory_space<vmem>>, vector<1x32x512xf32>
    %1 = vector.shape_cast %0 : vector<1x32x512xf32> to vector<32x512xf32>
    %c0_2 = arith.constant 0 : index
    %c0_3 = arith.constant 0 : index
    %2 = vector.load %arg4[%c0_2, %c0_3] : memref<1x512xf32, #tpu.memory_space<vmem>>, vector<1x512xf32>
    %3 = vector.broadcast %2 : vector<1x512xf32> to vector<32x512xf32>
    %4 = arith.mulf %1, %3 : vector<32x512xf32>
    %c0_4 = arith.constant 0 : index
    %c0_5 = arith.constant 0 : index
    %5 = vector.load %arg5[%c0_4, %c0_5] : memref<1x512xf32, #tpu.memory_space<vmem>>, vector<1x512xf32>
    %6 = vector.broadcast %5 : vector<1x512xf32> to vector<32x512xf32>
    %7 = arith.addf %4, %6 : vector<32x512xf32>
    %cst = arith.constant 0.000000e+00 : f32
    %8 = vector.broadcast %cst : f32 to vector<32x512xf32>
    %9 = arith.cmpf oge, %7, %8 : vector<32x512xf32>
    %cst_6 = arith.constant 2.000000e-01 : f32
    %10 = vector.broadcast %cst_6 : f32 to vector<32x512xf32>
    %11 = arith.mulf %10, %7 : vector<32x512xf32>
    %12 = arith.select %9, %7, %11 : vector<32x512xi1>, vector<32x512xf32>
    %c0_7 = arith.constant 0 : index
    %c0_8 = arith.constant 0 : index
    %c0_9 = arith.constant 0 : index
    %13 = vector.load %arg3[%c0_7, %c0_8, %c0_9] : memref<1x512x128xf32, #tpu.memory_space<vmem>>, vector<1x512x128xf32>
    %14 = vector.shape_cast %13 : vector<1x512x128xf32> to vector<512x128xf32>
    %cst_10 = arith.constant dense<0.000000e+00> : vector<32x128xf32>
    %15 = tpu.matmul %12, %14, %cst_10 {dimension_numbers = #tpu.dot_dimension_numbers<[1], [0], [0], [1], [0, 0, 1, 1], [], []>} : vector<32x512xf32>, vector<512x128xf32>, vector<32x128xf32> -> vector<32x128xf32>
    %c0_11 = arith.constant 0 : index
    %c0_12 = arith.constant 0 : index
    %16 = vector.load %arg6[%c0_11, %c0_12] : memref<1x128xf32, #tpu.memory_space<vmem>>, vector<1x128xf32>
    %17 = vector.broadcast %16 : vector<1x128xf32> to vector<32x128xf32>
    %18 = arith.addf %15, %17 : vector<32x128xf32>
    %c0_13 = arith.constant 0 : index
    %c0_14 = arith.constant 0 : index
    %c0_15 = arith.constant 0 : index
    %19 = vector.load %arg7[%c0_13, %c0_14, %c0_15] : memref<1x32x128xf32, #tpu.memory_space<vmem>>, vector<1x32x128xf32>
    %20 = vector.shape_cast %19 : vector<1x32x128xf32> to vector<32x128xf32>
    %21 = vector.shape_cast %18 : vector<32x128xf32> to vector<1x32x128xf32>
    tpu.vector_store %arg7[%c0_13, %c0_14, %c0_15], %21 {strides = array<i32>} : memref<1x32x128xf32, #tpu.memory_space<vmem>>, vector<1x32x128xf32>,
    %22 = tpu.iota {dimensions = array<i32: 0>} : vector<8x128xi32>
    %cst_16 = arith.constant dense<0.000000e+00> : vector<128xf32>
    %23 = vector.multi_reduction <add>, %18, %cst_16 [0] : vector<32x128xf32> to vector<128xf32>
    %24 = vector.shape_cast %23 : vector<128xf32> to vector<1x128xf32>
    %25 = arith.mulf %18, %18 : vector<32x128xf32>
    %cst_17 = arith.constant dense<0.000000e+00> : vector<128xf32>
    %26 = vector.multi_reduction <add>, %25, %cst_17 [0] : vector<32x128xf32> to vector<128xf32>
    %27 = vector.shape_cast %26 : vector<128xf32> to vector<1x128xf32>
    %c0_i32 = arith.constant 0 : i32
    %28 = vector.broadcast %c0_i32 : i32 to vector<8x128xi32>
    %29 = arith.cmpi eq, %22, %28 : vector<8x128xi32>
    %cst_18 = arith.constant 0.000000e+00 : f32
    %30 = vector.shape_cast %24 : vector<1x128xf32> to vector<1x128xf32>
    %31 = vector.broadcast %30 : vector<1x128xf32> to vector<8x128xf32>
    %32 = vector.broadcast %cst_18 : f32 to vector<8x128xf32>
    %33 = arith.select %29, %31, %32 : vector<8x128xi1>, vector<8x128xf32>
    %c0_19 = arith.constant 0 : index
    %c0_20 = arith.constant 0 : index
    %34 = vector.load %arg8[%c0_19, %c0_20] : memref<8x128xf32, #tpu.memory_space<vmem>>, vector<8x128xf32>
    tpu.vector_store %arg8[%c0_19, %c0_20], %33 {strides = array<i32>} : memref<8x128xf32, #tpu.memory_space<vmem>>, vector<8x128xf32>,
    %c0_i32_21 = arith.constant 0 : i32
    %35 = vector.broadcast %c0_i32_21 : i32 to vector<8x128xi32>
    %36 = arith.cmpi eq, %22, %35 : vector<8x128xi32>
    %cst_22 = arith.constant 0.000000e+00 : f32
    %37 = vector.shape_cast %27 : vector<1x128xf32> to vector<1x128xf32>
    %38 = vector.broadcast %37 : vector<1x128xf32> to vector<8x128xf32>
    %39 = vector.broadcast %cst_22 : f32 to vector<8x128xf32>
    %40 = arith.select %36, %38, %39 : vector<8x128xi1>, vector<8x128xf32>
    %c0_23 = arith.constant 0 : index
    %c0_24 = arith.constant 0 : index
    %41 = vector.load %arg9[%c0_23, %c0_24] : memref<8x128xf32, #tpu.memory_space<vmem>>, vector<8x128xf32>
    tpu.vector_store %arg9[%c0_23, %c0_24], %40 {strides = array<i32>} : memref<8x128xf32, #tpu.memory_space<vmem>>, vector<8x128xf32>,
    return
  }
  func.func @transform_0(%arg0: i32, %arg1: i32) -> (i32, i32, i32) {
    %c0_i32 = arith.constant 0 : i32
    %c0_i32_0 = arith.constant 0 : i32
    return %arg0, %arg1, %c0_i32 : i32, i32, i32
  }
  func.func @transform_1(%arg0: i32, %arg1: i32) -> (i32, i32, i32) {
    %c0_i32 = arith.constant 0 : i32
    %c0_i32_0 = arith.constant 0 : i32
    %c0_i32_1 = arith.constant 0 : i32
    return %arg0, %c0_i32, %c0_i32_0 : i32, i32, i32
  }
  func.func @transform_2(%arg0: i32, %arg1: i32) -> (i32, i32) {
    %c0_i32 = arith.constant 0 : i32
    %c0_i32_0 = arith.constant 0 : i32
    %c0_i32_1 = arith.constant 0 : i32
    return %c0_i32, %c0_i32_0 : i32, i32
  }
  func.func @transform_3(%arg0: i32, %arg1: i32) -> (i32, i32) {
    %c0_i32 = arith.constant 0 : i32
    %c0_i32_0 = arith.constant 0 : i32
    %c0_i32_1 = arith.constant 0 : i32
    return %c0_i32, %c0_i32_0 : i32, i32
  }
  func.func @transform_4(%arg0: i32, %arg1: i32) -> (i32, i32) {
    %c0_i32 = arith.constant 0 : i32
    %c0_i32_0 = arith.constant 0 : i32
    %c0_i32_1 = arith.constant 0 : i32
    return %c0_i32, %c0_i32_0 : i32, i32
  }
  func.func @transform_5(%arg0: i32, %arg1: i32) -> (i32, i32, i32) {
    %c0_i32 = arith.constant 0 : i32
    %c0_i32_0 = arith.constant 0 : i32
    return %arg0, %arg1, %c0_i32 : i32, i32, i32
  }
  func.func @transform_6(%arg0: i32, %arg1: i32) -> (i32, i32) {
    %c1_i32 = arith.constant 1 : i32
    %0 = arith.muli %arg0, %c1_i32 : i32
    %1 = arith.addi %0, %arg1 : i32
    %c0_i32 = arith.constant 0 : i32
    %c0_i32_0 = arith.constant 0 : i32
    return %1, %c0_i32 : i32, i32
  }
  func.func @transform_7(%arg0: i32, %arg1: i32) -> (i32, i32) {
    %c1_i32 = arith.constant 1 : i32
    %0 = arith.muli %arg0, %c1_i32 : i32
    %1 = arith.addi %0, %arg1 : i32
    %c0_i32 = arith.constant 0 : i32
    %c0_i32_0 = arith.constant 0 : i32
    return %1, %c0_i32 : i32, i32
  }
}

module attributes {stable_mosaic.version = 11 : i64} {
  func.func @_fused_matmul_kernel(%arg0: i32, %arg1: i32, %arg2: memref<1x8x1024xf32, #tpu.memory_space<vmem>>, %arg3: memref<1x1024x128xf32, #tpu.memory_space<vmem>>, %arg4: memref<1x1024xf32, #tpu.memory_space<vmem>>, %arg5: memref<1x1024xf32, #tpu.memory_space<vmem>>, %arg6: memref<1x128xf32, #tpu.memory_space<vmem>>, %arg7: memref<1x8x128xf32, #tpu.memory_space<vmem>>, %arg8: memref<8x128xf32, #tpu.memory_space<vmem>>, %arg9: memref<8x128xf32, #tpu.memory_space<vmem>>) attributes {dimension_semantics = [#tpu.dimension_semantics<parallel>, #tpu.dimension_semantics<parallel>], iteration_bounds = array<i64: 1, 1>, scalar_prefetch = 0 : i64, scratch_operands = 0 : i64, tpu.core_type = #tpu.core_type<tc>, window_params = [{transform_indices = @transform_0, window_bounds = array<i64: 1, 8, 1024>}, {transform_indices = @transform_1, window_bounds = array<i64: 1, 1024, 128>}, {pipeline_mode = #tpu.pipeline_mode<synchronous>, transform_indices = @transform_2, window_bounds = array<i64: 1, 1024>}, {pipeline_mode = #tpu.pipeline_mode<synchronous>, transform_indices = @transform_3, window_bounds = array<i64: 1, 1024>}, {pipeline_mode = #tpu.pipeline_mode<synchronous>, transform_indices = @transform_4, window_bounds = array<i64: 1, 128>}, {transform_indices = @transform_5, window_bounds = array<i64: 1, 8, 128>}, {transform_indices = @transform_6, window_bounds = array<i64: 8, 128>}, {transform_indices = @transform_7, window_bounds = array<i64: 8, 128>}]} {
    %c0 = arith.constant 0 : index
    %c0_0 = arith.constant 0 : index
    %c0_1 = arith.constant 0 : index
    %0 = vector.load %arg2[%c0, %c0_0, %c0_1] : memref<1x8x1024xf32, #tpu.memory_space<vmem>>, vector<1x8x1024xf32>
    %1 = vector.shape_cast %0 : vector<1x8x1024xf32> to vector<8x1024xf32>
    %c0_2 = arith.constant 0 : index
    %c0_3 = arith.constant 0 : index
    %2 = vector.load %arg4[%c0_2, %c0_3] : memref<1x1024xf32, #tpu.memory_space<vmem>>, vector<1x1024xf32>
    %3 = vector.broadcast %2 : vector<1x1024xf32> to vector<8x1024xf32>
    %4 = arith.mulf %1, %3 : vector<8x1024xf32>
    %c0_4 = arith.constant 0 : index
    %c0_5 = arith.constant 0 : index
    %5 = vector.load %arg5[%c0_4, %c0_5] : memref<1x1024xf32, #tpu.memory_space<vmem>>, vector<1x1024xf32>
    %6 = vector.broadcast %5 : vector<1x1024xf32> to vector<8x1024xf32>
    %7 = arith.addf %4, %6 : vector<8x1024xf32>
    %cst = arith.constant 0.000000e+00 : f32
    %8 = vector.broadcast %cst : f32 to vector<8x1024xf32>
    %9 = arith.cmpf oge, %7, %8 : vector<8x1024xf32>
    %cst_6 = arith.constant 2.000000e-01 : f32
    %10 = vector.broadcast %cst_6 : f32 to vector<8x1024xf32>
    %11 = arith.mulf %10, %7 : vector<8x1024xf32>
    %12 = arith.select %9, %7, %11 : vector<8x1024xi1>, vector<8x1024xf32>
    %c0_7 = arith.constant 0 : index
    %c0_8 = arith.constant 0 : index
    %c0_9 = arith.constant 0 : index
    %13 = vector.load %arg3[%c0_7, %c0_8, %c0_9] : memref<1x1024x128xf32, #tpu.memory_space<vmem>>, vector<1x1024x128xf32>
    %14 = vector.shape_cast %13 : vector<1x1024x128xf32> to vector<1024x128xf32>
    %cst_10 = arith.constant dense<0.000000e+00> : vector<8x128xf32>
    %15 = tpu.matmul %12, %14, %cst_10 {dimension_numbers = #tpu.dot_dimension_numbers<[1], [0], [0], [1], [0, 0, 1, 1], [], []>} : vector<8x1024xf32>, vector<1024x128xf32>, vector<8x128xf32> -> vector<8x128xf32>
    %c0_11 = arith.constant 0 : index
    %c0_12 = arith.constant 0 : index
    %16 = vector.load %arg6[%c0_11, %c0_12] : memref<1x128xf32, #tpu.memory_space<vmem>>, vector<1x128xf32>
    %17 = vector.broadcast %16 : vector<1x128xf32> to vector<8x128xf32>
    %18 = arith.addf %15, %17 : vector<8x128xf32>
    %c0_13 = arith.constant 0 : index
    %c0_14 = arith.constant 0 : index
    %c0_15 = arith.constant 0 : index
    %19 = vector.load %arg7[%c0_13, %c0_14, %c0_15] : memref<1x8x128xf32, #tpu.memory_space<vmem>>, vector<1x8x128xf32>
    %20 = vector.shape_cast %19 : vector<1x8x128xf32> to vector<8x128xf32>
    %21 = vector.shape_cast %18 : vector<8x128xf32> to vector<1x8x128xf32>
    tpu.vector_store %arg7[%c0_13, %c0_14, %c0_15], %21 {strides = array<i32>} : memref<1x8x128xf32, #tpu.memory_space<vmem>>, vector<1x8x128xf32>,
    %22 = tpu.iota {dimensions = array<i32: 0>} : vector<8x128xi32>
    %cst_16 = arith.constant dense<0.000000e+00> : vector<128xf32>
    %23 = vector.multi_reduction <add>, %18, %cst_16 [0] : vector<8x128xf32> to vector<128xf32>
    %24 = vector.shape_cast %23 : vector<128xf32> to vector<1x128xf32>
    %25 = arith.mulf %18, %18 : vector<8x128xf32>
    %cst_17 = arith.constant dense<0.000000e+00> : vector<128xf32>
    %26 = vector.multi_reduction <add>, %25, %cst_17 [0] : vector<8x128xf32> to vector<128xf32>
    %27 = vector.shape_cast %26 : vector<128xf32> to vector<1x128xf32>
    %c0_i32 = arith.constant 0 : i32
    %28 = vector.broadcast %c0_i32 : i32 to vector<8x128xi32>
    %29 = arith.cmpi eq, %22, %28 : vector<8x128xi32>
    %cst_18 = arith.constant 0.000000e+00 : f32
    %30 = vector.shape_cast %24 : vector<1x128xf32> to vector<1x128xf32>
    %31 = vector.broadcast %30 : vector<1x128xf32> to vector<8x128xf32>
    %32 = vector.broadcast %cst_18 : f32 to vector<8x128xf32>
    %33 = arith.select %29, %31, %32 : vector<8x128xi1>, vector<8x128xf32>
    %c0_19 = arith.constant 0 : index
    %c0_20 = arith.constant 0 : index
    %34 = vector.load %arg8[%c0_19, %c0_20] : memref<8x128xf32, #tpu.memory_space<vmem>>, vector<8x128xf32>
    tpu.vector_store %arg8[%c0_19, %c0_20], %33 {strides = array<i32>} : memref<8x128xf32, #tpu.memory_space<vmem>>, vector<8x128xf32>,
    %c0_i32_21 = arith.constant 0 : i32
    %35 = vector.broadcast %c0_i32_21 : i32 to vector<8x128xi32>
    %36 = arith.cmpi eq, %22, %35 : vector<8x128xi32>
    %cst_22 = arith.constant 0.000000e+00 : f32
    %37 = vector.shape_cast %27 : vector<1x128xf32> to vector<1x128xf32>
    %38 = vector.broadcast %37 : vector<1x128xf32> to vector<8x128xf32>
    %39 = vector.broadcast %cst_22 : f32 to vector<8x128xf32>
    %40 = arith.select %36, %38, %39 : vector<8x128xi1>, vector<8x128xf32>
    %c0_23 = arith.constant 0 : index
    %c0_24 = arith.constant 0 : index
    %41 = vector.load %arg9[%c0_23, %c0_24] : memref<8x128xf32, #tpu.memory_space<vmem>>, vector<8x128xf32>
    tpu.vector_store %arg9[%c0_23, %c0_24], %40 {strides = array<i32>} : memref<8x128xf32, #tpu.memory_space<vmem>>, vector<8x128xf32>,
    return
  }
  func.func @transform_0(%arg0: i32, %arg1: i32) -> (i32, i32, i32) {
    %c0_i32 = arith.constant 0 : i32
    %c0_i32_0 = arith.constant 0 : i32
    return %arg0, %arg1, %c0_i32 : i32, i32, i32
  }
  func.func @transform_1(%arg0: i32, %arg1: i32) -> (i32, i32, i32) {
    %c0_i32 = arith.constant 0 : i32
    %c0_i32_0 = arith.constant 0 : i32
    %c0_i32_1 = arith.constant 0 : i32
    return %arg0, %c0_i32, %c0_i32_0 : i32, i32, i32
  }
  func.func @transform_2(%arg0: i32, %arg1: i32) -> (i32, i32) {
    %c0_i32 = arith.constant 0 : i32
    %c0_i32_0 = arith.constant 0 : i32
    %c0_i32_1 = arith.constant 0 : i32
    return %c0_i32, %c0_i32_0 : i32, i32
  }
  func.func @transform_3(%arg0: i32, %arg1: i32) -> (i32, i32) {
    %c0_i32 = arith.constant 0 : i32
    %c0_i32_0 = arith.constant 0 : i32
    %c0_i32_1 = arith.constant 0 : i32
    return %c0_i32, %c0_i32_0 : i32, i32
  }
  func.func @transform_4(%arg0: i32, %arg1: i32) -> (i32, i32) {
    %c0_i32 = arith.constant 0 : i32
    %c0_i32_0 = arith.constant 0 : i32
    %c0_i32_1 = arith.constant 0 : i32
    return %c0_i32, %c0_i32_0 : i32, i32
  }
  func.func @transform_5(%arg0: i32, %arg1: i32) -> (i32, i32, i32) {
    %c0_i32 = arith.constant 0 : i32
    %c0_i32_0 = arith.constant 0 : i32
    return %arg0, %arg1, %c0_i32 : i32, i32, i32
  }
  func.func @transform_6(%arg0: i32, %arg1: i32) -> (i32, i32) {
    %c1_i32 = arith.constant 1 : i32
    %0 = arith.muli %arg0, %c1_i32 : i32
    %1 = arith.addi %0, %arg1 : i32
    %c0_i32 = arith.constant 0 : i32
    %c0_i32_0 = arith.constant 0 : i32
    return %1, %c0_i32 : i32, i32
  }
  func.func @transform_7(%arg0: i32, %arg1: i32) -> (i32, i32) {
    %c1_i32 = arith.constant 1 : i32
    %0 = arith.muli %arg0, %c1_i32 : i32
    %1 = arith.addi %0, %arg1 : i32
    %c0_i32 = arith.constant 0 : i32
    %c0_i32_0 = arith.constant 0 : i32
    return %1, %c0_i32 : i32, i32
  }
}

module attributes {stable_mosaic.version = 11 : i64} {
  func.func @_fused_matmul_kernel(%arg0: i32, %arg1: i32, %arg2: memref<1x2x2048xf32, #tpu.memory_space<vmem>>, %arg3: memref<1x2048x128xf32, #tpu.memory_space<vmem>>, %arg4: memref<1x2048xf32, #tpu.memory_space<vmem>>, %arg5: memref<1x2048xf32, #tpu.memory_space<vmem>>, %arg6: memref<1x128xf32, #tpu.memory_space<vmem>>, %arg7: memref<1x2x128xf32, #tpu.memory_space<vmem>>) attributes {dimension_semantics = [#tpu.dimension_semantics<parallel>, #tpu.dimension_semantics<parallel>], iteration_bounds = array<i64: 1, 1>, scalar_prefetch = 0 : i64, scratch_operands = 0 : i64, tpu.core_type = #tpu.core_type<tc>, window_params = [{transform_indices = @transform_0, window_bounds = array<i64: 1, 2, 2048>}, {transform_indices = @transform_1, window_bounds = array<i64: 1, 2048, 128>}, {pipeline_mode = #tpu.pipeline_mode<synchronous>, transform_indices = @transform_2, window_bounds = array<i64: 1, 2048>}, {pipeline_mode = #tpu.pipeline_mode<synchronous>, transform_indices = @transform_3, window_bounds = array<i64: 1, 2048>}, {pipeline_mode = #tpu.pipeline_mode<synchronous>, transform_indices = @transform_4, window_bounds = array<i64: 1, 128>}, {transform_indices = @transform_5, window_bounds = array<i64: 1, 2, 128>}]} {
    %c0 = arith.constant 0 : index
    %c0_0 = arith.constant 0 : index
    %c0_1 = arith.constant 0 : index
    %0 = vector.load %arg2[%c0, %c0_0, %c0_1] : memref<1x2x2048xf32, #tpu.memory_space<vmem>>, vector<1x2x2048xf32>
    %1 = vector.shape_cast %0 : vector<1x2x2048xf32> to vector<2x2048xf32>
    %c0_2 = arith.constant 0 : index
    %c0_3 = arith.constant 0 : index
    %2 = vector.load %arg4[%c0_2, %c0_3] : memref<1x2048xf32, #tpu.memory_space<vmem>>, vector<1x2048xf32>
    %3 = vector.broadcast %2 : vector<1x2048xf32> to vector<2x2048xf32>
    %4 = arith.mulf %1, %3 : vector<2x2048xf32>
    %c0_4 = arith.constant 0 : index
    %c0_5 = arith.constant 0 : index
    %5 = vector.load %arg5[%c0_4, %c0_5] : memref<1x2048xf32, #tpu.memory_space<vmem>>, vector<1x2048xf32>
    %6 = vector.broadcast %5 : vector<1x2048xf32> to vector<2x2048xf32>
    %7 = arith.addf %4, %6 : vector<2x2048xf32>
    %cst = arith.constant 0.000000e+00 : f32
    %8 = vector.broadcast %cst : f32 to vector<2x2048xf32>
    %9 = arith.cmpf oge, %7, %8 : vector<2x2048xf32>
    %cst_6 = arith.constant 2.000000e-01 : f32
    %10 = vector.broadcast %cst_6 : f32 to vector<2x2048xf32>
    %11 = arith.mulf %10, %7 : vector<2x2048xf32>
    %12 = arith.select %9, %7, %11 : vector<2x2048xi1>, vector<2x2048xf32>
    %c0_7 = arith.constant 0 : index
    %c0_8 = arith.constant 0 : index
    %c0_9 = arith.constant 0 : index
    %13 = vector.load %arg3[%c0_7, %c0_8, %c0_9] : memref<1x2048x128xf32, #tpu.memory_space<vmem>>, vector<1x2048x128xf32>
    %14 = vector.shape_cast %13 : vector<1x2048x128xf32> to vector<2048x128xf32>
    %cst_10 = arith.constant dense<0.000000e+00> : vector<2x128xf32>
    %15 = tpu.matmul %12, %14, %cst_10 {dimension_numbers = #tpu.dot_dimension_numbers<[1], [0], [0], [1], [0, 0, 1, 1], [], []>} : vector<2x2048xf32>, vector<2048x128xf32>, vector<2x128xf32> -> vector<2x128xf32>
    %c0_11 = arith.constant 0 : index
    %c0_12 = arith.constant 0 : index
    %16 = vector.load %arg6[%c0_11, %c0_12] : memref<1x128xf32, #tpu.memory_space<vmem>>, vector<1x128xf32>
    %17 = vector.broadcast %16 : vector<1x128xf32> to vector<2x128xf32>
    %18 = arith.addf %15, %17 : vector<2x128xf32>
    %c0_13 = arith.constant 0 : index
    %c0_14 = arith.constant 0 : index
    %c0_15 = arith.constant 0 : index
    %19 = vector.load %arg7[%c0_13, %c0_14, %c0_15] : memref<1x2x128xf32, #tpu.memory_space<vmem>>, vector<1x2x128xf32>
    %20 = vector.shape_cast %19 : vector<1x2x128xf32> to vector<2x128xf32>
    %21 = vector.shape_cast %18 : vector<2x128xf32> to vector<1x2x128xf32>
    tpu.vector_store %arg7[%c0_13, %c0_14, %c0_15], %21 {strides = array<i32>} : memref<1x2x128xf32, #tpu.memory_space<vmem>>, vector<1x2x128xf32>,
    return
  }
  func.func @transform_0(%arg0: i32, %arg1: i32) -> (i32, i32, i32) {
    %c0_i32 = arith.constant 0 : i32
    %c0_i32_0 = arith.constant 0 : i32
    return %arg0, %arg1, %c0_i32 : i32, i32, i32
  }
  func.func @transform_1(%arg0: i32, %arg1: i32) -> (i32, i32, i32) {
    %c0_i32 = arith.constant 0 : i32
    %c0_i32_0 = arith.constant 0 : i32
    %c0_i32_1 = arith.constant 0 : i32
    return %arg0, %c0_i32, %c0_i32_0 : i32, i32, i32
  }
  func.func @transform_2(%arg0: i32, %arg1: i32) -> (i32, i32) {
    %c0_i32 = arith.constant 0 : i32
    %c0_i32_0 = arith.constant 0 : i32
    %c0_i32_1 = arith.constant 0 : i32
    return %c0_i32, %c0_i32_0 : i32, i32
  }
  func.func @transform_3(%arg0: i32, %arg1: i32) -> (i32, i32) {
    %c0_i32 = arith.constant 0 : i32
    %c0_i32_0 = arith.constant 0 : i32
    %c0_i32_1 = arith.constant 0 : i32
    return %c0_i32, %c0_i32_0 : i32, i32
  }
  func.func @transform_4(%arg0: i32, %arg1: i32) -> (i32, i32) {
    %c0_i32 = arith.constant 0 : i32
    %c0_i32_0 = arith.constant 0 : i32
    %c0_i32_1 = arith.constant 0 : i32
    return %c0_i32, %c0_i32_0 : i32, i32
  }
  func.func @transform_5(%arg0: i32, %arg1: i32) -> (i32, i32, i32) {
    %c0_i32 = arith.constant 0 : i32
    %c0_i32_0 = arith.constant 0 : i32
    return %arg0, %arg1, %c0_i32 : i32, i32, i32
  }
}

module attributes {stable_mosaic.version = 11 : i64} {
  func.func @_fused_matmul_kernel(%arg0: i32, %arg1: i32, %arg2: memref<1x2x512xf32, #tpu.memory_space<vmem>>, %arg3: memref<1x512x128xf32, #tpu.memory_space<vmem>>, %arg4: memref<1x512xf32, #tpu.memory_space<vmem>>, %arg5: memref<1x512xf32, #tpu.memory_space<vmem>>, %arg6: memref<1x128xf32, #tpu.memory_space<vmem>>, %arg7: memref<1x2x128xf32, #tpu.memory_space<vmem>>, %arg8: memref<8x128xf32, #tpu.memory_space<vmem>>, %arg9: memref<8x128xf32, #tpu.memory_space<vmem>>) attributes {dimension_semantics = [#tpu.dimension_semantics<parallel>, #tpu.dimension_semantics<parallel>], iteration_bounds = array<i64: 4, 1>, scalar_prefetch = 0 : i64, scratch_operands = 0 : i64, tpu.core_type = #tpu.core_type<tc>, window_params = [{transform_indices = @transform_0, window_bounds = array<i64: 1, 2, 512>}, {transform_indices = @transform_1, window_bounds = array<i64: 1, 512, 128>}, {pipeline_mode = #tpu.pipeline_mode<synchronous>, transform_indices = @transform_2, window_bounds = array<i64: 1, 512>}, {pipeline_mode = #tpu.pipeline_mode<synchronous>, transform_indices = @transform_3, window_bounds = array<i64: 1, 512>}, {pipeline_mode = #tpu.pipeline_mode<synchronous>, transform_indices = @transform_4, window_bounds = array<i64: 1, 128>}, {transform_indices = @transform_5, window_bounds = array<i64: 1, 2, 128>}, {transform_indices = @transform_6, window_bounds = array<i64: 8, 128>}, {transform_indices = @transform_7, window_bounds = array<i64: 8, 128>}]} {
    %c0 = arith.constant 0 : index
    %c0_0 = arith.constant 0 : index
    %c0_1 = arith.constant 0 : index
    %0 = vector.load %arg2[%c0, %c0_0, %c0_1] : memref<1x2x512xf32, #tpu.memory_space<vmem>>, vector<1x2x512xf32>
    %1 = vector.shape_cast %0 : vector<1x2x512xf32> to vector<2x512xf32>
    %c0_2 = arith.constant 0 : index
    %c0_3 = arith.constant 0 : index
    %2 = vector.load %arg4[%c0_2, %c0_3] : memref<1x512xf32, #tpu.memory_space<vmem>>, vector<1x512xf32>
    %3 = vector.broadcast %2 : vector<1x512xf32> to vector<2x512xf32>
    %4 = arith.mulf %1, %3 : vector<2x512xf32>
    %c0_4 = arith.constant 0 : index
    %c0_5 = arith.constant 0 : index
    %5 = vector.load %arg5[%c0_4, %c0_5] : memref<1x512xf32, #tpu.memory_space<vmem>>, vector<1x512xf32>
    %6 = vector.broadcast %5 : vector<1x512xf32> to vector<2x512xf32>
    %7 = arith.addf %4, %6 : vector<2x512xf32>
    %cst = arith.constant 0.000000e+00 : f32
    %8 = vector.broadcast %cst : f32 to vector<2x512xf32>
    %9 = arith.maximumf %7, %8 : vector<2x512xf32>
    %c0_6 = arith.constant 0 : index
    %c0_7 = arith.constant 0 : index
    %c0_8 = arith.constant 0 : index
    %10 = vector.load %arg3[%c0_6, %c0_7, %c0_8] : memref<1x512x128xf32, #tpu.memory_space<vmem>>, vector<1x512x128xf32>
    %11 = vector.shape_cast %10 : vector<1x512x128xf32> to vector<512x128xf32>
    %cst_9 = arith.constant dense<0.000000e+00> : vector<2x128xf32>
    %12 = tpu.matmul %9, %11, %cst_9 {dimension_numbers = #tpu.dot_dimension_numbers<[1], [0], [0], [1], [0, 0, 1, 1], [], []>} : vector<2x512xf32>, vector<512x128xf32>, vector<2x128xf32> -> vector<2x128xf32>
    %c0_10 = arith.constant 0 : index
    %c0_11 = arith.constant 0 : index
    %13 = vector.load %arg6[%c0_10, %c0_11] : memref<1x128xf32, #tpu.memory_space<vmem>>, vector<1x128xf32>
    %14 = vector.broadcast %13 : vector<1x128xf32> to vector<2x128xf32>
    %15 = arith.addf %12, %14 : vector<2x128xf32>
    %c0_12 = arith.constant 0 : index
    %c0_13 = arith.constant 0 : index
    %c0_14 = arith.constant 0 : index
    %16 = vector.load %arg7[%c0_12, %c0_13, %c0_14] : memref<1x2x128xf32, #tpu.memory_space<vmem>>, vector<1x2x128xf32>
    %17 = vector.shape_cast %16 : vector<1x2x128xf32> to vector<2x128xf32>
    %18 = vector.shape_cast %15 : vector<2x128xf32> to vector<1x2x128xf32>
    tpu.vector_store %arg7[%c0_12, %c0_13, %c0_14], %18 {strides = array<i32>} : memref<1x2x128xf32, #tpu.memory_space<vmem>>, vector<1x2x128xf32>,
    %19 = tpu.iota {dimensions = array<i32: 0>} : vector<8x128xi32>
    %cst_15 = arith.constant dense<0.000000e+00> : vector<128xf32>
    %20 = vector.multi_reduction <add>, %15, %cst_15 [0] : vector<2x128xf32> to vector<128xf32>
    %21 = vector.shape_cast %20 : vector<128xf32> to vector<1x128xf32>
    %22 = arith.mulf %15, %15 : vector<2x128xf32>
    %cst_16 = arith.constant dense<0.000000e+00> : vector<128xf32>
    %23 = vector.multi_reduction <add>, %22, %cst_16 [0] : vector<2x128xf32> to vector<128xf32>
    %24 = vector.shape_cast %23 : vector<128xf32> to vector<1x128xf32>
    %c0_i32 = arith.constant 0 : i32
    %25 = vector.broadcast %c0_i32 : i32 to vector<8x128xi32>
    %26 = arith.cmpi eq, %19, %25 : vector<8x128xi32>
    %cst_17 = arith.constant 0.000000e+00 : f32
    %27 = vector.shape_cast %21 : vector<1x128xf32> to vector<1x128xf32>
    %28 = vector.broadcast %27 : vector<1x128xf32> to vector<8x128xf32>
    %29 = vector.broadcast %cst_17 : f32 to vector<8x128xf32>
    %30 = arith.select %26, %28, %29 : vector<8x128xi1>, vector<8x128xf32>
    %c0_18 = arith.constant 0 : index
    %c0_19 = arith.constant 0 : index
    %31 = vector.load %arg8[%c0_18, %c0_19] : memref<8x128xf32, #tpu.memory_space<vmem>>, vector<8x128xf32>
    tpu.vector_store %arg8[%c0_18, %c0_19], %30 {strides = array<i32>} : memref<8x128xf32, #tpu.memory_space<vmem>>, vector<8x128xf32>,
    %c0_i32_20 = arith.constant 0 : i32
    %32 = vector.broadcast %c0_i32_20 : i32 to vector<8x128xi32>
    %33 = arith.cmpi eq, %19, %32 : vector<8x128xi32>
    %cst_21 = arith.constant 0.000000e+00 : f32
    %34 = vector.shape_cast %24 : vector<1x128xf32> to vector<1x128xf32>
    %35 = vector.broadcast %34 : vector<1x128xf32> to vector<8x128xf32>
    %36 = vector.broadcast %cst_21 : f32 to vector<8x128xf32>
    %37 = arith.select %33, %35, %36 : vector<8x128xi1>, vector<8x128xf32>
    %c0_22 = arith.constant 0 : index
    %c0_23 = arith.constant 0 : index
    %38 = vector.load %arg9[%c0_22, %c0_23] : memref<8x128xf32, #tpu.memory_space<vmem>>, vector<8x128xf32>
    tpu.vector_store %arg9[%c0_22, %c0_23], %37 {strides = array<i32>} : memref<8x128xf32, #tpu.memory_space<vmem>>, vector<8x128xf32>,
    return
  }
  func.func @transform_0(%arg0: i32, %arg1: i32) -> (i32, i32, i32) {
    %c0_i32 = arith.constant 0 : i32
    %c0_i32_0 = arith.constant 0 : i32
    return %arg0, %arg1, %c0_i32 : i32, i32, i32
  }
  func.func @transform_1(%arg0: i32, %arg1: i32) -> (i32, i32, i32) {
    %c0_i32 = arith.constant 0 : i32
    %c0_i32_0 = arith.constant 0 : i32
    %c0_i32_1 = arith.constant 0 : i32
    return %arg0, %c0_i32, %c0_i32_0 : i32, i32, i32
  }
  func.func @transform_2(%arg0: i32, %arg1: i32) -> (i32, i32) {
    %c0_i32 = arith.constant 0 : i32
    %c0_i32_0 = arith.constant 0 : i32
    %c0_i32_1 = arith.constant 0 : i32
    return %c0_i32, %c0_i32_0 : i32, i32
  }
  func.func @transform_3(%arg0: i32, %arg1: i32) -> (i32, i32) {
    %c0_i32 = arith.constant 0 : i32
    %c0_i32_0 = arith.constant 0 : i32
    %c0_i32_1 = arith.constant 0 : i32
    return %c0_i32, %c0_i32_0 : i32, i32
  }
  func.func @transform_4(%arg0: i32, %arg1: i32) -> (i32, i32) {
    %c0_i32 = arith.constant 0 : i32
    %c0_i32_0 = arith.constant 0 : i32
    %c0_i32_1 = arith.constant 0 : i32
    return %c0_i32, %c0_i32_0 : i32, i32
  }
  func.func @transform_5(%arg0: i32, %arg1: i32) -> (i32, i32, i32) {
    %c0_i32 = arith.constant 0 : i32
    %c0_i32_0 = arith.constant 0 : i32
    return %arg0, %arg1, %c0_i32 : i32, i32, i32
  }
  func.func @transform_6(%arg0: i32, %arg1: i32) -> (i32, i32) {
    %c1_i32 = arith.constant 1 : i32
    %0 = arith.muli %arg0, %c1_i32 : i32
    %1 = arith.addi %0, %arg1 : i32
    %c0_i32 = arith.constant 0 : i32
    %c0_i32_0 = arith.constant 0 : i32
    return %1, %c0_i32 : i32, i32
  }
  func.func @transform_7(%arg0: i32, %arg1: i32) -> (i32, i32) {
    %c1_i32 = arith.constant 1 : i32
    %0 = arith.muli %arg0, %c1_i32 : i32
    %1 = arith.addi %0, %arg1 : i32
    %c0_i32 = arith.constant 0 : i32
    %c0_i32_0 = arith.constant 0 : i32
    return %1, %c0_i32 : i32, i32
  }
}

module attributes {stable_mosaic.version = 11 : i64} {
  func.func @_fused_matmul_kernel(%arg0: i32, %arg1: i32, %arg2: memref<1x8x1024xf32, #tpu.memory_space<vmem>>, %arg3: memref<1x1024x128xf32, #tpu.memory_space<vmem>>, %arg4: memref<1x1024xf32, #tpu.memory_space<vmem>>, %arg5: memref<1x1024xf32, #tpu.memory_space<vmem>>, %arg6: memref<1x128xf32, #tpu.memory_space<vmem>>, %arg7: memref<1x8x128xf32, #tpu.memory_space<vmem>>, %arg8: memref<8x128xf32, #tpu.memory_space<vmem>>, %arg9: memref<8x128xf32, #tpu.memory_space<vmem>>) attributes {dimension_semantics = [#tpu.dimension_semantics<parallel>, #tpu.dimension_semantics<parallel>], iteration_bounds = array<i64: 4, 1>, scalar_prefetch = 0 : i64, scratch_operands = 0 : i64, tpu.core_type = #tpu.core_type<tc>, window_params = [{transform_indices = @transform_0, window_bounds = array<i64: 1, 8, 1024>}, {transform_indices = @transform_1, window_bounds = array<i64: 1, 1024, 128>}, {pipeline_mode = #tpu.pipeline_mode<synchronous>, transform_indices = @transform_2, window_bounds = array<i64: 1, 1024>}, {pipeline_mode = #tpu.pipeline_mode<synchronous>, transform_indices = @transform_3, window_bounds = array<i64: 1, 1024>}, {pipeline_mode = #tpu.pipeline_mode<synchronous>, transform_indices = @transform_4, window_bounds = array<i64: 1, 128>}, {transform_indices = @transform_5, window_bounds = array<i64: 1, 8, 128>}, {transform_indices = @transform_6, window_bounds = array<i64: 8, 128>}, {transform_indices = @transform_7, window_bounds = array<i64: 8, 128>}]} {
    %c0 = arith.constant 0 : index
    %c0_0 = arith.constant 0 : index
    %c0_1 = arith.constant 0 : index
    %0 = vector.load %arg2[%c0, %c0_0, %c0_1] : memref<1x8x1024xf32, #tpu.memory_space<vmem>>, vector<1x8x1024xf32>
    %1 = vector.shape_cast %0 : vector<1x8x1024xf32> to vector<8x1024xf32>
    %c0_2 = arith.constant 0 : index
    %c0_3 = arith.constant 0 : index
    %2 = vector.load %arg4[%c0_2, %c0_3] : memref<1x1024xf32, #tpu.memory_space<vmem>>, vector<1x1024xf32>
    %3 = vector.broadcast %2 : vector<1x1024xf32> to vector<8x1024xf32>
    %4 = arith.mulf %1, %3 : vector<8x1024xf32>
    %c0_4 = arith.constant 0 : index
    %c0_5 = arith.constant 0 : index
    %5 = vector.load %arg5[%c0_4, %c0_5] : memref<1x1024xf32, #tpu.memory_space<vmem>>, vector<1x1024xf32>
    %6 = vector.broadcast %5 : vector<1x1024xf32> to vector<8x1024xf32>
    %7 = arith.addf %4, %6 : vector<8x1024xf32>
    %cst = arith.constant 0.000000e+00 : f32
    %8 = vector.broadcast %cst : f32 to vector<8x1024xf32>
    %9 = arith.maximumf %7, %8 : vector<8x1024xf32>
    %c0_6 = arith.constant 0 : index
    %c0_7 = arith.constant 0 : index
    %c0_8 = arith.constant 0 : index
    %10 = vector.load %arg3[%c0_6, %c0_7, %c0_8] : memref<1x1024x128xf32, #tpu.memory_space<vmem>>, vector<1x1024x128xf32>
    %11 = vector.shape_cast %10 : vector<1x1024x128xf32> to vector<1024x128xf32>
    %cst_9 = arith.constant dense<0.000000e+00> : vector<8x128xf32>
    %12 = tpu.matmul %9, %11, %cst_9 {dimension_numbers = #tpu.dot_dimension_numbers<[1], [0], [0], [1], [0, 0, 1, 1], [], []>} : vector<8x1024xf32>, vector<1024x128xf32>, vector<8x128xf32> -> vector<8x128xf32>
    %c0_10 = arith.constant 0 : index
    %c0_11 = arith.constant 0 : index
    %13 = vector.load %arg6[%c0_10, %c0_11] : memref<1x128xf32, #tpu.memory_space<vmem>>, vector<1x128xf32>
    %14 = vector.broadcast %13 : vector<1x128xf32> to vector<8x128xf32>
    %15 = arith.addf %12, %14 : vector<8x128xf32>
    %c0_12 = arith.constant 0 : index
    %c0_13 = arith.constant 0 : index
    %c0_14 = arith.constant 0 : index
    %16 = vector.load %arg7[%c0_12, %c0_13, %c0_14] : memref<1x8x128xf32, #tpu.memory_space<vmem>>, vector<1x8x128xf32>
    %17 = vector.shape_cast %16 : vector<1x8x128xf32> to vector<8x128xf32>
    %18 = vector.shape_cast %15 : vector<8x128xf32> to vector<1x8x128xf32>
    tpu.vector_store %arg7[%c0_12, %c0_13, %c0_14], %18 {strides = array<i32>} : memref<1x8x128xf32, #tpu.memory_space<vmem>>, vector<1x8x128xf32>,
    %19 = tpu.iota {dimensions = array<i32: 0>} : vector<8x128xi32>
    %cst_15 = arith.constant dense<0.000000e+00> : vector<128xf32>
    %20 = vector.multi_reduction <add>, %15, %cst_15 [0] : vector<8x128xf32> to vector<128xf32>
    %21 = vector.shape_cast %20 : vector<128xf32> to vector<1x128xf32>
    %22 = arith.mulf %15, %15 : vector<8x128xf32>
    %cst_16 = arith.constant dense<0.000000e+00> : vector<128xf32>
    %23 = vector.multi_reduction <add>, %22, %cst_16 [0] : vector<8x128xf32> to vector<128xf32>
    %24 = vector.shape_cast %23 : vector<128xf32> to vector<1x128xf32>
    %c0_i32 = arith.constant 0 : i32
    %25 = vector.broadcast %c0_i32 : i32 to vector<8x128xi32>
    %26 = arith.cmpi eq, %19, %25 : vector<8x128xi32>
    %cst_17 = arith.constant 0.000000e+00 : f32
    %27 = vector.shape_cast %21 : vector<1x128xf32> to vector<1x128xf32>
    %28 = vector.broadcast %27 : vector<1x128xf32> to vector<8x128xf32>
    %29 = vector.broadcast %cst_17 : f32 to vector<8x128xf32>
    %30 = arith.select %26, %28, %29 : vector<8x128xi1>, vector<8x128xf32>
    %c0_18 = arith.constant 0 : index
    %c0_19 = arith.constant 0 : index
    %31 = vector.load %arg8[%c0_18, %c0_19] : memref<8x128xf32, #tpu.memory_space<vmem>>, vector<8x128xf32>
    tpu.vector_store %arg8[%c0_18, %c0_19], %30 {strides = array<i32>} : memref<8x128xf32, #tpu.memory_space<vmem>>, vector<8x128xf32>,
    %c0_i32_20 = arith.constant 0 : i32
    %32 = vector.broadcast %c0_i32_20 : i32 to vector<8x128xi32>
    %33 = arith.cmpi eq, %19, %32 : vector<8x128xi32>
    %cst_21 = arith.constant 0.000000e+00 : f32
    %34 = vector.shape_cast %24 : vector<1x128xf32> to vector<1x128xf32>
    %35 = vector.broadcast %34 : vector<1x128xf32> to vector<8x128xf32>
    %36 = vector.broadcast %cst_21 : f32 to vector<8x128xf32>
    %37 = arith.select %33, %35, %36 : vector<8x128xi1>, vector<8x128xf32>
    %c0_22 = arith.constant 0 : index
    %c0_23 = arith.constant 0 : index
    %38 = vector.load %arg9[%c0_22, %c0_23] : memref<8x128xf32, #tpu.memory_space<vmem>>, vector<8x128xf32>
    tpu.vector_store %arg9[%c0_22, %c0_23], %37 {strides = array<i32>} : memref<8x128xf32, #tpu.memory_space<vmem>>, vector<8x128xf32>,
    return
  }
  func.func @transform_0(%arg0: i32, %arg1: i32) -> (i32, i32, i32) {
    %c0_i32 = arith.constant 0 : i32
    %c0_i32_0 = arith.constant 0 : i32
    return %arg0, %arg1, %c0_i32 : i32, i32, i32
  }
  func.func @transform_1(%arg0: i32, %arg1: i32) -> (i32, i32, i32) {
    %c0_i32 = arith.constant 0 : i32
    %c0_i32_0 = arith.constant 0 : i32
    %c0_i32_1 = arith.constant 0 : i32
    return %arg0, %c0_i32, %c0_i32_0 : i32, i32, i32
  }
  func.func @transform_2(%arg0: i32, %arg1: i32) -> (i32, i32) {
    %c0_i32 = arith.constant 0 : i32
    %c0_i32_0 = arith.constant 0 : i32
    %c0_i32_1 = arith.constant 0 : i32
    return %c0_i32, %c0_i32_0 : i32, i32
  }
  func.func @transform_3(%arg0: i32, %arg1: i32) -> (i32, i32) {
    %c0_i32 = arith.constant 0 : i32
    %c0_i32_0 = arith.constant 0 : i32
    %c0_i32_1 = arith.constant 0 : i32
    return %c0_i32, %c0_i32_0 : i32, i32
  }
  func.func @transform_4(%arg0: i32, %arg1: i32) -> (i32, i32) {
    %c0_i32 = arith.constant 0 : i32
    %c0_i32_0 = arith.constant 0 : i32
    %c0_i32_1 = arith.constant 0 : i32
    return %c0_i32, %c0_i32_0 : i32, i32
  }
  func.func @transform_5(%arg0: i32, %arg1: i32) -> (i32, i32, i32) {
    %c0_i32 = arith.constant 0 : i32
    %c0_i32_0 = arith.constant 0 : i32
    return %arg0, %arg1, %c0_i32 : i32, i32, i32
  }
  func.func @transform_6(%arg0: i32, %arg1: i32) -> (i32, i32) {
    %c1_i32 = arith.constant 1 : i32
    %0 = arith.muli %arg0, %c1_i32 : i32
    %1 = arith.addi %0, %arg1 : i32
    %c0_i32 = arith.constant 0 : i32
    %c0_i32_0 = arith.constant 0 : i32
    return %1, %c0_i32 : i32, i32
  }
  func.func @transform_7(%arg0: i32, %arg1: i32) -> (i32, i32) {
    %c1_i32 = arith.constant 1 : i32
    %0 = arith.muli %arg0, %c1_i32 : i32
    %1 = arith.addi %0, %arg1 : i32
    %c0_i32 = arith.constant 0 : i32
    %c0_i32_0 = arith.constant 0 : i32
    return %1, %c0_i32 : i32, i32
  }
}

module attributes {stable_mosaic.version = 11 : i64} {
  func.func @_fused_matmul_kernel(%arg0: i32, %arg1: i32, %arg2: memref<1x32x512xf32, #tpu.memory_space<vmem>>, %arg3: memref<1x512x128xf32, #tpu.memory_space<vmem>>, %arg4: memref<1x512xf32, #tpu.memory_space<vmem>>, %arg5: memref<1x512xf32, #tpu.memory_space<vmem>>, %arg6: memref<1x128xf32, #tpu.memory_space<vmem>>, %arg7: memref<1x32x128xf32, #tpu.memory_space<vmem>>, %arg8: memref<8x128xf32, #tpu.memory_space<vmem>>, %arg9: memref<8x128xf32, #tpu.memory_space<vmem>>) attributes {dimension_semantics = [#tpu.dimension_semantics<parallel>, #tpu.dimension_semantics<parallel>], iteration_bounds = array<i64: 4, 1>, scalar_prefetch = 0 : i64, scratch_operands = 0 : i64, tpu.core_type = #tpu.core_type<tc>, window_params = [{transform_indices = @transform_0, window_bounds = array<i64: 1, 32, 512>}, {transform_indices = @transform_1, window_bounds = array<i64: 1, 512, 128>}, {pipeline_mode = #tpu.pipeline_mode<synchronous>, transform_indices = @transform_2, window_bounds = array<i64: 1, 512>}, {pipeline_mode = #tpu.pipeline_mode<synchronous>, transform_indices = @transform_3, window_bounds = array<i64: 1, 512>}, {pipeline_mode = #tpu.pipeline_mode<synchronous>, transform_indices = @transform_4, window_bounds = array<i64: 1, 128>}, {transform_indices = @transform_5, window_bounds = array<i64: 1, 32, 128>}, {transform_indices = @transform_6, window_bounds = array<i64: 8, 128>}, {transform_indices = @transform_7, window_bounds = array<i64: 8, 128>}]} {
    %c0 = arith.constant 0 : index
    %c0_0 = arith.constant 0 : index
    %c0_1 = arith.constant 0 : index
    %0 = vector.load %arg2[%c0, %c0_0, %c0_1] : memref<1x32x512xf32, #tpu.memory_space<vmem>>, vector<1x32x512xf32>
    %1 = vector.shape_cast %0 : vector<1x32x512xf32> to vector<32x512xf32>
    %c0_2 = arith.constant 0 : index
    %c0_3 = arith.constant 0 : index
    %2 = vector.load %arg4[%c0_2, %c0_3] : memref<1x512xf32, #tpu.memory_space<vmem>>, vector<1x512xf32>
    %3 = vector.broadcast %2 : vector<1x512xf32> to vector<32x512xf32>
    %4 = arith.mulf %1, %3 : vector<32x512xf32>
    %c0_4 = arith.constant 0 : index
    %c0_5 = arith.constant 0 : index
    %5 = vector.load %arg5[%c0_4, %c0_5] : memref<1x512xf32, #tpu.memory_space<vmem>>, vector<1x512xf32>
    %6 = vector.broadcast %5 : vector<1x512xf32> to vector<32x512xf32>
    %7 = arith.addf %4, %6 : vector<32x512xf32>
    %cst = arith.constant 0.000000e+00 : f32
    %8 = vector.broadcast %cst : f32 to vector<32x512xf32>
    %9 = arith.maximumf %7, %8 : vector<32x512xf32>
    %c0_6 = arith.constant 0 : index
    %c0_7 = arith.constant 0 : index
    %c0_8 = arith.constant 0 : index
    %10 = vector.load %arg3[%c0_6, %c0_7, %c0_8] : memref<1x512x128xf32, #tpu.memory_space<vmem>>, vector<1x512x128xf32>
    %11 = vector.shape_cast %10 : vector<1x512x128xf32> to vector<512x128xf32>
    %cst_9 = arith.constant dense<0.000000e+00> : vector<32x128xf32>
    %12 = tpu.matmul %9, %11, %cst_9 {dimension_numbers = #tpu.dot_dimension_numbers<[1], [0], [0], [1], [0, 0, 1, 1], [], []>} : vector<32x512xf32>, vector<512x128xf32>, vector<32x128xf32> -> vector<32x128xf32>
    %c0_10 = arith.constant 0 : index
    %c0_11 = arith.constant 0 : index
    %13 = vector.load %arg6[%c0_10, %c0_11] : memref<1x128xf32, #tpu.memory_space<vmem>>, vector<1x128xf32>
    %14 = vector.broadcast %13 : vector<1x128xf32> to vector<32x128xf32>
    %15 = arith.addf %12, %14 : vector<32x128xf32>
    %c0_12 = arith.constant 0 : index
    %c0_13 = arith.constant 0 : index
    %c0_14 = arith.constant 0 : index
    %16 = vector.load %arg7[%c0_12, %c0_13, %c0_14] : memref<1x32x128xf32, #tpu.memory_space<vmem>>, vector<1x32x128xf32>
    %17 = vector.shape_cast %16 : vector<1x32x128xf32> to vector<32x128xf32>
    %18 = vector.shape_cast %15 : vector<32x128xf32> to vector<1x32x128xf32>
    tpu.vector_store %arg7[%c0_12, %c0_13, %c0_14], %18 {strides = array<i32>} : memref<1x32x128xf32, #tpu.memory_space<vmem>>, vector<1x32x128xf32>,
    %19 = tpu.iota {dimensions = array<i32: 0>} : vector<8x128xi32>
    %cst_15 = arith.constant dense<0.000000e+00> : vector<128xf32>
    %20 = vector.multi_reduction <add>, %15, %cst_15 [0] : vector<32x128xf32> to vector<128xf32>
    %21 = vector.shape_cast %20 : vector<128xf32> to vector<1x128xf32>
    %22 = arith.mulf %15, %15 : vector<32x128xf32>
    %cst_16 = arith.constant dense<0.000000e+00> : vector<128xf32>
    %23 = vector.multi_reduction <add>, %22, %cst_16 [0] : vector<32x128xf32> to vector<128xf32>
    %24 = vector.shape_cast %23 : vector<128xf32> to vector<1x128xf32>
    %c0_i32 = arith.constant 0 : i32
    %25 = vector.broadcast %c0_i32 : i32 to vector<8x128xi32>
    %26 = arith.cmpi eq, %19, %25 : vector<8x128xi32>
    %cst_17 = arith.constant 0.000000e+00 : f32
    %27 = vector.shape_cast %21 : vector<1x128xf32> to vector<1x128xf32>
    %28 = vector.broadcast %27 : vector<1x128xf32> to vector<8x128xf32>
    %29 = vector.broadcast %cst_17 : f32 to vector<8x128xf32>
    %30 = arith.select %26, %28, %29 : vector<8x128xi1>, vector<8x128xf32>
    %c0_18 = arith.constant 0 : index
    %c0_19 = arith.constant 0 : index
    %31 = vector.load %arg8[%c0_18, %c0_19] : memref<8x128xf32, #tpu.memory_space<vmem>>, vector<8x128xf32>
    tpu.vector_store %arg8[%c0_18, %c0_19], %30 {strides = array<i32>} : memref<8x128xf32, #tpu.memory_space<vmem>>, vector<8x128xf32>,
    %c0_i32_20 = arith.constant 0 : i32
    %32 = vector.broadcast %c0_i32_20 : i32 to vector<8x128xi32>
    %33 = arith.cmpi eq, %19, %32 : vector<8x128xi32>
    %cst_21 = arith.constant 0.000000e+00 : f32
    %34 = vector.shape_cast %24 : vector<1x128xf32> to vector<1x128xf32>
    %35 = vector.broadcast %34 : vector<1x128xf32> to vector<8x128xf32>
    %36 = vector.broadcast %cst_21 : f32 to vector<8x128xf32>
    %37 = arith.select %33, %35, %36 : vector<8x128xi1>, vector<8x128xf32>
    %c0_22 = arith.constant 0 : index
    %c0_23 = arith.constant 0 : index
    %38 = vector.load %arg9[%c0_22, %c0_23] : memref<8x128xf32, #tpu.memory_space<vmem>>, vector<8x128xf32>
    tpu.vector_store %arg9[%c0_22, %c0_23], %37 {strides = array<i32>} : memref<8x128xf32, #tpu.memory_space<vmem>>, vector<8x128xf32>,
    return
  }
  func.func @transform_0(%arg0: i32, %arg1: i32) -> (i32, i32, i32) {
    %c0_i32 = arith.constant 0 : i32
    %c0_i32_0 = arith.constant 0 : i32
    return %arg0, %arg1, %c0_i32 : i32, i32, i32
  }
  func.func @transform_1(%arg0: i32, %arg1: i32) -> (i32, i32, i32) {
    %c0_i32 = arith.constant 0 : i32
    %c0_i32_0 = arith.constant 0 : i32
    %c0_i32_1 = arith.constant 0 : i32
    return %arg0, %c0_i32, %c0_i32_0 : i32, i32, i32
  }
  func.func @transform_2(%arg0: i32, %arg1: i32) -> (i32, i32) {
    %c0_i32 = arith.constant 0 : i32
    %c0_i32_0 = arith.constant 0 : i32
    %c0_i32_1 = arith.constant 0 : i32
    return %c0_i32, %c0_i32_0 : i32, i32
  }
  func.func @transform_3(%arg0: i32, %arg1: i32) -> (i32, i32) {
    %c0_i32 = arith.constant 0 : i32
    %c0_i32_0 = arith.constant 0 : i32
    %c0_i32_1 = arith.constant 0 : i32
    return %c0_i32, %c0_i32_0 : i32, i32
  }
  func.func @transform_4(%arg0: i32, %arg1: i32) -> (i32, i32) {
    %c0_i32 = arith.constant 0 : i32
    %c0_i32_0 = arith.constant 0 : i32
    %c0_i32_1 = arith.constant 0 : i32
    return %c0_i32, %c0_i32_0 : i32, i32
  }
  func.func @transform_5(%arg0: i32, %arg1: i32) -> (i32, i32, i32) {
    %c0_i32 = arith.constant 0 : i32
    %c0_i32_0 = arith.constant 0 : i32
    return %arg0, %arg1, %c0_i32 : i32, i32, i32
  }
  func.func @transform_6(%arg0: i32, %arg1: i32) -> (i32, i32) {
    %c1_i32 = arith.constant 1 : i32
    %0 = arith.muli %arg0, %c1_i32 : i32
    %1 = arith.addi %0, %arg1 : i32
    %c0_i32 = arith.constant 0 : i32
    %c0_i32_0 = arith.constant 0 : i32
    return %1, %c0_i32 : i32, i32
  }
  func.func @transform_7(%arg0: i32, %arg1: i32) -> (i32, i32) {
    %c1_i32 = arith.constant 1 : i32
    %0 = arith.muli %arg0, %c1_i32 : i32
    %1 = arith.addi %0, %arg1 : i32
    %c0_i32 = arith.constant 0 : i32
    %c0_i32_0 = arith.constant 0 : i32
    return %1, %c0_i32 : i32, i32
  }
}

module attributes {stable_mosaic.version = 11 : i64} {
  func.func @_fused_matmul_kernel(%arg0: i32, %arg1: i32, %arg2: memref<1x128x256xf32, #tpu.memory_space<vmem>>, %arg3: memref<1x256x128xf32, #tpu.memory_space<vmem>>, %arg4: memref<1x256xf32, #tpu.memory_space<vmem>>, %arg5: memref<1x256xf32, #tpu.memory_space<vmem>>, %arg6: memref<1x128xf32, #tpu.memory_space<vmem>>, %arg7: memref<1x128x128xf32, #tpu.memory_space<vmem>>, %arg8: memref<8x128xf32, #tpu.memory_space<vmem>>, %arg9: memref<8x128xf32, #tpu.memory_space<vmem>>) attributes {dimension_semantics = [#tpu.dimension_semantics<parallel>, #tpu.dimension_semantics<parallel>], iteration_bounds = array<i64: 4, 1>, scalar_prefetch = 0 : i64, scratch_operands = 0 : i64, tpu.core_type = #tpu.core_type<tc>, window_params = [{transform_indices = @transform_0, window_bounds = array<i64: 1, 128, 256>}, {transform_indices = @transform_1, window_bounds = array<i64: 1, 256, 128>}, {pipeline_mode = #tpu.pipeline_mode<synchronous>, transform_indices = @transform_2, window_bounds = array<i64: 1, 256>}, {pipeline_mode = #tpu.pipeline_mode<synchronous>, transform_indices = @transform_3, window_bounds = array<i64: 1, 256>}, {pipeline_mode = #tpu.pipeline_mode<synchronous>, transform_indices = @transform_4, window_bounds = array<i64: 1, 128>}, {transform_indices = @transform_5, window_bounds = array<i64: 1, 128, 128>}, {transform_indices = @transform_6, window_bounds = array<i64: 8, 128>}, {transform_indices = @transform_7, window_bounds = array<i64: 8, 128>}]} {
    %c0 = arith.constant 0 : index
    %c0_0 = arith.constant 0 : index
    %c0_1 = arith.constant 0 : index
    %0 = vector.load %arg2[%c0, %c0_0, %c0_1] : memref<1x128x256xf32, #tpu.memory_space<vmem>>, vector<1x128x256xf32>
    %1 = vector.shape_cast %0 : vector<1x128x256xf32> to vector<128x256xf32>
    %c0_2 = arith.constant 0 : index
    %c0_3 = arith.constant 0 : index
    %2 = vector.load %arg4[%c0_2, %c0_3] : memref<1x256xf32, #tpu.memory_space<vmem>>, vector<1x256xf32>
    %3 = vector.broadcast %2 : vector<1x256xf32> to vector<128x256xf32>
    %4 = arith.mulf %1, %3 : vector<128x256xf32>
    %c0_4 = arith.constant 0 : index
    %c0_5 = arith.constant 0 : index
    %5 = vector.load %arg5[%c0_4, %c0_5] : memref<1x256xf32, #tpu.memory_space<vmem>>, vector<1x256xf32>
    %6 = vector.broadcast %5 : vector<1x256xf32> to vector<128x256xf32>
    %7 = arith.addf %4, %6 : vector<128x256xf32>
    %cst = arith.constant 0.000000e+00 : f32
    %8 = vector.broadcast %cst : f32 to vector<128x256xf32>
    %9 = arith.maximumf %7, %8 : vector<128x256xf32>
    %c0_6 = arith.constant 0 : index
    %c0_7 = arith.constant 0 : index
    %c0_8 = arith.constant 0 : index
    %10 = vector.load %arg3[%c0_6, %c0_7, %c0_8] : memref<1x256x128xf32, #tpu.memory_space<vmem>>, vector<1x256x128xf32>
    %11 = vector.shape_cast %10 : vector<1x256x128xf32> to vector<256x128xf32>
    %cst_9 = arith.constant dense<0.000000e+00> : vector<128x128xf32>
    %12 = tpu.matmul %9, %11, %cst_9 {dimension_numbers = #tpu.dot_dimension_numbers<[1], [0], [0], [1], [0, 0, 1, 1], [], []>} : vector<128x256xf32>, vector<256x128xf32>, vector<128x128xf32> -> vector<128x128xf32>
    %c0_10 = arith.constant 0 : index
    %c0_11 = arith.constant 0 : index
    %13 = vector.load %arg6[%c0_10, %c0_11] : memref<1x128xf32, #tpu.memory_space<vmem>>, vector<1x128xf32>
    %14 = vector.broadcast %13 : vector<1x128xf32> to vector<128x128xf32>
    %15 = arith.addf %12, %14 : vector<128x128xf32>
    %c0_12 = arith.constant 0 : index
    %c0_13 = arith.constant 0 : index
    %c0_14 = arith.constant 0 : index
    %16 = vector.load %arg7[%c0_12, %c0_13, %c0_14] : memref<1x128x128xf32, #tpu.memory_space<vmem>>, vector<1x128x128xf32>
    %17 = vector.shape_cast %16 : vector<1x128x128xf32> to vector<128x128xf32>
    %18 = vector.shape_cast %15 : vector<128x128xf32> to vector<1x128x128xf32>
    tpu.vector_store %arg7[%c0_12, %c0_13, %c0_14], %18 {strides = array<i32>} : memref<1x128x128xf32, #tpu.memory_space<vmem>>, vector<1x128x128xf32>,
    %19 = tpu.iota {dimensions = array<i32: 0>} : vector<8x128xi32>
    %cst_15 = arith.constant dense<0.000000e+00> : vector<128xf32>
    %20 = vector.multi_reduction <add>, %15, %cst_15 [0] : vector<128x128xf32> to vector<128xf32>
    %21 = vector.shape_cast %20 : vector<128xf32> to vector<1x128xf32>
    %22 = arith.mulf %15, %15 : vector<128x128xf32>
    %cst_16 = arith.constant dense<0.000000e+00> : vector<128xf32>
    %23 = vector.multi_reduction <add>, %22, %cst_16 [0] : vector<128x128xf32> to vector<128xf32>
    %24 = vector.shape_cast %23 : vector<128xf32> to vector<1x128xf32>
    %c0_i32 = arith.constant 0 : i32
    %25 = vector.broadcast %c0_i32 : i32 to vector<8x128xi32>
    %26 = arith.cmpi eq, %19, %25 : vector<8x128xi32>
    %cst_17 = arith.constant 0.000000e+00 : f32
    %27 = vector.shape_cast %21 : vector<1x128xf32> to vector<1x128xf32>
    %28 = vector.broadcast %27 : vector<1x128xf32> to vector<8x128xf32>
    %29 = vector.broadcast %cst_17 : f32 to vector<8x128xf32>
    %30 = arith.select %26, %28, %29 : vector<8x128xi1>, vector<8x128xf32>
    %c0_18 = arith.constant 0 : index
    %c0_19 = arith.constant 0 : index
    %31 = vector.load %arg8[%c0_18, %c0_19] : memref<8x128xf32, #tpu.memory_space<vmem>>, vector<8x128xf32>
    tpu.vector_store %arg8[%c0_18, %c0_19], %30 {strides = array<i32>} : memref<8x128xf32, #tpu.memory_space<vmem>>, vector<8x128xf32>,
    %c0_i32_20 = arith.constant 0 : i32
    %32 = vector.broadcast %c0_i32_20 : i32 to vector<8x128xi32>
    %33 = arith.cmpi eq, %19, %32 : vector<8x128xi32>
    %cst_21 = arith.constant 0.000000e+00 : f32
    %34 = vector.shape_cast %24 : vector<1x128xf32> to vector<1x128xf32>
    %35 = vector.broadcast %34 : vector<1x128xf32> to vector<8x128xf32>
    %36 = vector.broadcast %cst_21 : f32 to vector<8x128xf32>
    %37 = arith.select %33, %35, %36 : vector<8x128xi1>, vector<8x128xf32>
    %c0_22 = arith.constant 0 : index
    %c0_23 = arith.constant 0 : index
    %38 = vector.load %arg9[%c0_22, %c0_23] : memref<8x128xf32, #tpu.memory_space<vmem>>, vector<8x128xf32>
    tpu.vector_store %arg9[%c0_22, %c0_23], %37 {strides = array<i32>} : memref<8x128xf32, #tpu.memory_space<vmem>>, vector<8x128xf32>,
    return
  }
  func.func @transform_0(%arg0: i32, %arg1: i32) -> (i32, i32, i32) {
    %c0_i32 = arith.constant 0 : i32
    %c0_i32_0 = arith.constant 0 : i32
    return %arg0, %arg1, %c0_i32 : i32, i32, i32
  }
  func.func @transform_1(%arg0: i32, %arg1: i32) -> (i32, i32, i32) {
    %c0_i32 = arith.constant 0 : i32
    %c0_i32_0 = arith.constant 0 : i32
    %c0_i32_1 = arith.constant 0 : i32
    return %arg0, %c0_i32, %c0_i32_0 : i32, i32, i32
  }
  func.func @transform_2(%arg0: i32, %arg1: i32) -> (i32, i32) {
    %c0_i32 = arith.constant 0 : i32
    %c0_i32_0 = arith.constant 0 : i32
    %c0_i32_1 = arith.constant 0 : i32
    return %c0_i32, %c0_i32_0 : i32, i32
  }
  func.func @transform_3(%arg0: i32, %arg1: i32) -> (i32, i32) {
    %c0_i32 = arith.constant 0 : i32
    %c0_i32_0 = arith.constant 0 : i32
    %c0_i32_1 = arith.constant 0 : i32
    return %c0_i32, %c0_i32_0 : i32, i32
  }
  func.func @transform_4(%arg0: i32, %arg1: i32) -> (i32, i32) {
    %c0_i32 = arith.constant 0 : i32
    %c0_i32_0 = arith.constant 0 : i32
    %c0_i32_1 = arith.constant 0 : i32
    return %c0_i32, %c0_i32_0 : i32, i32
  }
  func.func @transform_5(%arg0: i32, %arg1: i32) -> (i32, i32, i32) {
    %c0_i32 = arith.constant 0 : i32
    %c0_i32_0 = arith.constant 0 : i32
    return %arg0, %arg1, %c0_i32 : i32, i32, i32
  }
  func.func @transform_6(%arg0: i32, %arg1: i32) -> (i32, i32) {
    %c1_i32 = arith.constant 1 : i32
    %0 = arith.muli %arg0, %c1_i32 : i32
    %1 = arith.addi %0, %arg1 : i32
    %c0_i32 = arith.constant 0 : i32
    %c0_i32_0 = arith.constant 0 : i32
    return %1, %c0_i32 : i32, i32
  }
  func.func @transform_7(%arg0: i32, %arg1: i32) -> (i32, i32) {
    %c1_i32 = arith.constant 1 : i32
    %0 = arith.muli %arg0, %c1_i32 : i32
    %1 = arith.addi %0, %arg1 : i32
    %c0_i32 = arith.constant 0 : i32
    %c0_i32_0 = arith.constant 0 : i32
    return %1, %c0_i32 : i32, i32
  }
}

module attributes {stable_mosaic.version = 11 : i64} {
  func.func @_fused_matmul_kernel(%arg0: i32, %arg1: i32, %arg2: memref<1x512x128xf32, #tpu.memory_space<vmem>>, %arg3: memref<1x128x128xf32, #tpu.memory_space<vmem>>, %arg4: memref<1x128xf32, #tpu.memory_space<vmem>>, %arg5: memref<1x128xf32, #tpu.memory_space<vmem>>, %arg6: memref<1x128xf32, #tpu.memory_space<vmem>>, %arg7: memref<1x512x128xf32, #tpu.memory_space<vmem>>) attributes {dimension_semantics = [#tpu.dimension_semantics<parallel>, #tpu.dimension_semantics<parallel>], iteration_bounds = array<i64: 4, 1>, scalar_prefetch = 0 : i64, scratch_operands = 0 : i64, tpu.core_type = #tpu.core_type<tc>, window_params = [{transform_indices = @transform_0, window_bounds = array<i64: 1, 512, 128>}, {transform_indices = @transform_1, window_bounds = array<i64: 1, 128, 128>}, {pipeline_mode = #tpu.pipeline_mode<synchronous>, transform_indices = @transform_2, window_bounds = array<i64: 1, 128>}, {pipeline_mode = #tpu.pipeline_mode<synchronous>, transform_indices = @transform_3, window_bounds = array<i64: 1, 128>}, {pipeline_mode = #tpu.pipeline_mode<synchronous>, transform_indices = @transform_4, window_bounds = array<i64: 1, 128>}, {transform_indices = @transform_5, window_bounds = array<i64: 1, 512, 128>}]} {
    %c0 = arith.constant 0 : index
    %c0_0 = arith.constant 0 : index
    %c0_1 = arith.constant 0 : index
    %0 = vector.load %arg2[%c0, %c0_0, %c0_1] : memref<1x512x128xf32, #tpu.memory_space<vmem>>, vector<1x512x128xf32>
    %1 = vector.shape_cast %0 : vector<1x512x128xf32> to vector<512x128xf32>
    %c0_2 = arith.constant 0 : index
    %c0_3 = arith.constant 0 : index
    %2 = vector.load %arg4[%c0_2, %c0_3] : memref<1x128xf32, #tpu.memory_space<vmem>>, vector<1x128xf32>
    %3 = vector.broadcast %2 : vector<1x128xf32> to vector<512x128xf32>
    %4 = arith.mulf %1, %3 : vector<512x128xf32>
    %c0_4 = arith.constant 0 : index
    %c0_5 = arith.constant 0 : index
    %5 = vector.load %arg5[%c0_4, %c0_5] : memref<1x128xf32, #tpu.memory_space<vmem>>, vector<1x128xf32>
    %6 = vector.broadcast %5 : vector<1x128xf32> to vector<512x128xf32>
    %7 = arith.addf %4, %6 : vector<512x128xf32>
    %cst = arith.constant 0.000000e+00 : f32
    %8 = vector.broadcast %cst : f32 to vector<512x128xf32>
    %9 = arith.maximumf %7, %8 : vector<512x128xf32>
    %c0_6 = arith.constant 0 : index
    %c0_7 = arith.constant 0 : index
    %c0_8 = arith.constant 0 : index
    %10 = vector.load %arg3[%c0_6, %c0_7, %c0_8] : memref<1x128x128xf32, #tpu.memory_space<vmem>>, vector<1x128x128xf32>
    %11 = vector.shape_cast %10 : vector<1x128x128xf32> to vector<128x128xf32>
    %cst_9 = arith.constant dense<0.000000e+00> : vector<512x128xf32>
    %12 = tpu.matmul %9, %11, %cst_9 {dimension_numbers = #tpu.dot_dimension_numbers<[1], [0], [0], [1], [0, 0, 1, 1], [], []>} : vector<512x128xf32>, vector<128x128xf32>, vector<512x128xf32> -> vector<512x128xf32>
    %c0_10 = arith.constant 0 : index
    %c0_11 = arith.constant 0 : index
    %13 = vector.load %arg6[%c0_10, %c0_11] : memref<1x128xf32, #tpu.memory_space<vmem>>, vector<1x128xf32>
    %14 = vector.broadcast %13 : vector<1x128xf32> to vector<512x128xf32>
    %15 = arith.addf %12, %14 : vector<512x128xf32>
    %16 = math.tanh %15 : vector<512x128xf32>
    %c0_12 = arith.constant 0 : index
    %c0_13 = arith.constant 0 : index
    %c0_14 = arith.constant 0 : index
    %17 = vector.load %arg7[%c0_12, %c0_13, %c0_14] : memref<1x512x128xf32, #tpu.memory_space<vmem>>, vector<1x512x128xf32>
    %18 = vector.shape_cast %17 : vector<1x512x128xf32> to vector<512x128xf32>
    %19 = vector.shape_cast %16 : vector<512x128xf32> to vector<1x512x128xf32>
    tpu.vector_store %arg7[%c0_12, %c0_13, %c0_14], %19 {strides = array<i32>} : memref<1x512x128xf32, #tpu.memory_space<vmem>>, vector<1x512x128xf32>,
    return
  }
  func.func @transform_0(%arg0: i32, %arg1: i32) -> (i32, i32, i32) {
    %c0_i32 = arith.constant 0 : i32
    %c0_i32_0 = arith.constant 0 : i32
    return %arg0, %arg1, %c0_i32 : i32, i32, i32
  }
  func.func @transform_1(%arg0: i32, %arg1: i32) -> (i32, i32, i32) {
    %c0_i32 = arith.constant 0 : i32
    %c0_i32_0 = arith.constant 0 : i32
    %c0_i32_1 = arith.constant 0 : i32
    return %arg0, %c0_i32, %c0_i32_0 : i32, i32, i32
  }
  func.func @transform_2(%arg0: i32, %arg1: i32) -> (i32, i32) {
    %c0_i32 = arith.constant 0 : i32
    %c0_i32_0 = arith.constant 0 : i32
    %c0_i32_1 = arith.constant 0 : i32
    return %c0_i32, %c0_i32_0 : i32, i32
  }
  func.func @transform_3(%arg0: i32, %arg1: i32) -> (i32, i32) {
    %c0_i32 = arith.constant 0 : i32
    %c0_i32_0 = arith.constant 0 : i32
    %c0_i32_1 = arith.constant 0 : i32
    return %c0_i32, %c0_i32_0 : i32, i32
  }
  func.func @transform_4(%arg0: i32, %arg1: i32) -> (i32, i32) {
    %c0_i32 = arith.constant 0 : i32
    %c0_i32_0 = arith.constant 0 : i32
    %c0_i32_1 = arith.constant 0 : i32
    return %c0_i32, %c0_i32_0 : i32, i32
  }
  func.func @transform_5(%arg0: i32, %arg1: i32) -> (i32, i32, i32) {
    %c0_i32 = arith.constant 0 : i32
    %c0_i32_0 = arith.constant 0 : i32
    return %arg0, %arg1, %c0_i32 : i32, i32, i32
  }
}

</mosaic_0001>

<llo_original>
// kernel: unet_generator_pallas.10
$region0: #{unet_generator_pallas.10}
  #allocation0 [shape = 'u32[]', space=smem, size = 0x4, offset = 0x4, fixed_abs, tag = 'smem constant byte address 0x4 - core index']
  #allocation1 [shape = 'u32[72,128]{1,0:T(1,128)}', space=vmem, size = 0x9000, scoped, tag = 'internal scratch']
  %s0 = inlined_call_operand.vmem [shape: f32[1,512,48], index: 0, kind: input, shape index: {}]
  %s1 = inlined_call_operand.vmem [shape: f32[1,48,128], index: 1, kind: input, shape index: {}]
  %s2 = inlined_call_operand.vmem [shape: f32[1,128], index: 2, kind: input, shape index: {}]
  %s3 = inlined_call_operand.vmem [shape: f32[1,512,128], index: 3, kind: output, shape index: {}]
  %s4 = sld [smem:[#allocation0]]
  $region22: #{unet_generator_pallas.10} parent=0
    _
  %s6 = ssub.s32 1, %s4
  %s7 = scalar_select 0, %s6, %s4
  // Predicated region
  $region2: #{unet_generator_pallas.10} parent=0 // pred_check
    _
  $region3: #{unet_generator_pallas.10} parent=0 // pred_check_branch
    %9 = sbr.rel (0) target = $region5
  $region4: #{unet_generator_pallas.10} parent=0 // pred_region
    _
  $region5: #{unet_generator_pallas.10} parent=0 // pred_fallthru
    _
  // Predicated region
  $region6: #{unet_generator_pallas.10} parent=0 // pred_check
    _
  $region7: #{unet_generator_pallas.10} parent=0 // pred_check_branch
    %11 = sbr.rel (0) target = $region9
  $region8: #{unet_generator_pallas.10} parent=0 // pred_region
    _
  $region9: #{unet_generator_pallas.10} parent=0 // pred_fallthru
    _
  // Predicated region
  $region10: #{unet_generator_pallas.10} parent=0 // pred_check
    _
  $region11: #{unet_generator_pallas.10} parent=0 // pred_check_branch
    %13 = sbr.rel (0) target = $region13
  $region12: #{unet_generator_pallas.10} parent=0 // pred_region
    _
  $region13: #{unet_generator_pallas.10} parent=0 // pred_fallthru
    _
  %v14 = vld [vmem:[%s0] sm:$0xff]
  %v15 = vld [vmem:[%s0 + $0x8] sm:$0xff]
  %v16 = vld [vmem:[%s0 + $0x10] sm:$0xff]
  %v17 = vld [vmem:[%s0 + $0x18] sm:$0xff]
  %v18 = vld [vmem:[%s0 + $0x20] sm:$0xff]
  %v19 = vld [vmem:[%s0 + $0x28] sm:$0xff]
  %v20 = vld [vmem:[%s0 + $0x30] sm:$0xff]
  %v21 = vld [vmem:[%s0 + $0x38] sm:$0xff]
  %v22 = vld [vmem:[%s0 + $0x40] sm:$0xff]
  %v23 = vld [vmem:[%s0 + $0x48] sm:$0xff]
  %v24 = vld [vmem:[%s0 + $0x50] sm:$0xff]
  %v25 = vld [vmem:[%s0 + $0x58] sm:$0xff]
  %v26 = vld [vmem:[%s0 + $0x60] sm:$0xff]
  %v27 = vld [vmem:[%s0 + $0x68] sm:$0xff]
  %v28 = vld [vmem:[%s0 + $0x70] sm:$0xff]
  %v29 = vld [vmem:[%s0 + $0x78] sm:$0xff]
  %v30 = vld [vmem:[%s0 + $0x80] sm:$0xff]
  %v31 = vld [vmem:[%s0 + $0x88] sm:$0xff]
  %v32 = vld [vmem:[%s0 + $0x90] sm:$0xff]
  %v33 = vld [vmem:[%s0 + $0x98] sm:$0xff]
  %v34 = vld [vmem:[%s0 + $0xa0] sm:$0xff]
  %v35 = vld [vmem:[%s0 + $0xa8] sm:$0xff]
  %v36 = vld [vmem:[%s0 + $0xb0] sm:$0xff]
  %v37 = vld [vmem:[%s0 + $0xb8] sm:$0xff]
  %v38 = vld [vmem:[%s0 + $0xc0] sm:$0xff]
  %v39 = vld [vmem:[%s0 + $0xc8] sm:$0xff]
  %v40 = vld [vmem:[%s0 + $0xd0] sm:$0xff]
  %v41 = vld [vmem:[%s0 + $0xd8] sm:$0xff]
  %v42 = vld [vmem:[%s0 + $0xe0] sm:$0xff]
  %v43 = vld [vmem:[%s0 + $0xe8] sm:$0xff]
  %v44 = vld [vmem:[%s0 + $0xf0] sm:$0xff]
  %v45 = vld [vmem:[%s0 + $0xf8] sm:$0xff]
  %v46 = vld [vmem:[%s0 + $0x100] sm:$0xff]
  %v47 = vld [vmem:[%s0 + $0x108] sm:$0xff]
  %v48 = vld [vmem:[%s0 + $0x110] sm:$0xff]
  %v49 = vld [vmem:[%s0 + $0x118] sm:$0xff]
  %v50 = vld [vmem:[%s0 + $0x120] sm:$0xff]
  %v51 = vld [vmem:[%s0 + $0x128] sm:$0xff]
  %v52 = vld [vmem:[%s0 + $0x130] sm:$0xff]
  %v53 = vld [vmem:[%s0 + $0x138] sm:$0xff]
  %v54 = vld [vmem:[%s0 + $0x140] sm:$0xff]
  %v55 = vld [vmem:[%s0 + $0x148] sm:$0xff]
  %v56 = vld [vmem:[%s0 + $0x150] sm:$0xff]
  %v57 = vld [vmem:[%s0 + $0x158] sm:$0xff]
  %v58 = vld [vmem:[%s0 + $0x160] sm:$0xff]
  %v59 = vld [vmem:[%s0 + $0x168] sm:$0xff]
  %v60 = vld [vmem:[%s0 + $0x170] sm:$0xff]
  %v61 = vld [vmem:[%s0 + $0x178] sm:$0xff]
  %v62 = vld [vmem:[%s0 + $0x180] sm:$0xff]
  %v63 = vld [vmem:[%s0 + $0x188] sm:$0xff]
  %v64 = vld [vmem:[%s0 + $0x190] sm:$0xff]
  %v65 = vld [vmem:[%s0 + $0x198] sm:$0xff]
  %v66 = vld [vmem:[%s0 + $0x1a0] sm:$0xff]
  %v67 = vld [vmem:[%s0 + $0x1a8] sm:$0xff]
  %v68 = vld [vmem:[%s0 + $0x1b0] sm:$0xff]
  %v69 = vld [vmem:[%s0 + $0x1b8] sm:$0xff]
  %v70 = vld [vmem:[%s0 + $0x1c0] sm:$0xff]
  %v71 = vld [vmem:[%s0 + $0x1c8] sm:$0xff]
  %v72 = vld [vmem:[%s0 + $0x1d0] sm:$0xff]
  %v73 = vld [vmem:[%s0 + $0x1d8] sm:$0xff]
  %v74 = vld [vmem:[%s0 + $0x1e0] sm:$0xff]
  %v75 = vld [vmem:[%s0 + $0x1e8] sm:$0xff]
  %v76 = vld [vmem:[%s0 + $0x1f0] sm:$0xff]
  %v77 = vld [vmem:[%s0 + $0x1f8] sm:$0xff]
  %v78 = vld [vmem:[%s1] sm:$0xff]
  %v79 = vld [vmem:[%s1 + $0x8] sm:$0xff]
  %v80 = vld [vmem:[%s1 + $0x10] sm:$0xff]
  %v81 = vld [vmem:[%s1 + $0x18] sm:$0xff]
  %v82 = vld [vmem:[%s1 + $0x20] sm:$0xff]
  %v83 = vld [vmem:[%s1 + $0x28] sm:$0xff]
  %v84 = vld [vmem:[%s2] sm:$0x1]
  %v86 = vperm.slane %v84, 0
  %vm88 = vcmask 392192
  %v90 = vsel %vm88, %v14, 0
  %v93 = vsel %vm88, %v15, 0
  %v96 = vsel %vm88, %v16, 0
  %v99 = vsel %vm88, %v17, 0
  %v102 = vsel %vm88, %v18, 0
  %v105 = vsel %vm88, %v19, 0
  %v108 = vsel %vm88, %v20, 0
  %v111 = vsel %vm88, %v21, 0
  %v114 = vsel %vm88, %v22, 0
  %v117 = vsel %vm88, %v23, 0
  %v120 = vsel %vm88, %v24, 0
  %v123 = vsel %vm88, %v25, 0
  %v126 = vsel %vm88, %v26, 0
  %v129 = vsel %vm88, %v27, 0
  %v132 = vsel %vm88, %v28, 0
  %v135 = vsel %vm88, %v29, 0
  %v138 = vsel %vm88, %v30, 0
  %v141 = vsel %vm88, %v31, 0
  %v144 = vsel %vm88, %v32, 0
  %v147 = vsel %vm88, %v33, 0
  %v150 = vsel %vm88, %v34, 0
  %v153 = vsel %vm88, %v35, 0
  %v156 = vsel %vm88, %v36, 0
  %v159 = vsel %vm88, %v37, 0
  %v162 = vsel %vm88, %v38, 0
  %v165 = vsel %vm88, %v39, 0
  %v168 = vsel %vm88, %v40, 0
  %v171 = vsel %vm88, %v41, 0
  %v174 = vsel %vm88, %v42, 0
  %v177 = vsel %vm88, %v43, 0
  %v180 = vsel %vm88, %v44, 0
  %v183 = vsel %vm88, %v45, 0
  %v186 = vsel %vm88, %v46, 0
  %v189 = vsel %vm88, %v47, 0
  %v192 = vsel %vm88, %v48, 0
  %v195 = vsel %vm88, %v49, 0
  %v198 = vsel %vm88, %v50, 0
  %v201 = vsel %vm88, %v51, 0
  %v204 = vsel %vm88, %v52, 0
  %v207 = vsel %vm88, %v53, 0
  %v210 = vsel %vm88, %v54, 0
  %v213 = vsel %vm88, %v55, 0
  %v216 = vsel %vm88, %v56, 0
  %v219 = vsel %vm88, %v57, 0
  %v222 = vsel %vm88, %v58, 0
  %v225 = vsel %vm88, %v59, 0
  %v228 = vsel %vm88, %v60, 0
  %v231 = vsel %vm88, %v61, 0
  %v234 = vsel %vm88, %v62, 0
  %v237 = vsel %vm88, %v63, 0
  %v240 = vsel %vm88, %v64, 0
  %v243 = vsel %vm88, %v65, 0
  %v246 = vsel %vm88, %v66, 0
  %v249 = vsel %vm88, %v67, 0
  %v252 = vsel %vm88, %v68, 0
  %v255 = vsel %vm88, %v69, 0
  %v258 = vsel %vm88, %v70, 0
  %v261 = vsel %vm88, %v71, 0
  %v264 = vsel %vm88, %v72, 0
  %v267 = vsel %vm88, %v73, 0
  %v270 = vsel %vm88, %v74, 0
  %v273 = vsel %vm88, %v75, 0
  %v276 = vsel %vm88, %v76, 0
  %v279 = vsel %vm88, %v77, 0
  %281 = vmatpush.msra.mxu0 0.0
  %282 = vmatpush.msra.mxu0 0.0
  %283 = vmatpush.msra.mxu0 0.0
  %284 = vmatpush.msra.mxu0 0.0
  %285 = vmatpush.msra.mxu0 0.0
  %286 = vmatpush.msra.mxu0 0.0
  %287 = vmatpush.msra.mxu0 0.0
  %288 = vmatpush.msra.mxu0 0.0
  %289 = vmatpush.msra.mxu0 0.0
  %290 = vmatpush.msra.mxu0 0.0
  %291 = vmatpush.msra.mxu0 %v83
  %292 = vmatpush.msra.mxu0 %v82
  %293 = vmatpush.msra.mxu0 %v81
  %294 = vmatpush.msra.mxu0 %v80
  %295 = vmatpush.msra.mxu0 %v79
  %296 = vmatpush.msra.mxu0 %v78
  %297 = vmatmul.f32.gmra.mxu0 %v90
  %v298 = vpop.f32.mrf.mxu0
  %v299 = vadd.f32 %v86, %v298
  %300 = vmatmul.f32.gmra.mxu0 %v93
  %v301 = vpop.f32.mrf.mxu0
  %v302 = vadd.f32 %v86, %v301
  %303 = vmatmul.f32.gmra.mxu0 %v96
  %v304 = vpop.f32.mrf.mxu0
  %v305 = vadd.f32 %v86, %v304
  %306 = vmatmul.f32.gmra.mxu0 %v99
  %v307 = vpop.f32.mrf.mxu0
  %v308 = vadd.f32 %v86, %v307
  %309 = vmatmul.f32.gmra.mxu0 %v102
  %v310 = vpop.f32.mrf.mxu0
  %v311 = vadd.f32 %v86, %v310
  %312 = vmatmul.f32.gmra.mxu0 %v105
  %v313 = vpop.f32.mrf.mxu0
  %v314 = vadd.f32 %v86, %v313
  %315 = vmatmul.f32.gmra.mxu0 %v108
  %v316 = vpop.f32.mrf.mxu0
  %v317 = vadd.f32 %v86, %v316
  %318 = vmatmul.f32.gmra.mxu0 %v111
  %v319 = vpop.f32.mrf.mxu0
  %v320 = vadd.f32 %v86, %v319
  %321 = vmatmul.f32.gmra.mxu0 %v114
  %v322 = vpop.f32.mrf.mxu0
  %v323 = vadd.f32 %v86, %v322
  %324 = vmatmul.f32.gmra.mxu0 %v117
  %v325 = vpop.f32.mrf.mxu0
  %v326 = vadd.f32 %v86, %v325
  %327 = vmatmul.f32.gmra.mxu0 %v120
  %v328 = vpop.f32.mrf.mxu0
  %v329 = vadd.f32 %v86, %v328
  %330 = vmatmul.f32.gmra.mxu0 %v123
  %v331 = vpop.f32.mrf.mxu0
  %v332 = vadd.f32 %v86, %v331
  %333 = vmatmul.f32.gmra.mxu0 %v126
  %v334 = vpop.f32.mrf.mxu0
  %v335 = vadd.f32 %v86, %v334
  %336 = vmatmul.f32.gmra.mxu0 %v129
  %v337 = vpop.f32.mrf.mxu0
  %v338 = vadd.f32 %v86, %v337
  %339 = vmatmul.f32.gmra.mxu0 %v132
  %v340 = vpop.f32.mrf.mxu0
  %v341 = vadd.f32 %v86, %v340
  %342 = vmatmul.f32.gmra.mxu0 %v135
  %v343 = vpop.f32.mrf.mxu0
  %v344 = vadd.f32 %v86, %v343
  %345 = vmatmul.f32.gmra.mxu0 %v138
  %v346 = vpop.f32.mrf.mxu0
  %v347 = vadd.f32 %v86, %v346
  %348 = vmatmul.f32.gmra.mxu0 %v141
  %v349 = vpop.f32.mrf.mxu0
  %v350 = vadd.f32 %v86, %v349
  %351 = vmatmul.f32.gmra.mxu0 %v144
  %v352 = vpop.f32.mrf.mxu0
  %v353 = vadd.f32 %v86, %v352
  %354 = vmatmul.f32.gmra.mxu0 %v147
  %v355 = vpop.f32.mrf.mxu0
  %v356 = vadd.f32 %v86, %v355
  %357 = vmatmul.f32.gmra.mxu0 %v150
  %v358 = vpop.f32.mrf.mxu0
  %v359 = vadd.f32 %v86, %v358
  %360 = vmatmul.f32.gmra.mxu0 %v153
  %v361 = vpop.f32.mrf.mxu0
  %v362 = vadd.f32 %v86, %v361
  %363 = vmatmul.f32.gmra.mxu0 %v156
  %v364 = vpop.f32.mrf.mxu0
  %v365 = vadd.f32 %v86, %v364
  %366 = vmatmul.f32.gmra.mxu0 %v159
  %v367 = vpop.f32.mrf.mxu0
  %v368 = vadd.f32 %v86, %v367
  %369 = vmatmul.f32.gmra.mxu0 %v162
  %v370 = vpop.f32.mrf.mxu0
  %v371 = vadd.f32 %v86, %v370
  %372 = vmatmul.f32.gmra.mxu0 %v165
  %v373 = vpop.f32.mrf.mxu0
  %v374 = vadd.f32 %v86, %v373
  %375 = vmatmul.f32.gmra.mxu0 %v168
  %v376 = vpop.f32.mrf.mxu0
  %v377 = vadd.f32 %v86, %v376
  %378 = vmatmul.f32.gmra.mxu0 %v171
  %v379 = vpop.f32.mrf.mxu0
  %v380 = vadd.f32 %v86, %v379
  %381 = vmatmul.f32.gmra.mxu0 %v174
  %v382 = vpop.f32.mrf.mxu0
  %v383 = vadd.f32 %v86, %v382
  %384 = vmatmul.f32.gmra.mxu0 %v177
  %v385 = vpop.f32.mrf.mxu0
  %v386 = vadd.f32 %v86, %v385
  %387 = vmatmul.f32.gmra.mxu0 %v180
  %v388 = vpop.f32.mrf.mxu0
  %v389 = vadd.f32 %v86, %v388
  %390 = vmatmul.f32.gmra.mxu0 %v183
  %v391 = vpop.f32.mrf.mxu0
  %v392 = vadd.f32 %v86, %v391
  %393 = vmatmul.f32.gmra.mxu0 %v186
  %v394 = vpop.f32.mrf.mxu0
  %v395 = vadd.f32 %v86, %v394
  %396 = vmatmul.f32.gmra.mxu0 %v189
  %v397 = vpop.f32.mrf.mxu0
  %v398 = vadd.f32 %v86, %v397
  %399 = vmatmul.f32.gmra.mxu0 %v192
  %v400 = vpop.f32.mrf.mxu0
  %v401 = vadd.f32 %v86, %v400
  %402 = vmatmul.f32.gmra.mxu0 %v195
  %v403 = vpop.f32.mrf.mxu0
  %v404 = vadd.f32 %v86, %v403
  %405 = vmatmul.f32.gmra.mxu0 %v198
  %v406 = vpop.f32.mrf.mxu0
  %v407 = vadd.f32 %v86, %v406
  %408 = vmatmul.f32.gmra.mxu0 %v201
  %v409 = vpop.f32.mrf.mxu0
  %v410 = vadd.f32 %v86, %v409
  %411 = vmatmul.f32.gmra.mxu0 %v204
  %v412 = vpop.f32.mrf.mxu0
  %v413 = vadd.f32 %v86, %v412
  %414 = vmatmul.f32.gmra.mxu0 %v207
  %v415 = vpop.f32.mrf.mxu0
  %v416 = vadd.f32 %v86, %v415
  %417 = vmatmul.f32.gmra.mxu0 %v210
  %v418 = vpop.f32.mrf.mxu0
  %v419 = vadd.f32 %v86, %v418
  %420 = vmatmul.f32.gmra.mxu0 %v213
  %v421 = vpop.f32.mrf.mxu0
  %v422 = vadd.f32 %v86, %v421
  %423 = vmatmul.f32.gmra.mxu0 %v216
  %v424 = vpop.f32.mrf.mxu0
  %v425 = vadd.f32 %v86, %v424
  %426 = vmatmul.f32.gmra.mxu0 %v219
  %v427 = vpop.f32.mrf.mxu0
  %v428 = vadd.f32 %v86, %v427
  %429 = vmatmul.f32.gmra.mxu0 %v222
  %v430 = vpop.f32.mrf.mxu0
  %v431 = vadd.f32 %v86, %v430
  %432 = vmatmul.f32.gmra.mxu0 %v225
  %v433 = vpop.f32.mrf.mxu0
  %v434 = vadd.f32 %v86, %v433
  %435 = vmatmul.f32.gmra.mxu0 %v228
  %v436 = vpop.f32.mrf.mxu0
  %v437 = vadd.f32 %v86, %v436
  %438 = vmatmul.f32.gmra.mxu0 %v231
  %v439 = vpop.f32.mrf.mxu0
  %v440 = vadd.f32 %v86, %v439
  %441 = vmatmul.f32.gmra.mxu0 %v234
  %v442 = vpop.f32.mrf.mxu0
  %v443 = vadd.f32 %v86, %v442
  %444 = vmatmul.f32.gmra.mxu0 %v237
  %v445 = vpop.f32.mrf.mxu0
  %v446 = vadd.f32 %v86, %v445
  %447 = vmatmul.f32.gmra.mxu0 %v240
  %v448 = vpop.f32.mrf.mxu0
  %v449 = vadd.f32 %v86, %v448
  %450 = vmatmul.f32.gmra.mxu0 %v243
  %v451 = vpop.f32.mrf.mxu0
  %v452 = vadd.f32 %v86, %v451
  %453 = vmatmul.f32.gmra.mxu0 %v246
  %v454 = vpop.f32.mrf.mxu0
  %v455 = vadd.f32 %v86, %v454
  %456 = vmatmul.f32.gmra.mxu0 %v249
  %v457 = vpop.f32.mrf.mxu0
  %v458 = vadd.f32 %v86, %v457
  %459 = vmatmul.f32.gmra.mxu0 %v252
  %v460 = vpop.f32.mrf.mxu0
  %v461 = vadd.f32 %v86, %v460
  %462 = vmatmul.f32.gmra.mxu0 %v255
  %v463 = vpop.f32.mrf.mxu0
  %v464 = vadd.f32 %v86, %v463
  %465 = vmatmul.f32.gmra.mxu0 %v258
  %v466 = vpop.f32.mrf.mxu0
  %v467 = vadd.f32 %v86, %v466
  %468 = vmatmul.f32.gmra.mxu0 %v261
  %v469 = vpop.f32.mrf.mxu0
  %v470 = vadd.f32 %v86, %v469
  %471 = vmatmul.f32.gmra.mxu0 %v264
  %v472 = vpop.f32.mrf.mxu0
  %v473 = vadd.f32 %v86, %v472
  %474 = vmatmul.f32.gmra.mxu0 %v267
  %v475 = vpop.f32.mrf.mxu0
  %v476 = vadd.f32 %v86, %v475
  %477 = vmatmul.f32.gmra.mxu0 %v270
  %v478 = vpop.f32.mrf.mxu0
  %v479 = vadd.f32 %v86, %v478
  %480 = vmatmul.f32.gmra.mxu0 %v273
  %v481 = vpop.f32.mrf.mxu0
  %v482 = vadd.f32 %v86, %v481
  %483 = vmatmul.f32.gmra.mxu0 %v276
  %v484 = vpop.f32.mrf.mxu0
  %v485 = vadd.f32 %v86, %v484
  %486 = vmatmul.f32.gmra.mxu0 %v279
  %v487 = vpop.f32.mrf.mxu0
  %v488 = vadd.f32 %v86, %v487
  %489 = vdwg.mxu0
  %490 = vst [vmem:[%s3] sm:$0xff] %v299
  %491 = vst [vmem:[%s3 + $0x8] sm:$0xff] %v302
  %492 = vst [vmem:[%s3 + $0x10] sm:$0xff] %v305
  %493 = vst [vmem:[%s3 + $0x18] sm:$0xff] %v308
  %494 = vst [vmem:[%s3 + $0x20] sm:$0xff] %v311
  %495 = vst [vmem:[%s3 + $0x28] sm:$0xff] %v314
  %496 = vst [vmem:[%s3 + $0x30] sm:$0xff] %v317
  %497 = vst [vmem:[%s3 + $0x38] sm:$0xff] %v320
  %498 = vst [vmem:[%s3 + $0x40] sm:$0xff] %v323
  %499 = vst [vmem:[%s3 + $0x48] sm:$0xff] %v326
  %500 = vst [vmem:[%s3 + $0x50] sm:$0xff] %v329
  %501 = vst [vmem:[%s3 + $0x58] sm:$0xff] %v332
  %502 = vst [vmem:[%s3 + $0x60] sm:$0xff] %v335
  %503 = vst [vmem:[%s3 + $0x68] sm:$0xff] %v338
  %504 = vst [vmem:[%s3 + $0x70] sm:$0xff] %v341
  %505 = vst [vmem:[%s3 + $0x78] sm:$0xff] %v344
  %506 = vst [vmem:[%s3 + $0x80] sm:$0xff] %v347
  %507 = vst [vmem:[%s3 + $0x88] sm:$0xff] %v350
  %508 = vst [vmem:[%s3 + $0x90] sm:$0xff] %v353
  %509 = vst [vmem:[%s3 + $0x98] sm:$0xff] %v356
  %510 = vst [vmem:[%s3 + $0xa0] sm:$0xff] %v359
  %511 = vst [vmem:[%s3 + $0xa8] sm:$0xff] %v362
  %512 = vst [vmem:[%s3 + $0xb0] sm:$0xff] %v365
  %513 = vst [vmem:[%s3 + $0xb8] sm:$0xff] %v368
  %514 = vst [vmem:[%s3 + $0xc0] sm:$0xff] %v371
  %515 = vst [vmem:[%s3 + $0xc8] sm:$0xff] %v374
  %516 = vst [vmem:[%s3 + $0xd0] sm:$0xff] %v377
  %517 = vst [vmem:[%s3 + $0xd8] sm:$0xff] %v380
  %518 = vst [vmem:[%s3 + $0xe0] sm:$0xff] %v383
  %519 = vst [vmem:[%s3 + $0xe8] sm:$0xff] %v386
  %520 = vst [vmem:[%s3 + $0xf0] sm:$0xff] %v389
  %521 = vst [vmem:[%s3 + $0xf8] sm:$0xff] %v392
  %522 = vst [vmem:[%s3 + $0x100] sm:$0xff] %v395
  %523 = vst [vmem:[%s3 + $0x108] sm:$0xff] %v398
  %524 = vst [vmem:[%s3 + $0x110] sm:$0xff] %v401
  %525 = vst [vmem:[%s3 + $0x118] sm:$0xff] %v404
  %526 = vst [vmem:[%s3 + $0x120] sm:$0xff] %v407
  %527 = vst [vmem:[%s3 + $0x128] sm:$0xff] %v410
  %528 = vst [vmem:[%s3 + $0x130] sm:$0xff] %v413
  %529 = vst [vmem:[%s3 + $0x138] sm:$0xff] %v416
  %530 = vst [vmem:[%s3 + $0x140] sm:$0xff] %v419
  %531 = vst [vmem:[%s3 + $0x148] sm:$0xff] %v422
  %532 = vst [vmem:[%s3 + $0x150] sm:$0xff] %v425
  %533 = vst [vmem:[%s3 + $0x158] sm:$0xff] %v428
  %534 = vst [vmem:[%s3 + $0x160] sm:$0xff] %v431
  %535 = vst [vmem:[%s3 + $0x168] sm:$0xff] %v434
  %536 = vst [vmem:[%s3 + $0x170] sm:$0xff] %v437
  %537 = vst [vmem:[%s3 + $0x178] sm:$0xff] %v440
  %538 = vst [vmem:[%s3 + $0x180] sm:$0xff] %v443
  %539 = vst [vmem:[%s3 + $0x188] sm:$0xff] %v446
  %540 = vst [vmem:[%s3 + $0x190] sm:$0xff] %v449
  %541 = vst [vmem:[%s3 + $0x198] sm:$0xff] %v452
  %542 = vst [vmem:[%s3 + $0x1a0] sm:$0xff] %v455
  %543 = vst [vmem:[%s3 + $0x1a8] sm:$0xff] %v458
  %544 = vst [vmem:[%s3 + $0x1b0] sm:$0xff] %v461
  %545 = vst [vmem:[%s3 + $0x1b8] sm:$0xff] %v464
  %546 = vst [vmem:[%s3 + $0x1c0] sm:$0xff] %v467
  %547 = vst [vmem:[%s3 + $0x1c8] sm:$0xff] %v470
  %548 = vst [vmem:[%s3 + $0x1d0] sm:$0xff] %v473
  %549 = vst [vmem:[%s3 + $0x1d8] sm:$0xff] %v476
  %550 = vst [vmem:[%s3 + $0x1e0] sm:$0xff] %v479
  %551 = vst [vmem:[%s3 + $0x1e8] sm:$0xff] %v482
  %552 = vst [vmem:[%s3 + $0x1f0] sm:$0xff] %v485
  %553 = vst [vmem:[%s3 + $0x1f8] sm:$0xff] %v488
  // Predicated region
  $region14: #{unet_generator_pallas.10} parent=0 // pred_check
    _
  $region15: #{unet_generator_pallas.10} parent=0 // pred_check_branch
    %555 = sbr.rel (0) target = $region17
  $region16: #{unet_generator_pallas.10} parent=0 // pred_region
    _
  $region17: #{unet_generator_pallas.10} parent=0 // pred_fallthru
    _
  // Predicated region
  $region18: #{unet_generator_pallas.10} parent=0 // pred_check
    _
  $region19: #{unet_generator_pallas.10} parent=0 // pred_check_branch
    %557 = sbr.rel (0) target = $region21
  $region20: #{unet_generator_pallas.10} parent=0 // pred_region
    _
  $region21: #{unet_generator_pallas.10} parent=0 // pred_fallthru
    _

// kernel: tile.76
$region0: #{tile.76}
  #allocation0 [shape = 's32[1]{0}', space=sflag, size = 0x4, scoped, tag = 'scoped memory for tile.76']
  %s0 = inlined_call_operand.<no memory space> [shape: f32[], index: 0, kind: input, shape index: {}]
  %s1 = inlined_call_operand.vmem [shape: f32[1,256], index: 1, kind: output, shape index: {}]
  %v2 = vstv %s0
  %3 = vst [vmem:[%s1] sm:$0x1] %v2
  %s4 = scalar_lea.vmem %s1, 1
  %5 = vst [vmem:[%s4] sm:$0x1] %v2

// kernel: unet_generator_pallas.11
$region0: #{unet_generator_pallas.11}
  #allocation0 [shape = 'u32[]', space=smem, size = 0x4, offset = 0x4, fixed_abs, tag = 'smem constant byte address 0x4 - core index']
  #allocation1 [shape = 'u32[72,128]{1,0:T(1,128)}', space=vmem, size = 0x9000, scoped, tag = 'internal scratch']
  %s0 = inlined_call_operand.vmem [shape: f32[1,128,256], index: 0, kind: input, shape index: {}]
  %s1 = inlined_call_operand.vmem [shape: f32[1,256,128], index: 1, kind: input, shape index: {}]
  %s2 = inlined_call_operand.vmem [shape: f32[1,256], index: 2, kind: input, shape index: {}]
  %s3 = inlined_call_operand.vmem [shape: f32[1,256], index: 3, kind: input, shape index: {}]
  %s4 = inlined_call_operand.vmem [shape: f32[1,128], index: 4, kind: input, shape index: {}]
  %s5 = inlined_call_operand.vmem [shape: f32[1,128,128], index: 5, kind: output, shape index: {0}]
  %s6 = inlined_call_operand.vmem [shape: f32[8,128], index: 6, kind: output, shape index: {1}]
  %s7 = inlined_call_operand.vmem [shape: f32[8,128], index: 7, kind: output, shape index: {2}]
  %8 = xla_tuple %s5, %s6, %s7
  %s9 = sld [smem:[#allocation0]]
  $region46: #{unet_generator_pallas.11} parent=0
    _
  %s11 = ssub.s32 1, %s9
  %s12 = scalar_select 0, %s11, %s9
  // Predicated region
  $region2: #{unet_generator_pallas.11} parent=0 // pred_check
    _
  $region3: #{unet_generator_pallas.11} parent=0 // pred_check_branch
    %14 = sbr.rel (0) target = $region5
  $region4: #{unet_generator_pallas.11} parent=0 // pred_region
    _
  $region5: #{unet_generator_pallas.11} parent=0 // pred_fallthru
    _
  // Predicated region
  $region6: #{unet_generator_pallas.11} parent=0 // pred_check
    _
  $region7: #{unet_generator_pallas.11} parent=0 // pred_check_branch
    %16 = sbr.rel (0) target = $region9
  $region8: #{unet_generator_pallas.11} parent=0 // pred_region
    _
  $region9: #{unet_generator_pallas.11} parent=0 // pred_fallthru
    _
  // Predicated region
  $region10: #{unet_generator_pallas.11} parent=0 // pred_check
    _
  $region11: #{unet_generator_pallas.11} parent=0 // pred_check_branch
    %18 = sbr.rel (0) target = $region13
  $region12: #{unet_generator_pallas.11} parent=0 // pred_region
    _
  $region13: #{unet_generator_pallas.11} parent=0 // pred_fallthru
    _
  // Predicated region
  $region14: #{unet_generator_pallas.11} parent=0 // pred_check
    _
  $region15: #{unet_generator_pallas.11} parent=0 // pred_check_branch
    %20 = sbr.rel (0) target = $region17
  $region16: #{unet_generator_pallas.11} parent=0 // pred_region
    _
  $region17: #{unet_generator_pallas.11} parent=0 // pred_fallthru
    _
  // Predicated region
  $region18: #{unet_generator_pallas.11} parent=0 // pred_check
    _
  $region19: #{unet_generator_pallas.11} parent=0 // pred_check_branch
    %22 = sbr.rel (0) target = $region21
  $region20: #{unet_generator_pallas.11} parent=0 // pred_region
    _
  $region21: #{unet_generator_pallas.11} parent=0 // pred_fallthru
    _
  %s23 = sadd.s32 0, 0
  %p24 = scmp.lt.s32.totalorder %s23, 0
  %s25 = scalar_select %p24, %s23, 0
  %s26 = smul.addr %s25, 8
  %s27 = scalar_lea.vmem %s6, %s26
  %s28 = sadd.s32 0, 0
  %p29 = scmp.lt.s32.totalorder %s28, 0
  %s30 = scalar_select %p29, %s28, 0
  %s31 = smul.addr %s30, 8
  %s32 = scalar_lea.vmem %s7, %s31
  %s33 = sadd.s32 0, 0
  %p34 = scmp.lt.s32.totalorder %s33, 0
  %s35 = scalar_select %p34, %s33, 0
  %s36 = smul.addr %s35, 8
  %s37 = scalar_lea.vmem %s6, %s36
  %s38 = sadd.s32 0, 0
  %s39 = sadd.s32 0, 0
  %p40 = scmp.lt.s32.totalorder %s39, 0
  %s41 = scalar_select %p40, %s39, 0
  %s42 = smul.addr %s41, 8
  %s43 = scalar_lea.vmem %s7, %s42
  %s44 = sadd.s32 0, 0
  %v45 = vld [vmem:[%s0] sm:$0xff]
  %v46 = vld [vmem:[%s0 + $0x8] sm:$0xff]
  %v47 = vld [vmem:[%s0 + $0x10] sm:$0xff]
  %v48 = vld [vmem:[%s0 + $0x18] sm:$0xff]
  %v49 = vld [vmem:[%s0 + $0x20] sm:$0xff]
  %v50 = vld [vmem:[%s0 + $0x28] sm:$0xff]
  %v51 = vld [vmem:[%s0 + $0x30] sm:$0xff]
  %v52 = vld [vmem:[%s0 + $0x38] sm:$0xff]
  %v53 = vld [vmem:[%s0 + $0x40] sm:$0xff]
  %v54 = vld [vmem:[%s0 + $0x48] sm:$0xff]
  %v55 = vld [vmem:[%s0 + $0x50] sm:$0xff]
  %v56 = vld [vmem:[%s0 + $0x58] sm:$0xff]
  %v57 = vld [vmem:[%s0 + $0x60] sm:$0xff]
  %v58 = vld [vmem:[%s0 + $0x68] sm:$0xff]
  %v59 = vld [vmem:[%s0 + $0x70] sm:$0xff]
  %v60 = vld [vmem:[%s0 + $0x78] sm:$0xff]
  %v61 = vld [vmem:[%s0 + $0x80] sm:$0xff]
  %v62 = vld [vmem:[%s0 + $0x88] sm:$0xff]
  %v63 = vld [vmem:[%s0 + $0x90] sm:$0xff]
  %v64 = vld [vmem:[%s0 + $0x98] sm:$0xff]
  %v65 = vld [vmem:[%s0 + $0xa0] sm:$0xff]
  %v66 = vld [vmem:[%s0 + $0xa8] sm:$0xff]
  %v67 = vld [vmem:[%s0 + $0xb0] sm:$0xff]
  %v68 = vld [vmem:[%s0 + $0xb8] sm:$0xff]
  %v69 = vld [vmem:[%s0 + $0xc0] sm:$0xff]
  %v70 = vld [vmem:[%s0 + $0xc8] sm:$0xff]
  %v71 = vld [vmem:[%s0 + $0xd0] sm:$0xff]
  %v72 = vld [vmem:[%s0 + $0xd8] sm:$0xff]
  %v73 = vld [vmem:[%s0 + $0xe0] sm:$0xff]
  %v74 = vld [vmem:[%s0 + $0xe8] sm:$0xff]
  %v75 = vld [vmem:[%s0 + $0xf0] sm:$0xff]
  %v76 = vld [vmem:[%s0 + $0xf8] sm:$0xff]
  %v77 = vld [vmem:[%s2] sm:$0x3]
  %v79 = vperm.slane %v77, 0
  %v80 = vperm.slane %v77, 1
  %v83 = vmul.f32 %v45, %v79
  %v84 = vmul.f32 %v46, %v80
  %v85 = vmul.f32 %v47, %v79
  %v86 = vmul.f32 %v48, %v80
  %v87 = vmul.f32 %v49, %v79
  %v88 = vmul.f32 %v50, %v80
  %v89 = vmul.f32 %v51, %v79
  %v90 = vmul.f32 %v52, %v80
  %v91 = vmul.f32 %v53, %v79
  %v92 = vmul.f32 %v54, %v80
  %v93 = vmul.f32 %v55, %v79
  %v94 = vmul.f32 %v56, %v80
  %v95 = vmul.f32 %v57, %v79
  %v96 = vmul.f32 %v58, %v80
  %v97 = vmul.f32 %v59, %v79
  %v98 = vmul.f32 %v60, %v80
  %v99 = vmul.f32 %v61, %v79
  %v100 = vmul.f32 %v62, %v80
  %v101 = vmul.f32 %v63, %v79
  %v102 = vmul.f32 %v64, %v80
  %v103 = vmul.f32 %v65, %v79
  %v104 = vmul.f32 %v66, %v80
  %v105 = vmul.f32 %v67, %v79
  %v106 = vmul.f32 %v68, %v80
  %v107 = vmul.f32 %v69, %v79
  %v108 = vmul.f32 %v70, %v80
  %v109 = vmul.f32 %v71, %v79
  %v110 = vmul.f32 %v72, %v80
  %v111 = vmul.f32 %v73, %v79
  %v112 = vmul.f32 %v74, %v80
  %v113 = vmul.f32 %v75, %v79
  %v114 = vmul.f32 %v76, %v80
  %v115 = vld [vmem:[%s3] sm:$0x3]
  %v117 = vperm.slane %v115, 0
  %v118 = vperm.slane %v115, 1
  %v121 = vadd.f32 %v83, %v117
  %v122 = vadd.f32 %v84, %v118
  %v123 = vadd.f32 %v85, %v117
  %v124 = vadd.f32 %v86, %v118
  %v125 = vadd.f32 %v87, %v117
  %v126 = vadd.f32 %v88, %v118
  %v127 = vadd.f32 %v89, %v117
  %v128 = vadd.f32 %v90, %v118
  %v129 = vadd.f32 %v91, %v117
  %v130 = vadd.f32 %v92, %v118
  %v131 = vadd.f32 %v93, %v117
  %v132 = vadd.f32 %v94, %v118
  %v133 = vadd.f32 %v95, %v117
  %v134 = vadd.f32 %v96, %v118
  %v135 = vadd.f32 %v97, %v117
  %v136 = vadd.f32 %v98, %v118
  %v137 = vadd.f32 %v99, %v117
  %v138 = vadd.f32 %v100, %v118
  %v139 = vadd.f32 %v101, %v117
  %v140 = vadd.f32 %v102, %v118
  %v141 = vadd.f32 %v103, %v117
  %v142 = vadd.f32 %v104, %v118
  %v143 = vadd.f32 %v105, %v117
  %v144 = vadd.f32 %v106, %v118
  %v145 = vadd.f32 %v107, %v117
  %v146 = vadd.f32 %v108, %v118
  %v147 = vadd.f32 %v109, %v117
  %v148 = vadd.f32 %v110, %v118
  %v149 = vadd.f32 %v111, %v117
  %v150 = vadd.f32 %v112, %v118
  %v151 = vadd.f32 %v113, %v117
  %v152 = vadd.f32 %v114, %v118
  %vm153 = vcmp.ge.f32.partialorder %v121, 0.0
  %vm154 = vcmp.ge.f32.partialorder %v122, 0.0
  %vm155 = vcmp.ge.f32.partialorder %v123, 0.0
  %vm156 = vcmp.ge.f32.partialorder %v124, 0.0
  %vm157 = vcmp.ge.f32.partialorder %v125, 0.0
  %vm158 = vcmp.ge.f32.partialorder %v126, 0.0
  %vm159 = vcmp.ge.f32.partialorder %v127, 0.0
  %vm160 = vcmp.ge.f32.partialorder %v128, 0.0
  %vm161 = vcmp.ge.f32.partialorder %v129, 0.0
  %vm162 = vcmp.ge.f32.partialorder %v130, 0.0
  %vm163 = vcmp.ge.f32.partialorder %v131, 0.0
  %vm164 = vcmp.ge.f32.partialorder %v132, 0.0
  %vm165 = vcmp.ge.f32.partialorder %v133, 0.0
  %vm166 = vcmp.ge.f32.partialorder %v134, 0.0
  %vm167 = vcmp.ge.f32.partialorder %v135, 0.0
  %vm168 = vcmp.ge.f32.partialorder %v136, 0.0
  %vm169 = vcmp.ge.f32.partialorder %v137, 0.0
  %vm170 = vcmp.ge.f32.partialorder %v138, 0.0
  %vm171 = vcmp.ge.f32.partialorder %v139, 0.0
  %vm172 = vcmp.ge.f32.partialorder %v140, 0.0
  %vm173 = vcmp.ge.f32.partialorder %v141, 0.0
  %vm174 = vcmp.ge.f32.partialorder %v142, 0.0
  %vm175 = vcmp.ge.f32.partialorder %v143, 0.0
  %vm176 = vcmp.ge.f32.partialorder %v144, 0.0
  %vm177 = vcmp.ge.f32.partialorder %v145, 0.0
  %vm178 = vcmp.ge.f32.partialorder %v146, 0.0
  %vm179 = vcmp.ge.f32.partialorder %v147, 0.0
  %vm180 = vcmp.ge.f32.partialorder %v148, 0.0
  %vm181 = vcmp.ge.f32.partialorder %v149, 0.0
  %vm182 = vcmp.ge.f32.partialorder %v150, 0.0
  %vm183 = vcmp.ge.f32.partialorder %v151, 0.0
  %vm184 = vcmp.ge.f32.partialorder %v152, 0.0
  %v185 = vmul.f32 %v121, 0.2
  %v186 = vmul.f32 %v122, 0.2
  %v187 = vmul.f32 %v123, 0.2
  %v188 = vmul.f32 %v124, 0.2
  %v189 = vmul.f32 %v125, 0.2
  %v190 = vmul.f32 %v126, 0.2
  %v191 = vmul.f32 %v127, 0.2
  %v192 = vmul.f32 %v128, 0.2
  %v193 = vmul.f32 %v129, 0.2
  %v194 = vmul.f32 %v130, 0.2
  %v195 = vmul.f32 %v131, 0.2
  %v196 = vmul.f32 %v132, 0.2
  %v197 = vmul.f32 %v133, 0.2
  %v198 = vmul.f32 %v134, 0.2
  %v199 = vmul.f32 %v135, 0.2
  %v200 = vmul.f32 %v136, 0.2
  %v201 = vmul.f32 %v137, 0.2
  %v202 = vmul.f32 %v138, 0.2
  %v203 = vmul.f32 %v139, 0.2
  %v204 = vmul.f32 %v140, 0.2
  %v205 = vmul.f32 %v141, 0.2
  %v206 = vmul.f32 %v142, 0.2
  %v207 = vmul.f32 %v143, 0.2
  %v208 = vmul.f32 %v144, 0.2
  %v209 = vmul.f32 %v145, 0.2
  %v210 = vmul.f32 %v146, 0.2
  %v211 = vmul.f32 %v147, 0.2
  %v212 = vmul.f32 %v148, 0.2
  %v213 = vmul.f32 %v149, 0.2
  %v214 = vmul.f32 %v150, 0.2
  %v215 = vmul.f32 %v151, 0.2
  %v216 = vmul.f32 %v152, 0.2
  %v217 = vsel %vm153, %v121, %v185
  %v218 = vsel %vm154, %v122, %v186
  %v219 = vsel %vm155, %v123, %v187
  %v220 = vsel %vm156, %v124, %v188
  %v221 = vsel %vm157, %v125, %v189
  %v222 = vsel %vm158, %v126, %v190
  %v223 = vsel %vm159, %v127, %v191
  %v224 = vsel %vm160, %v128, %v192
  %v225 = vsel %vm161, %v129, %v193
  %v226 = vsel %vm162, %v130, %v194
  %v227 = vsel %vm163, %v131, %v195
  %v228 = vsel %vm164, %v132, %v196
  %v229 = vsel %vm165, %v133, %v197
  %v230 = vsel %vm166, %v134, %v198
  %v231 = vsel %vm167, %v135, %v199
  %v232 = vsel %vm168, %v136, %v200
  %v233 = vsel %vm169, %v137, %v201
  %v234 = vsel %vm170, %v138, %v202
  %v235 = vsel %vm171, %v139, %v203
  %v236 = vsel %vm172, %v140, %v204
  %v237 = vsel %vm173, %v141, %v205
  %v238 = vsel %vm174, %v142, %v206
  %v239 = vsel %vm175, %v143, %v207
  %v240 = vsel %vm176, %v144, %v208
  %v241 = vsel %vm177, %v145, %v209
  %v242 = vsel %vm178, %v146, %v210
  %v243 = vsel %vm179, %v147, %v211
  %v244 = vsel %vm180, %v148, %v212
  %v245 = vsel %vm181, %v149, %v213
  %v246 = vsel %vm182, %v150, %v214
  %v247 = vsel %vm183, %v151, %v215
  %v248 = vsel %vm184, %v152, %v216
  %v249 = vld [vmem:[%s1] sm:$0xff]
  %v250 = vld [vmem:[%s1 + $0x8] sm:$0xff]
  %v251 = vld [vmem:[%s1 + $0x10] sm:$0xff]
  %v252 = vld [vmem:[%s1 + $0x18] sm:$0xff]
  %v253 = vld [vmem:[%s1 + $0x20] sm:$0xff]
  %v254 = vld [vmem:[%s1 + $0x28] sm:$0xff]
  %v255 = vld [vmem:[%s1 + $0x30] sm:$0xff]
  %v256 = vld [vmem:[%s1 + $0x38] sm:$0xff]
  %v257 = vld [vmem:[%s1 + $0x40] sm:$0xff]
  %v258 = vld [vmem:[%s1 + $0x48] sm:$0xff]
  %v259 = vld [vmem:[%s1 + $0x50] sm:$0xff]
  %v260 = vld [vmem:[%s1 + $0x58] sm:$0xff]
  %v261 = vld [vmem:[%s1 + $0x60] sm:$0xff]
  %v262 = vld [vmem:[%s1 + $0x68] sm:$0xff]
  %v263 = vld [vmem:[%s1 + $0x70] sm:$0xff]
  %v264 = vld [vmem:[%s1 + $0x78] sm:$0xff]
  %v265 = vld [vmem:[%s1 + $0x80] sm:$0xff]
  %v266 = vld [vmem:[%s1 + $0x88] sm:$0xff]
  %v267 = vld [vmem:[%s1 + $0x90] sm:$0xff]
  %v268 = vld [vmem:[%s1 + $0x98] sm:$0xff]
  %v269 = vld [vmem:[%s1 + $0xa0] sm:$0xff]
  %v270 = vld [vmem:[%s1 + $0xa8] sm:$0xff]
  %v271 = vld [vmem:[%s1 + $0xb0] sm:$0xff]
  %v272 = vld [vmem:[%s1 + $0xb8] sm:$0xff]
  %v273 = vld [vmem:[%s1 + $0xc0] sm:$0xff]
  %v274 = vld [vmem:[%s1 + $0xc8] sm:$0xff]
  %v275 = vld [vmem:[%s1 + $0xd0] sm:$0xff]
  %v276 = vld [vmem:[%s1 + $0xd8] sm:$0xff]
  %v277 = vld [vmem:[%s1 + $0xe0] sm:$0xff]
  %v278 = vld [vmem:[%s1 + $0xe8] sm:$0xff]
  %v279 = vld [vmem:[%s1 + $0xf0] sm:$0xff]
  %v280 = vld [vmem:[%s1 + $0xf8] sm:$0xff]
  %v281 = vld [vmem:[%s4] sm:$0x1]
  %v283 = vperm.slane %v281, 0
  %285 = vmatpush.msra.mxu0 %v264
  %286 = vmatpush.msra.mxu0 %v263
  %287 = vmatpush.msra.mxu0 %v262
  %288 = vmatpush.msra.mxu0 %v261
  %289 = vmatpush.msra.mxu0 %v260
  %290 = vmatpush.msra.mxu0 %v259
  %291 = vmatpush.msra.mxu0 %v258
  %292 = vmatpush.msra.mxu0 %v257
  %293 = vmatpush.msra.mxu0 %v256
  %294 = vmatpush.msra.mxu0 %v255
  %295 = vmatpush.msra.mxu0 %v254
  %296 = vmatpush.msra.mxu0 %v253
  %297 = vmatpush.msra.mxu0 %v252
  %298 = vmatpush.msra.mxu0 %v251
  %299 = vmatpush.msra.mxu0 %v250
  %300 = vmatpush.msra.mxu0 %v249
  %301 = vmatmul.f32.gmra.mxu0 %v217
  %v302 = vpop.f32.mrf.mxu0
  %v303 = vadd.f32 %v283, %v302
  %304 = vmatmul.f32.gmra.mxu0 %v219
  %v305 = vpop.f32.mrf.mxu0
  %v306 = vadd.f32 %v283, %v305
  %307 = vmatmul.f32.gmra.mxu0 %v221
  %v308 = vpop.f32.mrf.mxu0
  %v309 = vadd.f32 %v283, %v308
  %310 = vmatmul.f32.gmra.mxu0 %v223
  %v311 = vpop.f32.mrf.mxu0
  %v312 = vadd.f32 %v283, %v311
  %313 = vmatmul.f32.gmra.mxu0 %v225
  %v314 = vpop.f32.mrf.mxu0
  %v315 = vadd.f32 %v283, %v314
  %316 = vmatmul.f32.gmra.mxu0 %v227
  %v317 = vpop.f32.mrf.mxu0
  %v318 = vadd.f32 %v283, %v317
  %319 = vmatmul.f32.gmra.mxu0 %v229
  %v320 = vpop.f32.mrf.mxu0
  %v321 = vadd.f32 %v283, %v320
  %322 = vmatmul.f32.gmra.mxu0 %v231
  %v323 = vpop.f32.mrf.mxu0
  %v324 = vadd.f32 %v283, %v323
  %325 = vmatmul.f32.gmra.mxu0 %v233
  %v326 = vpop.f32.mrf.mxu0
  %v327 = vadd.f32 %v283, %v326
  %328 = vmatmul.f32.gmra.mxu0 %v235
  %v329 = vpop.f32.mrf.mxu0
  %v330 = vadd.f32 %v283, %v329
  %331 = vmatmul.f32.gmra.mxu0 %v237
  %v332 = vpop.f32.mrf.mxu0
  %v333 = vadd.f32 %v283, %v332
  %334 = vmatmul.f32.gmra.mxu0 %v239
  %v335 = vpop.f32.mrf.mxu0
  %v336 = vadd.f32 %v283, %v335
  %337 = vmatmul.f32.gmra.mxu0 %v241
  %v338 = vpop.f32.mrf.mxu0
  %v339 = vadd.f32 %v283, %v338
  %340 = vmatmul.f32.gmra.mxu0 %v243
  %v341 = vpop.f32.mrf.mxu0
  %v342 = vadd.f32 %v283, %v341
  %343 = vmatmul.f32.gmra.mxu0 %v245
  %v344 = vpop.f32.mrf.mxu0
  %v345 = vadd.f32 %v283, %v344
  %346 = vmatmul.f32.gmra.mxu0 %v247
  %v347 = vpop.f32.mrf.mxu0
  %v348 = vadd.f32 %v283, %v347
  %349 = vdwg.mxu0
  %350 = vmatpush.msra.mxu0 %v280
  %351 = vmatpush.msra.mxu0 %v279
  %352 = vmatpush.msra.mxu0 %v278
  %353 = vmatpush.msra.mxu0 %v277
  %354 = vmatpush.msra.mxu0 %v276
  %355 = vmatpush.msra.mxu0 %v275
  %356 = vmatpush.msra.mxu0 %v274
  %357 = vmatpush.msra.mxu0 %v273
  %358 = vmatpush.msra.mxu0 %v272
  %359 = vmatpush.msra.mxu0 %v271
  %360 = vmatpush.msra.mxu0 %v270
  %361 = vmatpush.msra.mxu0 %v269
  %362 = vmatpush.msra.mxu0 %v268
  %363 = vmatpush.msra.mxu0 %v267
  %364 = vmatpush.msra.mxu0 %v266
  %365 = vmatpush.msra.mxu0 %v265
  %366 = vmatmul.f32.gmra.mxu0 %v218
  %v367 = vpop.f32.mrf.mxu0
  %v368 = vadd.f32 %v303, %v367
  %369 = vmatmul.f32.gmra.mxu0 %v220
  %v370 = vpop.f32.mrf.mxu0
  %v371 = vadd.f32 %v306, %v370
  %372 = vmatmul.f32.gmra.mxu0 %v222
  %v373 = vpop.f32.mrf.mxu0
  %v374 = vadd.f32 %v309, %v373
  %375 = vmatmul.f32.gmra.mxu0 %v224
  %v376 = vpop.f32.mrf.mxu0
  %v377 = vadd.f32 %v312, %v376
  %378 = vmatmul.f32.gmra.mxu0 %v226
  %v379 = vpop.f32.mrf.mxu0
  %v380 = vadd.f32 %v315, %v379
  %381 = vmatmul.f32.gmra.mxu0 %v228
  %v382 = vpop.f32.mrf.mxu0
  %v383 = vadd.f32 %v318, %v382
  %384 = vmatmul.f32.gmra.mxu0 %v230
  %v385 = vpop.f32.mrf.mxu0
  %v386 = vadd.f32 %v321, %v385
  %387 = vmatmul.f32.gmra.mxu0 %v232
  %v388 = vpop.f32.mrf.mxu0
  %v389 = vadd.f32 %v324, %v388
  %390 = vmatmul.f32.gmra.mxu0 %v234
  %v391 = vpop.f32.mrf.mxu0
  %v392 = vadd.f32 %v327, %v391
  %393 = vmatmul.f32.gmra.mxu0 %v236
  %v394 = vpop.f32.mrf.mxu0
  %v395 = vadd.f32 %v330, %v394
  %396 = vmatmul.f32.gmra.mxu0 %v238
  %v397 = vpop.f32.mrf.mxu0
  %v398 = vadd.f32 %v333, %v397
  %399 = vmatmul.f32.gmra.mxu0 %v240
  %v400 = vpop.f32.mrf.mxu0
  %v401 = vadd.f32 %v336, %v400
  %402 = vmatmul.f32.gmra.mxu0 %v242
  %v403 = vpop.f32.mrf.mxu0
  %v404 = vadd.f32 %v339, %v403
  %405 = vmatmul.f32.gmra.mxu0 %v244
  %v406 = vpop.f32.mrf.mxu0
  %v407 = vadd.f32 %v342, %v406
  %408 = vmatmul.f32.gmra.mxu0 %v246
  %v409 = vpop.f32.mrf.mxu0
  %v410 = vadd.f32 %v345, %v409
  %411 = vmatmul.f32.gmra.mxu0 %v248
  %v412 = vpop.f32.mrf.mxu0
  %v413 = vadd.f32 %v348, %v412
  %414 = vdwg.mxu0
  %415 = vst [vmem:[%s5] sm:$0xff] %v368
  %416 = vst [vmem:[%s5 + $0x8] sm:$0xff] %v371
  %417 = vst [vmem:[%s5 + $0x10] sm:$0xff] %v374
  %418 = vst [vmem:[%s5 + $0x18] sm:$0xff] %v377
  %419 = vst [vmem:[%s5 + $0x20] sm:$0xff] %v380
  %420 = vst [vmem:[%s5 + $0x28] sm:$0xff] %v383
  %421 = vst [vmem:[%s5 + $0x30] sm:$0xff] %v386
  %422 = vst [vmem:[%s5 + $0x38] sm:$0xff] %v389
  %423 = vst [vmem:[%s5 + $0x40] sm:$0xff] %v392
  %424 = vst [vmem:[%s5 + $0x48] sm:$0xff] %v395
  %425 = vst [vmem:[%s5 + $0x50] sm:$0xff] %v398
  %426 = vst [vmem:[%s5 + $0x58] sm:$0xff] %v401
  %427 = vst [vmem:[%s5 + $0x60] sm:$0xff] %v404
  %428 = vst [vmem:[%s5 + $0x68] sm:$0xff] %v407
  %429 = vst [vmem:[%s5 + $0x70] sm:$0xff] %v410
  %430 = vst [vmem:[%s5 + $0x78] sm:$0xff] %v413
  %v431 = vlaneseq
  %v432 = vshrl.u32 %v431, 7
  %v433 = vadd.f32 %v368, %v371
  %v434 = vadd.f32 %v433, %v374
  %v435 = vadd.f32 %v434, %v377
  %v436 = vadd.f32 %v435, %v380
  %v437 = vadd.f32 %v436, %v383
  %v438 = vadd.f32 %v437, %v386
  %v439 = vadd.f32 %v438, %v389
  %v440 = vadd.f32 %v439, %v392
  %v441 = vadd.f32 %v440, %v395
  %v442 = vadd.f32 %v441, %v398
  %v443 = vadd.f32 %v442, %v401
  %v444 = vadd.f32 %v443, %v404
  %v445 = vadd.f32 %v444, %v407
  %v446 = vadd.f32 %v445, %v410
  %v447 = vadd.f32 %v446, %v413
  %v448 = vrot.slane %v447, 4
  %v449 = vadd.f32 %v447, %v448
  %v450 = vrot.slane %v449, 2
  %v451 = vadd.f32 %v449, %v450
  %v452 = vrot.slane %v451, 1
  %v453 = vadd.f32 %v451, %v452
  %v454 = vmul.f32 %v368, %v368
  %v455 = vmul.f32 %v371, %v371
  %v456 = vmul.f32 %v374, %v374
  %v457 = vmul.f32 %v377, %v377
  %v458 = vmul.f32 %v380, %v380
  %v459 = vmul.f32 %v383, %v383
  %v460 = vmul.f32 %v386, %v386
  %v461 = vmul.f32 %v389, %v389
  %v462 = vmul.f32 %v392, %v392
  %v463 = vmul.f32 %v395, %v395
  %v464 = vmul.f32 %v398, %v398
  %v465 = vmul.f32 %v401, %v401
  %v466 = vmul.f32 %v404, %v404
  %v467 = vmul.f32 %v407, %v407
  %v468 = vmul.f32 %v410, %v410
  %v469 = vmul.f32 %v413, %v413
  %v470 = vadd.f32 %v454, %v455
  %v471 = vadd.f32 %v470, %v456
  %v472 = vadd.f32 %v471, %v457
  %v473 = vadd.f32 %v472, %v458
  %v474 = vadd.f32 %v473, %v459
  %v475 = vadd.f32 %v474, %v460
  %v476 = vadd.f32 %v475, %v461
  %v477 = vadd.f32 %v476, %v462
  %v478 = vadd.f32 %v477, %v463
  %v479 = vadd.f32 %v478, %v464
  %v480 = vadd.f32 %v479, %v465
  %v481 = vadd.f32 %v480, %v466
  %v482 = vadd.f32 %v481, %v467
  %v483 = vadd.f32 %v482, %v468
  %v484 = vadd.f32 %v483, %v469
  %v485 = vrot.slane %v484, 4
  %v486 = vadd.f32 %v484, %v485
  %v487 = vrot.slane %v486, 2
  %v488 = vadd.f32 %v486, %v487
  %v489 = vrot.slane %v488, 1
  %v490 = vadd.f32 %v488, %v489
  %vm491 = vcmp.eq.s32.totalorder %v432, 0
  %v492 = vsel %vm491, %v453, 0.0
  %493 = vst [vmem:[%s37] sm:$0xff] %v492
  %v494 = vsel %vm491, %v490, 0.0
  %495 = vst [vmem:[%s43] sm:$0xff] %v494
  %s496 = sadd.s32 0, 0
  %p497 = scmp.lt.s32.totalorder %s496, 0
  %s498 = scalar_select %p497, %s496, 0
  %s499 = smul.addr %s498, 8
  %s500 = scalar_lea.vmem %s6, %s499
  %s501 = sadd.s32 0, 0
  %p502 = scmp.lt.s32.totalorder %s501, 0
  %s503 = scalar_select %p502, %s501, 0
  %s504 = smul.addr %s503, 8
  %s505 = scalar_lea.vmem %s7, %s504
  // Predicated region
  $region22: #{unet_generator_pallas.11} parent=0 // pred_check
    _
  $region23: #{unet_generator_pallas.11} parent=0 // pred_check_branch
    %507 = sbr.rel (0) target = $region25
  $region24: #{unet_generator_pallas.11} parent=0 // pred_region
    _
  $region25: #{unet_generator_pallas.11} parent=0 // pred_fallthru
    _
  // Predicated region
  $region26: #{unet_generator_pallas.11} parent=0 // pred_check
    _
  $region27: #{unet_generator_pallas.11} parent=0 // pred_check_branch
    %509 = sbr.rel (0) target = $region29
  $region28: #{unet_generator_pallas.11} parent=0 // pred_region
    %s510 = sadd.s32 0, 0
  $region29: #{unet_generator_pallas.11} parent=0 // pred_fallthru
    _
  // Predicated region
  $region30: #{unet_generator_pallas.11} parent=0 // pred_check
    _
  $region31: #{unet_generator_pallas.11} parent=0 // pred_check_branch
    %512 = sbr.rel (0) target = $region33
  $region32: #{unet_generator_pallas.11} parent=0 // pred_region
    %s513 = sadd.s32 0, 0
  $region33: #{unet_generator_pallas.11} parent=0 // pred_fallthru
    _
  // Predicated region
  $region34: #{unet_generator_pallas.11} parent=0 // pred_check
    _
  $region35: #{unet_generator_pallas.11} parent=0 // pred_check_branch
    %515 = sbr.rel (0) target = $region37
  $region36: #{unet_generator_pallas.11} parent=0 // pred_region
    _
  $region37: #{unet_generator_pallas.11} parent=0 // pred_fallthru
    _
  // Predicated region
  $region38: #{unet_generator_pallas.11} parent=0 // pred_check
    _
  $region39: #{unet_generator_pallas.11} parent=0 // pred_check_branch
    %517 = sbr.rel (0) target = $region41
  $region40: #{unet_generator_pallas.11} parent=0 // pred_region
    %s518 = sadd.s32 0, 0
    %p519 = scmp.lt.s32.totalorder %s518, 0
    %s520 = scalar_select %p519, %s518, 0
    %s521 = smul.addr %s520, 8
    %s522 = scalar_lea.vmem %s6, %s521
  $region41: #{unet_generator_pallas.11} parent=0 // pred_fallthru
    _
  // Predicated region
  $region42: #{unet_generator_pallas.11} parent=0 // pred_check
    _
  $region43: #{unet_generator_pallas.11} parent=0 // pred_check_branch
    %524 = sbr.rel (0) target = $region45
  $region44: #{unet_generator_pallas.11} parent=0 // pred_region
    %s525 = sadd.s32 0, 0
    %p526 = scmp.lt.s32.totalorder %s525, 0
    %s527 = scalar_select %p526, %s525, 0
    %s528 = smul.addr %s527, 8
    %s529 = scalar_lea.vmem %s7, %s528
  $region45: #{unet_generator_pallas.11} parent=0 // pred_fallthru
    _

// kernel: tile.81
$region0: #{tile.81}
  #allocation0 [shape = 's32[1]{0}', space=sflag, size = 0x4, scoped, tag = 'scoped memory for tile.81']
  %s0 = inlined_call_operand.vmem [shape: f32[32], index: 0, kind: input, shape index: {}]
  %s1 = inlined_call_operand.vmem [shape: f32[16,32], index: 1, kind: output, shape index: {}]
  // Predicated region
  $region2: #{tile.81} parent=0 // pred_check
    _
  $region3: #{tile.81} parent=0 // pred_check_branch
    %3 = sbr.rel (0) target = $region5
  $region4: #{tile.81} parent=0 // pred_region
    _
  $region5: #{tile.81} parent=0 // pred_fallthru
    _
  %v4 = vld [vmem:[%s0] ss:$0 sm:$0xff]
  %5 = vst [vmem:[%s1] sm:$0xff] %v4
  %s6 = scalar_lea.vmem %s1, 8
  %7 = vst [vmem:[%s6] sm:$0xff] %v4

// kernel: tile.86
$region0: #{tile.86}
  %s0 = inlined_call_operand.vmem [shape: f32[16,32], index: 0, kind: input, shape index: {}]
  %s1 = inlined_call_operand.vmem [shape: f32[1,512], index: 1, kind: output, shape index: {}]
  $region1: #{tile.86} parent=0
    #allocation0 [shape = 'u8[16384]{0}', space=vmem, size = 0x4000, scoped, tag = 'scoped mem for output reshape']
    %v2 = vld [vmem:[%s0] ss:$4 sm:$0xf]
    %vm3 = vcmask 261120
    %4 = vst.msk [vmem:[#allocation0] ss:$8 sm:$0xf] %vm3, %v2
    %s5 = scalar_lea.vmem %s0, 3
    %v6 = vld [vmem:[%s5] ss:$4 sm:$0xf]
    %7 = vrot.lane.b32.xlu0 %v6, 96
    %v8 = vpop.permute.xlu0 %7
    %vm9 = vcmask 1048320
    %10 = vst.msk [vmem:[#allocation0] ss:$8 sm:$0xf] %vm9, %v8
    %s11 = scalar_lea.vmem %s0, 2
    %v12 = vld [vmem:[%s11] ss:$4 sm:$0xf]
    %13 = vrot.lane.b32.xlu0 %v12, 64
    %v14 = vpop.permute.xlu0 %13
    %vm15 = vcmask 785920
    %16 = vst.msk [vmem:[#allocation0] ss:$8 sm:$0xf] %vm15, %v14
    %s17 = scalar_lea.vmem %s0, 1
    %v18 = vld [vmem:[%s17] ss:$4 sm:$0xf]
    %19 = vrot.lane.b32.xlu0 %v18, 32
    %v20 = vpop.permute.xlu0 %19
    %vm21 = vcmask 523520
    %22 = vst.msk [vmem:[#allocation0] ss:$8 sm:$0xf] %vm21, %v20
    %s24 = ssub.s32 2, 1
    %v25 = vld [vmem:[#allocation0] sm:%s24]
    %s27 = ssub.s32 2, 1
    %28 = vst [vmem:[%s1] sm:%s27] %v25
    %s29 = scalar_lea.vmem [#allocation0], 8
    %v30 = vld [vmem:[%s29] sm:%s24]
    %s32 = ssub.s32 2, 1
    %s33 = scalar_lea.vmem %s1, 1
    %34 = vst [vmem:[%s33] sm:%s32] %v30
    %s35 = scalar_lea.vmem [#allocation0], 16
    %v36 = vld [vmem:[%s35] sm:%s24]
    %s38 = ssub.s32 2, 1
    %s39 = scalar_lea.vmem %s1, 2
    %40 = vst [vmem:[%s39] sm:%s38] %v36
    %s41 = scalar_lea.vmem [#allocation0], 24
    %v42 = vld [vmem:[%s41] sm:%s24]
    %s44 = ssub.s32 2, 1
    %s45 = scalar_lea.vmem %s1, 3
    %46 = vst [vmem:[%s45] sm:%s44] %v42

// kernel: unet_generator_pallas.12
$region0: #{unet_generator_pallas.12}
  #allocation0 [shape = 'u32[]', space=smem, size = 0x4, offset = 0x4, fixed_abs, tag = 'smem constant byte address 0x4 - core index']
  #allocation1 [shape = 'u32[72,128]{1,0:T(1,128)}', space=vmem, size = 0x9000, scoped, tag = 'internal scratch']
  %s0 = inlined_call_operand.vmem [shape: f32[1,32,512], index: 0, kind: input, shape index: {}]
  %s1 = inlined_call_operand.vmem [shape: f32[1,512,128], index: 1, kind: input, shape index: {}]
  %s2 = inlined_call_operand.vmem [shape: f32[1,512], index: 2, kind: input, shape index: {}]
  %s3 = inlined_call_operand.vmem [shape: f32[1,512], index: 3, kind: input, shape index: {}]
  %s4 = inlined_call_operand.vmem [shape: f32[1,128], index: 4, kind: input, shape index: {}]
  %s5 = inlined_call_operand.vmem [shape: f32[1,32,128], index: 5, kind: output, shape index: {0}]
  %s6 = inlined_call_operand.vmem [shape: f32[8,128], index: 6, kind: output, shape index: {1}]
  %s7 = inlined_call_operand.vmem [shape: f32[8,128], index: 7, kind: output, shape index: {2}]
  %8 = xla_tuple %s5, %s6, %s7
  %s9 = sld [smem:[#allocation0]]
  $region46: #{unet_generator_pallas.12} parent=0
    _
  %s11 = ssub.s32 1, %s9
  %s12 = scalar_select 0, %s11, %s9
  // Predicated region
  $region2: #{unet_generator_pallas.12} parent=0 // pred_check
    _
  $region3: #{unet_generator_pallas.12} parent=0 // pred_check_branch
    %14 = sbr.rel (0) target = $region5
  $region4: #{unet_generator_pallas.12} parent=0 // pred_region
    _
  $region5: #{unet_generator_pallas.12} parent=0 // pred_fallthru
    _
  // Predicated region
  $region6: #{unet_generator_pallas.12} parent=0 // pred_check
    _
  $region7: #{unet_generator_pallas.12} parent=0 // pred_check_branch
    %16 = sbr.rel (0) target = $region9
  $region8: #{unet_generator_pallas.12} parent=0 // pred_region
    _
  $region9: #{unet_generator_pallas.12} parent=0 // pred_fallthru
    _
  // Predicated region
  $region10: #{unet_generator_pallas.12} parent=0 // pred_check
    _
  $region11: #{unet_generator_pallas.12} parent=0 // pred_check_branch
    %18 = sbr.rel (0) target = $region13
  $region12: #{unet_generator_pallas.12} parent=0 // pred_region
    _
  $region13: #{unet_generator_pallas.12} parent=0 // pred_fallthru
    _
  // Predicated region
  $region14: #{unet_generator_pallas.12} parent=0 // pred_check
    _
  $region15: #{unet_generator_pallas.12} parent=0 // pred_check_branch
    %20 = sbr.rel (0) target = $region17
  $region16: #{unet_generator_pallas.12} parent=0 // pred_region
    _
  $region17: #{unet_generator_pallas.12} parent=0 // pred_fallthru
    _
  // Predicated region
  $region18: #{unet_generator_pallas.12} parent=0 // pred_check
    _
  $region19: #{unet_generator_pallas.12} parent=0 // pred_check_branch
    %22 = sbr.rel (0) target = $region21
  $region20: #{unet_generator_pallas.12} parent=0 // pred_region
    _
  $region21: #{unet_generator_pallas.12} parent=0 // pred_fallthru
    _
  %s23 = sadd.s32 0, 0
  %p24 = scmp.lt.s32.totalorder %s23, 0
  %s25 = scalar_select %p24, %s23, 0
  %s26 = smul.addr %s25, 8
  %s27 = scalar_lea.vmem %s6, %s26
  %s28 = sadd.s32 0, 0
  %p29 = scmp.lt.s32.totalorder %s28, 0
  %s30 = scalar_select %p29, %s28, 0
  %s31 = smul.addr %s30, 8
  %s32 = scalar_lea.vmem %s7, %s31
  %s33 = sadd.s32 0, 0
  %p34 = scmp.lt.s32.totalorder %s33, 0
  %s35 = scalar_select %p34, %s33, 0
  %s36 = smul.addr %s35, 8
  %s37 = scalar_lea.vmem %s6, %s36
  %s38 = sadd.s32 0, 0
  %s39 = sadd.s32 0, 0
  %p40 = scmp.lt.s32.totalorder %s39, 0
  %s41 = scalar_select %p40, %s39, 0
  %s42 = smul.addr %s41, 8
  %s43 = scalar_lea.vmem %s7, %s42
  %s44 = sadd.s32 0, 0
  %v45 = vld [vmem:[%s0] sm:$0xff]
  %v46 = vld [vmem:[%s0 + $0x8] sm:$0xff]
  %v47 = vld [vmem:[%s0 + $0x10] sm:$0xff]
  %v48 = vld [vmem:[%s0 + $0x18] sm:$0xff]
  %v49 = vld [vmem:[%s0 + $0x20] sm:$0xff]
  %v50 = vld [vmem:[%s0 + $0x28] sm:$0xff]
  %v51 = vld [vmem:[%s0 + $0x30] sm:$0xff]
  %v52 = vld [vmem:[%s0 + $0x38] sm:$0xff]
  %v53 = vld [vmem:[%s0 + $0x40] sm:$0xff]
  %v54 = vld [vmem:[%s0 + $0x48] sm:$0xff]
  %v55 = vld [vmem:[%s0 + $0x50] sm:$0xff]
  %v56 = vld [vmem:[%s0 + $0x58] sm:$0xff]
  %v57 = vld [vmem:[%s0 + $0x60] sm:$0xff]
  %v58 = vld [vmem:[%s0 + $0x68] sm:$0xff]
  %v59 = vld [vmem:[%s0 + $0x70] sm:$0xff]
  %v60 = vld [vmem:[%s0 + $0x78] sm:$0xff]
  %v61 = vld [vmem:[%s2] sm:$0xf]
  %v63 = vperm.slane %v61, 0
  %v64 = vperm.slane %v61, 1
  %v65 = vperm.slane %v61, 2
  %v66 = vperm.slane %v61, 3
  %v71 = vmul.f32 %v45, %v63
  %v72 = vmul.f32 %v46, %v64
  %v73 = vmul.f32 %v47, %v65
  %v74 = vmul.f32 %v48, %v66
  %v75 = vmul.f32 %v49, %v63
  %v76 = vmul.f32 %v50, %v64
  %v77 = vmul.f32 %v51, %v65
  %v78 = vmul.f32 %v52, %v66
  %v79 = vmul.f32 %v53, %v63
  %v80 = vmul.f32 %v54, %v64
  %v81 = vmul.f32 %v55, %v65
  %v82 = vmul.f32 %v56, %v66
  %v83 = vmul.f32 %v57, %v63
  %v84 = vmul.f32 %v58, %v64
  %v85 = vmul.f32 %v59, %v65
  %v86 = vmul.f32 %v60, %v66
  %v87 = vld [vmem:[%s3] sm:$0xf]
  %v89 = vperm.slane %v87, 0
  %v90 = vperm.slane %v87, 1
  %v91 = vperm.slane %v87, 2
  %v92 = vperm.slane %v87, 3
  %v97 = vadd.f32 %v71, %v89
  %v98 = vadd.f32 %v72, %v90
  %v99 = vadd.f32 %v73, %v91
  %v100 = vadd.f32 %v74, %v92
  %v101 = vadd.f32 %v75, %v89
  %v102 = vadd.f32 %v76, %v90
  %v103 = vadd.f32 %v77, %v91
  %v104 = vadd.f32 %v78, %v92
  %v105 = vadd.f32 %v79, %v89
  %v106 = vadd.f32 %v80, %v90
  %v107 = vadd.f32 %v81, %v91
  %v108 = vadd.f32 %v82, %v92
  %v109 = vadd.f32 %v83, %v89
  %v110 = vadd.f32 %v84, %v90
  %v111 = vadd.f32 %v85, %v91
  %v112 = vadd.f32 %v86, %v92
  %vm113 = vcmp.ge.f32.partialorder %v97, 0.0
  %vm114 = vcmp.ge.f32.partialorder %v98, 0.0
  %vm115 = vcmp.ge.f32.partialorder %v99, 0.0
  %vm116 = vcmp.ge.f32.partialorder %v100, 0.0
  %vm117 = vcmp.ge.f32.partialorder %v101, 0.0
  %vm118 = vcmp.ge.f32.partialorder %v102, 0.0
  %vm119 = vcmp.ge.f32.partialorder %v103, 0.0
  %vm120 = vcmp.ge.f32.partialorder %v104, 0.0
  %vm121 = vcmp.ge.f32.partialorder %v105, 0.0
  %vm122 = vcmp.ge.f32.partialorder %v106, 0.0
  %vm123 = vcmp.ge.f32.partialorder %v107, 0.0
  %vm124 = vcmp.ge.f32.partialorder %v108, 0.0
  %vm125 = vcmp.ge.f32.partialorder %v109, 0.0
  %vm126 = vcmp.ge.f32.partialorder %v110, 0.0
  %vm127 = vcmp.ge.f32.partialorder %v111, 0.0
  %vm128 = vcmp.ge.f32.partialorder %v112, 0.0
  %v129 = vmul.f32 %v97, 0.2
  %v130 = vmul.f32 %v98, 0.2
  %v131 = vmul.f32 %v99, 0.2
  %v132 = vmul.f32 %v100, 0.2
  %v133 = vmul.f32 %v101, 0.2
  %v134 = vmul.f32 %v102, 0.2
  %v135 = vmul.f32 %v103, 0.2
  %v136 = vmul.f32 %v104, 0.2
  %v137 = vmul.f32 %v105, 0.2
  %v138 = vmul.f32 %v106, 0.2
  %v139 = vmul.f32 %v107, 0.2
  %v140 = vmul.f32 %v108, 0.2
  %v141 = vmul.f32 %v109, 0.2
  %v142 = vmul.f32 %v110, 0.2
  %v143 = vmul.f32 %v111, 0.2
  %v144 = vmul.f32 %v112, 0.2
  %v145 = vsel %vm113, %v97, %v129
  %v146 = vsel %vm114, %v98, %v130
  %v147 = vsel %vm115, %v99, %v131
  %v148 = vsel %vm116, %v100, %v132
  %v149 = vsel %vm117, %v101, %v133
  %v150 = vsel %vm118, %v102, %v134
  %v151 = vsel %vm119, %v103, %v135
  %v152 = vsel %vm120, %v104, %v136
  %v153 = vsel %vm121, %v105, %v137
  %v154 = vsel %vm122, %v106, %v138
  %v155 = vsel %vm123, %v107, %v139
  %v156 = vsel %vm124, %v108, %v140
  %v157 = vsel %vm125, %v109, %v141
  %v158 = vsel %vm126, %v110, %v142
  %v159 = vsel %vm127, %v111, %v143
  %v160 = vsel %vm128, %v112, %v144
  %v161 = vld [vmem:[%s1] sm:$0xff]
  %v162 = vld [vmem:[%s1 + $0x8] sm:$0xff]
  %v163 = vld [vmem:[%s1 + $0x10] sm:$0xff]
  %v164 = vld [vmem:[%s1 + $0x18] sm:$0xff]
  %v165 = vld [vmem:[%s1 + $0x20] sm:$0xff]
  %v166 = vld [vmem:[%s1 + $0x28] sm:$0xff]
  %v167 = vld [vmem:[%s1 + $0x30] sm:$0xff]
  %v168 = vld [vmem:[%s1 + $0x38] sm:$0xff]
  %v169 = vld [vmem:[%s1 + $0x40] sm:$0xff]
  %v170 = vld [vmem:[%s1 + $0x48] sm:$0xff]
  %v171 = vld [vmem:[%s1 + $0x50] sm:$0xff]
  %v172 = vld [vmem:[%s1 + $0x58] sm:$0xff]
  %v173 = vld [vmem:[%s1 + $0x60] sm:$0xff]
  %v174 = vld [vmem:[%s1 + $0x68] sm:$0xff]
  %v175 = vld [vmem:[%s1 + $0x70] sm:$0xff]
  %v176 = vld [vmem:[%s1 + $0x78] sm:$0xff]
  %v177 = vld [vmem:[%s1 + $0x80] sm:$0xff]
  %v178 = vld [vmem:[%s1 + $0x88] sm:$0xff]
  %v179 = vld [vmem:[%s1 + $0x90] sm:$0xff]
  %v180 = vld [vmem:[%s1 + $0x98] sm:$0xff]
  %v181 = vld [vmem:[%s1 + $0xa0] sm:$0xff]
  %v182 = vld [vmem:[%s1 + $0xa8] sm:$0xff]
  %v183 = vld [vmem:[%s1 + $0xb0] sm:$0xff]
  %v184 = vld [vmem:[%s1 + $0xb8] sm:$0xff]
  %v185 = vld [vmem:[%s1 + $0xc0] sm:$0xff]
  %v186 = vld [vmem:[%s1 + $0xc8] sm:$0xff]
  %v187 = vld [vmem:[%s1 + $0xd0] sm:$0xff]
  %v188 = vld [vmem:[%s1 + $0xd8] sm:$0xff]
  %v189 = vld [vmem:[%s1 + $0xe0] sm:$0xff]
  %v190 = vld [vmem:[%s1 + $0xe8] sm:$0xff]
  %v191 = vld [vmem:[%s1 + $0xf0] sm:$0xff]
  %v192 = vld [vmem:[%s1 + $0xf8] sm:$0xff]
  %v193 = vld [vmem:[%s1 + $0x100] sm:$0xff]
  %v194 = vld [vmem:[%s1 + $0x108] sm:$0xff]
  %v195 = vld [vmem:[%s1 + $0x110] sm:$0xff]
  %v196 = vld [vmem:[%s1 + $0x118] sm:$0xff]
  %v197 = vld [vmem:[%s1 + $0x120] sm:$0xff]
  %v198 = vld [vmem:[%s1 + $0x128] sm:$0xff]
  %v199 = vld [vmem:[%s1 + $0x130] sm:$0xff]
  %v200 = vld [vmem:[%s1 + $0x138] sm:$0xff]
  %v201 = vld [vmem:[%s1 + $0x140] sm:$0xff]
  %v202 = vld [vmem:[%s1 + $0x148] sm:$0xff]
  %v203 = vld [vmem:[%s1 + $0x150] sm:$0xff]
  %v204 = vld [vmem:[%s1 + $0x158] sm:$0xff]
  %v205 = vld [vmem:[%s1 + $0x160] sm:$0xff]
  %v206 = vld [vmem:[%s1 + $0x168] sm:$0xff]
  %v207 = vld [vmem:[%s1 + $0x170] sm:$0xff]
  %v208 = vld [vmem:[%s1 + $0x178] sm:$0xff]
  %v209 = vld [vmem:[%s1 + $0x180] sm:$0xff]
  %v210 = vld [vmem:[%s1 + $0x188] sm:$0xff]
  %v211 = vld [vmem:[%s1 + $0x190] sm:$0xff]
  %v212 = vld [vmem:[%s1 + $0x198] sm:$0xff]
  %v213 = vld [vmem:[%s1 + $0x1a0] sm:$0xff]
  %v214 = vld [vmem:[%s1 + $0x1a8] sm:$0xff]
  %v215 = vld [vmem:[%s1 + $0x1b0] sm:$0xff]
  %v216 = vld [vmem:[%s1 + $0x1b8] sm:$0xff]
  %v217 = vld [vmem:[%s1 + $0x1c0] sm:$0xff]
  %v218 = vld [vmem:[%s1 + $0x1c8] sm:$0xff]
  %v219 = vld [vmem:[%s1 + $0x1d0] sm:$0xff]
  %v220 = vld [vmem:[%s1 + $0x1d8] sm:$0xff]
  %v221 = vld [vmem:[%s1 + $0x1e0] sm:$0xff]
  %v222 = vld [vmem:[%s1 + $0x1e8] sm:$0xff]
  %v223 = vld [vmem:[%s1 + $0x1f0] sm:$0xff]
  %v224 = vld [vmem:[%s1 + $0x1f8] sm:$0xff]
  %v225 = vld [vmem:[%s4] sm:$0x1]
  %v227 = vperm.slane %v225, 0
  %229 = vmatpush.msra.mxu0 %v176
  %230 = vmatpush.msra.mxu0 %v175
  %231 = vmatpush.msra.mxu0 %v174
  %232 = vmatpush.msra.mxu0 %v173
  %233 = vmatpush.msra.mxu0 %v172
  %234 = vmatpush.msra.mxu0 %v171
  %235 = vmatpush.msra.mxu0 %v170
  %236 = vmatpush.msra.mxu0 %v169
  %237 = vmatpush.msra.mxu0 %v168
  %238 = vmatpush.msra.mxu0 %v167
  %239 = vmatpush.msra.mxu0 %v166
  %240 = vmatpush.msra.mxu0 %v165
  %241 = vmatpush.msra.mxu0 %v164
  %242 = vmatpush.msra.mxu0 %v163
  %243 = vmatpush.msra.mxu0 %v162
  %244 = vmatpush.msra.mxu0 %v161
  %245 = vmatmul.f32.gmra.mxu0 %v145
  %v246 = vpop.f32.mrf.mxu0
  %v247 = vadd.f32 %v227, %v246
  %248 = vmatmul.f32.gmra.mxu0 %v149
  %v249 = vpop.f32.mrf.mxu0
  %v250 = vadd.f32 %v227, %v249
  %251 = vmatmul.f32.gmra.mxu0 %v153
  %v252 = vpop.f32.mrf.mxu0
  %v253 = vadd.f32 %v227, %v252
  %254 = vmatmul.f32.gmra.mxu0 %v157
  %v255 = vpop.f32.mrf.mxu0
  %v256 = vadd.f32 %v227, %v255
  %257 = vdwg.mxu0
  %258 = vmatpush.msra.mxu0 %v192
  %259 = vmatpush.msra.mxu0 %v191
  %260 = vmatpush.msra.mxu0 %v190
  %261 = vmatpush.msra.mxu0 %v189
  %262 = vmatpush.msra.mxu0 %v188
  %263 = vmatpush.msra.mxu0 %v187
  %264 = vmatpush.msra.mxu0 %v186
  %265 = vmatpush.msra.mxu0 %v185
  %266 = vmatpush.msra.mxu0 %v184
  %267 = vmatpush.msra.mxu0 %v183
  %268 = vmatpush.msra.mxu0 %v182
  %269 = vmatpush.msra.mxu0 %v181
  %270 = vmatpush.msra.mxu0 %v180
  %271 = vmatpush.msra.mxu0 %v179
  %272 = vmatpush.msra.mxu0 %v178
  %273 = vmatpush.msra.mxu0 %v177
  %274 = vmatmul.f32.gmra.mxu0 %v146
  %v275 = vpop.f32.mrf.mxu0
  %v276 = vadd.f32 %v247, %v275
  %277 = vmatmul.f32.gmra.mxu0 %v150
  %v278 = vpop.f32.mrf.mxu0
  %v279 = vadd.f32 %v250, %v278
  %280 = vmatmul.f32.gmra.mxu0 %v154
  %v281 = vpop.f32.mrf.mxu0
  %v282 = vadd.f32 %v253, %v281
  %283 = vmatmul.f32.gmra.mxu0 %v158
  %v284 = vpop.f32.mrf.mxu0
  %v285 = vadd.f32 %v256, %v284
  %286 = vdwg.mxu0
  %287 = vmatpush.msra.mxu0 %v208
  %288 = vmatpush.msra.mxu0 %v207
  %289 = vmatpush.msra.mxu0 %v206
  %290 = vmatpush.msra.mxu0 %v205
  %291 = vmatpush.msra.mxu0 %v204
  %292 = vmatpush.msra.mxu0 %v203
  %293 = vmatpush.msra.mxu0 %v202
  %294 = vmatpush.msra.mxu0 %v201
  %295 = vmatpush.msra.mxu0 %v200
  %296 = vmatpush.msra.mxu0 %v199
  %297 = vmatpush.msra.mxu0 %v198
  %298 = vmatpush.msra.mxu0 %v197
  %299 = vmatpush.msra.mxu0 %v196
  %300 = vmatpush.msra.mxu0 %v195
  %301 = vmatpush.msra.mxu0 %v194
  %302 = vmatpush.msra.mxu0 %v193
  %303 = vmatmul.f32.gmra.mxu0 %v147
  %v304 = vpop.f32.mrf.mxu0
  %v305 = vadd.f32 %v276, %v304
  %306 = vmatmul.f32.gmra.mxu0 %v151
  %v307 = vpop.f32.mrf.mxu0
  %v308 = vadd.f32 %v279, %v307
  %309 = vmatmul.f32.gmra.mxu0 %v155
  %v310 = vpop.f32.mrf.mxu0
  %v311 = vadd.f32 %v282, %v310
  %312 = vmatmul.f32.gmra.mxu0 %v159
  %v313 = vpop.f32.mrf.mxu0
  %v314 = vadd.f32 %v285, %v313
  %315 = vdwg.mxu0
  %316 = vmatpush.msra.mxu0 %v224
  %317 = vmatpush.msra.mxu0 %v223
  %318 = vmatpush.msra.mxu0 %v222
  %319 = vmatpush.msra.mxu0 %v221
  %320 = vmatpush.msra.mxu0 %v220
  %321 = vmatpush.msra.mxu0 %v219
  %322 = vmatpush.msra.mxu0 %v218
  %323 = vmatpush.msra.mxu0 %v217
  %324 = vmatpush.msra.mxu0 %v216
  %325 = vmatpush.msra.mxu0 %v215
  %326 = vmatpush.msra.mxu0 %v214
  %327 = vmatpush.msra.mxu0 %v213
  %328 = vmatpush.msra.mxu0 %v212
  %329 = vmatpush.msra.mxu0 %v211
  %330 = vmatpush.msra.mxu0 %v210
  %331 = vmatpush.msra.mxu0 %v209
  %332 = vmatmul.f32.gmra.mxu0 %v148
  %v333 = vpop.f32.mrf.mxu0
  %v334 = vadd.f32 %v305, %v333
  %335 = vmatmul.f32.gmra.mxu0 %v152
  %v336 = vpop.f32.mrf.mxu0
  %v337 = vadd.f32 %v308, %v336
  %338 = vmatmul.f32.gmra.mxu0 %v156
  %v339 = vpop.f32.mrf.mxu0
  %v340 = vadd.f32 %v311, %v339
  %341 = vmatmul.f32.gmra.mxu0 %v160
  %v342 = vpop.f32.mrf.mxu0
  %v343 = vadd.f32 %v314, %v342
  %344 = vdwg.mxu0
  %345 = vst [vmem:[%s5] sm:$0xff] %v334
  %346 = vst [vmem:[%s5 + $0x8] sm:$0xff] %v337
  %347 = vst [vmem:[%s5 + $0x10] sm:$0xff] %v340
  %348 = vst [vmem:[%s5 + $0x18] sm:$0xff] %v343
  %v349 = vlaneseq
  %v350 = vshrl.u32 %v349, 7
  %v351 = vadd.f32 %v334, %v337
  %v352 = vadd.f32 %v351, %v340
  %v353 = vadd.f32 %v352, %v343
  %v354 = vrot.slane %v353, 4
  %v355 = vadd.f32 %v353, %v354
  %v356 = vrot.slane %v355, 2
  %v357 = vadd.f32 %v355, %v356
  %v358 = vrot.slane %v357, 1
  %v359 = vadd.f32 %v357, %v358
  %v360 = vmul.f32 %v334, %v334
  %v361 = vmul.f32 %v337, %v337
  %v362 = vmul.f32 %v340, %v340
  %v363 = vmul.f32 %v343, %v343
  %v364 = vadd.f32 %v360, %v361
  %v365 = vadd.f32 %v364, %v362
  %v366 = vadd.f32 %v365, %v363
  %v367 = vrot.slane %v366, 4
  %v368 = vadd.f32 %v366, %v367
  %v369 = vrot.slane %v368, 2
  %v370 = vadd.f32 %v368, %v369
  %v371 = vrot.slane %v370, 1
  %v372 = vadd.f32 %v370, %v371
  %vm373 = vcmp.eq.s32.totalorder %v350, 0
  %v374 = vsel %vm373, %v359, 0.0
  %375 = vst [vmem:[%s37] sm:$0xff] %v374
  %v376 = vsel %vm373, %v372, 0.0
  %377 = vst [vmem:[%s43] sm:$0xff] %v376
  %s378 = sadd.s32 0, 0
  %p379 = scmp.lt.s32.totalorder %s378, 0
  %s380 = scalar_select %p379, %s378, 0
  %s381 = smul.addr %s380, 8
  %s382 = scalar_lea.vmem %s6, %s381
  %s383 = sadd.s32 0, 0
  %p384 = scmp.lt.s32.totalorder %s383, 0
  %s385 = scalar_select %p384, %s383, 0
  %s386 = smul.addr %s385, 8
  %s387 = scalar_lea.vmem %s7, %s386
  // Predicated region
  $region22: #{unet_generator_pallas.12} parent=0 // pred_check
    _
  $region23: #{unet_generator_pallas.12} parent=0 // pred_check_branch
    %389 = sbr.rel (0) target = $region25
  $region24: #{unet_generator_pallas.12} parent=0 // pred_region
    _
  $region25: #{unet_generator_pallas.12} parent=0 // pred_fallthru
    _
  // Predicated region
  $region26: #{unet_generator_pallas.12} parent=0 // pred_check
    _
  $region27: #{unet_generator_pallas.12} parent=0 // pred_check_branch
    %391 = sbr.rel (0) target = $region29
  $region28: #{unet_generator_pallas.12} parent=0 // pred_region
    %s392 = sadd.s32 0, 0
  $region29: #{unet_generator_pallas.12} parent=0 // pred_fallthru
    _
  // Predicated region
  $region30: #{unet_generator_pallas.12} parent=0 // pred_check
    _
  $region31: #{unet_generator_pallas.12} parent=0 // pred_check_branch
    %394 = sbr.rel (0) target = $region33
  $region32: #{unet_generator_pallas.12} parent=0 // pred_region
    %s395 = sadd.s32 0, 0
  $region33: #{unet_generator_pallas.12} parent=0 // pred_fallthru
    _
  // Predicated region
  $region34: #{unet_generator_pallas.12} parent=0 // pred_check
    _
  $region35: #{unet_generator_pallas.12} parent=0 // pred_check_branch
    %397 = sbr.rel (0) target = $region37
  $region36: #{unet_generator_pallas.12} parent=0 // pred_region
    _
  $region37: #{unet_generator_pallas.12} parent=0 // pred_fallthru
    _
  // Predicated region
  $region38: #{unet_generator_pallas.12} parent=0 // pred_check
    _
  $region39: #{unet_generator_pallas.12} parent=0 // pred_check_branch
    %399 = sbr.rel (0) target = $region41
  $region40: #{unet_generator_pallas.12} parent=0 // pred_region
    %s400 = sadd.s32 0, 0
    %p401 = scmp.lt.s32.totalorder %s400, 0
    %s402 = scalar_select %p401, %s400, 0
    %s403 = smul.addr %s402, 8
    %s404 = scalar_lea.vmem %s6, %s403
  $region41: #{unet_generator_pallas.12} parent=0 // pred_fallthru
    _
  // Predicated region
  $region42: #{unet_generator_pallas.12} parent=0 // pred_check
    _
  $region43: #{unet_generator_pallas.12} parent=0 // pred_check_branch
    %406 = sbr.rel (0) target = $region45
  $region44: #{unet_generator_pallas.12} parent=0 // pred_region
    %s407 = sadd.s32 0, 0
    %p408 = scmp.lt.s32.totalorder %s407, 0
    %s409 = scalar_select %p408, %s407, 0
    %s410 = smul.addr %s409, 8
    %s411 = scalar_lea.vmem %s7, %s410
  $region45: #{unet_generator_pallas.12} parent=0 // pred_fallthru
    _

// kernel: tile.91
$region0: #{tile.91}
  #allocation0 [shape = 's32[1]{0}', space=sflag, size = 0x4, scoped, tag = 'scoped memory for tile.91']
  %s0 = inlined_call_operand.vmem [shape: f32[64], index: 0, kind: input, shape index: {}]
  %s1 = inlined_call_operand.vmem [shape: f32[16,64], index: 1, kind: output, shape index: {}]
  // Predicated region
  $region2: #{tile.91} parent=0 // pred_check
    _
  $region3: #{tile.91} parent=0 // pred_check_branch
    %3 = sbr.rel (0) target = $region5
  $region4: #{tile.91} parent=0 // pred_region
    _
  $region5: #{tile.91} parent=0 // pred_fallthru
    _
  %v4 = vld [vmem:[%s0] ss:$0 sm:$0xff]
  %5 = vst [vmem:[%s1] sm:$0xff] %v4
  %s6 = scalar_lea.vmem %s1, 8
  %7 = vst [vmem:[%s6] sm:$0xff] %v4

// kernel: tile.96
$region0: #{tile.96}
  %s0 = inlined_call_operand.vmem [shape: f32[16,64], index: 0, kind: input, shape index: {}]
  %s1 = inlined_call_operand.vmem [shape: f32[1,1024], index: 1, kind: output, shape index: {}]
  $region1: #{tile.96} parent=0
    #allocation0 [shape = 'u8[32768]{0}', space=vmem, size = 0x8000, scoped, tag = 'scoped mem for output reshape']
    %v2 = vld [vmem:[%s0] ss:$2 sm:$0xff]
    %vm3 = vcmask 523264
    %4 = vst.msk [vmem:[#allocation0] ss:$8 sm:$0xf] %vm3, %v2
    %5 = vst.msk [vmem:[#allocation0] ss:$8 sm:$0xf0] %vm3, %v2
    %s6 = scalar_lea.vmem %s0, 1
    %v7 = vld [vmem:[%s6] ss:$2 sm:$0xff]
    %8 = vrot.lane.b32.xlu0 %v7, 64
    %v9 = vpop.permute.xlu0 %8
    %vm10 = vcmask 1048064
    %11 = vst.msk [vmem:[#allocation0] ss:$8 sm:$0xf] %vm10, %v9
    %12 = vst.msk [vmem:[#allocation0] ss:$8 sm:$0xf0] %vm10, %v9
    %s14 = ssub.s32 2, 1
    %v15 = vld [vmem:[#allocation0] sm:%s14]
    %s17 = ssub.s32 2, 1
    %18 = vst [vmem:[%s1] sm:%s17] %v15
    %s19 = scalar_lea.vmem [#allocation0], 8
    %v20 = vld [vmem:[%s19] sm:%s14]
    %s22 = ssub.s32 2, 1
    %s23 = scalar_lea.vmem %s1, 1
    %24 = vst [vmem:[%s23] sm:%s22] %v20
    %s25 = scalar_lea.vmem [#allocation0], 16
    %v26 = vld [vmem:[%s25] sm:%s14]
    %s28 = ssub.s32 2, 1
    %s29 = scalar_lea.vmem %s1, 2
    %30 = vst [vmem:[%s29] sm:%s28] %v26
    %s31 = scalar_lea.vmem [#allocation0], 24
    %v32 = vld [vmem:[%s31] sm:%s14]
    %s34 = ssub.s32 2, 1
    %s35 = scalar_lea.vmem %s1, 3
    %36 = vst [vmem:[%s35] sm:%s34] %v32
    %s37 = scalar_lea.vmem [#allocation0], 32
    %v38 = vld [vmem:[%s37] sm:%s14]
    %s40 = ssub.s32 2, 1
    %s41 = scalar_lea.vmem %s1, 4
    %42 = vst [vmem:[%s41] sm:%s40] %v38
    %s43 = scalar_lea.vmem [#allocation0], 40
    %v44 = vld [vmem:[%s43] sm:%s14]
    %s46 = ssub.s32 2, 1
    %s47 = scalar_lea.vmem %s1, 5
    %48 = vst [vmem:[%s47] sm:%s46] %v44
    %s49 = scalar_lea.vmem [#allocation0], 48
    %v50 = vld [vmem:[%s49] sm:%s14]
    %s52 = ssub.s32 2, 1
    %s53 = scalar_lea.vmem %s1, 6
    %54 = vst [vmem:[%s53] sm:%s52] %v50
    %s55 = scalar_lea.vmem [#allocation0], 56
    %v56 = vld [vmem:[%s55] sm:%s14]
    %s58 = ssub.s32 2, 1
    %s59 = scalar_lea.vmem %s1, 7
    %60 = vst [vmem:[%s59] sm:%s58] %v56

// kernel: tile.101
$region0: #{tile.101}
  #allocation0 [shape = 's32[1]{0}', space=sflag, size = 0x4, scoped, tag = 'scoped memory for tile.101']
  %s0 = inlined_call_operand.vmem [shape: f32[128], index: 0, kind: input, shape index: {}]
  %s1 = inlined_call_operand.vmem [shape: f32[16,128], index: 1, kind: output, shape index: {}]
  // Predicated region
  $region2: #{tile.101} parent=0 // pred_check
    _
  $region3: #{tile.101} parent=0 // pred_check_branch
    %3 = sbr.rel (0) target = $region5
  $region4: #{tile.101} parent=0 // pred_region
    _
  $region5: #{tile.101} parent=0 // pred_fallthru
    _
  %v4 = vld [vmem:[%s0] ss:$0 sm:$0xff]
  %5 = vst [vmem:[%s1] sm:$0xff] %v4
  %s6 = scalar_lea.vmem %s1, 8
  %7 = vst [vmem:[%s6] sm:$0xff] %v4

// kernel: unet_generator_pallas.13
$region0: #{unet_generator_pallas.13}
  #allocation0 [shape = 'u32[]', space=smem, size = 0x4, offset = 0x4, fixed_abs, tag = 'smem constant byte address 0x4 - core index']
  #allocation1 [shape = 'u32[72,128]{1,0:T(1,128)}', space=vmem, size = 0x9000, scoped, tag = 'internal scratch']
  %s0 = inlined_call_operand.vmem [shape: f32[1,8,1024], index: 0, kind: input, shape index: {}]
  %s1 = inlined_call_operand.vmem [shape: f32[1,1024,128], index: 1, kind: input, shape index: {}]
  %s2 = inlined_call_operand.vmem [shape: f32[1,1024], index: 2, kind: input, shape index: {}]
  %s3 = inlined_call_operand.vmem [shape: f32[1,1024], index: 3, kind: input, shape index: {}]
  %s4 = inlined_call_operand.vmem [shape: f32[1,128], index: 4, kind: input, shape index: {}]
  %s5 = inlined_call_operand.vmem [shape: f32[1,8,128], index: 5, kind: output, shape index: {0}]
  %s6 = inlined_call_operand.vmem [shape: f32[8,128], index: 6, kind: output, shape index: {1}]
  %s7 = inlined_call_operand.vmem [shape: f32[8,128], index: 7, kind: output, shape index: {2}]
  %8 = xla_tuple %s5, %s6, %s7
  %s9 = sld [smem:[#allocation0]]
  $region46: #{unet_generator_pallas.13} parent=0
    _
  %s11 = ssub.s32 1, %s9
  %s12 = scalar_select 0, %s11, %s9
  // Predicated region
  $region2: #{unet_generator_pallas.13} parent=0 // pred_check
    _
  $region3: #{unet_generator_pallas.13} parent=0 // pred_check_branch
    %14 = sbr.rel (0) target = $region5
  $region4: #{unet_generator_pallas.13} parent=0 // pred_region
    _
  $region5: #{unet_generator_pallas.13} parent=0 // pred_fallthru
    _
  // Predicated region
  $region6: #{unet_generator_pallas.13} parent=0 // pred_check
    _
  $region7: #{unet_generator_pallas.13} parent=0 // pred_check_branch
    %16 = sbr.rel (0) target = $region9
  $region8: #{unet_generator_pallas.13} parent=0 // pred_region
    _
  $region9: #{unet_generator_pallas.13} parent=0 // pred_fallthru
    _
  // Predicated region
  $region10: #{unet_generator_pallas.13} parent=0 // pred_check
    _
  $region11: #{unet_generator_pallas.13} parent=0 // pred_check_branch
    %18 = sbr.rel (0) target = $region13
  $region12: #{unet_generator_pallas.13} parent=0 // pred_region
    _
  $region13: #{unet_generator_pallas.13} parent=0 // pred_fallthru
    _
  // Predicated region
  $region14: #{unet_generator_pallas.13} parent=0 // pred_check
    _
  $region15: #{unet_generator_pallas.13} parent=0 // pred_check_branch
    %20 = sbr.rel (0) target = $region17
  $region16: #{unet_generator_pallas.13} parent=0 // pred_region
    _
  $region17: #{unet_generator_pallas.13} parent=0 // pred_fallthru
    _
  // Predicated region
  $region18: #{unet_generator_pallas.13} parent=0 // pred_check
    _
  $region19: #{unet_generator_pallas.13} parent=0 // pred_check_branch
    %22 = sbr.rel (0) target = $region21
  $region20: #{unet_generator_pallas.13} parent=0 // pred_region
    _
  $region21: #{unet_generator_pallas.13} parent=0 // pred_fallthru
    _
  %s23 = sadd.s32 0, 0
  %p24 = scmp.lt.s32.totalorder %s23, 0
  %s25 = scalar_select %p24, %s23, 0
  %s26 = smul.addr %s25, 8
  %s27 = scalar_lea.vmem %s6, %s26
  %s28 = sadd.s32 0, 0
  %p29 = scmp.lt.s32.totalorder %s28, 0
  %s30 = scalar_select %p29, %s28, 0
  %s31 = smul.addr %s30, 8
  %s32 = scalar_lea.vmem %s7, %s31
  %s33 = sadd.s32 0, 0
  %p34 = scmp.lt.s32.totalorder %s33, 0
  %s35 = scalar_select %p34, %s33, 0
  %s36 = smul.addr %s35, 8
  %s37 = scalar_lea.vmem %s6, %s36
  %s38 = sadd.s32 0, 0
  %s39 = sadd.s32 0, 0
  %p40 = scmp.lt.s32.totalorder %s39, 0
  %s41 = scalar_select %p40, %s39, 0
  %s42 = smul.addr %s41, 8
  %s43 = scalar_lea.vmem %s7, %s42
  %s44 = sadd.s32 0, 0
  %v45 = vld [vmem:[%s0] sm:$0xff]
  %v46 = vld [vmem:[%s0 + $0x8] sm:$0xff]
  %v47 = vld [vmem:[%s0 + $0x10] sm:$0xff]
  %v48 = vld [vmem:[%s0 + $0x18] sm:$0xff]
  %v49 = vld [vmem:[%s0 + $0x20] sm:$0xff]
  %v50 = vld [vmem:[%s0 + $0x28] sm:$0xff]
  %v51 = vld [vmem:[%s0 + $0x30] sm:$0xff]
  %v52 = vld [vmem:[%s0 + $0x38] sm:$0xff]
  %v53 = vld [vmem:[%s2] sm:$0xff]
  %v55 = vperm.slane %v53, 0
  %v56 = vperm.slane %v53, 1
  %v57 = vperm.slane %v53, 2
  %v58 = vperm.slane %v53, 3
  %v59 = vperm.slane %v53, 4
  %v60 = vperm.slane %v53, 5
  %v61 = vperm.slane %v53, 6
  %v62 = vperm.slane %v53, 7
  %v71 = vmul.f32 %v45, %v55
  %v72 = vmul.f32 %v46, %v56
  %v73 = vmul.f32 %v47, %v57
  %v74 = vmul.f32 %v48, %v58
  %v75 = vmul.f32 %v49, %v59
  %v76 = vmul.f32 %v50, %v60
  %v77 = vmul.f32 %v51, %v61
  %v78 = vmul.f32 %v52, %v62
  %v79 = vld [vmem:[%s3] sm:$0xff]
  %v81 = vperm.slane %v79, 0
  %v82 = vperm.slane %v79, 1
  %v83 = vperm.slane %v79, 2
  %v84 = vperm.slane %v79, 3
  %v85 = vperm.slane %v79, 4
  %v86 = vperm.slane %v79, 5
  %v87 = vperm.slane %v79, 6
  %v88 = vperm.slane %v79, 7
  %v97 = vadd.f32 %v71, %v81
  %v98 = vadd.f32 %v72, %v82
  %v99 = vadd.f32 %v73, %v83
  %v100 = vadd.f32 %v74, %v84
  %v101 = vadd.f32 %v75, %v85
  %v102 = vadd.f32 %v76, %v86
  %v103 = vadd.f32 %v77, %v87
  %v104 = vadd.f32 %v78, %v88
  %vm105 = vcmp.ge.f32.partialorder %v97, 0.0
  %vm106 = vcmp.ge.f32.partialorder %v98, 0.0
  %vm107 = vcmp.ge.f32.partialorder %v99, 0.0
  %vm108 = vcmp.ge.f32.partialorder %v100, 0.0
  %vm109 = vcmp.ge.f32.partialorder %v101, 0.0
  %vm110 = vcmp.ge.f32.partialorder %v102, 0.0
  %vm111 = vcmp.ge.f32.partialorder %v103, 0.0
  %vm112 = vcmp.ge.f32.partialorder %v104, 0.0
  %v113 = vmul.f32 %v97, 0.2
  %v114 = vmul.f32 %v98, 0.2
  %v115 = vmul.f32 %v99, 0.2
  %v116 = vmul.f32 %v100, 0.2
  %v117 = vmul.f32 %v101, 0.2
  %v118 = vmul.f32 %v102, 0.2
  %v119 = vmul.f32 %v103, 0.2
  %v120 = vmul.f32 %v104, 0.2
  %v121 = vsel %vm105, %v97, %v113
  %v122 = vsel %vm106, %v98, %v114
  %v123 = vsel %vm107, %v99, %v115
  %v124 = vsel %vm108, %v100, %v116
  %v125 = vsel %vm109, %v101, %v117
  %v126 = vsel %vm110, %v102, %v118
  %v127 = vsel %vm111, %v103, %v119
  %v128 = vsel %vm112, %v104, %v120
  %v129 = vld [vmem:[%s1] sm:$0xff]
  %v130 = vld [vmem:[%s1 + $0x8] sm:$0xff]
  %v131 = vld [vmem:[%s1 + $0x10] sm:$0xff]
  %v132 = vld [vmem:[%s1 + $0x18] sm:$0xff]
  %v133 = vld [vmem:[%s1 + $0x20] sm:$0xff]
  %v134 = vld [vmem:[%s1 + $0x28] sm:$0xff]
  %v135 = vld [vmem:[%s1 + $0x30] sm:$0xff]
  %v136 = vld [vmem:[%s1 + $0x38] sm:$0xff]
  %v137 = vld [vmem:[%s1 + $0x40] sm:$0xff]
  %v138 = vld [vmem:[%s1 + $0x48] sm:$0xff]
  %v139 = vld [vmem:[%s1 + $0x50] sm:$0xff]
  %v140 = vld [vmem:[%s1 + $0x58] sm:$0xff]
  %v141 = vld [vmem:[%s1 + $0x60] sm:$0xff]
  %v142 = vld [vmem:[%s1 + $0x68] sm:$0xff]
  %v143 = vld [vmem:[%s1 + $0x70] sm:$0xff]
  %v144 = vld [vmem:[%s1 + $0x78] sm:$0xff]
  %v145 = vld [vmem:[%s1 + $0x80] sm:$0xff]
  %v146 = vld [vmem:[%s1 + $0x88] sm:$0xff]
  %v147 = vld [vmem:[%s1 + $0x90] sm:$0xff]
  %v148 = vld [vmem:[%s1 + $0x98] sm:$0xff]
  %v149 = vld [vmem:[%s1 + $0xa0] sm:$0xff]
  %v150 = vld [vmem:[%s1 + $0xa8] sm:$0xff]
  %v151 = vld [vmem:[%s1 + $0xb0] sm:$0xff]
  %v152 = vld [vmem:[%s1 + $0xb8] sm:$0xff]
  %v153 = vld [vmem:[%s1 + $0xc0] sm:$0xff]
  %v154 = vld [vmem:[%s1 + $0xc8] sm:$0xff]
  %v155 = vld [vmem:[%s1 + $0xd0] sm:$0xff]
  %v156 = vld [vmem:[%s1 + $0xd8] sm:$0xff]
  %v157 = vld [vmem:[%s1 + $0xe0] sm:$0xff]
  %v158 = vld [vmem:[%s1 + $0xe8] sm:$0xff]
  %v159 = vld [vmem:[%s1 + $0xf0] sm:$0xff]
  %v160 = vld [vmem:[%s1 + $0xf8] sm:$0xff]
  %v161 = vld [vmem:[%s1 + $0x100] sm:$0xff]
  %v162 = vld [vmem:[%s1 + $0x108] sm:$0xff]
  %v163 = vld [vmem:[%s1 + $0x110] sm:$0xff]
  %v164 = vld [vmem:[%s1 + $0x118] sm:$0xff]
  %v165 = vld [vmem:[%s1 + $0x120] sm:$0xff]
  %v166 = vld [vmem:[%s1 + $0x128] sm:$0xff]
  %v167 = vld [vmem:[%s1 + $0x130] sm:$0xff]
  %v168 = vld [vmem:[%s1 + $0x138] sm:$0xff]
  %v169 = vld [vmem:[%s1 + $0x140] sm:$0xff]
  %v170 = vld [vmem:[%s1 + $0x148] sm:$0xff]
  %v171 = vld [vmem:[%s1 + $0x150] sm:$0xff]
  %v172 = vld [vmem:[%s1 + $0x158] sm:$0xff]
  %v173 = vld [vmem:[%s1 + $0x160] sm:$0xff]
  %v174 = vld [vmem:[%s1 + $0x168] sm:$0xff]
  %v175 = vld [vmem:[%s1 + $0x170] sm:$0xff]
  %v176 = vld [vmem:[%s1 + $0x178] sm:$0xff]
  %v177 = vld [vmem:[%s1 + $0x180] sm:$0xff]
  %v178 = vld [vmem:[%s1 + $0x188] sm:$0xff]
  %v179 = vld [vmem:[%s1 + $0x190] sm:$0xff]
  %v180 = vld [vmem:[%s1 + $0x198] sm:$0xff]
  %v181 = vld [vmem:[%s1 + $0x1a0] sm:$0xff]
  %v182 = vld [vmem:[%s1 + $0x1a8] sm:$0xff]
  %v183 = vld [vmem:[%s1 + $0x1b0] sm:$0xff]
  %v184 = vld [vmem:[%s1 + $0x1b8] sm:$0xff]
  %v185 = vld [vmem:[%s1 + $0x1c0] sm:$0xff]
  %v186 = vld [vmem:[%s1 + $0x1c8] sm:$0xff]
  %v187 = vld [vmem:[%s1 + $0x1d0] sm:$0xff]
  %v188 = vld [vmem:[%s1 + $0x1d8] sm:$0xff]
  %v189 = vld [vmem:[%s1 + $0x1e0] sm:$0xff]
  %v190 = vld [vmem:[%s1 + $0x1e8] sm:$0xff]
  %v191 = vld [vmem:[%s1 + $0x1f0] sm:$0xff]
  %v192 = vld [vmem:[%s1 + $0x1f8] sm:$0xff]
  %v193 = vld [vmem:[%s1 + $0x200] sm:$0xff]
  %v194 = vld [vmem:[%s1 + $0x208] sm:$0xff]
  %v195 = vld [vmem:[%s1 + $0x210] sm:$0xff]
  %v196 = vld [vmem:[%s1 + $0x218] sm:$0xff]
  %v197 = vld [vmem:[%s1 + $0x220] sm:$0xff]
  %v198 = vld [vmem:[%s1 + $0x228] sm:$0xff]
  %v199 = vld [vmem:[%s1 + $0x230] sm:$0xff]
  %v200 = vld [vmem:[%s1 + $0x238] sm:$0xff]
  %v201 = vld [vmem:[%s1 + $0x240] sm:$0xff]
  %v202 = vld [vmem:[%s1 + $0x248] sm:$0xff]
  %v203 = vld [vmem:[%s1 + $0x250] sm:$0xff]
  %v204 = vld [vmem:[%s1 + $0x258] sm:$0xff]
  %v205 = vld [vmem:[%s1 + $0x260] sm:$0xff]
  %v206 = vld [vmem:[%s1 + $0x268] sm:$0xff]
  %v207 = vld [vmem:[%s1 + $0x270] sm:$0xff]
  %v208 = vld [vmem:[%s1 + $0x278] sm:$0xff]
  %v209 = vld [vmem:[%s1 + $0x280] sm:$0xff]
  %v210 = vld [vmem:[%s1 + $0x288] sm:$0xff]
  %v211 = vld [vmem:[%s1 + $0x290] sm:$0xff]
  %v212 = vld [vmem:[%s1 + $0x298] sm:$0xff]
  %v213 = vld [vmem:[%s1 + $0x2a0] sm:$0xff]
  %v214 = vld [vmem:[%s1 + $0x2a8] sm:$0xff]
  %v215 = vld [vmem:[%s1 + $0x2b0] sm:$0xff]
  %v216 = vld [vmem:[%s1 + $0x2b8] sm:$0xff]
  %v217 = vld [vmem:[%s1 + $0x2c0] sm:$0xff]
  %v218 = vld [vmem:[%s1 + $0x2c8] sm:$0xff]
  %v219 = vld [vmem:[%s1 + $0x2d0] sm:$0xff]
  %v220 = vld [vmem:[%s1 + $0x2d8] sm:$0xff]
  %v221 = vld [vmem:[%s1 + $0x2e0] sm:$0xff]
  %v222 = vld [vmem:[%s1 + $0x2e8] sm:$0xff]
  %v223 = vld [vmem:[%s1 + $0x2f0] sm:$0xff]
  %v224 = vld [vmem:[%s1 + $0x2f8] sm:$0xff]
  %v225 = vld [vmem:[%s1 + $0x300] sm:$0xff]
  %v226 = vld [vmem:[%s1 + $0x308] sm:$0xff]
  %v227 = vld [vmem:[%s1 + $0x310] sm:$0xff]
  %v228 = vld [vmem:[%s1 + $0x318] sm:$0xff]
  %v229 = vld [vmem:[%s1 + $0x320] sm:$0xff]
  %v230 = vld [vmem:[%s1 + $0x328] sm:$0xff]
  %v231 = vld [vmem:[%s1 + $0x330] sm:$0xff]
  %v232 = vld [vmem:[%s1 + $0x338] sm:$0xff]
  %v233 = vld [vmem:[%s1 + $0x340] sm:$0xff]
  %v234 = vld [vmem:[%s1 + $0x348] sm:$0xff]
  %v235 = vld [vmem:[%s1 + $0x350] sm:$0xff]
  %v236 = vld [vmem:[%s1 + $0x358] sm:$0xff]
  %v237 = vld [vmem:[%s1 + $0x360] sm:$0xff]
  %v238 = vld [vmem:[%s1 + $0x368] sm:$0xff]
  %v239 = vld [vmem:[%s1 + $0x370] sm:$0xff]
  %v240 = vld [vmem:[%s1 + $0x378] sm:$0xff]
  %v241 = vld [vmem:[%s1 + $0x380] sm:$0xff]
  %v242 = vld [vmem:[%s1 + $0x388] sm:$0xff]
  %v243 = vld [vmem:[%s1 + $0x390] sm:$0xff]
  %v244 = vld [vmem:[%s1 + $0x398] sm:$0xff]
  %v245 = vld [vmem:[%s1 + $0x3a0] sm:$0xff]
  %v246 = vld [vmem:[%s1 + $0x3a8] sm:$0xff]
  %v247 = vld [vmem:[%s1 + $0x3b0] sm:$0xff]
  %v248 = vld [vmem:[%s1 + $0x3b8] sm:$0xff]
  %v249 = vld [vmem:[%s1 + $0x3c0] sm:$0xff]
  %v250 = vld [vmem:[%s1 + $0x3c8] sm:$0xff]
  %v251 = vld [vmem:[%s1 + $0x3d0] sm:$0xff]
  %v252 = vld [vmem:[%s1 + $0x3d8] sm:$0xff]
  %v253 = vld [vmem:[%s1 + $0x3e0] sm:$0xff]
  %v254 = vld [vmem:[%s1 + $0x3e8] sm:$0xff]
  %v255 = vld [vmem:[%s1 + $0x3f0] sm:$0xff]
  %v256 = vld [vmem:[%s1 + $0x3f8] sm:$0xff]
  %v257 = vld [vmem:[%s4] sm:$0x1]
  %v259 = vperm.slane %v257, 0
  %261 = vmatpush.msra.mxu0 %v144
  %262 = vmatpush.msra.mxu0 %v143
  %263 = vmatpush.msra.mxu0 %v142
  %264 = vmatpush.msra.mxu0 %v141
  %265 = vmatpush.msra.mxu0 %v140
  %266 = vmatpush.msra.mxu0 %v139
  %267 = vmatpush.msra.mxu0 %v138
  %268 = vmatpush.msra.mxu0 %v137
  %269 = vmatpush.msra.mxu0 %v136
  %270 = vmatpush.msra.mxu0 %v135
  %271 = vmatpush.msra.mxu0 %v134
  %272 = vmatpush.msra.mxu0 %v133
  %273 = vmatpush.msra.mxu0 %v132
  %274 = vmatpush.msra.mxu0 %v131
  %275 = vmatpush.msra.mxu0 %v130
  %276 = vmatpush.msra.mxu0 %v129
  %277 = vmatmul.f32.gmra.mxu0 %v121
  %v278 = vpop.f32.mrf.mxu0
  %v279 = vadd.f32 %v259, %v278
  %280 = vdwg.mxu0
  %281 = vmatpush.msra.mxu0 %v160
  %282 = vmatpush.msra.mxu0 %v159
  %283 = vmatpush.msra.mxu0 %v158
  %284 = vmatpush.msra.mxu0 %v157
  %285 = vmatpush.msra.mxu0 %v156
  %286 = vmatpush.msra.mxu0 %v155
  %287 = vmatpush.msra.mxu0 %v154
  %288 = vmatpush.msra.mxu0 %v153
  %289 = vmatpush.msra.mxu0 %v152
  %290 = vmatpush.msra.mxu0 %v151
  %291 = vmatpush.msra.mxu0 %v150
  %292 = vmatpush.msra.mxu0 %v149
  %293 = vmatpush.msra.mxu0 %v148
  %294 = vmatpush.msra.mxu0 %v147
  %295 = vmatpush.msra.mxu0 %v146
  %296 = vmatpush.msra.mxu0 %v145
  %297 = vmatmul.f32.gmra.mxu0 %v122
  %v298 = vpop.f32.mrf.mxu0
  %v299 = vadd.f32 %v279, %v298
  %300 = vdwg.mxu0
  %301 = vmatpush.msra.mxu0 %v176
  %302 = vmatpush.msra.mxu0 %v175
  %303 = vmatpush.msra.mxu0 %v174
  %304 = vmatpush.msra.mxu0 %v173
  %305 = vmatpush.msra.mxu0 %v172
  %306 = vmatpush.msra.mxu0 %v171
  %307 = vmatpush.msra.mxu0 %v170
  %308 = vmatpush.msra.mxu0 %v169
  %309 = vmatpush.msra.mxu0 %v168
  %310 = vmatpush.msra.mxu0 %v167
  %311 = vmatpush.msra.mxu0 %v166
  %312 = vmatpush.msra.mxu0 %v165
  %313 = vmatpush.msra.mxu0 %v164
  %314 = vmatpush.msra.mxu0 %v163
  %315 = vmatpush.msra.mxu0 %v162
  %316 = vmatpush.msra.mxu0 %v161
  %317 = vmatmul.f32.gmra.mxu0 %v123
  %v318 = vpop.f32.mrf.mxu0
  %v319 = vadd.f32 %v299, %v318
  %320 = vdwg.mxu0
  %321 = vmatpush.msra.mxu0 %v192
  %322 = vmatpush.msra.mxu0 %v191
  %323 = vmatpush.msra.mxu0 %v190
  %324 = vmatpush.msra.mxu0 %v189
  %325 = vmatpush.msra.mxu0 %v188
  %326 = vmatpush.msra.mxu0 %v187
  %327 = vmatpush.msra.mxu0 %v186
  %328 = vmatpush.msra.mxu0 %v185
  %329 = vmatpush.msra.mxu0 %v184
  %330 = vmatpush.msra.mxu0 %v183
  %331 = vmatpush.msra.mxu0 %v182
  %332 = vmatpush.msra.mxu0 %v181
  %333 = vmatpush.msra.mxu0 %v180
  %334 = vmatpush.msra.mxu0 %v179
  %335 = vmatpush.msra.mxu0 %v178
  %336 = vmatpush.msra.mxu0 %v177
  %337 = vmatmul.f32.gmra.mxu0 %v124
  %v338 = vpop.f32.mrf.mxu0
  %v339 = vadd.f32 %v319, %v338
  %340 = vdwg.mxu0
  %341 = vmatpush.msra.mxu0 %v208
  %342 = vmatpush.msra.mxu0 %v207
  %343 = vmatpush.msra.mxu0 %v206
  %344 = vmatpush.msra.mxu0 %v205
  %345 = vmatpush.msra.mxu0 %v204
  %346 = vmatpush.msra.mxu0 %v203
  %347 = vmatpush.msra.mxu0 %v202
  %348 = vmatpush.msra.mxu0 %v201
  %349 = vmatpush.msra.mxu0 %v200
  %350 = vmatpush.msra.mxu0 %v199
  %351 = vmatpush.msra.mxu0 %v198
  %352 = vmatpush.msra.mxu0 %v197
  %353 = vmatpush.msra.mxu0 %v196
  %354 = vmatpush.msra.mxu0 %v195
  %355 = vmatpush.msra.mxu0 %v194
  %356 = vmatpush.msra.mxu0 %v193
  %357 = vmatmul.f32.gmra.mxu0 %v125
  %v358 = vpop.f32.mrf.mxu0
  %v359 = vadd.f32 %v339, %v358
  %360 = vdwg.mxu0
  %361 = vmatpush.msra.mxu0 %v224
  %362 = vmatpush.msra.mxu0 %v223
  %363 = vmatpush.msra.mxu0 %v222
  %364 = vmatpush.msra.mxu0 %v221
  %365 = vmatpush.msra.mxu0 %v220
  %366 = vmatpush.msra.mxu0 %v219
  %367 = vmatpush.msra.mxu0 %v218
  %368 = vmatpush.msra.mxu0 %v217
  %369 = vmatpush.msra.mxu0 %v216
  %370 = vmatpush.msra.mxu0 %v215
  %371 = vmatpush.msra.mxu0 %v214
  %372 = vmatpush.msra.mxu0 %v213
  %373 = vmatpush.msra.mxu0 %v212
  %374 = vmatpush.msra.mxu0 %v211
  %375 = vmatpush.msra.mxu0 %v210
  %376 = vmatpush.msra.mxu0 %v209
  %377 = vmatmul.f32.gmra.mxu0 %v126
  %v378 = vpop.f32.mrf.mxu0
  %v379 = vadd.f32 %v359, %v378
  %380 = vdwg.mxu0
  %381 = vmatpush.msra.mxu0 %v240
  %382 = vmatpush.msra.mxu0 %v239
  %383 = vmatpush.msra.mxu0 %v238
  %384 = vmatpush.msra.mxu0 %v237
  %385 = vmatpush.msra.mxu0 %v236
  %386 = vmatpush.msra.mxu0 %v235
  %387 = vmatpush.msra.mxu0 %v234
  %388 = vmatpush.msra.mxu0 %v233
  %389 = vmatpush.msra.mxu0 %v232
  %390 = vmatpush.msra.mxu0 %v231
  %391 = vmatpush.msra.mxu0 %v230
  %392 = vmatpush.msra.mxu0 %v229
  %393 = vmatpush.msra.mxu0 %v228
  %394 = vmatpush.msra.mxu0 %v227
  %395 = vmatpush.msra.mxu0 %v226
  %396 = vmatpush.msra.mxu0 %v225
  %397 = vmatmul.f32.gmra.mxu0 %v127
  %v398 = vpop.f32.mrf.mxu0
  %v399 = vadd.f32 %v379, %v398
  %400 = vdwg.mxu0
  %401 = vmatpush.msra.mxu0 %v256
  %402 = vmatpush.msra.mxu0 %v255
  %403 = vmatpush.msra.mxu0 %v254
  %404 = vmatpush.msra.mxu0 %v253
  %405 = vmatpush.msra.mxu0 %v252
  %406 = vmatpush.msra.mxu0 %v251
  %407 = vmatpush.msra.mxu0 %v250
  %408 = vmatpush.msra.mxu0 %v249
  %409 = vmatpush.msra.mxu0 %v248
  %410 = vmatpush.msra.mxu0 %v247
  %411 = vmatpush.msra.mxu0 %v246
  %412 = vmatpush.msra.mxu0 %v245
  %413 = vmatpush.msra.mxu0 %v244
  %414 = vmatpush.msra.mxu0 %v243
  %415 = vmatpush.msra.mxu0 %v242
  %416 = vmatpush.msra.mxu0 %v241
  %417 = vmatmul.f32.gmra.mxu0 %v128
  %v418 = vpop.f32.mrf.mxu0
  %v419 = vadd.f32 %v399, %v418
  %420 = vdwg.mxu0
  %421 = vst [vmem:[%s5] sm:$0xff] %v419
  %v422 = vlaneseq
  %v423 = vshrl.u32 %v422, 7
  %v424 = vrot.slane %v419, 4
  %v425 = vadd.f32 %v419, %v424
  %v426 = vrot.slane %v425, 2
  %v427 = vadd.f32 %v425, %v426
  %v428 = vrot.slane %v427, 1
  %v429 = vadd.f32 %v427, %v428
  %v430 = vmul.f32 %v419, %v419
  %v431 = vrot.slane %v430, 4
  %v432 = vadd.f32 %v430, %v431
  %v433 = vrot.slane %v432, 2
  %v434 = vadd.f32 %v432, %v433
  %v435 = vrot.slane %v434, 1
  %v436 = vadd.f32 %v434, %v435
  %vm437 = vcmp.eq.s32.totalorder %v423, 0
  %v438 = vsel %vm437, %v429, 0.0
  %439 = vst [vmem:[%s37] sm:$0xff] %v438
  %v440 = vsel %vm437, %v436, 0.0
  %441 = vst [vmem:[%s43] sm:$0xff] %v440
  %s442 = sadd.s32 0, 0
  %p443 = scmp.lt.s32.totalorder %s442, 0
  %s444 = scalar_select %p443, %s442, 0
  %s445 = smul.addr %s444, 8
  %s446 = scalar_lea.vmem %s6, %s445
  %s447 = sadd.s32 0, 0
  %p448 = scmp.lt.s32.totalorder %s447, 0
  %s449 = scalar_select %p448, %s447, 0
  %s450 = smul.addr %s449, 8
  %s451 = scalar_lea.vmem %s7, %s450
  // Predicated region
  $region22: #{unet_generator_pallas.13} parent=0 // pred_check
    _
  $region23: #{unet_generator_pallas.13} parent=0 // pred_check_branch
    %453 = sbr.rel (0) target = $region25
  $region24: #{unet_generator_pallas.13} parent=0 // pred_region
    _
  $region25: #{unet_generator_pallas.13} parent=0 // pred_fallthru
    _
  // Predicated region
  $region26: #{unet_generator_pallas.13} parent=0 // pred_check
    _
  $region27: #{unet_generator_pallas.13} parent=0 // pred_check_branch
    %455 = sbr.rel (0) target = $region29
  $region28: #{unet_generator_pallas.13} parent=0 // pred_region
    %s456 = sadd.s32 0, 0
  $region29: #{unet_generator_pallas.13} parent=0 // pred_fallthru
    _
  // Predicated region
  $region30: #{unet_generator_pallas.13} parent=0 // pred_check
    _
  $region31: #{unet_generator_pallas.13} parent=0 // pred_check_branch
    %458 = sbr.rel (0) target = $region33
  $region32: #{unet_generator_pallas.13} parent=0 // pred_region
    %s459 = sadd.s32 0, 0
  $region33: #{unet_generator_pallas.13} parent=0 // pred_fallthru
    _
  // Predicated region
  $region34: #{unet_generator_pallas.13} parent=0 // pred_check
    _
  $region35: #{unet_generator_pallas.13} parent=0 // pred_check_branch
    %461 = sbr.rel (0) target = $region37
  $region36: #{unet_generator_pallas.13} parent=0 // pred_region
    _
  $region37: #{unet_generator_pallas.13} parent=0 // pred_fallthru
    _
  // Predicated region
  $region38: #{unet_generator_pallas.13} parent=0 // pred_check
    _
  $region39: #{unet_generator_pallas.13} parent=0 // pred_check_branch
    %463 = sbr.rel (0) target = $region41
  $region40: #{unet_generator_pallas.13} parent=0 // pred_region
    %s464 = sadd.s32 0, 0
    %p465 = scmp.lt.s32.totalorder %s464, 0
    %s466 = scalar_select %p465, %s464, 0
    %s467 = smul.addr %s466, 8
    %s468 = scalar_lea.vmem %s6, %s467
  $region41: #{unet_generator_pallas.13} parent=0 // pred_fallthru
    _
  // Predicated region
  $region42: #{unet_generator_pallas.13} parent=0 // pred_check
    _
  $region43: #{unet_generator_pallas.13} parent=0 // pred_check_branch
    %470 = sbr.rel (0) target = $region45
  $region44: #{unet_generator_pallas.13} parent=0 // pred_region
    %s471 = sadd.s32 0, 0
    %p472 = scmp.lt.s32.totalorder %s471, 0
    %s473 = scalar_select %p472, %s471, 0
    %s474 = smul.addr %s473, 8
    %s475 = scalar_lea.vmem %s7, %s474
  $region45: #{unet_generator_pallas.13} parent=0 // pred_fallthru
    _

// kernel: unet_generator_pallas.14
$region0: #{unet_generator_pallas.14}
  #allocation0 [shape = 'u32[]', space=smem, size = 0x4, offset = 0x4, fixed_abs, tag = 'smem constant byte address 0x4 - core index']
  #allocation1 [shape = 'u32[72,128]{1,0:T(1,128)}', space=vmem, size = 0x9000, scoped, tag = 'internal scratch']
  %s0 = inlined_call_operand.vmem [shape: f32[1,2,2048], index: 0, kind: input, shape index: {}]
  %s1 = inlined_call_operand.vmem [shape: f32[1,2048,128], index: 1, kind: input, shape index: {}]
  %s2 = inlined_call_operand.vmem [shape: f32[1,2048], index: 2, kind: input, shape index: {}]
  %s3 = inlined_call_operand.vmem [shape: f32[1,2048], index: 3, kind: input, shape index: {}]
  %s4 = inlined_call_operand.vmem [shape: f32[1,128], index: 4, kind: input, shape index: {}]
  %s5 = inlined_call_operand.vmem [shape: f32[1,2,128], index: 5, kind: output, shape index: {}]
  %s6 = sld [smem:[#allocation0]]
  $region30: #{unet_generator_pallas.14} parent=0
    _
  %s8 = ssub.s32 1, %s6
  %s9 = scalar_select 0, %s8, %s6
  // Predicated region
  $region2: #{unet_generator_pallas.14} parent=0 // pred_check
    _
  $region3: #{unet_generator_pallas.14} parent=0 // pred_check_branch
    %11 = sbr.rel (0) target = $region5
  $region4: #{unet_generator_pallas.14} parent=0 // pred_region
    _
  $region5: #{unet_generator_pallas.14} parent=0 // pred_fallthru
    _
  // Predicated region
  $region6: #{unet_generator_pallas.14} parent=0 // pred_check
    _
  $region7: #{unet_generator_pallas.14} parent=0 // pred_check_branch
    %13 = sbr.rel (0) target = $region9
  $region8: #{unet_generator_pallas.14} parent=0 // pred_region
    _
  $region9: #{unet_generator_pallas.14} parent=0 // pred_fallthru
    _
  // Predicated region
  $region10: #{unet_generator_pallas.14} parent=0 // pred_check
    _
  $region11: #{unet_generator_pallas.14} parent=0 // pred_check_branch
    %15 = sbr.rel (0) target = $region13
  $region12: #{unet_generator_pallas.14} parent=0 // pred_region
    _
  $region13: #{unet_generator_pallas.14} parent=0 // pred_fallthru
    _
  // Predicated region
  $region14: #{unet_generator_pallas.14} parent=0 // pred_check
    _
  $region15: #{unet_generator_pallas.14} parent=0 // pred_check_branch
    %17 = sbr.rel (0) target = $region17
  $region16: #{unet_generator_pallas.14} parent=0 // pred_region
    _
  $region17: #{unet_generator_pallas.14} parent=0 // pred_fallthru
    _
  // Predicated region
  $region18: #{unet_generator_pallas.14} parent=0 // pred_check
    _
  $region19: #{unet_generator_pallas.14} parent=0 // pred_check_branch
    %19 = sbr.rel (0) target = $region21
  $region20: #{unet_generator_pallas.14} parent=0 // pred_region
    _
  $region21: #{unet_generator_pallas.14} parent=0 // pred_fallthru
    _
  %v20 = vld [vmem:[%s0] sm:$0xff]
  %v21 = vld [vmem:[%s0 + $0x8] sm:$0xff]
  %v22 = vld [vmem:[%s0 + $0x10] sm:$0xff]
  %v23 = vld [vmem:[%s0 + $0x18] sm:$0xff]
  %v24 = vld [vmem:[%s2] sm:$0xff]
  %v25 = vld [vmem:[%s2 + $0x8] sm:$0xff]
  %v28 = vperm.slane %v24, 0
  %v29 = vperm.slane %v24, 1
  %v30 = vperm.slane %v24, 2
  %v31 = vperm.slane %v24, 3
  %v32 = vperm.slane %v24, 4
  %v33 = vperm.slane %v24, 5
  %v34 = vperm.slane %v24, 6
  %v35 = vperm.slane %v24, 7
  %v36 = vperm.slane %v25, 0
  %v37 = vperm.slane %v25, 1
  %v38 = vperm.slane %v25, 2
  %v39 = vperm.slane %v25, 3
  %v40 = vperm.slane %v25, 4
  %v41 = vperm.slane %v25, 5
  %v42 = vperm.slane %v25, 6
  %v43 = vperm.slane %v25, 7
  %v44 = vrot.slane %v29, 6
  %v45 = vrot.slane %v30, 4
  %v46 = vrot.slane %v31, 2
  %v47 = vrot.slane %v33, 6
  %v48 = vrot.slane %v34, 4
  %v49 = vrot.slane %v35, 2
  %v50 = vrot.slane %v37, 6
  %v51 = vrot.slane %v38, 4
  %v52 = vrot.slane %v39, 2
  %v53 = vrot.slane %v41, 6
  %v54 = vrot.slane %v42, 4
  %v55 = vrot.slane %v43, 2
  %vm56 = vcmask 1041408
  %v57 = vsel %vm56, %v28, %v44
  %vm58 = vcmask 1045508
  %v59 = vsel %vm58, %v45, %v46
  %vm60 = vcmask 1043456
  %v61 = vsel %vm60, %v57, %v59
  %v62 = vsel %vm56, %v32, %v47
  %v63 = vsel %vm58, %v48, %v49
  %v64 = vsel %vm60, %v62, %v63
  %v65 = vsel %vm56, %v36, %v50
  %v66 = vsel %vm58, %v51, %v52
  %v67 = vsel %vm60, %v65, %v66
  %v68 = vsel %vm56, %v40, %v53
  %v69 = vsel %vm58, %v54, %v55
  %v70 = vsel %vm60, %v68, %v69
  %v75 = vmul.f32 %v20, %v61
  %v76 = vmul.f32 %v21, %v64
  %v77 = vmul.f32 %v22, %v67
  %v78 = vmul.f32 %v23, %v70
  %v79 = vld [vmem:[%s3] sm:$0xff]
  %v80 = vld [vmem:[%s3 + $0x8] sm:$0xff]
  %v83 = vperm.slane %v79, 0
  %v84 = vperm.slane %v79, 1
  %v85 = vperm.slane %v79, 2
  %v86 = vperm.slane %v79, 3
  %v87 = vperm.slane %v79, 4
  %v88 = vperm.slane %v79, 5
  %v89 = vperm.slane %v79, 6
  %v90 = vperm.slane %v79, 7
  %v91 = vperm.slane %v80, 0
  %v92 = vperm.slane %v80, 1
  %v93 = vperm.slane %v80, 2
  %v94 = vperm.slane %v80, 3
  %v95 = vperm.slane %v80, 4
  %v96 = vperm.slane %v80, 5
  %v97 = vperm.slane %v80, 6
  %v98 = vperm.slane %v80, 7
  %v99 = vrot.slane %v84, 6
  %v100 = vrot.slane %v85, 4
  %v101 = vrot.slane %v86, 2
  %v102 = vrot.slane %v88, 6
  %v103 = vrot.slane %v89, 4
  %v104 = vrot.slane %v90, 2
  %v105 = vrot.slane %v92, 6
  %v106 = vrot.slane %v93, 4
  %v107 = vrot.slane %v94, 2
  %v108 = vrot.slane %v96, 6
  %v109 = vrot.slane %v97, 4
  %v110 = vrot.slane %v98, 2
  %v111 = vsel %vm56, %v83, %v99
  %v112 = vsel %vm58, %v100, %v101
  %v113 = vsel %vm60, %v111, %v112
  %v114 = vsel %vm56, %v87, %v102
  %v115 = vsel %vm58, %v103, %v104
  %v116 = vsel %vm60, %v114, %v115
  %v117 = vsel %vm56, %v91, %v105
  %v118 = vsel %vm58, %v106, %v107
  %v119 = vsel %vm60, %v117, %v118
  %v120 = vsel %vm56, %v95, %v108
  %v121 = vsel %vm58, %v109, %v110
  %v122 = vsel %vm60, %v120, %v121
  %v127 = vadd.f32 %v75, %v113
  %v128 = vadd.f32 %v76, %v116
  %v129 = vadd.f32 %v77, %v119
  %v130 = vadd.f32 %v78, %v122
  %vm131 = vcmp.ge.f32.partialorder %v127, 0.0
  %vm132 = vcmp.ge.f32.partialorder %v128, 0.0
  %vm133 = vcmp.ge.f32.partialorder %v129, 0.0
  %vm134 = vcmp.ge.f32.partialorder %v130, 0.0
  %v135 = vmul.f32 %v127, 0.2
  %v136 = vmul.f32 %v128, 0.2
  %v137 = vmul.f32 %v129, 0.2
  %v138 = vmul.f32 %v130, 0.2
  %v139 = vsel %vm131, %v127, %v135
  %v140 = vsel %vm132, %v128, %v136
  %v141 = vsel %vm133, %v129, %v137
  %v142 = vsel %vm134, %v130, %v138
  %v143 = vld [vmem:[%s1] sm:$0xff]
  %v144 = vld [vmem:[%s1 + $0x8] sm:$0xff]
  %v145 = vld [vmem:[%s1 + $0x10] sm:$0xff]
  %v146 = vld [vmem:[%s1 + $0x18] sm:$0xff]
  %v147 = vld [vmem:[%s1 + $0x20] sm:$0xff]
  %v148 = vld [vmem:[%s1 + $0x28] sm:$0xff]
  %v149 = vld [vmem:[%s1 + $0x30] sm:$0xff]
  %v150 = vld [vmem:[%s1 + $0x38] sm:$0xff]
  %v151 = vld [vmem:[%s1 + $0x40] sm:$0xff]
  %v152 = vld [vmem:[%s1 + $0x48] sm:$0xff]
  %v153 = vld [vmem:[%s1 + $0x50] sm:$0xff]
  %v154 = vld [vmem:[%s1 + $0x58] sm:$0xff]
  %v155 = vld [vmem:[%s1 + $0x60] sm:$0xff]
  %v156 = vld [vmem:[%s1 + $0x68] sm:$0xff]
  %v157 = vld [vmem:[%s1 + $0x70] sm:$0xff]
  %v158 = vld [vmem:[%s1 + $0x78] sm:$0xff]
  %v159 = vld [vmem:[%s1 + $0x80] sm:$0xff]
  %v160 = vld [vmem:[%s1 + $0x88] sm:$0xff]
  %v161 = vld [vmem:[%s1 + $0x90] sm:$0xff]
  %v162 = vld [vmem:[%s1 + $0x98] sm:$0xff]
  %v163 = vld [vmem:[%s1 + $0xa0] sm:$0xff]
  %v164 = vld [vmem:[%s1 + $0xa8] sm:$0xff]
  %v165 = vld [vmem:[%s1 + $0xb0] sm:$0xff]
  %v166 = vld [vmem:[%s1 + $0xb8] sm:$0xff]
  %v167 = vld [vmem:[%s1 + $0xc0] sm:$0xff]
  %v168 = vld [vmem:[%s1 + $0xc8] sm:$0xff]
  %v169 = vld [vmem:[%s1 + $0xd0] sm:$0xff]
  %v170 = vld [vmem:[%s1 + $0xd8] sm:$0xff]
  %v171 = vld [vmem:[%s1 + $0xe0] sm:$0xff]
  %v172 = vld [vmem:[%s1 + $0xe8] sm:$0xff]
  %v173 = vld [vmem:[%s1 + $0xf0] sm:$0xff]
  %v174 = vld [vmem:[%s1 + $0xf8] sm:$0xff]
  %v175 = vld [vmem:[%s1 + $0x100] sm:$0xff]
  %v176 = vld [vmem:[%s1 + $0x108] sm:$0xff]
  %v177 = vld [vmem:[%s1 + $0x110] sm:$0xff]
  %v178 = vld [vmem:[%s1 + $0x118] sm:$0xff]
  %v179 = vld [vmem:[%s1 + $0x120] sm:$0xff]
  %v180 = vld [vmem:[%s1 + $0x128] sm:$0xff]
  %v181 = vld [vmem:[%s1 + $0x130] sm:$0xff]
  %v182 = vld [vmem:[%s1 + $0x138] sm:$0xff]
  %v183 = vld [vmem:[%s1 + $0x140] sm:$0xff]
  %v184 = vld [vmem:[%s1 + $0x148] sm:$0xff]
  %v185 = vld [vmem:[%s1 + $0x150] sm:$0xff]
  %v186 = vld [vmem:[%s1 + $0x158] sm:$0xff]
  %v187 = vld [vmem:[%s1 + $0x160] sm:$0xff]
  %v188 = vld [vmem:[%s1 + $0x168] sm:$0xff]
  %v189 = vld [vmem:[%s1 + $0x170] sm:$0xff]
  %v190 = vld [vmem:[%s1 + $0x178] sm:$0xff]
  %v191 = vld [vmem:[%s1 + $0x180] sm:$0xff]
  %v192 = vld [vmem:[%s1 + $0x188] sm:$0xff]
  %v193 = vld [vmem:[%s1 + $0x190] sm:$0xff]
  %v194 = vld [vmem:[%s1 + $0x198] sm:$0xff]
  %v195 = vld [vmem:[%s1 + $0x1a0] sm:$0xff]
  %v196 = vld [vmem:[%s1 + $0x1a8] sm:$0xff]
  %v197 = vld [vmem:[%s1 + $0x1b0] sm:$0xff]
  %v198 = vld [vmem:[%s1 + $0x1b8] sm:$0xff]
  %v199 = vld [vmem:[%s1 + $0x1c0] sm:$0xff]
  %v200 = vld [vmem:[%s1 + $0x1c8] sm:$0xff]
  %v201 = vld [vmem:[%s1 + $0x1d0] sm:$0xff]
  %v202 = vld [vmem:[%s1 + $0x1d8] sm:$0xff]
  %v203 = vld [vmem:[%s1 + $0x1e0] sm:$0xff]
  %v204 = vld [vmem:[%s1 + $0x1e8] sm:$0xff]
  %v205 = vld [vmem:[%s1 + $0x1f0] sm:$0xff]
  %v206 = vld [vmem:[%s1 + $0x1f8] sm:$0xff]
  %v207 = vld [vmem:[%s1 + $0x200] sm:$0xff]
  %v208 = vld [vmem:[%s1 + $0x208] sm:$0xff]
  %v209 = vld [vmem:[%s1 + $0x210] sm:$0xff]
  %v210 = vld [vmem:[%s1 + $0x218] sm:$0xff]
  %v211 = vld [vmem:[%s1 + $0x220] sm:$0xff]
  %v212 = vld [vmem:[%s1 + $0x228] sm:$0xff]
  %v213 = vld [vmem:[%s1 + $0x230] sm:$0xff]
  %v214 = vld [vmem:[%s1 + $0x238] sm:$0xff]
  %v215 = vld [vmem:[%s1 + $0x240] sm:$0xff]
  %v216 = vld [vmem:[%s1 + $0x248] sm:$0xff]
  %v217 = vld [vmem:[%s1 + $0x250] sm:$0xff]
  %v218 = vld [vmem:[%s1 + $0x258] sm:$0xff]
  %v219 = vld [vmem:[%s1 + $0x260] sm:$0xff]
  %v220 = vld [vmem:[%s1 + $0x268] sm:$0xff]
  %v221 = vld [vmem:[%s1 + $0x270] sm:$0xff]
  %v222 = vld [vmem:[%s1 + $0x278] sm:$0xff]
  %v223 = vld [vmem:[%s1 + $0x280] sm:$0xff]
  %v224 = vld [vmem:[%s1 + $0x288] sm:$0xff]
  %v225 = vld [vmem:[%s1 + $0x290] sm:$0xff]
  %v226 = vld [vmem:[%s1 + $0x298] sm:$0xff]
  %v227 = vld [vmem:[%s1 + $0x2a0] sm:$0xff]
  %v228 = vld [vmem:[%s1 + $0x2a8] sm:$0xff]
  %v229 = vld [vmem:[%s1 + $0x2b0] sm:$0xff]
  %v230 = vld [vmem:[%s1 + $0x2b8] sm:$0xff]
  %v231 = vld [vmem:[%s1 + $0x2c0] sm:$0xff]
  %v232 = vld [vmem:[%s1 + $0x2c8] sm:$0xff]
  %v233 = vld [vmem:[%s1 + $0x2d0] sm:$0xff]
  %v234 = vld [vmem:[%s1 + $0x2d8] sm:$0xff]
  %v235 = vld [vmem:[%s1 + $0x2e0] sm:$0xff]
  %v236 = vld [vmem:[%s1 + $0x2e8] sm:$0xff]
  %v237 = vld [vmem:[%s1 + $0x2f0] sm:$0xff]
  %v238 = vld [vmem:[%s1 + $0x2f8] sm:$0xff]
  %v239 = vld [vmem:[%s1 + $0x300] sm:$0xff]
  %v240 = vld [vmem:[%s1 + $0x308] sm:$0xff]
  %v241 = vld [vmem:[%s1 + $0x310] sm:$0xff]
  %v242 = vld [vmem:[%s1 + $0x318] sm:$0xff]
  %v243 = vld [vmem:[%s1 + $0x320] sm:$0xff]
  %v244 = vld [vmem:[%s1 + $0x328] sm:$0xff]
  %v245 = vld [vmem:[%s1 + $0x330] sm:$0xff]
  %v246 = vld [vmem:[%s1 + $0x338] sm:$0xff]
  %v247 = vld [vmem:[%s1 + $0x340] sm:$0xff]
  %v248 = vld [vmem:[%s1 + $0x348] sm:$0xff]
  %v249 = vld [vmem:[%s1 + $0x350] sm:$0xff]
  %v250 = vld [vmem:[%s1 + $0x358] sm:$0xff]
  %v251 = vld [vmem:[%s1 + $0x360] sm:$0xff]
  %v252 = vld [vmem:[%s1 + $0x368] sm:$0xff]
  %v253 = vld [vmem:[%s1 + $0x370] sm:$0xff]
  %v254 = vld [vmem:[%s1 + $0x378] sm:$0xff]
  %v255 = vld [vmem:[%s1 + $0x380] sm:$0xff]
  %v256 = vld [vmem:[%s1 + $0x388] sm:$0xff]
  %v257 = vld [vmem:[%s1 + $0x390] sm:$0xff]
  %v258 = vld [vmem:[%s1 + $0x398] sm:$0xff]
  %v259 = vld [vmem:[%s1 + $0x3a0] sm:$0xff]
  %v260 = vld [vmem:[%s1 + $0x3a8] sm:$0xff]
  %v261 = vld [vmem:[%s1 + $0x3b0] sm:$0xff]
  %v262 = vld [vmem:[%s1 + $0x3b8] sm:$0xff]
  %v263 = vld [vmem:[%s1 + $0x3c0] sm:$0xff]
  %v264 = vld [vmem:[%s1 + $0x3c8] sm:$0xff]
  %v265 = vld [vmem:[%s1 + $0x3d0] sm:$0xff]
  %v266 = vld [vmem:[%s1 + $0x3d8] sm:$0xff]
  %v267 = vld [vmem:[%s1 + $0x3e0] sm:$0xff]
  %v268 = vld [vmem:[%s1 + $0x3e8] sm:$0xff]
  %v269 = vld [vmem:[%s1 + $0x3f0] sm:$0xff]
  %v270 = vld [vmem:[%s1 + $0x3f8] sm:$0xff]
  %v271 = vld [vmem:[%s1 + $0x400] sm:$0xff]
  %v272 = vld [vmem:[%s1 + $0x408] sm:$0xff]
  %v273 = vld [vmem:[%s1 + $0x410] sm:$0xff]
  %v274 = vld [vmem:[%s1 + $0x418] sm:$0xff]
  %v275 = vld [vmem:[%s1 + $0x420] sm:$0xff]
  %v276 = vld [vmem:[%s1 + $0x428] sm:$0xff]
  %v277 = vld [vmem:[%s1 + $0x430] sm:$0xff]
  %v278 = vld [vmem:[%s1 + $0x438] sm:$0xff]
  %v279 = vld [vmem:[%s1 + $0x440] sm:$0xff]
  %v280 = vld [vmem:[%s1 + $0x448] sm:$0xff]
  %v281 = vld [vmem:[%s1 + $0x450] sm:$0xff]
  %v282 = vld [vmem:[%s1 + $0x458] sm:$0xff]
  %v283 = vld [vmem:[%s1 + $0x460] sm:$0xff]
  %v284 = vld [vmem:[%s1 + $0x468] sm:$0xff]
  %v285 = vld [vmem:[%s1 + $0x470] sm:$0xff]
  %v286 = vld [vmem:[%s1 + $0x478] sm:$0xff]
  %v287 = vld [vmem:[%s1 + $0x480] sm:$0xff]
  %v288 = vld [vmem:[%s1 + $0x488] sm:$0xff]
  %v289 = vld [vmem:[%s1 + $0x490] sm:$0xff]
  %v290 = vld [vmem:[%s1 + $0x498] sm:$0xff]
  %v291 = vld [vmem:[%s1 + $0x4a0] sm:$0xff]
  %v292 = vld [vmem:[%s1 + $0x4a8] sm:$0xff]
  %v293 = vld [vmem:[%s1 + $0x4b0] sm:$0xff]
  %v294 = vld [vmem:[%s1 + $0x4b8] sm:$0xff]
  %v295 = vld [vmem:[%s1 + $0x4c0] sm:$0xff]
  %v296 = vld [vmem:[%s1 + $0x4c8] sm:$0xff]
  %v297 = vld [vmem:[%s1 + $0x4d0] sm:$0xff]
  %v298 = vld [vmem:[%s1 + $0x4d8] sm:$0xff]
  %v299 = vld [vmem:[%s1 + $0x4e0] sm:$0xff]
  %v300 = vld [vmem:[%s1 + $0x4e8] sm:$0xff]
  %v301 = vld [vmem:[%s1 + $0x4f0] sm:$0xff]
  %v302 = vld [vmem:[%s1 + $0x4f8] sm:$0xff]
  %v303 = vld [vmem:[%s1 + $0x500] sm:$0xff]
  %v304 = vld [vmem:[%s1 + $0x508] sm:$0xff]
  %v305 = vld [vmem:[%s1 + $0x510] sm:$0xff]
  %v306 = vld [vmem:[%s1 + $0x518] sm:$0xff]
  %v307 = vld [vmem:[%s1 + $0x520] sm:$0xff]
  %v308 = vld [vmem:[%s1 + $0x528] sm:$0xff]
  %v309 = vld [vmem:[%s1 + $0x530] sm:$0xff]
  %v310 = vld [vmem:[%s1 + $0x538] sm:$0xff]
  %v311 = vld [vmem:[%s1 + $0x540] sm:$0xff]
  %v312 = vld [vmem:[%s1 + $0x548] sm:$0xff]
  %v313 = vld [vmem:[%s1 + $0x550] sm:$0xff]
  %v314 = vld [vmem:[%s1 + $0x558] sm:$0xff]
  %v315 = vld [vmem:[%s1 + $0x560] sm:$0xff]
  %v316 = vld [vmem:[%s1 + $0x568] sm:$0xff]
  %v317 = vld [vmem:[%s1 + $0x570] sm:$0xff]
  %v318 = vld [vmem:[%s1 + $0x578] sm:$0xff]
  %v319 = vld [vmem:[%s1 + $0x580] sm:$0xff]
  %v320 = vld [vmem:[%s1 + $0x588] sm:$0xff]
  %v321 = vld [vmem:[%s1 + $0x590] sm:$0xff]
  %v322 = vld [vmem:[%s1 + $0x598] sm:$0xff]
  %v323 = vld [vmem:[%s1 + $0x5a0] sm:$0xff]
  %v324 = vld [vmem:[%s1 + $0x5a8] sm:$0xff]
  %v325 = vld [vmem:[%s1 + $0x5b0] sm:$0xff]
  %v326 = vld [vmem:[%s1 + $0x5b8] sm:$0xff]
  %v327 = vld [vmem:[%s1 + $0x5c0] sm:$0xff]
  %v328 = vld [vmem:[%s1 + $0x5c8] sm:$0xff]
  %v329 = vld [vmem:[%s1 + $0x5d0] sm:$0xff]
  %v330 = vld [vmem:[%s1 + $0x5d8] sm:$0xff]
  %v331 = vld [vmem:[%s1 + $0x5e0] sm:$0xff]
  %v332 = vld [vmem:[%s1 + $0x5e8] sm:$0xff]
  %v333 = vld [vmem:[%s1 + $0x5f0] sm:$0xff]
  %v334 = vld [vmem:[%s1 + $0x5f8] sm:$0xff]
  %v335 = vld [vmem:[%s1 + $0x600] sm:$0xff]
  %v336 = vld [vmem:[%s1 + $0x608] sm:$0xff]
  %v337 = vld [vmem:[%s1 + $0x610] sm:$0xff]
  %v338 = vld [vmem:[%s1 + $0x618] sm:$0xff]
  %v339 = vld [vmem:[%s1 + $0x620] sm:$0xff]
  %v340 = vld [vmem:[%s1 + $0x628] sm:$0xff]
  %v341 = vld [vmem:[%s1 + $0x630] sm:$0xff]
  %v342 = vld [vmem:[%s1 + $0x638] sm:$0xff]
  %v343 = vld [vmem:[%s1 + $0x640] sm:$0xff]
  %v344 = vld [vmem:[%s1 + $0x648] sm:$0xff]
  %v345 = vld [vmem:[%s1 + $0x650] sm:$0xff]
  %v346 = vld [vmem:[%s1 + $0x658] sm:$0xff]
  %v347 = vld [vmem:[%s1 + $0x660] sm:$0xff]
  %v348 = vld [vmem:[%s1 + $0x668] sm:$0xff]
  %v349 = vld [vmem:[%s1 + $0x670] sm:$0xff]
  %v350 = vld [vmem:[%s1 + $0x678] sm:$0xff]
  %v351 = vld [vmem:[%s1 + $0x680] sm:$0xff]
  %v352 = vld [vmem:[%s1 + $0x688] sm:$0xff]
  %v353 = vld [vmem:[%s1 + $0x690] sm:$0xff]
  %v354 = vld [vmem:[%s1 + $0x698] sm:$0xff]
  %v355 = vld [vmem:[%s1 + $0x6a0] sm:$0xff]
  %v356 = vld [vmem:[%s1 + $0x6a8] sm:$0xff]
  %v357 = vld [vmem:[%s1 + $0x6b0] sm:$0xff]
  %v358 = vld [vmem:[%s1 + $0x6b8] sm:$0xff]
  %v359 = vld [vmem:[%s1 + $0x6c0] sm:$0xff]
  %v360 = vld [vmem:[%s1 + $0x6c8] sm:$0xff]
  %v361 = vld [vmem:[%s1 + $0x6d0] sm:$0xff]
  %v362 = vld [vmem:[%s1 + $0x6d8] sm:$0xff]
  %v363 = vld [vmem:[%s1 + $0x6e0] sm:$0xff]
  %v364 = vld [vmem:[%s1 + $0x6e8] sm:$0xff]
  %v365 = vld [vmem:[%s1 + $0x6f0] sm:$0xff]
  %v366 = vld [vmem:[%s1 + $0x6f8] sm:$0xff]
  %v367 = vld [vmem:[%s1 + $0x700] sm:$0xff]
  %v368 = vld [vmem:[%s1 + $0x708] sm:$0xff]
  %v369 = vld [vmem:[%s1 + $0x710] sm:$0xff]
  %v370 = vld [vmem:[%s1 + $0x718] sm:$0xff]
  %v371 = vld [vmem:[%s1 + $0x720] sm:$0xff]
  %v372 = vld [vmem:[%s1 + $0x728] sm:$0xff]
  %v373 = vld [vmem:[%s1 + $0x730] sm:$0xff]
  %v374 = vld [vmem:[%s1 + $0x738] sm:$0xff]
  %v375 = vld [vmem:[%s1 + $0x740] sm:$0xff]
  %v376 = vld [vmem:[%s1 + $0x748] sm:$0xff]
  %v377 = vld [vmem:[%s1 + $0x750] sm:$0xff]
  %v378 = vld [vmem:[%s1 + $0x758] sm:$0xff]
  %v379 = vld [vmem:[%s1 + $0x760] sm:$0xff]
  %v380 = vld [vmem:[%s1 + $0x768] sm:$0xff]
  %v381 = vld [vmem:[%s1 + $0x770] sm:$0xff]
  %v382 = vld [vmem:[%s1 + $0x778] sm:$0xff]
  %v383 = vld [vmem:[%s1 + $0x780] sm:$0xff]
  %v384 = vld [vmem:[%s1 + $0x788] sm:$0xff]
  %v385 = vld [vmem:[%s1 + $0x790] sm:$0xff]
  %v386 = vld [vmem:[%s1 + $0x798] sm:$0xff]
  %v387 = vld [vmem:[%s1 + $0x7a0] sm:$0xff]
  %v388 = vld [vmem:[%s1 + $0x7a8] sm:$0xff]
  %v389 = vld [vmem:[%s1 + $0x7b0] sm:$0xff]
  %v390 = vld [vmem:[%s1 + $0x7b8] sm:$0xff]
  %v391 = vld [vmem:[%s1 + $0x7c0] sm:$0xff]
  %v392 = vld [vmem:[%s1 + $0x7c8] sm:$0xff]
  %v393 = vld [vmem:[%s1 + $0x7d0] sm:$0xff]
  %v394 = vld [vmem:[%s1 + $0x7d8] sm:$0xff]
  %v395 = vld [vmem:[%s1 + $0x7e0] sm:$0xff]
  %v396 = vld [vmem:[%s1 + $0x7e8] sm:$0xff]
  %v397 = vld [vmem:[%s1 + $0x7f0] sm:$0xff]
  %v398 = vld [vmem:[%s1 + $0x7f8] sm:$0xff]
  %v399 = vld [vmem:[%s4] sm:$0x1]
  %v401 = vperm.slane %v399, 0
  %407 = vst [vmem:[#allocation1] ss:$4 sm:$0xff] %v139
  %s408 = scalar_lea.vmem [#allocation1], 32
  %409 = vst [vmem:[%s408] ss:$4 sm:$0xff] %v140
  %v410 = vld.sshfl [vmem:[#allocation1] sm:$0xff pattern:$0x73625140]
  %v411 = vld.sshfl [vmem:[#allocation1 + $0x8] sm:$0xff pattern:$0x73625140]
  %v412 = vld.sshfl [vmem:[#allocation1 + $0x10] sm:$0xff pattern:$0x73625140]
  %v413 = vld.sshfl [vmem:[#allocation1 + $0x18] sm:$0xff pattern:$0x73625140]
  %v414 = vld.sshfl [vmem:[#allocation1 + $0x20] sm:$0xff pattern:$0x73625140]
  %v415 = vld.sshfl [vmem:[#allocation1 + $0x28] sm:$0xff pattern:$0x73625140]
  %v416 = vld.sshfl [vmem:[#allocation1 + $0x30] sm:$0xff pattern:$0x73625140]
  %v417 = vld.sshfl [vmem:[#allocation1 + $0x38] sm:$0xff pattern:$0x73625140]
  %418 = vst [vmem:[#allocation1] ss:$4 sm:$0xff] %v141
  %419 = vst [vmem:[%s408] ss:$4 sm:$0xff] %v142
  %v420 = vld.sshfl [vmem:[#allocation1] sm:$0xff pattern:$0x73625140]
  %v421 = vld.sshfl [vmem:[#allocation1 + $0x8] sm:$0xff pattern:$0x73625140]
  %v422 = vld.sshfl [vmem:[#allocation1 + $0x10] sm:$0xff pattern:$0x73625140]
  %v423 = vld.sshfl [vmem:[#allocation1 + $0x18] sm:$0xff pattern:$0x73625140]
  %v424 = vld.sshfl [vmem:[#allocation1 + $0x20] sm:$0xff pattern:$0x73625140]
  %v425 = vld.sshfl [vmem:[#allocation1 + $0x28] sm:$0xff pattern:$0x73625140]
  %v426 = vld.sshfl [vmem:[#allocation1 + $0x30] sm:$0xff pattern:$0x73625140]
  %v427 = vld.sshfl [vmem:[#allocation1 + $0x38] sm:$0xff pattern:$0x73625140]
  %444 = vmatpush.msra.mxu0 %v158
  %445 = vmatpush.msra.mxu0 %v157
  %446 = vmatpush.msra.mxu0 %v156
  %447 = vmatpush.msra.mxu0 %v155
  %448 = vmatpush.msra.mxu0 %v154
  %449 = vmatpush.msra.mxu0 %v153
  %450 = vmatpush.msra.mxu0 %v152
  %451 = vmatpush.msra.mxu0 %v151
  %452 = vmatpush.msra.mxu0 %v150
  %453 = vmatpush.msra.mxu0 %v149
  %454 = vmatpush.msra.mxu0 %v148
  %455 = vmatpush.msra.mxu0 %v147
  %456 = vmatpush.msra.mxu0 %v146
  %457 = vmatpush.msra.mxu0 %v145
  %458 = vmatpush.msra.mxu0 %v144
  %459 = vmatpush.msra.mxu0 %v143
  %460 = vmatmul.f32.gmra.mxu0 %v410
  %v461 = vpop.f32.mrf.mxu0
  %v462 = vadd.f32 %v401, %v461
  %463 = vdwg.mxu0
  %464 = vmatpush.msra.mxu0 %v174
  %465 = vmatpush.msra.mxu0 %v173
  %466 = vmatpush.msra.mxu0 %v172
  %467 = vmatpush.msra.mxu0 %v171
  %468 = vmatpush.msra.mxu0 %v170
  %469 = vmatpush.msra.mxu0 %v169
  %470 = vmatpush.msra.mxu0 %v168
  %471 = vmatpush.msra.mxu0 %v167
  %472 = vmatpush.msra.mxu0 %v166
  %473 = vmatpush.msra.mxu0 %v165
  %474 = vmatpush.msra.mxu0 %v164
  %475 = vmatpush.msra.mxu0 %v163
  %476 = vmatpush.msra.mxu0 %v162
  %477 = vmatpush.msra.mxu0 %v161
  %478 = vmatpush.msra.mxu0 %v160
  %479 = vmatpush.msra.mxu0 %v159
  %480 = vmatmul.f32.gmra.mxu0 %v411
  %v481 = vpop.f32.mrf.mxu0
  %v482 = vadd.f32 %v462, %v481
  %483 = vdwg.mxu0
  %484 = vmatpush.msra.mxu0 %v190
  %485 = vmatpush.msra.mxu0 %v189
  %486 = vmatpush.msra.mxu0 %v188
  %487 = vmatpush.msra.mxu0 %v187
  %488 = vmatpush.msra.mxu0 %v186
  %489 = vmatpush.msra.mxu0 %v185
  %490 = vmatpush.msra.mxu0 %v184
  %491 = vmatpush.msra.mxu0 %v183
  %492 = vmatpush.msra.mxu0 %v182
  %493 = vmatpush.msra.mxu0 %v181
  %494 = vmatpush.msra.mxu0 %v180
  %495 = vmatpush.msra.mxu0 %v179
  %496 = vmatpush.msra.mxu0 %v178
  %497 = vmatpush.msra.mxu0 %v177
  %498 = vmatpush.msra.mxu0 %v176
  %499 = vmatpush.msra.mxu0 %v175
  %500 = vmatmul.f32.gmra.mxu0 %v412
  %v501 = vpop.f32.mrf.mxu0
  %v502 = vadd.f32 %v482, %v501
  %503 = vdwg.mxu0
  %504 = vmatpush.msra.mxu0 %v206
  %505 = vmatpush.msra.mxu0 %v205
  %506 = vmatpush.msra.mxu0 %v204
  %507 = vmatpush.msra.mxu0 %v203
  %508 = vmatpush.msra.mxu0 %v202
  %509 = vmatpush.msra.mxu0 %v201
  %510 = vmatpush.msra.mxu0 %v200
  %511 = vmatpush.msra.mxu0 %v199
  %512 = vmatpush.msra.mxu0 %v198
  %513 = vmatpush.msra.mxu0 %v197
  %514 = vmatpush.msra.mxu0 %v196
  %515 = vmatpush.msra.mxu0 %v195
  %516 = vmatpush.msra.mxu0 %v194
  %517 = vmatpush.msra.mxu0 %v193
  %518 = vmatpush.msra.mxu0 %v192
  %519 = vmatpush.msra.mxu0 %v191
  %520 = vmatmul.f32.gmra.mxu0 %v413
  %v521 = vpop.f32.mrf.mxu0
  %v522 = vadd.f32 %v502, %v521
  %523 = vdwg.mxu0
  %524 = vmatpush.msra.mxu0 %v222
  %525 = vmatpush.msra.mxu0 %v221
  %526 = vmatpush.msra.mxu0 %v220
  %527 = vmatpush.msra.mxu0 %v219
  %528 = vmatpush.msra.mxu0 %v218
  %529 = vmatpush.msra.mxu0 %v217
  %530 = vmatpush.msra.mxu0 %v216
  %531 = vmatpush.msra.mxu0 %v215
  %532 = vmatpush.msra.mxu0 %v214
  %533 = vmatpush.msra.mxu0 %v213
  %534 = vmatpush.msra.mxu0 %v212
  %535 = vmatpush.msra.mxu0 %v211
  %536 = vmatpush.msra.mxu0 %v210
  %537 = vmatpush.msra.mxu0 %v209
  %538 = vmatpush.msra.mxu0 %v208
  %539 = vmatpush.msra.mxu0 %v207
  %540 = vmatmul.f32.gmra.mxu0 %v414
  %v541 = vpop.f32.mrf.mxu0
  %v542 = vadd.f32 %v522, %v541
  %543 = vdwg.mxu0
  %544 = vmatpush.msra.mxu0 %v238
  %545 = vmatpush.msra.mxu0 %v237
  %546 = vmatpush.msra.mxu0 %v236
  %547 = vmatpush.msra.mxu0 %v235
  %548 = vmatpush.msra.mxu0 %v234
  %549 = vmatpush.msra.mxu0 %v233
  %550 = vmatpush.msra.mxu0 %v232
  %551 = vmatpush.msra.mxu0 %v231
  %552 = vmatpush.msra.mxu0 %v230
  %553 = vmatpush.msra.mxu0 %v229
  %554 = vmatpush.msra.mxu0 %v228
  %555 = vmatpush.msra.mxu0 %v227
  %556 = vmatpush.msra.mxu0 %v226
  %557 = vmatpush.msra.mxu0 %v225
  %558 = vmatpush.msra.mxu0 %v224
  %559 = vmatpush.msra.mxu0 %v223
  %560 = vmatmul.f32.gmra.mxu0 %v415
  %v561 = vpop.f32.mrf.mxu0
  %v562 = vadd.f32 %v542, %v561
  %563 = vdwg.mxu0
  %564 = vmatpush.msra.mxu0 %v254
  %565 = vmatpush.msra.mxu0 %v253
  %566 = vmatpush.msra.mxu0 %v252
  %567 = vmatpush.msra.mxu0 %v251
  %568 = vmatpush.msra.mxu0 %v250
  %569 = vmatpush.msra.mxu0 %v249
  %570 = vmatpush.msra.mxu0 %v248
  %571 = vmatpush.msra.mxu0 %v247
  %572 = vmatpush.msra.mxu0 %v246
  %573 = vmatpush.msra.mxu0 %v245
  %574 = vmatpush.msra.mxu0 %v244
  %575 = vmatpush.msra.mxu0 %v243
  %576 = vmatpush.msra.mxu0 %v242
  %577 = vmatpush.msra.mxu0 %v241
  %578 = vmatpush.msra.mxu0 %v240
  %579 = vmatpush.msra.mxu0 %v239
  %580 = vmatmul.f32.gmra.mxu0 %v416
  %v581 = vpop.f32.mrf.mxu0
  %v582 = vadd.f32 %v562, %v581
  %583 = vdwg.mxu0
  %584 = vmatpush.msra.mxu0 %v270
  %585 = vmatpush.msra.mxu0 %v269
  %586 = vmatpush.msra.mxu0 %v268
  %587 = vmatpush.msra.mxu0 %v267
  %588 = vmatpush.msra.mxu0 %v266
  %589 = vmatpush.msra.mxu0 %v265
  %590 = vmatpush.msra.mxu0 %v264
  %591 = vmatpush.msra.mxu0 %v263
  %592 = vmatpush.msra.mxu0 %v262
  %593 = vmatpush.msra.mxu0 %v261
  %594 = vmatpush.msra.mxu0 %v260
  %595 = vmatpush.msra.mxu0 %v259
  %596 = vmatpush.msra.mxu0 %v258
  %597 = vmatpush.msra.mxu0 %v257
  %598 = vmatpush.msra.mxu0 %v256
  %599 = vmatpush.msra.mxu0 %v255
  %600 = vmatmul.f32.gmra.mxu0 %v417
  %v601 = vpop.f32.mrf.mxu0
  %v602 = vadd.f32 %v582, %v601
  %603 = vdwg.mxu0
  %604 = vmatpush.msra.mxu0 %v286
  %605 = vmatpush.msra.mxu0 %v285
  %606 = vmatpush.msra.mxu0 %v284
  %607 = vmatpush.msra.mxu0 %v283
  %608 = vmatpush.msra.mxu0 %v282
  %609 = vmatpush.msra.mxu0 %v281
  %610 = vmatpush.msra.mxu0 %v280
  %611 = vmatpush.msra.mxu0 %v279
  %612 = vmatpush.msra.mxu0 %v278
  %613 = vmatpush.msra.mxu0 %v277
  %614 = vmatpush.msra.mxu0 %v276
  %615 = vmatpush.msra.mxu0 %v275
  %616 = vmatpush.msra.mxu0 %v274
  %617 = vmatpush.msra.mxu0 %v273
  %618 = vmatpush.msra.mxu0 %v272
  %619 = vmatpush.msra.mxu0 %v271
  %620 = vmatmul.f32.gmra.mxu0 %v420
  %v621 = vpop.f32.mrf.mxu0
  %v622 = vadd.f32 %v602, %v621
  %623 = vdwg.mxu0
  %624 = vmatpush.msra.mxu0 %v302
  %625 = vmatpush.msra.mxu0 %v301
  %626 = vmatpush.msra.mxu0 %v300
  %627 = vmatpush.msra.mxu0 %v299
  %628 = vmatpush.msra.mxu0 %v298
  %629 = vmatpush.msra.mxu0 %v297
  %630 = vmatpush.msra.mxu0 %v296
  %631 = vmatpush.msra.mxu0 %v295
  %632 = vmatpush.msra.mxu0 %v294
  %633 = vmatpush.msra.mxu0 %v293
  %634 = vmatpush.msra.mxu0 %v292
  %635 = vmatpush.msra.mxu0 %v291
  %636 = vmatpush.msra.mxu0 %v290
  %637 = vmatpush.msra.mxu0 %v289
  %638 = vmatpush.msra.mxu0 %v288
  %639 = vmatpush.msra.mxu0 %v287
  %640 = vmatmul.f32.gmra.mxu0 %v421
  %v641 = vpop.f32.mrf.mxu0
  %v642 = vadd.f32 %v622, %v641
  %643 = vdwg.mxu0
  %644 = vmatpush.msra.mxu0 %v318
  %645 = vmatpush.msra.mxu0 %v317
  %646 = vmatpush.msra.mxu0 %v316
  %647 = vmatpush.msra.mxu0 %v315
  %648 = vmatpush.msra.mxu0 %v314
  %649 = vmatpush.msra.mxu0 %v313
  %650 = vmatpush.msra.mxu0 %v312
  %651 = vmatpush.msra.mxu0 %v311
  %652 = vmatpush.msra.mxu0 %v310
  %653 = vmatpush.msra.mxu0 %v309
  %654 = vmatpush.msra.mxu0 %v308
  %655 = vmatpush.msra.mxu0 %v307
  %656 = vmatpush.msra.mxu0 %v306
  %657 = vmatpush.msra.mxu0 %v305
  %658 = vmatpush.msra.mxu0 %v304
  %659 = vmatpush.msra.mxu0 %v303
  %660 = vmatmul.f32.gmra.mxu0 %v422
  %v661 = vpop.f32.mrf.mxu0
  %v662 = vadd.f32 %v642, %v661
  %663 = vdwg.mxu0
  %664 = vmatpush.msra.mxu0 %v334
  %665 = vmatpush.msra.mxu0 %v333
  %666 = vmatpush.msra.mxu0 %v332
  %667 = vmatpush.msra.mxu0 %v331
  %668 = vmatpush.msra.mxu0 %v330
  %669 = vmatpush.msra.mxu0 %v329
  %670 = vmatpush.msra.mxu0 %v328
  %671 = vmatpush.msra.mxu0 %v327
  %672 = vmatpush.msra.mxu0 %v326
  %673 = vmatpush.msra.mxu0 %v325
  %674 = vmatpush.msra.mxu0 %v324
  %675 = vmatpush.msra.mxu0 %v323
  %676 = vmatpush.msra.mxu0 %v322
  %677 = vmatpush.msra.mxu0 %v321
  %678 = vmatpush.msra.mxu0 %v320
  %679 = vmatpush.msra.mxu0 %v319
  %680 = vmatmul.f32.gmra.mxu0 %v423
  %v681 = vpop.f32.mrf.mxu0
  %v682 = vadd.f32 %v662, %v681
  %683 = vdwg.mxu0
  %684 = vmatpush.msra.mxu0 %v350
  %685 = vmatpush.msra.mxu0 %v349
  %686 = vmatpush.msra.mxu0 %v348
  %687 = vmatpush.msra.mxu0 %v347
  %688 = vmatpush.msra.mxu0 %v346
  %689 = vmatpush.msra.mxu0 %v345
  %690 = vmatpush.msra.mxu0 %v344
  %691 = vmatpush.msra.mxu0 %v343
  %692 = vmatpush.msra.mxu0 %v342
  %693 = vmatpush.msra.mxu0 %v341
  %694 = vmatpush.msra.mxu0 %v340
  %695 = vmatpush.msra.mxu0 %v339
  %696 = vmatpush.msra.mxu0 %v338
  %697 = vmatpush.msra.mxu0 %v337
  %698 = vmatpush.msra.mxu0 %v336
  %699 = vmatpush.msra.mxu0 %v335
  %700 = vmatmul.f32.gmra.mxu0 %v424
  %v701 = vpop.f32.mrf.mxu0
  %v702 = vadd.f32 %v682, %v701
  %703 = vdwg.mxu0
  %704 = vmatpush.msra.mxu0 %v366
  %705 = vmatpush.msra.mxu0 %v365
  %706 = vmatpush.msra.mxu0 %v364
  %707 = vmatpush.msra.mxu0 %v363
  %708 = vmatpush.msra.mxu0 %v362
  %709 = vmatpush.msra.mxu0 %v361
  %710 = vmatpush.msra.mxu0 %v360
  %711 = vmatpush.msra.mxu0 %v359
  %712 = vmatpush.msra.mxu0 %v358
  %713 = vmatpush.msra.mxu0 %v357
  %714 = vmatpush.msra.mxu0 %v356
  %715 = vmatpush.msra.mxu0 %v355
  %716 = vmatpush.msra.mxu0 %v354
  %717 = vmatpush.msra.mxu0 %v353
  %718 = vmatpush.msra.mxu0 %v352
  %719 = vmatpush.msra.mxu0 %v351
  %720 = vmatmul.f32.gmra.mxu0 %v425
  %v721 = vpop.f32.mrf.mxu0
  %v722 = vadd.f32 %v702, %v721
  %723 = vdwg.mxu0
  %724 = vmatpush.msra.mxu0 %v382
  %725 = vmatpush.msra.mxu0 %v381
  %726 = vmatpush.msra.mxu0 %v380
  %727 = vmatpush.msra.mxu0 %v379
  %728 = vmatpush.msra.mxu0 %v378
  %729 = vmatpush.msra.mxu0 %v377
  %730 = vmatpush.msra.mxu0 %v376
  %731 = vmatpush.msra.mxu0 %v375
  %732 = vmatpush.msra.mxu0 %v374
  %733 = vmatpush.msra.mxu0 %v373
  %734 = vmatpush.msra.mxu0 %v372
  %735 = vmatpush.msra.mxu0 %v371
  %736 = vmatpush.msra.mxu0 %v370
  %737 = vmatpush.msra.mxu0 %v369
  %738 = vmatpush.msra.mxu0 %v368
  %739 = vmatpush.msra.mxu0 %v367
  %740 = vmatmul.f32.gmra.mxu0 %v426
  %v741 = vpop.f32.mrf.mxu0
  %v742 = vadd.f32 %v722, %v741
  %743 = vdwg.mxu0
  %744 = vmatpush.msra.mxu0 %v398
  %745 = vmatpush.msra.mxu0 %v397
  %746 = vmatpush.msra.mxu0 %v396
  %747 = vmatpush.msra.mxu0 %v395
  %748 = vmatpush.msra.mxu0 %v394
  %749 = vmatpush.msra.mxu0 %v393
  %750 = vmatpush.msra.mxu0 %v392
  %751 = vmatpush.msra.mxu0 %v391
  %752 = vmatpush.msra.mxu0 %v390
  %753 = vmatpush.msra.mxu0 %v389
  %754 = vmatpush.msra.mxu0 %v388
  %755 = vmatpush.msra.mxu0 %v387
  %756 = vmatpush.msra.mxu0 %v386
  %757 = vmatpush.msra.mxu0 %v385
  %758 = vmatpush.msra.mxu0 %v384
  %759 = vmatpush.msra.mxu0 %v383
  %760 = vmatmul.f32.gmra.mxu0 %v427
  %v761 = vpop.f32.mrf.mxu0
  %v762 = vadd.f32 %v742, %v761
  %763 = vdwg.mxu0
  %764 = vst [vmem:[%s5] sm:$0x3] %v762
  // Predicated region
  $region22: #{unet_generator_pallas.14} parent=0 // pred_check
    _
  $region23: #{unet_generator_pallas.14} parent=0 // pred_check_branch
    %766 = sbr.rel (0) target = $region25
  $region24: #{unet_generator_pallas.14} parent=0 // pred_region
    _
  $region25: #{unet_generator_pallas.14} parent=0 // pred_fallthru
    _
  // Predicated region
  $region26: #{unet_generator_pallas.14} parent=0 // pred_check
    _
  $region27: #{unet_generator_pallas.14} parent=0 // pred_check_branch
    %768 = sbr.rel (0) target = $region29
  $region28: #{unet_generator_pallas.14} parent=0 // pred_region
    _
  $region29: #{unet_generator_pallas.14} parent=0 // pred_fallthru
    _

// kernel: tile.74
$region0: #{tile.74}
  #allocation0 [shape = 's32[1]{0}', space=sflag, size = 0x4, scoped, tag = 'scoped memory for tile.74']
  %s0 = inlined_call_operand.<no memory space> [shape: f32[], index: 0, kind: input, shape index: {}]
  %s1 = inlined_call_operand.vmem [shape: f32[1,512], index: 1, kind: output, shape index: {}]
  %v2 = vstv %s0
  %3 = vst [vmem:[%s1] sm:$0x1] %v2
  %s4 = scalar_lea.vmem %s1, 1
  %5 = vst [vmem:[%s4] sm:$0x1] %v2
  %s6 = scalar_lea.vmem %s1, 2
  %7 = vst [vmem:[%s6] sm:$0x1] %v2
  %s8 = scalar_lea.vmem %s1, 3
  %9 = vst [vmem:[%s8] sm:$0x1] %v2

// kernel: unet_generator_pallas.15
$region0: #{unet_generator_pallas.15}
  #allocation0 [shape = 'u32[]', space=smem, size = 0x4, offset = 0x4, fixed_abs, tag = 'smem constant byte address 0x4 - core index']
  #allocation1 [shape = 'u32[72,128]{1,0:T(1,128)}', space=vmem, size = 0x9000, scoped, tag = 'internal scratch']
  %s0 = inlined_call_operand.vmem [shape: f32[4,2,512], index: 0, kind: input, shape index: {}]
  %s1 = inlined_call_operand.vmem [shape: f32[4,512,128], index: 1, kind: input, shape index: {}]
  %s2 = inlined_call_operand.vmem [shape: f32[1,512], index: 2, kind: input, shape index: {}]
  %s3 = inlined_call_operand.vmem [shape: f32[1,512], index: 3, kind: input, shape index: {}]
  %s4 = inlined_call_operand.vmem [shape: f32[1,128], index: 4, kind: input, shape index: {}]
  %s5 = inlined_call_operand.vmem [shape: f32[4,2,128], index: 5, kind: output, shape index: {0}]
  %s6 = inlined_call_operand.vmem [shape: f32[32,128], index: 6, kind: output, shape index: {1}]
  %s7 = inlined_call_operand.vmem [shape: f32[32,128], index: 7, kind: output, shape index: {2}]
  %8 = xla_tuple %s5, %s6, %s7
  %s9 = sld [smem:[#allocation0]]
  $region69: #{unet_generator_pallas.15} parent=0
    _
  %s11 = ssub.s32 1, %s9
  %s12 = scalar_select 0, %s11, %s9
  loop: start=0, step=1, limit=6
  $region2: #{unet_generator_pallas.15} parent=0 // loop_pre_header
    _
  $region3: #{unet_generator_pallas.15} parent=0 // loop_header
    %s14 = sphi 0, %s18
    %p15 = scmp.ge.s32.totalorder %s14, 6
    %s21 = sphi 0, %s33
    %s22 = sphi 0, %s29
    %s23 = sphi 0, %s21
    %s24 = sphi 0, %s22
    %s25 = sphi 0, %s23
    %s26 = sphi 0, %s24
    %s38 = sphi 0, %s40
    %s41 = sphi 0, %s38
    %s42 = sphi 0, %s41
    %s58 = sphi 0, %s42
    %s64 = sphi 0, %s66
    %s67 = sphi 0, %s64
    %s68 = sphi 0, %s67
    %s84 = sphi 0, %s68
    %s88 = sphi 0, %s88
    %s90 = sphi 0, %s88
    %s91 = sphi 0, %s90
    %s105 = sphi 0, %s91
    %s109 = sphi 0, %s109
    %s111 = sphi 0, %s109
    %s112 = sphi 0, %s111
    %s126 = sphi 0, %s112
    %s130 = sphi 0, %s130
    %s132 = sphi 0, %s130
    %s133 = sphi 0, %s132
    %s147 = sphi 0, %s133
    %s155 = sphi 0, %s157
    %s158 = sphi 0, %s155
    %s159 = sphi 0, %s158
    %s175 = sphi 0, %s159
    %s183 = sphi 0, %s185
    %s186 = sphi 0, %s183
    %s187 = sphi 0, %s186
    %s203 = sphi 0, %s187
    %s211 = sphi 0, %s213
    %s214 = sphi 0, %s211
    %s215 = sphi 0, %s214
    %s231 = sphi 0, %s215
  $region4: #{unet_generator_pallas.15} parent=0 // loop_header_branch
    %17 = sbr.rel (%p15) target = $region8
  $region5: #{unet_generator_pallas.15} parent=0 // loop_body
    %s19 = ssub.s32 %s14, 1
    %s20 = ssub.s32 %s14, 2
    %s27 = sadd.s32 1, %s22
    %p28 = scmp.ge.s32.totalorder %s27, 1
    %s29 = scalar_select %p28, 0, %s27
    %s30 = sadd.s32 1, %s21
    %s31 = scalar_select %p28, %s30, %s21
    %p32 = scmp.ge.s32.totalorder %s31, 4
    %s33 = scalar_select %p32, 0, %s31
    %s34 = ssub.s32 %s21, %s33
    %s35 = ssub.s32 %s22, %s29
    %s36 = sor.u32 %s34, %s35
    %p37 = scmp.eq.s32.totalorder %s36, 0
    %s39 = sadd.s32 %s38, 1
    %s40 = scalar_select %p37, %s38, %s39
    %p43 = pneg %p37
    %p44 = scmp.eq.s32.totalorder %s14, 3
    %p45 = por %p43, %p44
    %p46 = scmp.ne.s32.totalorder %s38, %s41
    %p47 = scmp.eq.s32.totalorder %s14, 0
    %p48 = por %p46, %p47
    %p49 = scmp.ne.s32.totalorder %s38, %s41
    %p50 = scmp.eq.s32.totalorder %s19, 3
    %p51 = por %p49, %p50
    %p52 = scmp.ne.s32.totalorder %s41, %s42
    %p53 = scmp.eq.s32.totalorder %s19, 0
    %p54 = por %p52, %p53
    %p55 = scmp.ne.s32.totalorder %s41, %s42
    %p56 = scmp.eq.s32.totalorder %s20, 3
    %p57 = por %p55, %p56
    %p59 = scmp.ne.s32.totalorder %s42, %s58
    %p60 = scmp.eq.s32.totalorder %s20, 0
    %p61 = por %p59, %p60
    %s62 = ssub.s32 %s21, %s33
    %p63 = scmp.eq.s32.totalorder %s62, 0
    %s65 = sadd.s32 %s64, 1
    %s66 = scalar_select %p63, %s64, %s65
    %p69 = pneg %p63
    %p70 = scmp.eq.s32.totalorder %s14, 3
    %p71 = por %p69, %p70
    %p72 = scmp.ne.s32.totalorder %s64, %s67
    %p73 = scmp.eq.s32.totalorder %s14, 0
    %p74 = por %p72, %p73
    %p75 = scmp.ne.s32.totalorder %s64, %s67
    %p76 = scmp.eq.s32.totalorder %s19, 3
    %p77 = por %p75, %p76
    %p78 = scmp.ne.s32.totalorder %s67, %s68
    %p79 = scmp.eq.s32.totalorder %s19, 0
    %p80 = por %p78, %p79
    %p81 = scmp.ne.s32.totalorder %s67, %s68
    %p82 = scmp.eq.s32.totalorder %s20, 3
    %p83 = por %p81, %p82
    %p85 = scmp.ne.s32.totalorder %s68, %s84
    %p86 = scmp.eq.s32.totalorder %s20, 0
    %p87 = por %p85, %p86
    %s89 = sadd.s32 %s88, 1
    %p92 = scmp.eq.s32.totalorder %s14, 3
    %p93 = scmp.ne.s32.totalorder %s88, %s90
    %p94 = scmp.eq.s32.totalorder %s14, 0
    %p95 = por %p93, %p94
    %p96 = scmp.ne.s32.totalorder %s88, %s90
    %p97 = scmp.eq.s32.totalorder %s19, 3
    %p98 = por %p96, %p97
    %p99 = scmp.ne.s32.totalorder %s90, %s91
    %p100 = scmp.eq.s32.totalorder %s19, 0
    %p101 = por %p99, %p100
    %p102 = scmp.ne.s32.totalorder %s90, %s91
    %p103 = scmp.eq.s32.totalorder %s20, 3
    %p104 = por %p102, %p103
    %p106 = scmp.ne.s32.totalorder %s91, %s105
    %p107 = scmp.eq.s32.totalorder %s20, 0
    %p108 = por %p106, %p107
    %s110 = sadd.s32 %s109, 1
    %p113 = scmp.eq.s32.totalorder %s14, 3
    %p114 = scmp.ne.s32.totalorder %s109, %s111
    %p115 = scmp.eq.s32.totalorder %s14, 0
    %p116 = por %p114, %p115
    %p117 = scmp.ne.s32.totalorder %s109, %s111
    %p118 = scmp.eq.s32.totalorder %s19, 3
    %p119 = por %p117, %p118
    %p120 = scmp.ne.s32.totalorder %s111, %s112
    %p121 = scmp.eq.s32.totalorder %s19, 0
    %p122 = por %p120, %p121
    %p123 = scmp.ne.s32.totalorder %s111, %s112
    %p124 = scmp.eq.s32.totalorder %s20, 3
    %p125 = por %p123, %p124
    %p127 = scmp.ne.s32.totalorder %s112, %s126
    %p128 = scmp.eq.s32.totalorder %s20, 0
    %p129 = por %p127, %p128
    %s131 = sadd.s32 %s130, 1
    %p134 = scmp.eq.s32.totalorder %s14, 3
    %p135 = scmp.ne.s32.totalorder %s130, %s132
    %p136 = scmp.eq.s32.totalorder %s14, 0
    %p137 = por %p135, %p136
    %p138 = scmp.ne.s32.totalorder %s130, %s132
    %p139 = scmp.eq.s32.totalorder %s19, 3
    %p140 = por %p138, %p139
    %p141 = scmp.ne.s32.totalorder %s132, %s133
    %p142 = scmp.eq.s32.totalorder %s19, 0
    %p143 = por %p141, %p142
    %p144 = scmp.ne.s32.totalorder %s132, %s133
    %p145 = scmp.eq.s32.totalorder %s20, 3
    %p146 = por %p144, %p145
    %p148 = scmp.ne.s32.totalorder %s133, %s147
    %p149 = scmp.eq.s32.totalorder %s20, 0
    %p150 = por %p148, %p149
    %s151 = ssub.s32 %s21, %s33
    %s152 = ssub.s32 %s22, %s29
    %s153 = sor.u32 %s151, %s152
    %p154 = scmp.eq.s32.totalorder %s153, 0
    %s156 = sadd.s32 %s155, 1
    %s157 = scalar_select %p154, %s155, %s156
    %p160 = pneg %p154
    %p161 = scmp.eq.s32.totalorder %s14, 3
    %p162 = por %p160, %p161
    %p163 = scmp.ne.s32.totalorder %s155, %s158
    %p164 = scmp.eq.s32.totalorder %s14, 0
    %p165 = por %p163, %p164
    %p166 = scmp.ne.s32.totalorder %s155, %s158
    %p167 = scmp.eq.s32.totalorder %s19, 3
    %p168 = por %p166, %p167
    %p169 = scmp.ne.s32.totalorder %s158, %s159
    %p170 = scmp.eq.s32.totalorder %s19, 0
    %p171 = por %p169, %p170
    %p172 = scmp.ne.s32.totalorder %s158, %s159
    %p173 = scmp.eq.s32.totalorder %s20, 3
    %p174 = por %p172, %p173
    %p176 = scmp.ne.s32.totalorder %s159, %s175
    %p177 = scmp.eq.s32.totalorder %s20, 0
    %p178 = por %p176, %p177
    %s179 = sadd.s32 %s21, %s22
    %s180 = sadd.s32 %s33, %s29
    %s181 = ssub.s32 %s179, %s180
    %p182 = scmp.eq.s32.totalorder %s181, 0
    %s184 = sadd.s32 %s183, 1
    %s185 = scalar_select %p182, %s183, %s184
    %p188 = pneg %p182
    %p189 = scmp.eq.s32.totalorder %s14, 3
    %p190 = por %p188, %p189
    %p191 = scmp.ne.s32.totalorder %s183, %s186
    %p192 = scmp.eq.s32.totalorder %s14, 0
    %p193 = por %p191, %p192
    %p194 = scmp.ne.s32.totalorder %s183, %s186
    %p195 = scmp.eq.s32.totalorder %s19, 3
    %p196 = por %p194, %p195
    %p197 = scmp.ne.s32.totalorder %s186, %s187
    %p198 = scmp.eq.s32.totalorder %s19, 0
    %p199 = por %p197, %p198
    %p200 = scmp.ne.s32.totalorder %s186, %s187
    %p201 = scmp.eq.s32.totalorder %s20, 3
    %p202 = por %p200, %p201
    %p204 = scmp.ne.s32.totalorder %s187, %s203
    %p205 = scmp.eq.s32.totalorder %s20, 0
    %p206 = por %p204, %p205
    %s207 = sadd.s32 %s21, %s22
    %s208 = sadd.s32 %s33, %s29
    %s209 = ssub.s32 %s207, %s208
    %p210 = scmp.eq.s32.totalorder %s209, 0
    %s212 = sadd.s32 %s211, 1
    %s213 = scalar_select %p210, %s211, %s212
    %p216 = pneg %p210
    %p217 = scmp.eq.s32.totalorder %s14, 3
    %p218 = por %p216, %p217
    %p219 = scmp.ne.s32.totalorder %s211, %s214
    %p220 = scmp.eq.s32.totalorder %s14, 0
    %p221 = por %p219, %p220
    %p222 = scmp.ne.s32.totalorder %s211, %s214
    %p223 = scmp.eq.s32.totalorder %s19, 3
    %p224 = por %p222, %p223
    %p225 = scmp.ne.s32.totalorder %s214, %s215
    %p226 = scmp.eq.s32.totalorder %s19, 0
    %p227 = por %p225, %p226
    %p228 = scmp.ne.s32.totalorder %s214, %s215
    %p229 = scmp.eq.s32.totalorder %s20, 3
    %p230 = por %p228, %p229
    %p232 = scmp.ne.s32.totalorder %s215, %s231
    %p233 = scmp.eq.s32.totalorder %s20, 0
    %p234 = por %p232, %p233
    %p235 = scmp.le.s32.totalorder 1, %s14
    %p236 = scmp.lt.s32.totalorder %s14, 5
    %p237 = pnand %p235, %p236
    %p238 = pneg %p237
    // Predicated region
    $region9: #{unet_generator_pallas.15} parent=5 // pred_check
      _
    $region10: #{unet_generator_pallas.15} parent=5 // pred_check_branch
      %240 = sbr.rel (%p237) target = $region12
    $region11: #{unet_generator_pallas.15} parent=5 // pred_region
      %s241 = ssub.s32 %s14, 1
      // Predicated region
      $region13: #{unet_generator_pallas.15} parent=11 // pred_check
        %p242 = pneg %p101
      $region14: #{unet_generator_pallas.15} parent=11 // pred_check_branch
        %244 = sbr.rel (%p242) target = $region16
      $region15: #{unet_generator_pallas.15} parent=11 // pred_region
        _
      $region16: #{unet_generator_pallas.15} parent=11 // pred_fallthru
        _
      // Predicated region
      $region17: #{unet_generator_pallas.15} parent=11 // pred_check
        %p245 = pneg %p122
      $region18: #{unet_generator_pallas.15} parent=11 // pred_check_branch
        %247 = sbr.rel (%p245) target = $region20
      $region19: #{unet_generator_pallas.15} parent=11 // pred_region
        _
      $region20: #{unet_generator_pallas.15} parent=11 // pred_fallthru
        _
      // Predicated region
      $region21: #{unet_generator_pallas.15} parent=11 // pred_check
        %p248 = pneg %p143
      $region22: #{unet_generator_pallas.15} parent=11 // pred_check_branch
        %250 = sbr.rel (%p248) target = $region24
      $region23: #{unet_generator_pallas.15} parent=11 // pred_region
        _
      $region24: #{unet_generator_pallas.15} parent=11 // pred_fallthru
        _
    $region12: #{unet_generator_pallas.15} parent=5 // pred_fallthru
      _
    %p251 = scmp.lt.s32.totalorder %s14, 4
    // Predicated region
    $region25: #{unet_generator_pallas.15} parent=5 // pred_check
      %p252 = pneg %p251
    $region26: #{unet_generator_pallas.15} parent=5 // pred_check_branch
      %254 = sbr.rel (%p252) target = $region28
    $region27: #{unet_generator_pallas.15} parent=5 // pred_region
      // Predicated region
      $region29: #{unet_generator_pallas.15} parent=27 // pred_check
        %p255 = pneg %p48
      $region30: #{unet_generator_pallas.15} parent=27 // pred_check_branch
        %257 = sbr.rel (%p255) target = $region32
      $region31: #{unet_generator_pallas.15} parent=27 // pred_region
        %p258 = scmp.lt.s32.totalorder %s21, 3
        %s259 = scalar_select %p258, %s21, 3
        %p260 = scmp.lt.s32.totalorder %s22, 0
        %s261 = scalar_select %p260, %s22, 0
        %s262 = smul.addr %s261, 4
        %s263 = smul.addr %s259, 4
        %s264 = sadd.s32 %s262, %s263
        %s265 = smul.addr %s264, 2
        %s266 = scalar_lea.vmem %s0, %s265
      $region32: #{unet_generator_pallas.15} parent=27 // pred_fallthru
        _
      // Predicated region
      $region33: #{unet_generator_pallas.15} parent=27 // pred_check
        %p267 = pneg %p74
      $region34: #{unet_generator_pallas.15} parent=27 // pred_check_branch
        %269 = sbr.rel (%p267) target = $region36
      $region35: #{unet_generator_pallas.15} parent=27 // pred_region
        %p270 = scmp.lt.s32.totalorder %s21, 3
        %s271 = scalar_select %p270, %s21, 3
        %s272 = smul.addr %s271, 64
        %s273 = smul.addr %s272, 8
        %s274 = scalar_lea.vmem %s1, %s273
      $region36: #{unet_generator_pallas.15} parent=27 // pred_fallthru
        _
    $region28: #{unet_generator_pallas.15} parent=5 // pred_fallthru
      _
    %p275 = scmp.le.s32.totalorder 1, %s14
    %p276 = scmp.lt.s32.totalorder %s14, 5
    %p277 = pnand %p275, %p276
    %p278 = pneg %p277
    // Predicated region
    $region37: #{unet_generator_pallas.15} parent=5 // pred_check
      _
    $region38: #{unet_generator_pallas.15} parent=5 // pred_check_branch
      %280 = sbr.rel (%p277) target = $region40
    $region39: #{unet_generator_pallas.15} parent=5 // pred_region
      %s281 = ssub.s32 %s14, 1
      %p282 = scmp.lt.s32.totalorder %s23, 3
      %s283 = scalar_select %p282, %s23, 3
      %p284 = scmp.lt.s32.totalorder %s24, 0
      %s285 = scalar_select %p284, %s24, 0
      %s286 = smul.addr %s285, 4
      %s287 = smul.addr %s283, 4
      %s288 = sadd.s32 %s286, %s287
      %s289 = smul.addr %s288, 2
      %s290 = scalar_lea.vmem %s0, %s289
      %p291 = pneg %p54
      %p292 = pneg %p51
      %p293 = scmp.lt.s32.totalorder %s23, 3
      %s294 = scalar_select %p293, %s23, 3
      %s295 = smul.addr %s294, 64
      %s296 = smul.addr %s295, 8
      %s297 = scalar_lea.vmem %s1, %s296
      %p298 = pneg %p80
      %p299 = pneg %p77
      %p300 = pneg %p101
      %p301 = pneg %p98
      %p302 = pneg %p122
      %p303 = pneg %p119
      %p304 = pneg %p143
      %p305 = pneg %p140
      %p306 = pneg %p171
      %p307 = pneg %p168
      %p308 = scmp.lt.s32.totalorder %s23, 3
      %s309 = scalar_select %p308, %s23, 3
      %p310 = scmp.lt.s32.totalorder %s24, 0
      %s311 = scalar_select %p310, %s24, 0
      %s312 = sadd.s32 %s311, %s309
      %s313 = smul.addr %s312, 2
      %s314 = scalar_lea.vmem %s5, %s313
      %p315 = pneg %p199
      %p316 = pneg %p196
      %s317 = sadd.s32 %s23, %s24
      %p318 = scmp.lt.s32.totalorder %s317, 3
      %s319 = scalar_select %p318, %s317, 3
      %s320 = smul.addr %s319, 8
      %s321 = scalar_lea.vmem %s6, %s320
      %p322 = pneg %p227
      %p323 = pneg %p224
      %s324 = sadd.s32 %s23, %s24
      %p325 = scmp.lt.s32.totalorder %s324, 3
      %s326 = scalar_select %p325, %s324, 3
      %s327 = smul.addr %s326, 8
      %s328 = scalar_lea.vmem %s7, %s327
      %p329 = scmp.lt.s32.totalorder %s23, 3
      %s330 = scalar_select %p329, %s23, 3
      %p331 = scmp.lt.s32.totalorder %s24, 0
      %s332 = scalar_select %p331, %s24, 0
      %s333 = smul.addr %s332, 4
      %s334 = smul.addr %s330, 4
      %s335 = sadd.s32 %s333, %s334
      %s336 = smul.addr %s335, 2
      %s337 = scalar_lea.vmem %s0, %s336
      %p338 = scmp.lt.s32.totalorder %s23, 3
      %s339 = scalar_select %p338, %s23, 3
      %s340 = smul.addr %s339, 64
      %s341 = smul.addr %s340, 8
      %s342 = scalar_lea.vmem %s1, %s341
      %p343 = scmp.lt.s32.totalorder %s23, 3
      %s344 = scalar_select %p343, %s23, 3
      %p345 = scmp.lt.s32.totalorder %s24, 0
      %s346 = scalar_select %p345, %s24, 0
      %s347 = sadd.s32 %s346, %s344
      %s348 = smul.addr %s347, 2
      %s349 = scalar_lea.vmem %s5, %s348
      %s350 = sadd.s32 %s23, %s24
      %p351 = scmp.lt.s32.totalorder %s350, 3
      %s352 = scalar_select %p351, %s350, 3
      %s353 = smul.addr %s352, 8
      %s354 = scalar_lea.vmem %s6, %s353
      %s355 = sadd.s32 %s23, %s24
      %s356 = sadd.s32 %s23, %s24
      %p357 = scmp.lt.s32.totalorder %s356, 3
      %s358 = scalar_select %p357, %s356, 3
      %s359 = smul.addr %s358, 8
      %s360 = scalar_lea.vmem %s7, %s359
      %s361 = sadd.s32 %s23, %s24
      %v362 = vld [vmem:[%s337] sm:$0xff]
      %v363 = vld [vmem:[%s2] sm:$0xf]
      %v365 = vperm.slane %v363, 0
      %v366 = vperm.slane %v363, 1
      %v367 = vperm.slane %v363, 2
      %v368 = vperm.slane %v363, 3
      %v369 = vrot.slane %v366, 6
      %v370 = vrot.slane %v367, 4
      %v371 = vrot.slane %v368, 2
      %vm372 = vcmask 1041408
      %v373 = vsel %vm372, %v365, %v369
      %vm374 = vcmask 1045508
      %v375 = vsel %vm374, %v370, %v371
      %vm376 = vcmask 1043456
      %v377 = vsel %vm376, %v373, %v375
      %v379 = vmul.f32 %v362, %v377
      %v380 = vld [vmem:[%s3] sm:$0xf]
      %v382 = vperm.slane %v380, 0
      %v383 = vperm.slane %v380, 1
      %v384 = vperm.slane %v380, 2
      %v385 = vperm.slane %v380, 3
      %v386 = vrot.slane %v383, 6
      %v387 = vrot.slane %v384, 4
      %v388 = vrot.slane %v385, 2
      %v389 = vsel %vm372, %v382, %v386
      %v390 = vsel %vm374, %v387, %v388
      %v391 = vsel %vm376, %v389, %v390
      %v393 = vadd.f32 %v379, %v391
      %v394 = vmax.f32 %v393, 0.0
      %v395 = vld [vmem:[%s342] sm:$0xff]
      %v396 = vld [vmem:[%s342 + $0x8] sm:$0xff]
      %v397 = vld [vmem:[%s342 + $0x10] sm:$0xff]
      %v398 = vld [vmem:[%s342 + $0x18] sm:$0xff]
      %v399 = vld [vmem:[%s342 + $0x20] sm:$0xff]
      %v400 = vld [vmem:[%s342 + $0x28] sm:$0xff]
      %v401 = vld [vmem:[%s342 + $0x30] sm:$0xff]
      %v402 = vld [vmem:[%s342 + $0x38] sm:$0xff]
      %v403 = vld [vmem:[%s342 + $0x40] sm:$0xff]
      %v404 = vld [vmem:[%s342 + $0x48] sm:$0xff]
      %v405 = vld [vmem:[%s342 + $0x50] sm:$0xff]
      %v406 = vld [vmem:[%s342 + $0x58] sm:$0xff]
      %v407 = vld [vmem:[%s342 + $0x60] sm:$0xff]
      %v408 = vld [vmem:[%s342 + $0x68] sm:$0xff]
      %v409 = vld [vmem:[%s342 + $0x70] sm:$0xff]
      %v410 = vld [vmem:[%s342 + $0x78] sm:$0xff]
      %v411 = vld [vmem:[%s342 + $0x80] sm:$0xff]
      %v412 = vld [vmem:[%s342 + $0x88] sm:$0xff]
      %v413 = vld [vmem:[%s342 + $0x90] sm:$0xff]
      %v414 = vld [vmem:[%s342 + $0x98] sm:$0xff]
      %v415 = vld [vmem:[%s342 + $0xa0] sm:$0xff]
      %v416 = vld [vmem:[%s342 + $0xa8] sm:$0xff]
      %v417 = vld [vmem:[%s342 + $0xb0] sm:$0xff]
      %v418 = vld [vmem:[%s342 + $0xb8] sm:$0xff]
      %v419 = vld [vmem:[%s342 + $0xc0] sm:$0xff]
      %v420 = vld [vmem:[%s342 + $0xc8] sm:$0xff]
      %v421 = vld [vmem:[%s342 + $0xd0] sm:$0xff]
      %v422 = vld [vmem:[%s342 + $0xd8] sm:$0xff]
      %v423 = vld [vmem:[%s342 + $0xe0] sm:$0xff]
      %v424 = vld [vmem:[%s342 + $0xe8] sm:$0xff]
      %v425 = vld [vmem:[%s342 + $0xf0] sm:$0xff]
      %v426 = vld [vmem:[%s342 + $0xf8] sm:$0xff]
      %v427 = vld [vmem:[%s342 + $0x100] sm:$0xff]
      %v428 = vld [vmem:[%s342 + $0x108] sm:$0xff]
      %v429 = vld [vmem:[%s342 + $0x110] sm:$0xff]
      %v430 = vld [vmem:[%s342 + $0x118] sm:$0xff]
      %v431 = vld [vmem:[%s342 + $0x120] sm:$0xff]
      %v432 = vld [vmem:[%s342 + $0x128] sm:$0xff]
      %v433 = vld [vmem:[%s342 + $0x130] sm:$0xff]
      %v434 = vld [vmem:[%s342 + $0x138] sm:$0xff]
      %v435 = vld [vmem:[%s342 + $0x140] sm:$0xff]
      %v436 = vld [vmem:[%s342 + $0x148] sm:$0xff]
      %v437 = vld [vmem:[%s342 + $0x150] sm:$0xff]
      %v438 = vld [vmem:[%s342 + $0x158] sm:$0xff]
      %v439 = vld [vmem:[%s342 + $0x160] sm:$0xff]
      %v440 = vld [vmem:[%s342 + $0x168] sm:$0xff]
      %v441 = vld [vmem:[%s342 + $0x170] sm:$0xff]
      %v442 = vld [vmem:[%s342 + $0x178] sm:$0xff]
      %v443 = vld [vmem:[%s342 + $0x180] sm:$0xff]
      %v444 = vld [vmem:[%s342 + $0x188] sm:$0xff]
      %v445 = vld [vmem:[%s342 + $0x190] sm:$0xff]
      %v446 = vld [vmem:[%s342 + $0x198] sm:$0xff]
      %v447 = vld [vmem:[%s342 + $0x1a0] sm:$0xff]
      %v448 = vld [vmem:[%s342 + $0x1a8] sm:$0xff]
      %v449 = vld [vmem:[%s342 + $0x1b0] sm:$0xff]
      %v450 = vld [vmem:[%s342 + $0x1b8] sm:$0xff]
      %v451 = vld [vmem:[%s342 + $0x1c0] sm:$0xff]
      %v452 = vld [vmem:[%s342 + $0x1c8] sm:$0xff]
      %v453 = vld [vmem:[%s342 + $0x1d0] sm:$0xff]
      %v454 = vld [vmem:[%s342 + $0x1d8] sm:$0xff]
      %v455 = vld [vmem:[%s342 + $0x1e0] sm:$0xff]
      %v456 = vld [vmem:[%s342 + $0x1e8] sm:$0xff]
      %v457 = vld [vmem:[%s342 + $0x1f0] sm:$0xff]
      %v458 = vld [vmem:[%s342 + $0x1f8] sm:$0xff]
      %v459 = vld [vmem:[%s4] sm:$0x1]
      %v461 = vperm.slane %v459, 0
      %464 = vst [vmem:[#allocation1] ss:$4 sm:$0xff] %v394
      %v465 = vld.sshfl [vmem:[#allocation1] sm:$0xff pattern:$0x73625140]
      %v466 = vld.sshfl [vmem:[#allocation1 + $0x8] sm:$0xff pattern:$0x73625140]
      %v467 = vld.sshfl [vmem:[#allocation1 + $0x10] sm:$0xff pattern:$0x73625140]
      %v468 = vld.sshfl [vmem:[#allocation1 + $0x18] sm:$0xff pattern:$0x73625140]
      %473 = vmatpush.msra.mxu0 %v410
      %474 = vmatpush.msra.mxu0 %v409
      %475 = vmatpush.msra.mxu0 %v408
      %476 = vmatpush.msra.mxu0 %v407
      %477 = vmatpush.msra.mxu0 %v406
      %478 = vmatpush.msra.mxu0 %v405
      %479 = vmatpush.msra.mxu0 %v404
      %480 = vmatpush.msra.mxu0 %v403
      %481 = vmatpush.msra.mxu0 %v402
      %482 = vmatpush.msra.mxu0 %v401
      %483 = vmatpush.msra.mxu0 %v400
      %484 = vmatpush.msra.mxu0 %v399
      %485 = vmatpush.msra.mxu0 %v398
      %486 = vmatpush.msra.mxu0 %v397
      %487 = vmatpush.msra.mxu0 %v396
      %488 = vmatpush.msra.mxu0 %v395
      %489 = vmatmul.f32.gmra.mxu0 %v465
      %v490 = vpop.f32.mrf.mxu0
      %v491 = vadd.f32 %v461, %v490
      %492 = vdwg.mxu0
      %493 = vmatpush.msra.mxu0 %v426
      %494 = vmatpush.msra.mxu0 %v425
      %495 = vmatpush.msra.mxu0 %v424
      %496 = vmatpush.msra.mxu0 %v423
      %497 = vmatpush.msra.mxu0 %v422
      %498 = vmatpush.msra.mxu0 %v421
      %499 = vmatpush.msra.mxu0 %v420
      %500 = vmatpush.msra.mxu0 %v419
      %501 = vmatpush.msra.mxu0 %v418
      %502 = vmatpush.msra.mxu0 %v417
      %503 = vmatpush.msra.mxu0 %v416
      %504 = vmatpush.msra.mxu0 %v415
      %505 = vmatpush.msra.mxu0 %v414
      %506 = vmatpush.msra.mxu0 %v413
      %507 = vmatpush.msra.mxu0 %v412
      %508 = vmatpush.msra.mxu0 %v411
      %509 = vmatmul.f32.gmra.mxu0 %v466
      %v510 = vpop.f32.mrf.mxu0
      %v511 = vadd.f32 %v491, %v510
      %512 = vdwg.mxu0
      %513 = vmatpush.msra.mxu0 %v442
      %514 = vmatpush.msra.mxu0 %v441
      %515 = vmatpush.msra.mxu0 %v440
      %516 = vmatpush.msra.mxu0 %v439
      %517 = vmatpush.msra.mxu0 %v438
      %518 = vmatpush.msra.mxu0 %v437
      %519 = vmatpush.msra.mxu0 %v436
      %520 = vmatpush.msra.mxu0 %v435
      %521 = vmatpush.msra.mxu0 %v434
      %522 = vmatpush.msra.mxu0 %v433
      %523 = vmatpush.msra.mxu0 %v432
      %524 = vmatpush.msra.mxu0 %v431
      %525 = vmatpush.msra.mxu0 %v430
      %526 = vmatpush.msra.mxu0 %v429
      %527 = vmatpush.msra.mxu0 %v428
      %528 = vmatpush.msra.mxu0 %v427
      %529 = vmatmul.f32.gmra.mxu0 %v467
      %v530 = vpop.f32.mrf.mxu0
      %v531 = vadd.f32 %v511, %v530
      %532 = vdwg.mxu0
      %533 = vmatpush.msra.mxu0 %v458
      %534 = vmatpush.msra.mxu0 %v457
      %535 = vmatpush.msra.mxu0 %v456
      %536 = vmatpush.msra.mxu0 %v455
      %537 = vmatpush.msra.mxu0 %v454
      %538 = vmatpush.msra.mxu0 %v453
      %539 = vmatpush.msra.mxu0 %v452
      %540 = vmatpush.msra.mxu0 %v451
      %541 = vmatpush.msra.mxu0 %v450
      %542 = vmatpush.msra.mxu0 %v449
      %543 = vmatpush.msra.mxu0 %v448
      %544 = vmatpush.msra.mxu0 %v447
      %545 = vmatpush.msra.mxu0 %v446
      %546 = vmatpush.msra.mxu0 %v445
      %547 = vmatpush.msra.mxu0 %v444
      %548 = vmatpush.msra.mxu0 %v443
      %549 = vmatmul.f32.gmra.mxu0 %v468
      %v550 = vpop.f32.mrf.mxu0
      %v551 = vadd.f32 %v531, %v550
      %552 = vdwg.mxu0
      %553 = vst [vmem:[%s349] sm:$0x3] %v551
      %v554 = vlaneseq
      %v555 = vshrl.u32 %v554, 7
      %v556 = vsel %vm372, %v551, 0.0
      %v557 = vrot.slane %v556, 4
      %v558 = vadd.f32 %v556, %v557
      %v559 = vrot.slane %v558, 2
      %v560 = vadd.f32 %v558, %v559
      %v561 = vrot.slane %v560, 1
      %v562 = vadd.f32 %v560, %v561
      %v563 = vmul.f32 %v551, %v551
      %v564 = vsel %vm372, %v563, 0.0
      %v565 = vrot.slane %v564, 4
      %v566 = vadd.f32 %v564, %v565
      %v567 = vrot.slane %v566, 2
      %v568 = vadd.f32 %v566, %v567
      %v569 = vrot.slane %v568, 1
      %v570 = vadd.f32 %v568, %v569
      %vm571 = vcmp.eq.s32.totalorder %v555, 0
      %v572 = vsel %vm571, %v562, 0.0
      %573 = vst [vmem:[%s354] sm:$0xff] %v572
      %v574 = vsel %vm571, %v570, 0.0
      %575 = vst [vmem:[%s360] sm:$0xff] %v574
      %p576 = scmp.lt.s32.totalorder %s23, 3
      %s577 = scalar_select %p576, %s23, 3
      %p578 = scmp.lt.s32.totalorder %s24, 0
      %s579 = scalar_select %p578, %s24, 0
      %s580 = sadd.s32 %s579, %s577
      %s581 = smul.addr %s580, 2
      %s582 = scalar_lea.vmem %s5, %s581
      %s583 = sadd.s32 %s23, %s24
      %p584 = scmp.lt.s32.totalorder %s583, 3
      %s585 = scalar_select %p584, %s583, 3
      %s586 = smul.addr %s585, 8
      %s587 = scalar_lea.vmem %s6, %s586
      %s588 = sadd.s32 %s23, %s24
      %p589 = scmp.lt.s32.totalorder %s588, 3
      %s590 = scalar_select %p589, %s588, 3
      %s591 = smul.addr %s590, 8
      %s592 = scalar_lea.vmem %s7, %s591
      // Predicated region
      $region41: #{unet_generator_pallas.15} parent=39 // pred_check
        %p593 = pneg %p168
      $region42: #{unet_generator_pallas.15} parent=39 // pred_check_branch
        %595 = sbr.rel (%p593) target = $region44
      $region43: #{unet_generator_pallas.15} parent=39 // pred_region
        _
      $region44: #{unet_generator_pallas.15} parent=39 // pred_fallthru
        _
      // Predicated region
      $region45: #{unet_generator_pallas.15} parent=39 // pred_check
        %p596 = pneg %p196
      $region46: #{unet_generator_pallas.15} parent=39 // pred_check_branch
        %598 = sbr.rel (%p596) target = $region48
      $region47: #{unet_generator_pallas.15} parent=39 // pred_region
        %s599 = sadd.s32 %s23, %s24
      $region48: #{unet_generator_pallas.15} parent=39 // pred_fallthru
        _
      // Predicated region
      $region49: #{unet_generator_pallas.15} parent=39 // pred_check
        %p600 = pneg %p224
      $region50: #{unet_generator_pallas.15} parent=39 // pred_check_branch
        %602 = sbr.rel (%p600) target = $region52
      $region51: #{unet_generator_pallas.15} parent=39 // pred_region
        %s603 = sadd.s32 %s23, %s24
      $region52: #{unet_generator_pallas.15} parent=39 // pred_fallthru
        _
    $region40: #{unet_generator_pallas.15} parent=5 // pred_fallthru
      _
    %p604 = scmp.le.s32.totalorder 2, %s14
    // Predicated region
    $region53: #{unet_generator_pallas.15} parent=5 // pred_check
      %p605 = pneg %p604
    $region54: #{unet_generator_pallas.15} parent=5 // pred_check_branch
      %607 = sbr.rel (%p605) target = $region56
    $region55: #{unet_generator_pallas.15} parent=5 // pred_region
      %s608 = ssub.s32 %s14, 2
      // Predicated region
      $region57: #{unet_generator_pallas.15} parent=55 // pred_check
        %p609 = pneg %p174
      $region58: #{unet_generator_pallas.15} parent=55 // pred_check_branch
        %611 = sbr.rel (%p609) target = $region60
      $region59: #{unet_generator_pallas.15} parent=55 // pred_region
        %p612 = scmp.lt.s32.totalorder %s25, 3
        %s613 = scalar_select %p612, %s25, 3
        %p614 = scmp.lt.s32.totalorder %s26, 0
        %s615 = scalar_select %p614, %s26, 0
        %s616 = sadd.s32 %s615, %s613
        %s617 = smul.addr %s616, 2
        %s618 = scalar_lea.vmem %s5, %s617
      $region60: #{unet_generator_pallas.15} parent=55 // pred_fallthru
        _
      // Predicated region
      $region61: #{unet_generator_pallas.15} parent=55 // pred_check
        %p619 = pneg %p202
      $region62: #{unet_generator_pallas.15} parent=55 // pred_check_branch
        %621 = sbr.rel (%p619) target = $region64
      $region63: #{unet_generator_pallas.15} parent=55 // pred_region
        %s622 = sadd.s32 %s25, %s26
        %p623 = scmp.lt.s32.totalorder %s622, 3
        %s624 = scalar_select %p623, %s622, 3
        %s625 = smul.addr %s624, 8
        %s626 = scalar_lea.vmem %s6, %s625
      $region64: #{unet_generator_pallas.15} parent=55 // pred_fallthru
        _
      // Predicated region
      $region65: #{unet_generator_pallas.15} parent=55 // pred_check
        %p627 = pneg %p230
      $region66: #{unet_generator_pallas.15} parent=55 // pred_check_branch
        %629 = sbr.rel (%p627) target = $region68
      $region67: #{unet_generator_pallas.15} parent=55 // pred_region
        %s630 = sadd.s32 %s25, %s26
        %p631 = scmp.lt.s32.totalorder %s630, 3
        %s632 = scalar_select %p631, %s630, 3
        %s633 = smul.addr %s632, 8
        %s634 = scalar_lea.vmem %s7, %s633
      $region68: #{unet_generator_pallas.15} parent=55 // pred_fallthru
        _
    $region56: #{unet_generator_pallas.15} parent=5 // pred_fallthru
      _
  $region6: #{unet_generator_pallas.15} parent=0 // loop_footer
    %s18 = sadd.s32 1, %s14
  $region7: #{unet_generator_pallas.15} parent=0 // loop_footer_branch
    %13 = sbr.rel target = $region3
  $region8: #{unet_generator_pallas.15} parent=0 // loop_exit
    _

// kernel: unet_generator_pallas.16
$region0: #{unet_generator_pallas.16}
  #allocation0 [shape = 'u32[]', space=smem, size = 0x4, offset = 0x4, fixed_abs, tag = 'smem constant byte address 0x4 - core index']
  #allocation1 [shape = 'u32[72,128]{1,0:T(1,128)}', space=vmem, size = 0x9000, scoped, tag = 'internal scratch']
  %s0 = inlined_call_operand.vmem [shape: f32[4,8,1024], index: 0, kind: input, shape index: {}]
  %s1 = inlined_call_operand.vmem [shape: f32[4,1024,128], index: 1, kind: input, shape index: {}]
  %s2 = inlined_call_operand.vmem [shape: f32[1,1024], index: 2, kind: input, shape index: {}]
  %s3 = inlined_call_operand.vmem [shape: f32[1,1024], index: 3, kind: input, shape index: {}]
  %s4 = inlined_call_operand.vmem [shape: f32[1,128], index: 4, kind: input, shape index: {}]
  %s5 = inlined_call_operand.vmem [shape: f32[4,8,128], index: 5, kind: output, shape index: {0}]
  %s6 = inlined_call_operand.vmem [shape: f32[32,128], index: 6, kind: output, shape index: {1}]
  %s7 = inlined_call_operand.vmem [shape: f32[32,128], index: 7, kind: output, shape index: {2}]
  %8 = xla_tuple %s5, %s6, %s7
  %s9 = sld [smem:[#allocation0]]
  $region69: #{unet_generator_pallas.16} parent=0
    _
  %s11 = ssub.s32 1, %s9
  %s12 = scalar_select 0, %s11, %s9
  loop: start=0, step=1, limit=6
  $region2: #{unet_generator_pallas.16} parent=0 // loop_pre_header
    _
  $region3: #{unet_generator_pallas.16} parent=0 // loop_header
    %s14 = sphi 0, %s18
    %p15 = scmp.ge.s32.totalorder %s14, 6
    %s21 = sphi 0, %s33
    %s22 = sphi 0, %s29
    %s23 = sphi 0, %s21
    %s24 = sphi 0, %s22
    %s25 = sphi 0, %s23
    %s26 = sphi 0, %s24
    %s38 = sphi 0, %s40
    %s41 = sphi 0, %s38
    %s42 = sphi 0, %s41
    %s58 = sphi 0, %s42
    %s64 = sphi 0, %s66
    %s67 = sphi 0, %s64
    %s68 = sphi 0, %s67
    %s84 = sphi 0, %s68
    %s88 = sphi 0, %s88
    %s90 = sphi 0, %s88
    %s91 = sphi 0, %s90
    %s105 = sphi 0, %s91
    %s109 = sphi 0, %s109
    %s111 = sphi 0, %s109
    %s112 = sphi 0, %s111
    %s126 = sphi 0, %s112
    %s130 = sphi 0, %s130
    %s132 = sphi 0, %s130
    %s133 = sphi 0, %s132
    %s147 = sphi 0, %s133
    %s155 = sphi 0, %s157
    %s158 = sphi 0, %s155
    %s159 = sphi 0, %s158
    %s175 = sphi 0, %s159
    %s183 = sphi 0, %s185
    %s186 = sphi 0, %s183
    %s187 = sphi 0, %s186
    %s203 = sphi 0, %s187
    %s211 = sphi 0, %s213
    %s214 = sphi 0, %s211
    %s215 = sphi 0, %s214
    %s231 = sphi 0, %s215
  $region4: #{unet_generator_pallas.16} parent=0 // loop_header_branch
    %17 = sbr.rel (%p15) target = $region8
  $region5: #{unet_generator_pallas.16} parent=0 // loop_body
    %s19 = ssub.s32 %s14, 1
    %s20 = ssub.s32 %s14, 2
    %s27 = sadd.s32 1, %s22
    %p28 = scmp.ge.s32.totalorder %s27, 1
    %s29 = scalar_select %p28, 0, %s27
    %s30 = sadd.s32 1, %s21
    %s31 = scalar_select %p28, %s30, %s21
    %p32 = scmp.ge.s32.totalorder %s31, 4
    %s33 = scalar_select %p32, 0, %s31
    %s34 = ssub.s32 %s21, %s33
    %s35 = ssub.s32 %s22, %s29
    %s36 = sor.u32 %s34, %s35
    %p37 = scmp.eq.s32.totalorder %s36, 0
    %s39 = sadd.s32 %s38, 1
    %s40 = scalar_select %p37, %s38, %s39
    %p43 = pneg %p37
    %p44 = scmp.eq.s32.totalorder %s14, 3
    %p45 = por %p43, %p44
    %p46 = scmp.ne.s32.totalorder %s38, %s41
    %p47 = scmp.eq.s32.totalorder %s14, 0
    %p48 = por %p46, %p47
    %p49 = scmp.ne.s32.totalorder %s38, %s41
    %p50 = scmp.eq.s32.totalorder %s19, 3
    %p51 = por %p49, %p50
    %p52 = scmp.ne.s32.totalorder %s41, %s42
    %p53 = scmp.eq.s32.totalorder %s19, 0
    %p54 = por %p52, %p53
    %p55 = scmp.ne.s32.totalorder %s41, %s42
    %p56 = scmp.eq.s32.totalorder %s20, 3
    %p57 = por %p55, %p56
    %p59 = scmp.ne.s32.totalorder %s42, %s58
    %p60 = scmp.eq.s32.totalorder %s20, 0
    %p61 = por %p59, %p60
    %s62 = ssub.s32 %s21, %s33
    %p63 = scmp.eq.s32.totalorder %s62, 0
    %s65 = sadd.s32 %s64, 1
    %s66 = scalar_select %p63, %s64, %s65
    %p69 = pneg %p63
    %p70 = scmp.eq.s32.totalorder %s14, 3
    %p71 = por %p69, %p70
    %p72 = scmp.ne.s32.totalorder %s64, %s67
    %p73 = scmp.eq.s32.totalorder %s14, 0
    %p74 = por %p72, %p73
    %p75 = scmp.ne.s32.totalorder %s64, %s67
    %p76 = scmp.eq.s32.totalorder %s19, 3
    %p77 = por %p75, %p76
    %p78 = scmp.ne.s32.totalorder %s67, %s68
    %p79 = scmp.eq.s32.totalorder %s19, 0
    %p80 = por %p78, %p79
    %p81 = scmp.ne.s32.totalorder %s67, %s68
    %p82 = scmp.eq.s32.totalorder %s20, 3
    %p83 = por %p81, %p82
    %p85 = scmp.ne.s32.totalorder %s68, %s84
    %p86 = scmp.eq.s32.totalorder %s20, 0
    %p87 = por %p85, %p86
    %s89 = sadd.s32 %s88, 1
    %p92 = scmp.eq.s32.totalorder %s14, 3
    %p93 = scmp.ne.s32.totalorder %s88, %s90
    %p94 = scmp.eq.s32.totalorder %s14, 0
    %p95 = por %p93, %p94
    %p96 = scmp.ne.s32.totalorder %s88, %s90
    %p97 = scmp.eq.s32.totalorder %s19, 3
    %p98 = por %p96, %p97
    %p99 = scmp.ne.s32.totalorder %s90, %s91
    %p100 = scmp.eq.s32.totalorder %s19, 0
    %p101 = por %p99, %p100
    %p102 = scmp.ne.s32.totalorder %s90, %s91
    %p103 = scmp.eq.s32.totalorder %s20, 3
    %p104 = por %p102, %p103
    %p106 = scmp.ne.s32.totalorder %s91, %s105
    %p107 = scmp.eq.s32.totalorder %s20, 0
    %p108 = por %p106, %p107
    %s110 = sadd.s32 %s109, 1
    %p113 = scmp.eq.s32.totalorder %s14, 3
    %p114 = scmp.ne.s32.totalorder %s109, %s111
    %p115 = scmp.eq.s32.totalorder %s14, 0
    %p116 = por %p114, %p115
    %p117 = scmp.ne.s32.totalorder %s109, %s111
    %p118 = scmp.eq.s32.totalorder %s19, 3
    %p119 = por %p117, %p118
    %p120 = scmp.ne.s32.totalorder %s111, %s112
    %p121 = scmp.eq.s32.totalorder %s19, 0
    %p122 = por %p120, %p121
    %p123 = scmp.ne.s32.totalorder %s111, %s112
    %p124 = scmp.eq.s32.totalorder %s20, 3
    %p125 = por %p123, %p124
    %p127 = scmp.ne.s32.totalorder %s112, %s126
    %p128 = scmp.eq.s32.totalorder %s20, 0
    %p129 = por %p127, %p128
    %s131 = sadd.s32 %s130, 1
    %p134 = scmp.eq.s32.totalorder %s14, 3
    %p135 = scmp.ne.s32.totalorder %s130, %s132
    %p136 = scmp.eq.s32.totalorder %s14, 0
    %p137 = por %p135, %p136
    %p138 = scmp.ne.s32.totalorder %s130, %s132
    %p139 = scmp.eq.s32.totalorder %s19, 3
    %p140 = por %p138, %p139
    %p141 = scmp.ne.s32.totalorder %s132, %s133
    %p142 = scmp.eq.s32.totalorder %s19, 0
    %p143 = por %p141, %p142
    %p144 = scmp.ne.s32.totalorder %s132, %s133
    %p145 = scmp.eq.s32.totalorder %s20, 3
    %p146 = por %p144, %p145
    %p148 = scmp.ne.s32.totalorder %s133, %s147
    %p149 = scmp.eq.s32.totalorder %s20, 0
    %p150 = por %p148, %p149
    %s151 = ssub.s32 %s21, %s33
    %s152 = ssub.s32 %s22, %s29
    %s153 = sor.u32 %s151, %s152
    %p154 = scmp.eq.s32.totalorder %s153, 0
    %s156 = sadd.s32 %s155, 1
    %s157 = scalar_select %p154, %s155, %s156
    %p160 = pneg %p154
    %p161 = scmp.eq.s32.totalorder %s14, 3
    %p162 = por %p160, %p161
    %p163 = scmp.ne.s32.totalorder %s155, %s158
    %p164 = scmp.eq.s32.totalorder %s14, 0
    %p165 = por %p163, %p164
    %p166 = scmp.ne.s32.totalorder %s155, %s158
    %p167 = scmp.eq.s32.totalorder %s19, 3
    %p168 = por %p166, %p167
    %p169 = scmp.ne.s32.totalorder %s158, %s159
    %p170 = scmp.eq.s32.totalorder %s19, 0
    %p171 = por %p169, %p170
    %p172 = scmp.ne.s32.totalorder %s158, %s159
    %p173 = scmp.eq.s32.totalorder %s20, 3
    %p174 = por %p172, %p173
    %p176 = scmp.ne.s32.totalorder %s159, %s175
    %p177 = scmp.eq.s32.totalorder %s20, 0
    %p178 = por %p176, %p177
    %s179 = sadd.s32 %s21, %s22
    %s180 = sadd.s32 %s33, %s29
    %s181 = ssub.s32 %s179, %s180
    %p182 = scmp.eq.s32.totalorder %s181, 0
    %s184 = sadd.s32 %s183, 1
    %s185 = scalar_select %p182, %s183, %s184
    %p188 = pneg %p182
    %p189 = scmp.eq.s32.totalorder %s14, 3
    %p190 = por %p188, %p189
    %p191 = scmp.ne.s32.totalorder %s183, %s186
    %p192 = scmp.eq.s32.totalorder %s14, 0
    %p193 = por %p191, %p192
    %p194 = scmp.ne.s32.totalorder %s183, %s186
    %p195 = scmp.eq.s32.totalorder %s19, 3
    %p196 = por %p194, %p195
    %p197 = scmp.ne.s32.totalorder %s186, %s187
    %p198 = scmp.eq.s32.totalorder %s19, 0
    %p199 = por %p197, %p198
    %p200 = scmp.ne.s32.totalorder %s186, %s187
    %p201 = scmp.eq.s32.totalorder %s20, 3
    %p202 = por %p200, %p201
    %p204 = scmp.ne.s32.totalorder %s187, %s203
    %p205 = scmp.eq.s32.totalorder %s20, 0
    %p206 = por %p204, %p205
    %s207 = sadd.s32 %s21, %s22
    %s208 = sadd.s32 %s33, %s29
    %s209 = ssub.s32 %s207, %s208
    %p210 = scmp.eq.s32.totalorder %s209, 0
    %s212 = sadd.s32 %s211, 1
    %s213 = scalar_select %p210, %s211, %s212
    %p216 = pneg %p210
    %p217 = scmp.eq.s32.totalorder %s14, 3
    %p218 = por %p216, %p217
    %p219 = scmp.ne.s32.totalorder %s211, %s214
    %p220 = scmp.eq.s32.totalorder %s14, 0
    %p221 = por %p219, %p220
    %p222 = scmp.ne.s32.totalorder %s211, %s214
    %p223 = scmp.eq.s32.totalorder %s19, 3
    %p224 = por %p222, %p223
    %p225 = scmp.ne.s32.totalorder %s214, %s215
    %p226 = scmp.eq.s32.totalorder %s19, 0
    %p227 = por %p225, %p226
    %p228 = scmp.ne.s32.totalorder %s214, %s215
    %p229 = scmp.eq.s32.totalorder %s20, 3
    %p230 = por %p228, %p229
    %p232 = scmp.ne.s32.totalorder %s215, %s231
    %p233 = scmp.eq.s32.totalorder %s20, 0
    %p234 = por %p232, %p233
    %p235 = scmp.le.s32.totalorder 1, %s14
    %p236 = scmp.lt.s32.totalorder %s14, 5
    %p237 = pnand %p235, %p236
    %p238 = pneg %p237
    // Predicated region
    $region9: #{unet_generator_pallas.16} parent=5 // pred_check
      _
    $region10: #{unet_generator_pallas.16} parent=5 // pred_check_branch
      %240 = sbr.rel (%p237) target = $region12
    $region11: #{unet_generator_pallas.16} parent=5 // pred_region
      %s241 = ssub.s32 %s14, 1
      // Predicated region
      $region13: #{unet_generator_pallas.16} parent=11 // pred_check
        %p242 = pneg %p101
      $region14: #{unet_generator_pallas.16} parent=11 // pred_check_branch
        %244 = sbr.rel (%p242) target = $region16
      $region15: #{unet_generator_pallas.16} parent=11 // pred_region
        _
      $region16: #{unet_generator_pallas.16} parent=11 // pred_fallthru
        _
      // Predicated region
      $region17: #{unet_generator_pallas.16} parent=11 // pred_check
        %p245 = pneg %p122
      $region18: #{unet_generator_pallas.16} parent=11 // pred_check_branch
        %247 = sbr.rel (%p245) target = $region20
      $region19: #{unet_generator_pallas.16} parent=11 // pred_region
        _
      $region20: #{unet_generator_pallas.16} parent=11 // pred_fallthru
        _
      // Predicated region
      $region21: #{unet_generator_pallas.16} parent=11 // pred_check
        %p248 = pneg %p143
      $region22: #{unet_generator_pallas.16} parent=11 // pred_check_branch
        %250 = sbr.rel (%p248) target = $region24
      $region23: #{unet_generator_pallas.16} parent=11 // pred_region
        _
      $region24: #{unet_generator_pallas.16} parent=11 // pred_fallthru
        _
    $region12: #{unet_generator_pallas.16} parent=5 // pred_fallthru
      _
    %p251 = scmp.lt.s32.totalorder %s14, 4
    // Predicated region
    $region25: #{unet_generator_pallas.16} parent=5 // pred_check
      %p252 = pneg %p251
    $region26: #{unet_generator_pallas.16} parent=5 // pred_check_branch
      %254 = sbr.rel (%p252) target = $region28
    $region27: #{unet_generator_pallas.16} parent=5 // pred_region
      // Predicated region
      $region29: #{unet_generator_pallas.16} parent=27 // pred_check
        %p255 = pneg %p48
      $region30: #{unet_generator_pallas.16} parent=27 // pred_check_branch
        %257 = sbr.rel (%p255) target = $region32
      $region31: #{unet_generator_pallas.16} parent=27 // pred_region
        %p258 = scmp.lt.s32.totalorder %s21, 3
        %s259 = scalar_select %p258, %s21, 3
        %p260 = scmp.lt.s32.totalorder %s22, 0
        %s261 = scalar_select %p260, %s22, 0
        %s262 = smul.addr %s261, 8
        %s263 = smul.addr %s259, 8
        %s264 = sadd.s32 %s262, %s263
        %s265 = smul.addr %s264, 8
        %s266 = scalar_lea.vmem %s0, %s265
      $region32: #{unet_generator_pallas.16} parent=27 // pred_fallthru
        _
      // Predicated region
      $region33: #{unet_generator_pallas.16} parent=27 // pred_check
        %p267 = pneg %p74
      $region34: #{unet_generator_pallas.16} parent=27 // pred_check_branch
        %269 = sbr.rel (%p267) target = $region36
      $region35: #{unet_generator_pallas.16} parent=27 // pred_region
        %p270 = scmp.lt.s32.totalorder %s21, 3
        %s271 = scalar_select %p270, %s21, 3
        %s272 = smul.addr %s271, 128
        %s273 = smul.addr %s272, 8
        %s274 = scalar_lea.vmem %s1, %s273
      $region36: #{unet_generator_pallas.16} parent=27 // pred_fallthru
        _
    $region28: #{unet_generator_pallas.16} parent=5 // pred_fallthru
      _
    %p275 = scmp.le.s32.totalorder 1, %s14
    %p276 = scmp.lt.s32.totalorder %s14, 5
    %p277 = pnand %p275, %p276
    %p278 = pneg %p277
    // Predicated region
    $region37: #{unet_generator_pallas.16} parent=5 // pred_check
      _
    $region38: #{unet_generator_pallas.16} parent=5 // pred_check_branch
      %280 = sbr.rel (%p277) target = $region40
    $region39: #{unet_generator_pallas.16} parent=5 // pred_region
      %s281 = ssub.s32 %s14, 1
      %p282 = scmp.lt.s32.totalorder %s23, 3
      %s283 = scalar_select %p282, %s23, 3
      %p284 = scmp.lt.s32.totalorder %s24, 0
      %s285 = scalar_select %p284, %s24, 0
      %s286 = smul.addr %s285, 8
      %s287 = smul.addr %s283, 8
      %s288 = sadd.s32 %s286, %s287
      %s289 = smul.addr %s288, 8
      %s290 = scalar_lea.vmem %s0, %s289
      %p291 = pneg %p54
      %p292 = pneg %p51
      %p293 = scmp.lt.s32.totalorder %s23, 3
      %s294 = scalar_select %p293, %s23, 3
      %s295 = smul.addr %s294, 128
      %s296 = smul.addr %s295, 8
      %s297 = scalar_lea.vmem %s1, %s296
      %p298 = pneg %p80
      %p299 = pneg %p77
      %p300 = pneg %p101
      %p301 = pneg %p98
      %p302 = pneg %p122
      %p303 = pneg %p119
      %p304 = pneg %p143
      %p305 = pneg %p140
      %p306 = pneg %p171
      %p307 = pneg %p168
      %p308 = scmp.lt.s32.totalorder %s23, 3
      %s309 = scalar_select %p308, %s23, 3
      %p310 = scmp.lt.s32.totalorder %s24, 0
      %s311 = scalar_select %p310, %s24, 0
      %s312 = sadd.s32 %s311, %s309
      %s313 = smul.addr %s312, 8
      %s314 = scalar_lea.vmem %s5, %s313
      %p315 = pneg %p199
      %p316 = pneg %p196
      %s317 = sadd.s32 %s23, %s24
      %p318 = scmp.lt.s32.totalorder %s317, 3
      %s319 = scalar_select %p318, %s317, 3
      %s320 = smul.addr %s319, 8
      %s321 = scalar_lea.vmem %s6, %s320
      %p322 = pneg %p227
      %p323 = pneg %p224
      %s324 = sadd.s32 %s23, %s24
      %p325 = scmp.lt.s32.totalorder %s324, 3
      %s326 = scalar_select %p325, %s324, 3
      %s327 = smul.addr %s326, 8
      %s328 = scalar_lea.vmem %s7, %s327
      %p329 = scmp.lt.s32.totalorder %s23, 3
      %s330 = scalar_select %p329, %s23, 3
      %p331 = scmp.lt.s32.totalorder %s24, 0
      %s332 = scalar_select %p331, %s24, 0
      %s333 = smul.addr %s332, 8
      %s334 = smul.addr %s330, 8
      %s335 = sadd.s32 %s333, %s334
      %s336 = smul.addr %s335, 8
      %s337 = scalar_lea.vmem %s0, %s336
      %p338 = scmp.lt.s32.totalorder %s23, 3
      %s339 = scalar_select %p338, %s23, 3
      %s340 = smul.addr %s339, 128
      %s341 = smul.addr %s340, 8
      %s342 = scalar_lea.vmem %s1, %s341
      %p343 = scmp.lt.s32.totalorder %s23, 3
      %s344 = scalar_select %p343, %s23, 3
      %p345 = scmp.lt.s32.totalorder %s24, 0
      %s346 = scalar_select %p345, %s24, 0
      %s347 = sadd.s32 %s346, %s344
      %s348 = smul.addr %s347, 8
      %s349 = scalar_lea.vmem %s5, %s348
      %s350 = sadd.s32 %s23, %s24
      %p351 = scmp.lt.s32.totalorder %s350, 3
      %s352 = scalar_select %p351, %s350, 3
      %s353 = smul.addr %s352, 8
      %s354 = scalar_lea.vmem %s6, %s353
      %s355 = sadd.s32 %s23, %s24
      %s356 = sadd.s32 %s23, %s24
      %p357 = scmp.lt.s32.totalorder %s356, 3
      %s358 = scalar_select %p357, %s356, 3
      %s359 = smul.addr %s358, 8
      %s360 = scalar_lea.vmem %s7, %s359
      %s361 = sadd.s32 %s23, %s24
      %v362 = vld [vmem:[%s337] sm:$0xff]
      %v363 = vld [vmem:[%s337 + $0x8] sm:$0xff]
      %v364 = vld [vmem:[%s337 + $0x10] sm:$0xff]
      %v365 = vld [vmem:[%s337 + $0x18] sm:$0xff]
      %v366 = vld [vmem:[%s337 + $0x20] sm:$0xff]
      %v367 = vld [vmem:[%s337 + $0x28] sm:$0xff]
      %v368 = vld [vmem:[%s337 + $0x30] sm:$0xff]
      %v369 = vld [vmem:[%s337 + $0x38] sm:$0xff]
      %v370 = vld [vmem:[%s2] sm:$0xff]
      %v372 = vperm.slane %v370, 0
      %v373 = vperm.slane %v370, 1
      %v374 = vperm.slane %v370, 2
      %v375 = vperm.slane %v370, 3
      %v376 = vperm.slane %v370, 4
      %v377 = vperm.slane %v370, 5
      %v378 = vperm.slane %v370, 6
      %v379 = vperm.slane %v370, 7
      %v388 = vmul.f32 %v362, %v372
      %v389 = vmul.f32 %v363, %v373
      %v390 = vmul.f32 %v364, %v374
      %v391 = vmul.f32 %v365, %v375
      %v392 = vmul.f32 %v366, %v376
      %v393 = vmul.f32 %v367, %v377
      %v394 = vmul.f32 %v368, %v378
      %v395 = vmul.f32 %v369, %v379
      %v396 = vld [vmem:[%s3] sm:$0xff]
      %v398 = vperm.slane %v396, 0
      %v399 = vperm.slane %v396, 1
      %v400 = vperm.slane %v396, 2
      %v401 = vperm.slane %v396, 3
      %v402 = vperm.slane %v396, 4
      %v403 = vperm.slane %v396, 5
      %v404 = vperm.slane %v396, 6
      %v405 = vperm.slane %v396, 7
      %v414 = vadd.f32 %v388, %v398
      %v415 = vadd.f32 %v389, %v399
      %v416 = vadd.f32 %v390, %v400
      %v417 = vadd.f32 %v391, %v401
      %v418 = vadd.f32 %v392, %v402
      %v419 = vadd.f32 %v393, %v403
      %v420 = vadd.f32 %v394, %v404
      %v421 = vadd.f32 %v395, %v405
      %v422 = vmax.f32 %v414, 0.0
      %v423 = vmax.f32 %v415, 0.0
      %v424 = vmax.f32 %v416, 0.0
      %v425 = vmax.f32 %v417, 0.0
      %v426 = vmax.f32 %v418, 0.0
      %v427 = vmax.f32 %v419, 0.0
      %v428 = vmax.f32 %v420, 0.0
      %v429 = vmax.f32 %v421, 0.0
      %v430 = vld [vmem:[%s342] sm:$0xff]
      %v431 = vld [vmem:[%s342 + $0x8] sm:$0xff]
      %v432 = vld [vmem:[%s342 + $0x10] sm:$0xff]
      %v433 = vld [vmem:[%s342 + $0x18] sm:$0xff]
      %v434 = vld [vmem:[%s342 + $0x20] sm:$0xff]
      %v435 = vld [vmem:[%s342 + $0x28] sm:$0xff]
      %v436 = vld [vmem:[%s342 + $0x30] sm:$0xff]
      %v437 = vld [vmem:[%s342 + $0x38] sm:$0xff]
      %v438 = vld [vmem:[%s342 + $0x40] sm:$0xff]
      %v439 = vld [vmem:[%s342 + $0x48] sm:$0xff]
      %v440 = vld [vmem:[%s342 + $0x50] sm:$0xff]
      %v441 = vld [vmem:[%s342 + $0x58] sm:$0xff]
      %v442 = vld [vmem:[%s342 + $0x60] sm:$0xff]
      %v443 = vld [vmem:[%s342 + $0x68] sm:$0xff]
      %v444 = vld [vmem:[%s342 + $0x70] sm:$0xff]
      %v445 = vld [vmem:[%s342 + $0x78] sm:$0xff]
      %v446 = vld [vmem:[%s342 + $0x80] sm:$0xff]
      %v447 = vld [vmem:[%s342 + $0x88] sm:$0xff]
      %v448 = vld [vmem:[%s342 + $0x90] sm:$0xff]
      %v449 = vld [vmem:[%s342 + $0x98] sm:$0xff]
      %v450 = vld [vmem:[%s342 + $0xa0] sm:$0xff]
      %v451 = vld [vmem:[%s342 + $0xa8] sm:$0xff]
      %v452 = vld [vmem:[%s342 + $0xb0] sm:$0xff]
      %v453 = vld [vmem:[%s342 + $0xb8] sm:$0xff]
      %v454 = vld [vmem:[%s342 + $0xc0] sm:$0xff]
      %v455 = vld [vmem:[%s342 + $0xc8] sm:$0xff]
      %v456 = vld [vmem:[%s342 + $0xd0] sm:$0xff]
      %v457 = vld [vmem:[%s342 + $0xd8] sm:$0xff]
      %v458 = vld [vmem:[%s342 + $0xe0] sm:$0xff]
      %v459 = vld [vmem:[%s342 + $0xe8] sm:$0xff]
      %v460 = vld [vmem:[%s342 + $0xf0] sm:$0xff]
      %v461 = vld [vmem:[%s342 + $0xf8] sm:$0xff]
      %v462 = vld [vmem:[%s342 + $0x100] sm:$0xff]
      %v463 = vld [vmem:[%s342 + $0x108] sm:$0xff]
      %v464 = vld [vmem:[%s342 + $0x110] sm:$0xff]
      %v465 = vld [vmem:[%s342 + $0x118] sm:$0xff]
      %v466 = vld [vmem:[%s342 + $0x120] sm:$0xff]
      %v467 = vld [vmem:[%s342 + $0x128] sm:$0xff]
      %v468 = vld [vmem:[%s342 + $0x130] sm:$0xff]
      %v469 = vld [vmem:[%s342 + $0x138] sm:$0xff]
      %v470 = vld [vmem:[%s342 + $0x140] sm:$0xff]
      %v471 = vld [vmem:[%s342 + $0x148] sm:$0xff]
      %v472 = vld [vmem:[%s342 + $0x150] sm:$0xff]
      %v473 = vld [vmem:[%s342 + $0x158] sm:$0xff]
      %v474 = vld [vmem:[%s342 + $0x160] sm:$0xff]
      %v475 = vld [vmem:[%s342 + $0x168] sm:$0xff]
      %v476 = vld [vmem:[%s342 + $0x170] sm:$0xff]
      %v477 = vld [vmem:[%s342 + $0x178] sm:$0xff]
      %v478 = vld [vmem:[%s342 + $0x180] sm:$0xff]
      %v479 = vld [vmem:[%s342 + $0x188] sm:$0xff]
      %v480 = vld [vmem:[%s342 + $0x190] sm:$0xff]
      %v481 = vld [vmem:[%s342 + $0x198] sm:$0xff]
      %v482 = vld [vmem:[%s342 + $0x1a0] sm:$0xff]
      %v483 = vld [vmem:[%s342 + $0x1a8] sm:$0xff]
      %v484 = vld [vmem:[%s342 + $0x1b0] sm:$0xff]
      %v485 = vld [vmem:[%s342 + $0x1b8] sm:$0xff]
      %v486 = vld [vmem:[%s342 + $0x1c0] sm:$0xff]
      %v487 = vld [vmem:[%s342 + $0x1c8] sm:$0xff]
      %v488 = vld [vmem:[%s342 + $0x1d0] sm:$0xff]
      %v489 = vld [vmem:[%s342 + $0x1d8] sm:$0xff]
      %v490 = vld [vmem:[%s342 + $0x1e0] sm:$0xff]
      %v491 = vld [vmem:[%s342 + $0x1e8] sm:$0xff]
      %v492 = vld [vmem:[%s342 + $0x1f0] sm:$0xff]
      %v493 = vld [vmem:[%s342 + $0x1f8] sm:$0xff]
      %v494 = vld [vmem:[%s342 + $0x200] sm:$0xff]
      %v495 = vld [vmem:[%s342 + $0x208] sm:$0xff]
      %v496 = vld [vmem:[%s342 + $0x210] sm:$0xff]
      %v497 = vld [vmem:[%s342 + $0x218] sm:$0xff]
      %v498 = vld [vmem:[%s342 + $0x220] sm:$0xff]
      %v499 = vld [vmem:[%s342 + $0x228] sm:$0xff]
      %v500 = vld [vmem:[%s342 + $0x230] sm:$0xff]
      %v501 = vld [vmem:[%s342 + $0x238] sm:$0xff]
      %v502 = vld [vmem:[%s342 + $0x240] sm:$0xff]
      %v503 = vld [vmem:[%s342 + $0x248] sm:$0xff]
      %v504 = vld [vmem:[%s342 + $0x250] sm:$0xff]
      %v505 = vld [vmem:[%s342 + $0x258] sm:$0xff]
      %v506 = vld [vmem:[%s342 + $0x260] sm:$0xff]
      %v507 = vld [vmem:[%s342 + $0x268] sm:$0xff]
      %v508 = vld [vmem:[%s342 + $0x270] sm:$0xff]
      %v509 = vld [vmem:[%s342 + $0x278] sm:$0xff]
      %v510 = vld [vmem:[%s342 + $0x280] sm:$0xff]
      %v511 = vld [vmem:[%s342 + $0x288] sm:$0xff]
      %v512 = vld [vmem:[%s342 + $0x290] sm:$0xff]
      %v513 = vld [vmem:[%s342 + $0x298] sm:$0xff]
      %v514 = vld [vmem:[%s342 + $0x2a0] sm:$0xff]
      %v515 = vld [vmem:[%s342 + $0x2a8] sm:$0xff]
      %v516 = vld [vmem:[%s342 + $0x2b0] sm:$0xff]
      %v517 = vld [vmem:[%s342 + $0x2b8] sm:$0xff]
      %v518 = vld [vmem:[%s342 + $0x2c0] sm:$0xff]
      %v519 = vld [vmem:[%s342 + $0x2c8] sm:$0xff]
      %v520 = vld [vmem:[%s342 + $0x2d0] sm:$0xff]
      %v521 = vld [vmem:[%s342 + $0x2d8] sm:$0xff]
      %v522 = vld [vmem:[%s342 + $0x2e0] sm:$0xff]
      %v523 = vld [vmem:[%s342 + $0x2e8] sm:$0xff]
      %v524 = vld [vmem:[%s342 + $0x2f0] sm:$0xff]
      %v525 = vld [vmem:[%s342 + $0x2f8] sm:$0xff]
      %v526 = vld [vmem:[%s342 + $0x300] sm:$0xff]
      %v527 = vld [vmem:[%s342 + $0x308] sm:$0xff]
      %v528 = vld [vmem:[%s342 + $0x310] sm:$0xff]
      %v529 = vld [vmem:[%s342 + $0x318] sm:$0xff]
      %v530 = vld [vmem:[%s342 + $0x320] sm:$0xff]
      %v531 = vld [vmem:[%s342 + $0x328] sm:$0xff]
      %v532 = vld [vmem:[%s342 + $0x330] sm:$0xff]
      %v533 = vld [vmem:[%s342 + $0x338] sm:$0xff]
      %v534 = vld [vmem:[%s342 + $0x340] sm:$0xff]
      %v535 = vld [vmem:[%s342 + $0x348] sm:$0xff]
      %v536 = vld [vmem:[%s342 + $0x350] sm:$0xff]
      %v537 = vld [vmem:[%s342 + $0x358] sm:$0xff]
      %v538 = vld [vmem:[%s342 + $0x360] sm:$0xff]
      %v539 = vld [vmem:[%s342 + $0x368] sm:$0xff]
      %v540 = vld [vmem:[%s342 + $0x370] sm:$0xff]
      %v541 = vld [vmem:[%s342 + $0x378] sm:$0xff]
      %v542 = vld [vmem:[%s342 + $0x380] sm:$0xff]
      %v543 = vld [vmem:[%s342 + $0x388] sm:$0xff]
      %v544 = vld [vmem:[%s342 + $0x390] sm:$0xff]
      %v545 = vld [vmem:[%s342 + $0x398] sm:$0xff]
      %v546 = vld [vmem:[%s342 + $0x3a0] sm:$0xff]
      %v547 = vld [vmem:[%s342 + $0x3a8] sm:$0xff]
      %v548 = vld [vmem:[%s342 + $0x3b0] sm:$0xff]
      %v549 = vld [vmem:[%s342 + $0x3b8] sm:$0xff]
      %v550 = vld [vmem:[%s342 + $0x3c0] sm:$0xff]
      %v551 = vld [vmem:[%s342 + $0x3c8] sm:$0xff]
      %v552 = vld [vmem:[%s342 + $0x3d0] sm:$0xff]
      %v553 = vld [vmem:[%s342 + $0x3d8] sm:$0xff]
      %v554 = vld [vmem:[%s342 + $0x3e0] sm:$0xff]
      %v555 = vld [vmem:[%s342 + $0x3e8] sm:$0xff]
      %v556 = vld [vmem:[%s342 + $0x3f0] sm:$0xff]
      %v557 = vld [vmem:[%s342 + $0x3f8] sm:$0xff]
      %v558 = vld [vmem:[%s4] sm:$0x1]
      %v560 = vperm.slane %v558, 0
      %562 = vmatpush.msra.mxu0 %v445
      %563 = vmatpush.msra.mxu0 %v444
      %564 = vmatpush.msra.mxu0 %v443
      %565 = vmatpush.msra.mxu0 %v442
      %566 = vmatpush.msra.mxu0 %v441
      %567 = vmatpush.msra.mxu0 %v440
      %568 = vmatpush.msra.mxu0 %v439
      %569 = vmatpush.msra.mxu0 %v438
      %570 = vmatpush.msra.mxu0 %v437
      %571 = vmatpush.msra.mxu0 %v436
      %572 = vmatpush.msra.mxu0 %v435
      %573 = vmatpush.msra.mxu0 %v434
      %574 = vmatpush.msra.mxu0 %v433
      %575 = vmatpush.msra.mxu0 %v432
      %576 = vmatpush.msra.mxu0 %v431
      %577 = vmatpush.msra.mxu0 %v430
      %578 = vmatmul.f32.gmra.mxu0 %v422
      %v579 = vpop.f32.mrf.mxu0
      %v580 = vadd.f32 %v560, %v579
      %581 = vdwg.mxu0
      %582 = vmatpush.msra.mxu0 %v461
      %583 = vmatpush.msra.mxu0 %v460
      %584 = vmatpush.msra.mxu0 %v459
      %585 = vmatpush.msra.mxu0 %v458
      %586 = vmatpush.msra.mxu0 %v457
      %587 = vmatpush.msra.mxu0 %v456
      %588 = vmatpush.msra.mxu0 %v455
      %589 = vmatpush.msra.mxu0 %v454
      %590 = vmatpush.msra.mxu0 %v453
      %591 = vmatpush.msra.mxu0 %v452
      %592 = vmatpush.msra.mxu0 %v451
      %593 = vmatpush.msra.mxu0 %v450
      %594 = vmatpush.msra.mxu0 %v449
      %595 = vmatpush.msra.mxu0 %v448
      %596 = vmatpush.msra.mxu0 %v447
      %597 = vmatpush.msra.mxu0 %v446
      %598 = vmatmul.f32.gmra.mxu0 %v423
      %v599 = vpop.f32.mrf.mxu0
      %v600 = vadd.f32 %v580, %v599
      %601 = vdwg.mxu0
      %602 = vmatpush.msra.mxu0 %v477
      %603 = vmatpush.msra.mxu0 %v476
      %604 = vmatpush.msra.mxu0 %v475
      %605 = vmatpush.msra.mxu0 %v474
      %606 = vmatpush.msra.mxu0 %v473
      %607 = vmatpush.msra.mxu0 %v472
      %608 = vmatpush.msra.mxu0 %v471
      %609 = vmatpush.msra.mxu0 %v470
      %610 = vmatpush.msra.mxu0 %v469
      %611 = vmatpush.msra.mxu0 %v468
      %612 = vmatpush.msra.mxu0 %v467
      %613 = vmatpush.msra.mxu0 %v466
      %614 = vmatpush.msra.mxu0 %v465
      %615 = vmatpush.msra.mxu0 %v464
      %616 = vmatpush.msra.mxu0 %v463
      %617 = vmatpush.msra.mxu0 %v462
      %618 = vmatmul.f32.gmra.mxu0 %v424
      %v619 = vpop.f32.mrf.mxu0
      %v620 = vadd.f32 %v600, %v619
      %621 = vdwg.mxu0
      %622 = vmatpush.msra.mxu0 %v493
      %623 = vmatpush.msra.mxu0 %v492
      %624 = vmatpush.msra.mxu0 %v491
      %625 = vmatpush.msra.mxu0 %v490
      %626 = vmatpush.msra.mxu0 %v489
      %627 = vmatpush.msra.mxu0 %v488
      %628 = vmatpush.msra.mxu0 %v487
      %629 = vmatpush.msra.mxu0 %v486
      %630 = vmatpush.msra.mxu0 %v485
      %631 = vmatpush.msra.mxu0 %v484
      %632 = vmatpush.msra.mxu0 %v483
      %633 = vmatpush.msra.mxu0 %v482
      %634 = vmatpush.msra.mxu0 %v481
      %635 = vmatpush.msra.mxu0 %v480
      %636 = vmatpush.msra.mxu0 %v479
      %637 = vmatpush.msra.mxu0 %v478
      %638 = vmatmul.f32.gmra.mxu0 %v425
      %v639 = vpop.f32.mrf.mxu0
      %v640 = vadd.f32 %v620, %v639
      %641 = vdwg.mxu0
      %642 = vmatpush.msra.mxu0 %v509
      %643 = vmatpush.msra.mxu0 %v508
      %644 = vmatpush.msra.mxu0 %v507
      %645 = vmatpush.msra.mxu0 %v506
      %646 = vmatpush.msra.mxu0 %v505
      %647 = vmatpush.msra.mxu0 %v504
      %648 = vmatpush.msra.mxu0 %v503
      %649 = vmatpush.msra.mxu0 %v502
      %650 = vmatpush.msra.mxu0 %v501
      %651 = vmatpush.msra.mxu0 %v500
      %652 = vmatpush.msra.mxu0 %v499
      %653 = vmatpush.msra.mxu0 %v498
      %654 = vmatpush.msra.mxu0 %v497
      %655 = vmatpush.msra.mxu0 %v496
      %656 = vmatpush.msra.mxu0 %v495
      %657 = vmatpush.msra.mxu0 %v494
      %658 = vmatmul.f32.gmra.mxu0 %v426
      %v659 = vpop.f32.mrf.mxu0
      %v660 = vadd.f32 %v640, %v659
      %661 = vdwg.mxu0
      %662 = vmatpush.msra.mxu0 %v525
      %663 = vmatpush.msra.mxu0 %v524
      %664 = vmatpush.msra.mxu0 %v523
      %665 = vmatpush.msra.mxu0 %v522
      %666 = vmatpush.msra.mxu0 %v521
      %667 = vmatpush.msra.mxu0 %v520
      %668 = vmatpush.msra.mxu0 %v519
      %669 = vmatpush.msra.mxu0 %v518
      %670 = vmatpush.msra.mxu0 %v517
      %671 = vmatpush.msra.mxu0 %v516
      %672 = vmatpush.msra.mxu0 %v515
      %673 = vmatpush.msra.mxu0 %v514
      %674 = vmatpush.msra.mxu0 %v513
      %675 = vmatpush.msra.mxu0 %v512
      %676 = vmatpush.msra.mxu0 %v511
      %677 = vmatpush.msra.mxu0 %v510
      %678 = vmatmul.f32.gmra.mxu0 %v427
      %v679 = vpop.f32.mrf.mxu0
      %v680 = vadd.f32 %v660, %v679
      %681 = vdwg.mxu0
      %682 = vmatpush.msra.mxu0 %v541
      %683 = vmatpush.msra.mxu0 %v540
      %684 = vmatpush.msra.mxu0 %v539
      %685 = vmatpush.msra.mxu0 %v538
      %686 = vmatpush.msra.mxu0 %v537
      %687 = vmatpush.msra.mxu0 %v536
      %688 = vmatpush.msra.mxu0 %v535
      %689 = vmatpush.msra.mxu0 %v534
      %690 = vmatpush.msra.mxu0 %v533
      %691 = vmatpush.msra.mxu0 %v532
      %692 = vmatpush.msra.mxu0 %v531
      %693 = vmatpush.msra.mxu0 %v530
      %694 = vmatpush.msra.mxu0 %v529
      %695 = vmatpush.msra.mxu0 %v528
      %696 = vmatpush.msra.mxu0 %v527
      %697 = vmatpush.msra.mxu0 %v526
      %698 = vmatmul.f32.gmra.mxu0 %v428
      %v699 = vpop.f32.mrf.mxu0
      %v700 = vadd.f32 %v680, %v699
      %701 = vdwg.mxu0
      %702 = vmatpush.msra.mxu0 %v557
      %703 = vmatpush.msra.mxu0 %v556
      %704 = vmatpush.msra.mxu0 %v555
      %705 = vmatpush.msra.mxu0 %v554
      %706 = vmatpush.msra.mxu0 %v553
      %707 = vmatpush.msra.mxu0 %v552
      %708 = vmatpush.msra.mxu0 %v551
      %709 = vmatpush.msra.mxu0 %v550
      %710 = vmatpush.msra.mxu0 %v549
      %711 = vmatpush.msra.mxu0 %v548
      %712 = vmatpush.msra.mxu0 %v547
      %713 = vmatpush.msra.mxu0 %v546
      %714 = vmatpush.msra.mxu0 %v545
      %715 = vmatpush.msra.mxu0 %v544
      %716 = vmatpush.msra.mxu0 %v543
      %717 = vmatpush.msra.mxu0 %v542
      %718 = vmatmul.f32.gmra.mxu0 %v429
      %v719 = vpop.f32.mrf.mxu0
      %v720 = vadd.f32 %v700, %v719
      %721 = vdwg.mxu0
      %722 = vst [vmem:[%s349] sm:$0xff] %v720
      %v723 = vlaneseq
      %v724 = vshrl.u32 %v723, 7
      %v725 = vrot.slane %v720, 4
      %v726 = vadd.f32 %v720, %v725
      %v727 = vrot.slane %v726, 2
      %v728 = vadd.f32 %v726, %v727
      %v729 = vrot.slane %v728, 1
      %v730 = vadd.f32 %v728, %v729
      %v731 = vmul.f32 %v720, %v720
      %v732 = vrot.slane %v731, 4
      %v733 = vadd.f32 %v731, %v732
      %v734 = vrot.slane %v733, 2
      %v735 = vadd.f32 %v733, %v734
      %v736 = vrot.slane %v735, 1
      %v737 = vadd.f32 %v735, %v736
      %vm738 = vcmp.eq.s32.totalorder %v724, 0
      %v739 = vsel %vm738, %v730, 0.0
      %740 = vst [vmem:[%s354] sm:$0xff] %v739
      %v741 = vsel %vm738, %v737, 0.0
      %742 = vst [vmem:[%s360] sm:$0xff] %v741
      %p743 = scmp.lt.s32.totalorder %s23, 3
      %s744 = scalar_select %p743, %s23, 3
      %p745 = scmp.lt.s32.totalorder %s24, 0
      %s746 = scalar_select %p745, %s24, 0
      %s747 = sadd.s32 %s746, %s744
      %s748 = smul.addr %s747, 8
      %s749 = scalar_lea.vmem %s5, %s748
      %s750 = sadd.s32 %s23, %s24
      %p751 = scmp.lt.s32.totalorder %s750, 3
      %s752 = scalar_select %p751, %s750, 3
      %s753 = smul.addr %s752, 8
      %s754 = scalar_lea.vmem %s6, %s753
      %s755 = sadd.s32 %s23, %s24
      %p756 = scmp.lt.s32.totalorder %s755, 3
      %s757 = scalar_select %p756, %s755, 3
      %s758 = smul.addr %s757, 8
      %s759 = scalar_lea.vmem %s7, %s758
      // Predicated region
      $region41: #{unet_generator_pallas.16} parent=39 // pred_check
        %p760 = pneg %p168
      $region42: #{unet_generator_pallas.16} parent=39 // pred_check_branch
        %762 = sbr.rel (%p760) target = $region44
      $region43: #{unet_generator_pallas.16} parent=39 // pred_region
        _
      $region44: #{unet_generator_pallas.16} parent=39 // pred_fallthru
        _
      // Predicated region
      $region45: #{unet_generator_pallas.16} parent=39 // pred_check
        %p763 = pneg %p196
      $region46: #{unet_generator_pallas.16} parent=39 // pred_check_branch
        %765 = sbr.rel (%p763) target = $region48
      $region47: #{unet_generator_pallas.16} parent=39 // pred_region
        %s766 = sadd.s32 %s23, %s24
      $region48: #{unet_generator_pallas.16} parent=39 // pred_fallthru
        _
      // Predicated region
      $region49: #{unet_generator_pallas.16} parent=39 // pred_check
        %p767 = pneg %p224
      $region50: #{unet_generator_pallas.16} parent=39 // pred_check_branch
        %769 = sbr.rel (%p767) target = $region52
      $region51: #{unet_generator_pallas.16} parent=39 // pred_region
        %s770 = sadd.s32 %s23, %s24
      $region52: #{unet_generator_pallas.16} parent=39 // pred_fallthru
        _
    $region40: #{unet_generator_pallas.16} parent=5 // pred_fallthru
      _
    %p771 = scmp.le.s32.totalorder 2, %s14
    // Predicated region
    $region53: #{unet_generator_pallas.16} parent=5 // pred_check
      %p772 = pneg %p771
    $region54: #{unet_generator_pallas.16} parent=5 // pred_check_branch
      %774 = sbr.rel (%p772) target = $region56
    $region55: #{unet_generator_pallas.16} parent=5 // pred_region
      %s775 = ssub.s32 %s14, 2
      // Predicated region
      $region57: #{unet_generator_pallas.16} parent=55 // pred_check
        %p776 = pneg %p174
      $region58: #{unet_generator_pallas.16} parent=55 // pred_check_branch
        %778 = sbr.rel (%p776) target = $region60
      $region59: #{unet_generator_pallas.16} parent=55 // pred_region
        %p779 = scmp.lt.s32.totalorder %s25, 3
        %s780 = scalar_select %p779, %s25, 3
        %p781 = scmp.lt.s32.totalorder %s26, 0
        %s782 = scalar_select %p781, %s26, 0
        %s783 = sadd.s32 %s782, %s780
        %s784 = smul.addr %s783, 8
        %s785 = scalar_lea.vmem %s5, %s784
      $region60: #{unet_generator_pallas.16} parent=55 // pred_fallthru
        _
      // Predicated region
      $region61: #{unet_generator_pallas.16} parent=55 // pred_check
        %p786 = pneg %p202
      $region62: #{unet_generator_pallas.16} parent=55 // pred_check_branch
        %788 = sbr.rel (%p786) target = $region64
      $region63: #{unet_generator_pallas.16} parent=55 // pred_region
        %s789 = sadd.s32 %s25, %s26
        %p790 = scmp.lt.s32.totalorder %s789, 3
        %s791 = scalar_select %p790, %s789, 3
        %s792 = smul.addr %s791, 8
        %s793 = scalar_lea.vmem %s6, %s792
      $region64: #{unet_generator_pallas.16} parent=55 // pred_fallthru
        _
      // Predicated region
      $region65: #{unet_generator_pallas.16} parent=55 // pred_check
        %p794 = pneg %p230
      $region66: #{unet_generator_pallas.16} parent=55 // pred_check_branch
        %796 = sbr.rel (%p794) target = $region68
      $region67: #{unet_generator_pallas.16} parent=55 // pred_region
        %s797 = sadd.s32 %s25, %s26
        %p798 = scmp.lt.s32.totalorder %s797, 3
        %s799 = scalar_select %p798, %s797, 3
        %s800 = smul.addr %s799, 8
        %s801 = scalar_lea.vmem %s7, %s800
      $region68: #{unet_generator_pallas.16} parent=55 // pred_fallthru
        _
    $region56: #{unet_generator_pallas.16} parent=5 // pred_fallthru
      _
  $region6: #{unet_generator_pallas.16} parent=0 // loop_footer
    %s18 = sadd.s32 1, %s14
  $region7: #{unet_generator_pallas.16} parent=0 // loop_footer_branch
    %13 = sbr.rel target = $region3
  $region8: #{unet_generator_pallas.16} parent=0 // loop_exit
    _

// kernel: tile.121
$region0: #{tile.121}
  #allocation0 [shape = 's32[1]{0}', space=sflag, size = 0x4, scoped, tag = 'scoped memory for tile.121']
  %s0 = inlined_call_operand.vmem [shape: f32[128], index: 0, kind: input, shape index: {}]
  %s1 = inlined_call_operand.vmem [shape: f32[4,128], index: 1, kind: output, shape index: {}]
  // Predicated region
  $region2: #{tile.121} parent=0 // pred_check
    _
  $region3: #{tile.121} parent=0 // pred_check_branch
    %3 = sbr.rel (0) target = $region5
  $region4: #{tile.121} parent=0 // pred_region
    _
  $region5: #{tile.121} parent=0 // pred_fallthru
    _
  %v4 = vld [vmem:[%s0] ss:$0 sm:$0xff]
  %5 = vst [vmem:[%s1] sm:$0xf] %v4

// kernel: unet_generator_pallas.17
$region0: #{unet_generator_pallas.17}
  #allocation0 [shape = 'u32[]', space=smem, size = 0x4, offset = 0x4, fixed_abs, tag = 'smem constant byte address 0x4 - core index']
  #allocation1 [shape = 'u32[72,128]{1,0:T(1,128)}', space=vmem, size = 0x9000, scoped, tag = 'internal scratch']
  %s0 = inlined_call_operand.vmem [shape: f32[4,32,512], index: 0, kind: input, shape index: {}]
  %s1 = inlined_call_operand.vmem [shape: f32[4,512,128], index: 1, kind: input, shape index: {}]
  %s2 = inlined_call_operand.vmem [shape: f32[1,512], index: 2, kind: input, shape index: {}]
  %s3 = inlined_call_operand.vmem [shape: f32[1,512], index: 3, kind: input, shape index: {}]
  %s4 = inlined_call_operand.vmem [shape: f32[1,128], index: 4, kind: input, shape index: {}]
  %s5 = inlined_call_operand.vmem [shape: f32[4,32,128], index: 5, kind: output, shape index: {0}]
  %s6 = inlined_call_operand.vmem [shape: f32[32,128], index: 6, kind: output, shape index: {1}]
  %s7 = inlined_call_operand.vmem [shape: f32[32,128], index: 7, kind: output, shape index: {2}]
  %8 = xla_tuple %s5, %s6, %s7
  %s9 = sld [smem:[#allocation0]]
  $region69: #{unet_generator_pallas.17} parent=0
    _
  %s11 = ssub.s32 1, %s9
  %s12 = scalar_select 0, %s11, %s9
  loop: start=0, step=1, limit=6
  $region2: #{unet_generator_pallas.17} parent=0 // loop_pre_header
    _
  $region3: #{unet_generator_pallas.17} parent=0 // loop_header
    %s14 = sphi 0, %s18
    %p15 = scmp.ge.s32.totalorder %s14, 6
    %s21 = sphi 0, %s33
    %s22 = sphi 0, %s29
    %s23 = sphi 0, %s21
    %s24 = sphi 0, %s22
    %s25 = sphi 0, %s23
    %s26 = sphi 0, %s24
    %s38 = sphi 0, %s40
    %s41 = sphi 0, %s38
    %s42 = sphi 0, %s41
    %s58 = sphi 0, %s42
    %s64 = sphi 0, %s66
    %s67 = sphi 0, %s64
    %s68 = sphi 0, %s67
    %s84 = sphi 0, %s68
    %s88 = sphi 0, %s88
    %s90 = sphi 0, %s88
    %s91 = sphi 0, %s90
    %s105 = sphi 0, %s91
    %s109 = sphi 0, %s109
    %s111 = sphi 0, %s109
    %s112 = sphi 0, %s111
    %s126 = sphi 0, %s112
    %s130 = sphi 0, %s130
    %s132 = sphi 0, %s130
    %s133 = sphi 0, %s132
    %s147 = sphi 0, %s133
    %s155 = sphi 0, %s157
    %s158 = sphi 0, %s155
    %s159 = sphi 0, %s158
    %s175 = sphi 0, %s159
    %s183 = sphi 0, %s185
    %s186 = sphi 0, %s183
    %s187 = sphi 0, %s186
    %s203 = sphi 0, %s187
    %s211 = sphi 0, %s213
    %s214 = sphi 0, %s211
    %s215 = sphi 0, %s214
    %s231 = sphi 0, %s215
  $region4: #{unet_generator_pallas.17} parent=0 // loop_header_branch
    %17 = sbr.rel (%p15) target = $region8
  $region5: #{unet_generator_pallas.17} parent=0 // loop_body
    %s19 = ssub.s32 %s14, 1
    %s20 = ssub.s32 %s14, 2
    %s27 = sadd.s32 1, %s22
    %p28 = scmp.ge.s32.totalorder %s27, 1
    %s29 = scalar_select %p28, 0, %s27
    %s30 = sadd.s32 1, %s21
    %s31 = scalar_select %p28, %s30, %s21
    %p32 = scmp.ge.s32.totalorder %s31, 4
    %s33 = scalar_select %p32, 0, %s31
    %s34 = ssub.s32 %s21, %s33
    %s35 = ssub.s32 %s22, %s29
    %s36 = sor.u32 %s34, %s35
    %p37 = scmp.eq.s32.totalorder %s36, 0
    %s39 = sadd.s32 %s38, 1
    %s40 = scalar_select %p37, %s38, %s39
    %p43 = pneg %p37
    %p44 = scmp.eq.s32.totalorder %s14, 3
    %p45 = por %p43, %p44
    %p46 = scmp.ne.s32.totalorder %s38, %s41
    %p47 = scmp.eq.s32.totalorder %s14, 0
    %p48 = por %p46, %p47
    %p49 = scmp.ne.s32.totalorder %s38, %s41
    %p50 = scmp.eq.s32.totalorder %s19, 3
    %p51 = por %p49, %p50
    %p52 = scmp.ne.s32.totalorder %s41, %s42
    %p53 = scmp.eq.s32.totalorder %s19, 0
    %p54 = por %p52, %p53
    %p55 = scmp.ne.s32.totalorder %s41, %s42
    %p56 = scmp.eq.s32.totalorder %s20, 3
    %p57 = por %p55, %p56
    %p59 = scmp.ne.s32.totalorder %s42, %s58
    %p60 = scmp.eq.s32.totalorder %s20, 0
    %p61 = por %p59, %p60
    %s62 = ssub.s32 %s21, %s33
    %p63 = scmp.eq.s32.totalorder %s62, 0
    %s65 = sadd.s32 %s64, 1
    %s66 = scalar_select %p63, %s64, %s65
    %p69 = pneg %p63
    %p70 = scmp.eq.s32.totalorder %s14, 3
    %p71 = por %p69, %p70
    %p72 = scmp.ne.s32.totalorder %s64, %s67
    %p73 = scmp.eq.s32.totalorder %s14, 0
    %p74 = por %p72, %p73
    %p75 = scmp.ne.s32.totalorder %s64, %s67
    %p76 = scmp.eq.s32.totalorder %s19, 3
    %p77 = por %p75, %p76
    %p78 = scmp.ne.s32.totalorder %s67, %s68
    %p79 = scmp.eq.s32.totalorder %s19, 0
    %p80 = por %p78, %p79
    %p81 = scmp.ne.s32.totalorder %s67, %s68
    %p82 = scmp.eq.s32.totalorder %s20, 3
    %p83 = por %p81, %p82
    %p85 = scmp.ne.s32.totalorder %s68, %s84
    %p86 = scmp.eq.s32.totalorder %s20, 0
    %p87 = por %p85, %p86
    %s89 = sadd.s32 %s88, 1
    %p92 = scmp.eq.s32.totalorder %s14, 3
    %p93 = scmp.ne.s32.totalorder %s88, %s90
    %p94 = scmp.eq.s32.totalorder %s14, 0
    %p95 = por %p93, %p94
    %p96 = scmp.ne.s32.totalorder %s88, %s90
    %p97 = scmp.eq.s32.totalorder %s19, 3
    %p98 = por %p96, %p97
    %p99 = scmp.ne.s32.totalorder %s90, %s91
    %p100 = scmp.eq.s32.totalorder %s19, 0
    %p101 = por %p99, %p100
    %p102 = scmp.ne.s32.totalorder %s90, %s91
    %p103 = scmp.eq.s32.totalorder %s20, 3
    %p104 = por %p102, %p103
    %p106 = scmp.ne.s32.totalorder %s91, %s105
    %p107 = scmp.eq.s32.totalorder %s20, 0
    %p108 = por %p106, %p107
    %s110 = sadd.s32 %s109, 1
    %p113 = scmp.eq.s32.totalorder %s14, 3
    %p114 = scmp.ne.s32.totalorder %s109, %s111
    %p115 = scmp.eq.s32.totalorder %s14, 0
    %p116 = por %p114, %p115
    %p117 = scmp.ne.s32.totalorder %s109, %s111
    %p118 = scmp.eq.s32.totalorder %s19, 3
    %p119 = por %p117, %p118
    %p120 = scmp.ne.s32.totalorder %s111, %s112
    %p121 = scmp.eq.s32.totalorder %s19, 0
    %p122 = por %p120, %p121
    %p123 = scmp.ne.s32.totalorder %s111, %s112
    %p124 = scmp.eq.s32.totalorder %s20, 3
    %p125 = por %p123, %p124
    %p127 = scmp.ne.s32.totalorder %s112, %s126
    %p128 = scmp.eq.s32.totalorder %s20, 0
    %p129 = por %p127, %p128
    %s131 = sadd.s32 %s130, 1
    %p134 = scmp.eq.s32.totalorder %s14, 3
    %p135 = scmp.ne.s32.totalorder %s130, %s132
    %p136 = scmp.eq.s32.totalorder %s14, 0
    %p137 = por %p135, %p136
    %p138 = scmp.ne.s32.totalorder %s130, %s132
    %p139 = scmp.eq.s32.totalorder %s19, 3
    %p140 = por %p138, %p139
    %p141 = scmp.ne.s32.totalorder %s132, %s133
    %p142 = scmp.eq.s32.totalorder %s19, 0
    %p143 = por %p141, %p142
    %p144 = scmp.ne.s32.totalorder %s132, %s133
    %p145 = scmp.eq.s32.totalorder %s20, 3
    %p146 = por %p144, %p145
    %p148 = scmp.ne.s32.totalorder %s133, %s147
    %p149 = scmp.eq.s32.totalorder %s20, 0
    %p150 = por %p148, %p149
    %s151 = ssub.s32 %s21, %s33
    %s152 = ssub.s32 %s22, %s29
    %s153 = sor.u32 %s151, %s152
    %p154 = scmp.eq.s32.totalorder %s153, 0
    %s156 = sadd.s32 %s155, 1
    %s157 = scalar_select %p154, %s155, %s156
    %p160 = pneg %p154
    %p161 = scmp.eq.s32.totalorder %s14, 3
    %p162 = por %p160, %p161
    %p163 = scmp.ne.s32.totalorder %s155, %s158
    %p164 = scmp.eq.s32.totalorder %s14, 0
    %p165 = por %p163, %p164
    %p166 = scmp.ne.s32.totalorder %s155, %s158
    %p167 = scmp.eq.s32.totalorder %s19, 3
    %p168 = por %p166, %p167
    %p169 = scmp.ne.s32.totalorder %s158, %s159
    %p170 = scmp.eq.s32.totalorder %s19, 0
    %p171 = por %p169, %p170
    %p172 = scmp.ne.s32.totalorder %s158, %s159
    %p173 = scmp.eq.s32.totalorder %s20, 3
    %p174 = por %p172, %p173
    %p176 = scmp.ne.s32.totalorder %s159, %s175
    %p177 = scmp.eq.s32.totalorder %s20, 0
    %p178 = por %p176, %p177
    %s179 = sadd.s32 %s21, %s22
    %s180 = sadd.s32 %s33, %s29
    %s181 = ssub.s32 %s179, %s180
    %p182 = scmp.eq.s32.totalorder %s181, 0
    %s184 = sadd.s32 %s183, 1
    %s185 = scalar_select %p182, %s183, %s184
    %p188 = pneg %p182
    %p189 = scmp.eq.s32.totalorder %s14, 3
    %p190 = por %p188, %p189
    %p191 = scmp.ne.s32.totalorder %s183, %s186
    %p192 = scmp.eq.s32.totalorder %s14, 0
    %p193 = por %p191, %p192
    %p194 = scmp.ne.s32.totalorder %s183, %s186
    %p195 = scmp.eq.s32.totalorder %s19, 3
    %p196 = por %p194, %p195
    %p197 = scmp.ne.s32.totalorder %s186, %s187
    %p198 = scmp.eq.s32.totalorder %s19, 0
    %p199 = por %p197, %p198
    %p200 = scmp.ne.s32.totalorder %s186, %s187
    %p201 = scmp.eq.s32.totalorder %s20, 3
    %p202 = por %p200, %p201
    %p204 = scmp.ne.s32.totalorder %s187, %s203
    %p205 = scmp.eq.s32.totalorder %s20, 0
    %p206 = por %p204, %p205
    %s207 = sadd.s32 %s21, %s22
    %s208 = sadd.s32 %s33, %s29
    %s209 = ssub.s32 %s207, %s208
    %p210 = scmp.eq.s32.totalorder %s209, 0
    %s212 = sadd.s32 %s211, 1
    %s213 = scalar_select %p210, %s211, %s212
    %p216 = pneg %p210
    %p217 = scmp.eq.s32.totalorder %s14, 3
    %p218 = por %p216, %p217
    %p219 = scmp.ne.s32.totalorder %s211, %s214
    %p220 = scmp.eq.s32.totalorder %s14, 0
    %p221 = por %p219, %p220
    %p222 = scmp.ne.s32.totalorder %s211, %s214
    %p223 = scmp.eq.s32.totalorder %s19, 3
    %p224 = por %p222, %p223
    %p225 = scmp.ne.s32.totalorder %s214, %s215
    %p226 = scmp.eq.s32.totalorder %s19, 0
    %p227 = por %p225, %p226
    %p228 = scmp.ne.s32.totalorder %s214, %s215
    %p229 = scmp.eq.s32.totalorder %s20, 3
    %p230 = por %p228, %p229
    %p232 = scmp.ne.s32.totalorder %s215, %s231
    %p233 = scmp.eq.s32.totalorder %s20, 0
    %p234 = por %p232, %p233
    %p235 = scmp.le.s32.totalorder 1, %s14
    %p236 = scmp.lt.s32.totalorder %s14, 5
    %p237 = pnand %p235, %p236
    %p238 = pneg %p237
    // Predicated region
    $region9: #{unet_generator_pallas.17} parent=5 // pred_check
      _
    $region10: #{unet_generator_pallas.17} parent=5 // pred_check_branch
      %240 = sbr.rel (%p237) target = $region12
    $region11: #{unet_generator_pallas.17} parent=5 // pred_region
      %s241 = ssub.s32 %s14, 1
      // Predicated region
      $region13: #{unet_generator_pallas.17} parent=11 // pred_check
        %p242 = pneg %p101
      $region14: #{unet_generator_pallas.17} parent=11 // pred_check_branch
        %244 = sbr.rel (%p242) target = $region16
      $region15: #{unet_generator_pallas.17} parent=11 // pred_region
        _
      $region16: #{unet_generator_pallas.17} parent=11 // pred_fallthru
        _
      // Predicated region
      $region17: #{unet_generator_pallas.17} parent=11 // pred_check
        %p245 = pneg %p122
      $region18: #{unet_generator_pallas.17} parent=11 // pred_check_branch
        %247 = sbr.rel (%p245) target = $region20
      $region19: #{unet_generator_pallas.17} parent=11 // pred_region
        _
      $region20: #{unet_generator_pallas.17} parent=11 // pred_fallthru
        _
      // Predicated region
      $region21: #{unet_generator_pallas.17} parent=11 // pred_check
        %p248 = pneg %p143
      $region22: #{unet_generator_pallas.17} parent=11 // pred_check_branch
        %250 = sbr.rel (%p248) target = $region24
      $region23: #{unet_generator_pallas.17} parent=11 // pred_region
        _
      $region24: #{unet_generator_pallas.17} parent=11 // pred_fallthru
        _
    $region12: #{unet_generator_pallas.17} parent=5 // pred_fallthru
      _
    %p251 = scmp.lt.s32.totalorder %s14, 4
    // Predicated region
    $region25: #{unet_generator_pallas.17} parent=5 // pred_check
      %p252 = pneg %p251
    $region26: #{unet_generator_pallas.17} parent=5 // pred_check_branch
      %254 = sbr.rel (%p252) target = $region28
    $region27: #{unet_generator_pallas.17} parent=5 // pred_region
      // Predicated region
      $region29: #{unet_generator_pallas.17} parent=27 // pred_check
        %p255 = pneg %p48
      $region30: #{unet_generator_pallas.17} parent=27 // pred_check_branch
        %257 = sbr.rel (%p255) target = $region32
      $region31: #{unet_generator_pallas.17} parent=27 // pred_region
        %s258 = smul.u32 4, %s22
        %p259 = scmp.lt.s32.totalorder %s21, 3
        %s260 = scalar_select %p259, %s21, 3
        %p261 = scmp.lt.s32.totalorder %s258, 3
        %s262 = scalar_select %p261, %s258, 3
        %s263 = smul.addr %s262, 4
        %s264 = smul.addr %s260, 16
        %s265 = sadd.s32 %s263, %s264
        %s266 = smul.addr %s265, 8
        %s267 = scalar_lea.vmem %s0, %s266
        %s268 = smul.u32 4, %s22
      $region32: #{unet_generator_pallas.17} parent=27 // pred_fallthru
        _
      // Predicated region
      $region33: #{unet_generator_pallas.17} parent=27 // pred_check
        %p269 = pneg %p74
      $region34: #{unet_generator_pallas.17} parent=27 // pred_check_branch
        %271 = sbr.rel (%p269) target = $region36
      $region35: #{unet_generator_pallas.17} parent=27 // pred_region
        %p272 = scmp.lt.s32.totalorder %s21, 3
        %s273 = scalar_select %p272, %s21, 3
        %s274 = smul.addr %s273, 64
        %s275 = smul.addr %s274, 8
        %s276 = scalar_lea.vmem %s1, %s275
      $region36: #{unet_generator_pallas.17} parent=27 // pred_fallthru
        _
    $region28: #{unet_generator_pallas.17} parent=5 // pred_fallthru
      _
    %p277 = scmp.le.s32.totalorder 1, %s14
    %p278 = scmp.lt.s32.totalorder %s14, 5
    %p279 = pnand %p277, %p278
    %p280 = pneg %p279
    // Predicated region
    $region37: #{unet_generator_pallas.17} parent=5 // pred_check
      _
    $region38: #{unet_generator_pallas.17} parent=5 // pred_check_branch
      %282 = sbr.rel (%p279) target = $region40
    $region39: #{unet_generator_pallas.17} parent=5 // pred_region
      %s283 = ssub.s32 %s14, 1
      %s284 = smul.u32 4, %s24
      %p285 = scmp.lt.s32.totalorder %s23, 3
      %s286 = scalar_select %p285, %s23, 3
      %p287 = scmp.lt.s32.totalorder %s284, 3
      %s288 = scalar_select %p287, %s284, 3
      %s289 = smul.addr %s288, 4
      %s290 = smul.addr %s286, 16
      %s291 = sadd.s32 %s289, %s290
      %s292 = smul.addr %s291, 8
      %s293 = scalar_lea.vmem %s0, %s292
      %p294 = pneg %p54
      %p295 = pneg %p51
      %p296 = scmp.lt.s32.totalorder %s23, 3
      %s297 = scalar_select %p296, %s23, 3
      %s298 = smul.addr %s297, 64
      %s299 = smul.addr %s298, 8
      %s300 = scalar_lea.vmem %s1, %s299
      %p301 = pneg %p80
      %p302 = pneg %p77
      %p303 = pneg %p101
      %p304 = pneg %p98
      %p305 = pneg %p122
      %p306 = pneg %p119
      %p307 = pneg %p143
      %p308 = pneg %p140
      %p309 = pneg %p171
      %p310 = pneg %p168
      %s311 = smul.u32 4, %s24
      %p312 = scmp.lt.s32.totalorder %s23, 3
      %s313 = scalar_select %p312, %s23, 3
      %p314 = scmp.lt.s32.totalorder %s311, 3
      %s315 = scalar_select %p314, %s311, 3
      %s316 = smul.addr %s313, 4
      %s317 = sadd.s32 %s315, %s316
      %s318 = smul.addr %s317, 8
      %s319 = scalar_lea.vmem %s5, %s318
      %p320 = pneg %p199
      %p321 = pneg %p196
      %s322 = sadd.s32 %s23, %s24
      %p323 = scmp.lt.s32.totalorder %s322, 3
      %s324 = scalar_select %p323, %s322, 3
      %s325 = smul.addr %s324, 8
      %s326 = scalar_lea.vmem %s6, %s325
      %p327 = pneg %p227
      %p328 = pneg %p224
      %s329 = sadd.s32 %s23, %s24
      %p330 = scmp.lt.s32.totalorder %s329, 3
      %s331 = scalar_select %p330, %s329, 3
      %s332 = smul.addr %s331, 8
      %s333 = scalar_lea.vmem %s7, %s332
      %s334 = smul.u32 4, %s24
      %p335 = scmp.lt.s32.totalorder %s23, 3
      %s336 = scalar_select %p335, %s23, 3
      %p337 = scmp.lt.s32.totalorder %s334, 3
      %s338 = scalar_select %p337, %s334, 3
      %s339 = smul.addr %s338, 4
      %s340 = smul.addr %s336, 16
      %s341 = sadd.s32 %s339, %s340
      %s342 = smul.addr %s341, 8
      %s343 = scalar_lea.vmem %s0, %s342
      %s344 = smul.u32 4, %s24
      %p345 = scmp.lt.s32.totalorder %s23, 3
      %s346 = scalar_select %p345, %s23, 3
      %s347 = smul.addr %s346, 64
      %s348 = smul.addr %s347, 8
      %s349 = scalar_lea.vmem %s1, %s348
      %s350 = smul.u32 4, %s24
      %p351 = scmp.lt.s32.totalorder %s23, 3
      %s352 = scalar_select %p351, %s23, 3
      %p353 = scmp.lt.s32.totalorder %s350, 3
      %s354 = scalar_select %p353, %s350, 3
      %s355 = smul.addr %s352, 4
      %s356 = sadd.s32 %s354, %s355
      %s357 = smul.addr %s356, 8
      %s358 = scalar_lea.vmem %s5, %s357
      %s359 = smul.u32 4, %s24
      %s360 = sadd.s32 %s23, %s24
      %p361 = scmp.lt.s32.totalorder %s360, 3
      %s362 = scalar_select %p361, %s360, 3
      %s363 = smul.addr %s362, 8
      %s364 = scalar_lea.vmem %s6, %s363
      %s365 = sadd.s32 %s23, %s24
      %s366 = sadd.s32 %s23, %s24
      %p367 = scmp.lt.s32.totalorder %s366, 3
      %s368 = scalar_select %p367, %s366, 3
      %s369 = smul.addr %s368, 8
      %s370 = scalar_lea.vmem %s7, %s369
      %s371 = sadd.s32 %s23, %s24
      %v372 = vld [vmem:[%s343] sm:$0xff]
      %v373 = vld [vmem:[%s343 + $0x8] sm:$0xff]
      %v374 = vld [vmem:[%s343 + $0x10] sm:$0xff]
      %v375 = vld [vmem:[%s343 + $0x18] sm:$0xff]
      %v376 = vld [vmem:[%s343 + $0x20] sm:$0xff]
      %v377 = vld [vmem:[%s343 + $0x28] sm:$0xff]
      %v378 = vld [vmem:[%s343 + $0x30] sm:$0xff]
      %v379 = vld [vmem:[%s343 + $0x38] sm:$0xff]
      %v380 = vld [vmem:[%s343 + $0x40] sm:$0xff]
      %v381 = vld [vmem:[%s343 + $0x48] sm:$0xff]
      %v382 = vld [vmem:[%s343 + $0x50] sm:$0xff]
      %v383 = vld [vmem:[%s343 + $0x58] sm:$0xff]
      %v384 = vld [vmem:[%s343 + $0x60] sm:$0xff]
      %v385 = vld [vmem:[%s343 + $0x68] sm:$0xff]
      %v386 = vld [vmem:[%s343 + $0x70] sm:$0xff]
      %v387 = vld [vmem:[%s343 + $0x78] sm:$0xff]
      %v388 = vld [vmem:[%s2] sm:$0xf]
      %v390 = vperm.slane %v388, 0
      %v391 = vperm.slane %v388, 1
      %v392 = vperm.slane %v388, 2
      %v393 = vperm.slane %v388, 3
      %v398 = vmul.f32 %v372, %v390
      %v399 = vmul.f32 %v373, %v391
      %v400 = vmul.f32 %v374, %v392
      %v401 = vmul.f32 %v375, %v393
      %v402 = vmul.f32 %v376, %v390
      %v403 = vmul.f32 %v377, %v391
      %v404 = vmul.f32 %v378, %v392
      %v405 = vmul.f32 %v379, %v393
      %v406 = vmul.f32 %v380, %v390
      %v407 = vmul.f32 %v381, %v391
      %v408 = vmul.f32 %v382, %v392
      %v409 = vmul.f32 %v383, %v393
      %v410 = vmul.f32 %v384, %v390
      %v411 = vmul.f32 %v385, %v391
      %v412 = vmul.f32 %v386, %v392
      %v413 = vmul.f32 %v387, %v393
      %v414 = vld [vmem:[%s3] sm:$0xf]
      %v416 = vperm.slane %v414, 0
      %v417 = vperm.slane %v414, 1
      %v418 = vperm.slane %v414, 2
      %v419 = vperm.slane %v414, 3
      %v424 = vadd.f32 %v398, %v416
      %v425 = vadd.f32 %v399, %v417
      %v426 = vadd.f32 %v400, %v418
      %v427 = vadd.f32 %v401, %v419
      %v428 = vadd.f32 %v402, %v416
      %v429 = vadd.f32 %v403, %v417
      %v430 = vadd.f32 %v404, %v418
      %v431 = vadd.f32 %v405, %v419
      %v432 = vadd.f32 %v406, %v416
      %v433 = vadd.f32 %v407, %v417
      %v434 = vadd.f32 %v408, %v418
      %v435 = vadd.f32 %v409, %v419
      %v436 = vadd.f32 %v410, %v416
      %v437 = vadd.f32 %v411, %v417
      %v438 = vadd.f32 %v412, %v418
      %v439 = vadd.f32 %v413, %v419
      %v440 = vmax.f32 %v424, 0.0
      %v441 = vmax.f32 %v425, 0.0
      %v442 = vmax.f32 %v426, 0.0
      %v443 = vmax.f32 %v427, 0.0
      %v444 = vmax.f32 %v428, 0.0
      %v445 = vmax.f32 %v429, 0.0
      %v446 = vmax.f32 %v430, 0.0
      %v447 = vmax.f32 %v431, 0.0
      %v448 = vmax.f32 %v432, 0.0
      %v449 = vmax.f32 %v433, 0.0
      %v450 = vmax.f32 %v434, 0.0
      %v451 = vmax.f32 %v435, 0.0
      %v452 = vmax.f32 %v436, 0.0
      %v453 = vmax.f32 %v437, 0.0
      %v454 = vmax.f32 %v438, 0.0
      %v455 = vmax.f32 %v439, 0.0
      %v456 = vld [vmem:[%s349] sm:$0xff]
      %v457 = vld [vmem:[%s349 + $0x8] sm:$0xff]
      %v458 = vld [vmem:[%s349 + $0x10] sm:$0xff]
      %v459 = vld [vmem:[%s349 + $0x18] sm:$0xff]
      %v460 = vld [vmem:[%s349 + $0x20] sm:$0xff]
      %v461 = vld [vmem:[%s349 + $0x28] sm:$0xff]
      %v462 = vld [vmem:[%s349 + $0x30] sm:$0xff]
      %v463 = vld [vmem:[%s349 + $0x38] sm:$0xff]
      %v464 = vld [vmem:[%s349 + $0x40] sm:$0xff]
      %v465 = vld [vmem:[%s349 + $0x48] sm:$0xff]
      %v466 = vld [vmem:[%s349 + $0x50] sm:$0xff]
      %v467 = vld [vmem:[%s349 + $0x58] sm:$0xff]
      %v468 = vld [vmem:[%s349 + $0x60] sm:$0xff]
      %v469 = vld [vmem:[%s349 + $0x68] sm:$0xff]
      %v470 = vld [vmem:[%s349 + $0x70] sm:$0xff]
      %v471 = vld [vmem:[%s349 + $0x78] sm:$0xff]
      %v472 = vld [vmem:[%s349 + $0x80] sm:$0xff]
      %v473 = vld [vmem:[%s349 + $0x88] sm:$0xff]
      %v474 = vld [vmem:[%s349 + $0x90] sm:$0xff]
      %v475 = vld [vmem:[%s349 + $0x98] sm:$0xff]
      %v476 = vld [vmem:[%s349 + $0xa0] sm:$0xff]
      %v477 = vld [vmem:[%s349 + $0xa8] sm:$0xff]
      %v478 = vld [vmem:[%s349 + $0xb0] sm:$0xff]
      %v479 = vld [vmem:[%s349 + $0xb8] sm:$0xff]
      %v480 = vld [vmem:[%s349 + $0xc0] sm:$0xff]
      %v481 = vld [vmem:[%s349 + $0xc8] sm:$0xff]
      %v482 = vld [vmem:[%s349 + $0xd0] sm:$0xff]
      %v483 = vld [vmem:[%s349 + $0xd8] sm:$0xff]
      %v484 = vld [vmem:[%s349 + $0xe0] sm:$0xff]
      %v485 = vld [vmem:[%s349 + $0xe8] sm:$0xff]
      %v486 = vld [vmem:[%s349 + $0xf0] sm:$0xff]
      %v487 = vld [vmem:[%s349 + $0xf8] sm:$0xff]
      %v488 = vld [vmem:[%s349 + $0x100] sm:$0xff]
      %v489 = vld [vmem:[%s349 + $0x108] sm:$0xff]
      %v490 = vld [vmem:[%s349 + $0x110] sm:$0xff]
      %v491 = vld [vmem:[%s349 + $0x118] sm:$0xff]
      %v492 = vld [vmem:[%s349 + $0x120] sm:$0xff]
      %v493 = vld [vmem:[%s349 + $0x128] sm:$0xff]
      %v494 = vld [vmem:[%s349 + $0x130] sm:$0xff]
      %v495 = vld [vmem:[%s349 + $0x138] sm:$0xff]
      %v496 = vld [vmem:[%s349 + $0x140] sm:$0xff]
      %v497 = vld [vmem:[%s349 + $0x148] sm:$0xff]
      %v498 = vld [vmem:[%s349 + $0x150] sm:$0xff]
      %v499 = vld [vmem:[%s349 + $0x158] sm:$0xff]
      %v500 = vld [vmem:[%s349 + $0x160] sm:$0xff]
      %v501 = vld [vmem:[%s349 + $0x168] sm:$0xff]
      %v502 = vld [vmem:[%s349 + $0x170] sm:$0xff]
      %v503 = vld [vmem:[%s349 + $0x178] sm:$0xff]
      %v504 = vld [vmem:[%s349 + $0x180] sm:$0xff]
      %v505 = vld [vmem:[%s349 + $0x188] sm:$0xff]
      %v506 = vld [vmem:[%s349 + $0x190] sm:$0xff]
      %v507 = vld [vmem:[%s349 + $0x198] sm:$0xff]
      %v508 = vld [vmem:[%s349 + $0x1a0] sm:$0xff]
      %v509 = vld [vmem:[%s349 + $0x1a8] sm:$0xff]
      %v510 = vld [vmem:[%s349 + $0x1b0] sm:$0xff]
      %v511 = vld [vmem:[%s349 + $0x1b8] sm:$0xff]
      %v512 = vld [vmem:[%s349 + $0x1c0] sm:$0xff]
      %v513 = vld [vmem:[%s349 + $0x1c8] sm:$0xff]
      %v514 = vld [vmem:[%s349 + $0x1d0] sm:$0xff]
      %v515 = vld [vmem:[%s349 + $0x1d8] sm:$0xff]
      %v516 = vld [vmem:[%s349 + $0x1e0] sm:$0xff]
      %v517 = vld [vmem:[%s349 + $0x1e8] sm:$0xff]
      %v518 = vld [vmem:[%s349 + $0x1f0] sm:$0xff]
      %v519 = vld [vmem:[%s349 + $0x1f8] sm:$0xff]
      %v520 = vld [vmem:[%s4] sm:$0x1]
      %v522 = vperm.slane %v520, 0
      %524 = vmatpush.msra.mxu0 %v471
      %525 = vmatpush.msra.mxu0 %v470
      %526 = vmatpush.msra.mxu0 %v469
      %527 = vmatpush.msra.mxu0 %v468
      %528 = vmatpush.msra.mxu0 %v467
      %529 = vmatpush.msra.mxu0 %v466
      %530 = vmatpush.msra.mxu0 %v465
      %531 = vmatpush.msra.mxu0 %v464
      %532 = vmatpush.msra.mxu0 %v463
      %533 = vmatpush.msra.mxu0 %v462
      %534 = vmatpush.msra.mxu0 %v461
      %535 = vmatpush.msra.mxu0 %v460
      %536 = vmatpush.msra.mxu0 %v459
      %537 = vmatpush.msra.mxu0 %v458
      %538 = vmatpush.msra.mxu0 %v457
      %539 = vmatpush.msra.mxu0 %v456
      %540 = vmatmul.f32.gmra.mxu0 %v440
      %v541 = vpop.f32.mrf.mxu0
      %v542 = vadd.f32 %v522, %v541
      %543 = vmatmul.f32.gmra.mxu0 %v444
      %v544 = vpop.f32.mrf.mxu0
      %v545 = vadd.f32 %v522, %v544
      %546 = vmatmul.f32.gmra.mxu0 %v448
      %v547 = vpop.f32.mrf.mxu0
      %v548 = vadd.f32 %v522, %v547
      %549 = vmatmul.f32.gmra.mxu0 %v452
      %v550 = vpop.f32.mrf.mxu0
      %v551 = vadd.f32 %v522, %v550
      %552 = vdwg.mxu0
      %553 = vmatpush.msra.mxu0 %v487
      %554 = vmatpush.msra.mxu0 %v486
      %555 = vmatpush.msra.mxu0 %v485
      %556 = vmatpush.msra.mxu0 %v484
      %557 = vmatpush.msra.mxu0 %v483
      %558 = vmatpush.msra.mxu0 %v482
      %559 = vmatpush.msra.mxu0 %v481
      %560 = vmatpush.msra.mxu0 %v480
      %561 = vmatpush.msra.mxu0 %v479
      %562 = vmatpush.msra.mxu0 %v478
      %563 = vmatpush.msra.mxu0 %v477
      %564 = vmatpush.msra.mxu0 %v476
      %565 = vmatpush.msra.mxu0 %v475
      %566 = vmatpush.msra.mxu0 %v474
      %567 = vmatpush.msra.mxu0 %v473
      %568 = vmatpush.msra.mxu0 %v472
      %569 = vmatmul.f32.gmra.mxu0 %v441
      %v570 = vpop.f32.mrf.mxu0
      %v571 = vadd.f32 %v542, %v570
      %572 = vmatmul.f32.gmra.mxu0 %v445
      %v573 = vpop.f32.mrf.mxu0
      %v574 = vadd.f32 %v545, %v573
      %575 = vmatmul.f32.gmra.mxu0 %v449
      %v576 = vpop.f32.mrf.mxu0
      %v577 = vadd.f32 %v548, %v576
      %578 = vmatmul.f32.gmra.mxu0 %v453
      %v579 = vpop.f32.mrf.mxu0
      %v580 = vadd.f32 %v551, %v579
      %581 = vdwg.mxu0
      %582 = vmatpush.msra.mxu0 %v503
      %583 = vmatpush.msra.mxu0 %v502
      %584 = vmatpush.msra.mxu0 %v501
      %585 = vmatpush.msra.mxu0 %v500
      %586 = vmatpush.msra.mxu0 %v499
      %587 = vmatpush.msra.mxu0 %v498
      %588 = vmatpush.msra.mxu0 %v497
      %589 = vmatpush.msra.mxu0 %v496
      %590 = vmatpush.msra.mxu0 %v495
      %591 = vmatpush.msra.mxu0 %v494
      %592 = vmatpush.msra.mxu0 %v493
      %593 = vmatpush.msra.mxu0 %v492
      %594 = vmatpush.msra.mxu0 %v491
      %595 = vmatpush.msra.mxu0 %v490
      %596 = vmatpush.msra.mxu0 %v489
      %597 = vmatpush.msra.mxu0 %v488
      %598 = vmatmul.f32.gmra.mxu0 %v442
      %v599 = vpop.f32.mrf.mxu0
      %v600 = vadd.f32 %v571, %v599
      %601 = vmatmul.f32.gmra.mxu0 %v446
      %v602 = vpop.f32.mrf.mxu0
      %v603 = vadd.f32 %v574, %v602
      %604 = vmatmul.f32.gmra.mxu0 %v450
      %v605 = vpop.f32.mrf.mxu0
      %v606 = vadd.f32 %v577, %v605
      %607 = vmatmul.f32.gmra.mxu0 %v454
      %v608 = vpop.f32.mrf.mxu0
      %v609 = vadd.f32 %v580, %v608
      %610 = vdwg.mxu0
      %611 = vmatpush.msra.mxu0 %v519
      %612 = vmatpush.msra.mxu0 %v518
      %613 = vmatpush.msra.mxu0 %v517
      %614 = vmatpush.msra.mxu0 %v516
      %615 = vmatpush.msra.mxu0 %v515
      %616 = vmatpush.msra.mxu0 %v514
      %617 = vmatpush.msra.mxu0 %v513
      %618 = vmatpush.msra.mxu0 %v512
      %619 = vmatpush.msra.mxu0 %v511
      %620 = vmatpush.msra.mxu0 %v510
      %621 = vmatpush.msra.mxu0 %v509
      %622 = vmatpush.msra.mxu0 %v508
      %623 = vmatpush.msra.mxu0 %v507
      %624 = vmatpush.msra.mxu0 %v506
      %625 = vmatpush.msra.mxu0 %v505
      %626 = vmatpush.msra.mxu0 %v504
      %627 = vmatmul.f32.gmra.mxu0 %v443
      %v628 = vpop.f32.mrf.mxu0
      %v629 = vadd.f32 %v600, %v628
      %630 = vmatmul.f32.gmra.mxu0 %v447
      %v631 = vpop.f32.mrf.mxu0
      %v632 = vadd.f32 %v603, %v631
      %633 = vmatmul.f32.gmra.mxu0 %v451
      %v634 = vpop.f32.mrf.mxu0
      %v635 = vadd.f32 %v606, %v634
      %636 = vmatmul.f32.gmra.mxu0 %v455
      %v637 = vpop.f32.mrf.mxu0
      %v638 = vadd.f32 %v609, %v637
      %639 = vdwg.mxu0
      %640 = vst [vmem:[%s358] sm:$0xff] %v629
      %641 = vst [vmem:[%s358 + $0x8] sm:$0xff] %v632
      %642 = vst [vmem:[%s358 + $0x10] sm:$0xff] %v635
      %643 = vst [vmem:[%s358 + $0x18] sm:$0xff] %v638
      %v644 = vlaneseq
      %v645 = vshrl.u32 %v644, 7
      %v646 = vadd.f32 %v629, %v632
      %v647 = vadd.f32 %v646, %v635
      %v648 = vadd.f32 %v647, %v638
      %v649 = vrot.slane %v648, 4
      %v650 = vadd.f32 %v648, %v649
      %v651 = vrot.slane %v650, 2
      %v652 = vadd.f32 %v650, %v651
      %v653 = vrot.slane %v652, 1
      %v654 = vadd.f32 %v652, %v653
      %v655 = vmul.f32 %v629, %v629
      %v656 = vmul.f32 %v632, %v632
      %v657 = vmul.f32 %v635, %v635
      %v658 = vmul.f32 %v638, %v638
      %v659 = vadd.f32 %v655, %v656
      %v660 = vadd.f32 %v659, %v657
      %v661 = vadd.f32 %v660, %v658
      %v662 = vrot.slane %v661, 4
      %v663 = vadd.f32 %v661, %v662
      %v664 = vrot.slane %v663, 2
      %v665 = vadd.f32 %v663, %v664
      %v666 = vrot.slane %v665, 1
      %v667 = vadd.f32 %v665, %v666
      %vm668 = vcmp.eq.s32.totalorder %v645, 0
      %v669 = vsel %vm668, %v654, 0.0
      %670 = vst [vmem:[%s364] sm:$0xff] %v669
      %v671 = vsel %vm668, %v667, 0.0
      %672 = vst [vmem:[%s370] sm:$0xff] %v671
      %s673 = smul.u32 4, %s24
      %p674 = scmp.lt.s32.totalorder %s23, 3
      %s675 = scalar_select %p674, %s23, 3
      %p676 = scmp.lt.s32.totalorder %s673, 3
      %s677 = scalar_select %p676, %s673, 3
      %s678 = smul.addr %s675, 4
      %s679 = sadd.s32 %s677, %s678
      %s680 = smul.addr %s679, 8
      %s681 = scalar_lea.vmem %s5, %s680
      %s682 = sadd.s32 %s23, %s24
      %p683 = scmp.lt.s32.totalorder %s682, 3
      %s684 = scalar_select %p683, %s682, 3
      %s685 = smul.addr %s684, 8
      %s686 = scalar_lea.vmem %s6, %s685
      %s687 = sadd.s32 %s23, %s24
      %p688 = scmp.lt.s32.totalorder %s687, 3
      %s689 = scalar_select %p688, %s687, 3
      %s690 = smul.addr %s689, 8
      %s691 = scalar_lea.vmem %s7, %s690
      // Predicated region
      $region41: #{unet_generator_pallas.17} parent=39 // pred_check
        %p692 = pneg %p168
      $region42: #{unet_generator_pallas.17} parent=39 // pred_check_branch
        %694 = sbr.rel (%p692) target = $region44
      $region43: #{unet_generator_pallas.17} parent=39 // pred_region
        %s695 = smul.u32 4, %s24
      $region44: #{unet_generator_pallas.17} parent=39 // pred_fallthru
        _
      // Predicated region
      $region45: #{unet_generator_pallas.17} parent=39 // pred_check
        %p696 = pneg %p196
      $region46: #{unet_generator_pallas.17} parent=39 // pred_check_branch
        %698 = sbr.rel (%p696) target = $region48
      $region47: #{unet_generator_pallas.17} parent=39 // pred_region
        %s699 = sadd.s32 %s23, %s24
      $region48: #{unet_generator_pallas.17} parent=39 // pred_fallthru
        _
      // Predicated region
      $region49: #{unet_generator_pallas.17} parent=39 // pred_check
        %p700 = pneg %p224
      $region50: #{unet_generator_pallas.17} parent=39 // pred_check_branch
        %702 = sbr.rel (%p700) target = $region52
      $region51: #{unet_generator_pallas.17} parent=39 // pred_region
        %s703 = sadd.s32 %s23, %s24
      $region52: #{unet_generator_pallas.17} parent=39 // pred_fallthru
        _
    $region40: #{unet_generator_pallas.17} parent=5 // pred_fallthru
      _
    %p704 = scmp.le.s32.totalorder 2, %s14
    // Predicated region
    $region53: #{unet_generator_pallas.17} parent=5 // pred_check
      %p705 = pneg %p704
    $region54: #{unet_generator_pallas.17} parent=5 // pred_check_branch
      %707 = sbr.rel (%p705) target = $region56
    $region55: #{unet_generator_pallas.17} parent=5 // pred_region
      %s708 = ssub.s32 %s14, 2
      // Predicated region
      $region57: #{unet_generator_pallas.17} parent=55 // pred_check
        %p709 = pneg %p174
      $region58: #{unet_generator_pallas.17} parent=55 // pred_check_branch
        %711 = sbr.rel (%p709) target = $region60
      $region59: #{unet_generator_pallas.17} parent=55 // pred_region
        %s712 = smul.u32 4, %s26
        %p713 = scmp.lt.s32.totalorder %s25, 3
        %s714 = scalar_select %p713, %s25, 3
        %p715 = scmp.lt.s32.totalorder %s712, 3
        %s716 = scalar_select %p715, %s712, 3
        %s717 = smul.addr %s714, 4
        %s718 = sadd.s32 %s716, %s717
        %s719 = smul.addr %s718, 8
        %s720 = scalar_lea.vmem %s5, %s719
      $region60: #{unet_generator_pallas.17} parent=55 // pred_fallthru
        _
      // Predicated region
      $region61: #{unet_generator_pallas.17} parent=55 // pred_check
        %p721 = pneg %p202
      $region62: #{unet_generator_pallas.17} parent=55 // pred_check_branch
        %723 = sbr.rel (%p721) target = $region64
      $region63: #{unet_generator_pallas.17} parent=55 // pred_region
        %s724 = sadd.s32 %s25, %s26
        %p725 = scmp.lt.s32.totalorder %s724, 3
        %s726 = scalar_select %p725, %s724, 3
        %s727 = smul.addr %s726, 8
        %s728 = scalar_lea.vmem %s6, %s727
      $region64: #{unet_generator_pallas.17} parent=55 // pred_fallthru
        _
      // Predicated region
      $region65: #{unet_generator_pallas.17} parent=55 // pred_check
        %p729 = pneg %p230
      $region66: #{unet_generator_pallas.17} parent=55 // pred_check_branch
        %731 = sbr.rel (%p729) target = $region68
      $region67: #{unet_generator_pallas.17} parent=55 // pred_region
        %s732 = sadd.s32 %s25, %s26
        %p733 = scmp.lt.s32.totalorder %s732, 3
        %s734 = scalar_select %p733, %s732, 3
        %s735 = smul.addr %s734, 8
        %s736 = scalar_lea.vmem %s7, %s735
      $region68: #{unet_generator_pallas.17} parent=55 // pred_fallthru
        _
    $region56: #{unet_generator_pallas.17} parent=5 // pred_fallthru
      _
  $region6: #{unet_generator_pallas.17} parent=0 // loop_footer
    %s18 = sadd.s32 1, %s14
  $region7: #{unet_generator_pallas.17} parent=0 // loop_footer_branch
    %13 = sbr.rel target = $region3
  $region8: #{unet_generator_pallas.17} parent=0 // loop_exit
    _

// kernel: tile.131
$region0: #{tile.131}
  #allocation0 [shape = 's32[1]{0}', space=sflag, size = 0x4, scoped, tag = 'scoped memory for tile.131']
  %s0 = inlined_call_operand.vmem [shape: f32[64], index: 0, kind: input, shape index: {}]
  %s1 = inlined_call_operand.vmem [shape: f32[4,64], index: 1, kind: output, shape index: {}]
  // Predicated region
  $region2: #{tile.131} parent=0 // pred_check
    _
  $region3: #{tile.131} parent=0 // pred_check_branch
    %3 = sbr.rel (0) target = $region5
  $region4: #{tile.131} parent=0 // pred_region
    _
  $region5: #{tile.131} parent=0 // pred_fallthru
    _
  %v4 = vld [vmem:[%s0] ss:$0 sm:$0xff]
  %5 = vst [vmem:[%s1] sm:$0xf] %v4

// kernel: tile.136
$region0: #{tile.136}
  %s0 = inlined_call_operand.vmem [shape: f32[4,64], index: 0, kind: input, shape index: {}]
  %s1 = inlined_call_operand.vmem [shape: f32[1,256], index: 1, kind: output, shape index: {}]
  $region1: #{tile.136} parent=0
    #allocation0 [shape = 'u8[8192]{0}', space=vmem, size = 0x2000, scoped, tag = 'scoped mem for output reshape']
    #allocation1 [shape = 'u8[4096]{0}', space=vmem, size = 0x1000, scoped, tag = 'scoped mem for input reshape']
    %s3 = ssub.s32 16, 1
    %v4 = vld [vmem:[%s0] sm:%s3]
    %5 = vst [vmem:[#allocation1] sm:%s3] %v4
    %s6 = smov 3
    %v7 = vld [vmem:[#allocation1] ss:$2 sm:%s6]
    %vm8 = vcmask 523264
    %9 = vst.msk [vmem:[#allocation0] ss:$8 sm:$0x3] %vm8, %v7
    %s10 = scalar_lea.vmem [#allocation1], 1
    %s11 = smov 3
    %v12 = vld [vmem:[%s10] ss:$2 sm:%s11]
    %13 = vrot.lane.b32.xlu0 %v12, 64
    %v14 = vpop.permute.xlu0 %13
    %vm15 = vcmask 1048064
    %16 = vst.msk [vmem:[#allocation0] ss:$8 sm:$0x3] %vm15, %v14
    %s18 = ssub.s32 2, 1
    %v19 = vld [vmem:[#allocation0] sm:%s18]
    %s21 = ssub.s32 2, 1
    %22 = vst [vmem:[%s1] sm:%s21] %v19
    %s23 = scalar_lea.vmem [#allocation0], 8
    %v24 = vld [vmem:[%s23] sm:%s18]
    %s26 = ssub.s32 2, 1
    %s27 = scalar_lea.vmem %s1, 1
    %28 = vst [vmem:[%s27] sm:%s26] %v24

// kernel: unet_generator_pallas.18
$region0: #{unet_generator_pallas.18}
  #allocation0 [shape = 'u32[]', space=smem, size = 0x4, offset = 0x4, fixed_abs, tag = 'smem constant byte address 0x4 - core index']
  #allocation1 [shape = 'u32[72,128]{1,0:T(1,128)}', space=vmem, size = 0x9000, scoped, tag = 'internal scratch']
  %s0 = inlined_call_operand.vmem [shape: f32[4,128,256], index: 0, kind: input, shape index: {}]
  %s1 = inlined_call_operand.vmem [shape: f32[4,256,128], index: 1, kind: input, shape index: {}]
  %s2 = inlined_call_operand.vmem [shape: f32[1,256], index: 2, kind: input, shape index: {}]
  %s3 = inlined_call_operand.vmem [shape: f32[1,256], index: 3, kind: input, shape index: {}]
  %s4 = inlined_call_operand.vmem [shape: f32[1,128], index: 4, kind: input, shape index: {}]
  %s5 = inlined_call_operand.vmem [shape: f32[4,128,128], index: 5, kind: output, shape index: {0}]
  %s6 = inlined_call_operand.vmem [shape: f32[32,128], index: 6, kind: output, shape index: {1}]
  %s7 = inlined_call_operand.vmem [shape: f32[32,128], index: 7, kind: output, shape index: {2}]
  %8 = xla_tuple %s5, %s6, %s7
  %s9 = sld [smem:[#allocation0]]
  $region69: #{unet_generator_pallas.18} parent=0
    _
  %s11 = ssub.s32 1, %s9
  %s12 = scalar_select 0, %s11, %s9
  loop: start=0, step=1, limit=6
  $region2: #{unet_generator_pallas.18} parent=0 // loop_pre_header
    _
  $region3: #{unet_generator_pallas.18} parent=0 // loop_header
    %s14 = sphi 0, %s18
    %p15 = scmp.ge.s32.totalorder %s14, 6
    %s21 = sphi 0, %s33
    %s22 = sphi 0, %s29
    %s23 = sphi 0, %s21
    %s24 = sphi 0, %s22
    %s25 = sphi 0, %s23
    %s26 = sphi 0, %s24
    %s38 = sphi 0, %s40
    %s41 = sphi 0, %s38
    %s42 = sphi 0, %s41
    %s58 = sphi 0, %s42
    %s64 = sphi 0, %s66
    %s67 = sphi 0, %s64
    %s68 = sphi 0, %s67
    %s84 = sphi 0, %s68
    %s88 = sphi 0, %s88
    %s90 = sphi 0, %s88
    %s91 = sphi 0, %s90
    %s105 = sphi 0, %s91
    %s109 = sphi 0, %s109
    %s111 = sphi 0, %s109
    %s112 = sphi 0, %s111
    %s126 = sphi 0, %s112
    %s130 = sphi 0, %s130
    %s132 = sphi 0, %s130
    %s133 = sphi 0, %s132
    %s147 = sphi 0, %s133
    %s155 = sphi 0, %s157
    %s158 = sphi 0, %s155
    %s159 = sphi 0, %s158
    %s175 = sphi 0, %s159
    %s183 = sphi 0, %s185
    %s186 = sphi 0, %s183
    %s187 = sphi 0, %s186
    %s203 = sphi 0, %s187
    %s211 = sphi 0, %s213
    %s214 = sphi 0, %s211
    %s215 = sphi 0, %s214
    %s231 = sphi 0, %s215
  $region4: #{unet_generator_pallas.18} parent=0 // loop_header_branch
    %17 = sbr.rel (%p15) target = $region8
  $region5: #{unet_generator_pallas.18} parent=0 // loop_body
    %s19 = ssub.s32 %s14, 1
    %s20 = ssub.s32 %s14, 2
    %s27 = sadd.s32 1, %s22
    %p28 = scmp.ge.s32.totalorder %s27, 1
    %s29 = scalar_select %p28, 0, %s27
    %s30 = sadd.s32 1, %s21
    %s31 = scalar_select %p28, %s30, %s21
    %p32 = scmp.ge.s32.totalorder %s31, 4
    %s33 = scalar_select %p32, 0, %s31
    %s34 = ssub.s32 %s21, %s33
    %s35 = ssub.s32 %s22, %s29
    %s36 = sor.u32 %s34, %s35
    %p37 = scmp.eq.s32.totalorder %s36, 0
    %s39 = sadd.s32 %s38, 1
    %s40 = scalar_select %p37, %s38, %s39
    %p43 = pneg %p37
    %p44 = scmp.eq.s32.totalorder %s14, 3
    %p45 = por %p43, %p44
    %p46 = scmp.ne.s32.totalorder %s38, %s41
    %p47 = scmp.eq.s32.totalorder %s14, 0
    %p48 = por %p46, %p47
    %p49 = scmp.ne.s32.totalorder %s38, %s41
    %p50 = scmp.eq.s32.totalorder %s19, 3
    %p51 = por %p49, %p50
    %p52 = scmp.ne.s32.totalorder %s41, %s42
    %p53 = scmp.eq.s32.totalorder %s19, 0
    %p54 = por %p52, %p53
    %p55 = scmp.ne.s32.totalorder %s41, %s42
    %p56 = scmp.eq.s32.totalorder %s20, 3
    %p57 = por %p55, %p56
    %p59 = scmp.ne.s32.totalorder %s42, %s58
    %p60 = scmp.eq.s32.totalorder %s20, 0
    %p61 = por %p59, %p60
    %s62 = ssub.s32 %s21, %s33
    %p63 = scmp.eq.s32.totalorder %s62, 0
    %s65 = sadd.s32 %s64, 1
    %s66 = scalar_select %p63, %s64, %s65
    %p69 = pneg %p63
    %p70 = scmp.eq.s32.totalorder %s14, 3
    %p71 = por %p69, %p70
    %p72 = scmp.ne.s32.totalorder %s64, %s67
    %p73 = scmp.eq.s32.totalorder %s14, 0
    %p74 = por %p72, %p73
    %p75 = scmp.ne.s32.totalorder %s64, %s67
    %p76 = scmp.eq.s32.totalorder %s19, 3
    %p77 = por %p75, %p76
    %p78 = scmp.ne.s32.totalorder %s67, %s68
    %p79 = scmp.eq.s32.totalorder %s19, 0
    %p80 = por %p78, %p79
    %p81 = scmp.ne.s32.totalorder %s67, %s68
    %p82 = scmp.eq.s32.totalorder %s20, 3
    %p83 = por %p81, %p82
    %p85 = scmp.ne.s32.totalorder %s68, %s84
    %p86 = scmp.eq.s32.totalorder %s20, 0
    %p87 = por %p85, %p86
    %s89 = sadd.s32 %s88, 1
    %p92 = scmp.eq.s32.totalorder %s14, 3
    %p93 = scmp.ne.s32.totalorder %s88, %s90
    %p94 = scmp.eq.s32.totalorder %s14, 0
    %p95 = por %p93, %p94
    %p96 = scmp.ne.s32.totalorder %s88, %s90
    %p97 = scmp.eq.s32.totalorder %s19, 3
    %p98 = por %p96, %p97
    %p99 = scmp.ne.s32.totalorder %s90, %s91
    %p100 = scmp.eq.s32.totalorder %s19, 0
    %p101 = por %p99, %p100
    %p102 = scmp.ne.s32.totalorder %s90, %s91
    %p103 = scmp.eq.s32.totalorder %s20, 3
    %p104 = por %p102, %p103
    %p106 = scmp.ne.s32.totalorder %s91, %s105
    %p107 = scmp.eq.s32.totalorder %s20, 0
    %p108 = por %p106, %p107
    %s110 = sadd.s32 %s109, 1
    %p113 = scmp.eq.s32.totalorder %s14, 3
    %p114 = scmp.ne.s32.totalorder %s109, %s111
    %p115 = scmp.eq.s32.totalorder %s14, 0
    %p116 = por %p114, %p115
    %p117 = scmp.ne.s32.totalorder %s109, %s111
    %p118 = scmp.eq.s32.totalorder %s19, 3
    %p119 = por %p117, %p118
    %p120 = scmp.ne.s32.totalorder %s111, %s112
    %p121 = scmp.eq.s32.totalorder %s19, 0
    %p122 = por %p120, %p121
    %p123 = scmp.ne.s32.totalorder %s111, %s112
    %p124 = scmp.eq.s32.totalorder %s20, 3
    %p125 = por %p123, %p124
    %p127 = scmp.ne.s32.totalorder %s112, %s126
    %p128 = scmp.eq.s32.totalorder %s20, 0
    %p129 = por %p127, %p128
    %s131 = sadd.s32 %s130, 1
    %p134 = scmp.eq.s32.totalorder %s14, 3
    %p135 = scmp.ne.s32.totalorder %s130, %s132
    %p136 = scmp.eq.s32.totalorder %s14, 0
    %p137 = por %p135, %p136
    %p138 = scmp.ne.s32.totalorder %s130, %s132
    %p139 = scmp.eq.s32.totalorder %s19, 3
    %p140 = por %p138, %p139
    %p141 = scmp.ne.s32.totalorder %s132, %s133
    %p142 = scmp.eq.s32.totalorder %s19, 0
    %p143 = por %p141, %p142
    %p144 = scmp.ne.s32.totalorder %s132, %s133
    %p145 = scmp.eq.s32.totalorder %s20, 3
    %p146 = por %p144, %p145
    %p148 = scmp.ne.s32.totalorder %s133, %s147
    %p149 = scmp.eq.s32.totalorder %s20, 0
    %p150 = por %p148, %p149
    %s151 = ssub.s32 %s21, %s33
    %s152 = ssub.s32 %s22, %s29
    %s153 = sor.u32 %s151, %s152
    %p154 = scmp.eq.s32.totalorder %s153, 0
    %s156 = sadd.s32 %s155, 1
    %s157 = scalar_select %p154, %s155, %s156
    %p160 = pneg %p154
    %p161 = scmp.eq.s32.totalorder %s14, 3
    %p162 = por %p160, %p161
    %p163 = scmp.ne.s32.totalorder %s155, %s158
    %p164 = scmp.eq.s32.totalorder %s14, 0
    %p165 = por %p163, %p164
    %p166 = scmp.ne.s32.totalorder %s155, %s158
    %p167 = scmp.eq.s32.totalorder %s19, 3
    %p168 = por %p166, %p167
    %p169 = scmp.ne.s32.totalorder %s158, %s159
    %p170 = scmp.eq.s32.totalorder %s19, 0
    %p171 = por %p169, %p170
    %p172 = scmp.ne.s32.totalorder %s158, %s159
    %p173 = scmp.eq.s32.totalorder %s20, 3
    %p174 = por %p172, %p173
    %p176 = scmp.ne.s32.totalorder %s159, %s175
    %p177 = scmp.eq.s32.totalorder %s20, 0
    %p178 = por %p176, %p177
    %s179 = sadd.s32 %s21, %s22
    %s180 = sadd.s32 %s33, %s29
    %s181 = ssub.s32 %s179, %s180
    %p182 = scmp.eq.s32.totalorder %s181, 0
    %s184 = sadd.s32 %s183, 1
    %s185 = scalar_select %p182, %s183, %s184
    %p188 = pneg %p182
    %p189 = scmp.eq.s32.totalorder %s14, 3
    %p190 = por %p188, %p189
    %p191 = scmp.ne.s32.totalorder %s183, %s186
    %p192 = scmp.eq.s32.totalorder %s14, 0
    %p193 = por %p191, %p192
    %p194 = scmp.ne.s32.totalorder %s183, %s186
    %p195 = scmp.eq.s32.totalorder %s19, 3
    %p196 = por %p194, %p195
    %p197 = scmp.ne.s32.totalorder %s186, %s187
    %p198 = scmp.eq.s32.totalorder %s19, 0
    %p199 = por %p197, %p198
    %p200 = scmp.ne.s32.totalorder %s186, %s187
    %p201 = scmp.eq.s32.totalorder %s20, 3
    %p202 = por %p200, %p201
    %p204 = scmp.ne.s32.totalorder %s187, %s203
    %p205 = scmp.eq.s32.totalorder %s20, 0
    %p206 = por %p204, %p205
    %s207 = sadd.s32 %s21, %s22
    %s208 = sadd.s32 %s33, %s29
    %s209 = ssub.s32 %s207, %s208
    %p210 = scmp.eq.s32.totalorder %s209, 0
    %s212 = sadd.s32 %s211, 1
    %s213 = scalar_select %p210, %s211, %s212
    %p216 = pneg %p210
    %p217 = scmp.eq.s32.totalorder %s14, 3
    %p218 = por %p216, %p217
    %p219 = scmp.ne.s32.totalorder %s211, %s214
    %p220 = scmp.eq.s32.totalorder %s14, 0
    %p221 = por %p219, %p220
    %p222 = scmp.ne.s32.totalorder %s211, %s214
    %p223 = scmp.eq.s32.totalorder %s19, 3
    %p224 = por %p222, %p223
    %p225 = scmp.ne.s32.totalorder %s214, %s215
    %p226 = scmp.eq.s32.totalorder %s19, 0
    %p227 = por %p225, %p226
    %p228 = scmp.ne.s32.totalorder %s214, %s215
    %p229 = scmp.eq.s32.totalorder %s20, 3
    %p230 = por %p228, %p229
    %p232 = scmp.ne.s32.totalorder %s215, %s231
    %p233 = scmp.eq.s32.totalorder %s20, 0
    %p234 = por %p232, %p233
    %p235 = scmp.le.s32.totalorder 1, %s14
    %p236 = scmp.lt.s32.totalorder %s14, 5
    %p237 = pnand %p235, %p236
    %p238 = pneg %p237
    // Predicated region
    $region9: #{unet_generator_pallas.18} parent=5 // pred_check
      _
    $region10: #{unet_generator_pallas.18} parent=5 // pred_check_branch
      %240 = sbr.rel (%p237) target = $region12
    $region11: #{unet_generator_pallas.18} parent=5 // pred_region
      %s241 = ssub.s32 %s14, 1
      // Predicated region
      $region13: #{unet_generator_pallas.18} parent=11 // pred_check
        %p242 = pneg %p101
      $region14: #{unet_generator_pallas.18} parent=11 // pred_check_branch
        %244 = sbr.rel (%p242) target = $region16
      $region15: #{unet_generator_pallas.18} parent=11 // pred_region
        _
      $region16: #{unet_generator_pallas.18} parent=11 // pred_fallthru
        _
      // Predicated region
      $region17: #{unet_generator_pallas.18} parent=11 // pred_check
        %p245 = pneg %p122
      $region18: #{unet_generator_pallas.18} parent=11 // pred_check_branch
        %247 = sbr.rel (%p245) target = $region20
      $region19: #{unet_generator_pallas.18} parent=11 // pred_region
        _
      $region20: #{unet_generator_pallas.18} parent=11 // pred_fallthru
        _
      // Predicated region
      $region21: #{unet_generator_pallas.18} parent=11 // pred_check
        %p248 = pneg %p143
      $region22: #{unet_generator_pallas.18} parent=11 // pred_check_branch
        %250 = sbr.rel (%p248) target = $region24
      $region23: #{unet_generator_pallas.18} parent=11 // pred_region
        _
      $region24: #{unet_generator_pallas.18} parent=11 // pred_fallthru
        _
    $region12: #{unet_generator_pallas.18} parent=5 // pred_fallthru
      _
    %p251 = scmp.lt.s32.totalorder %s14, 4
    // Predicated region
    $region25: #{unet_generator_pallas.18} parent=5 // pred_check
      %p252 = pneg %p251
    $region26: #{unet_generator_pallas.18} parent=5 // pred_check_branch
      %254 = sbr.rel (%p252) target = $region28
    $region27: #{unet_generator_pallas.18} parent=5 // pred_region
      // Predicated region
      $region29: #{unet_generator_pallas.18} parent=27 // pred_check
        %p255 = pneg %p48
      $region30: #{unet_generator_pallas.18} parent=27 // pred_check_branch
        %257 = sbr.rel (%p255) target = $region32
      $region31: #{unet_generator_pallas.18} parent=27 // pred_region
        %s258 = smul.u32 16, %s22
        %p259 = scmp.lt.s32.totalorder %s21, 3
        %s260 = scalar_select %p259, %s21, 3
        %p261 = scmp.lt.s32.totalorder %s258, 15
        %s262 = scalar_select %p261, %s258, 15
        %s263 = smul.addr %s262, 2
        %s264 = smul.addr %s260, 32
        %s265 = sadd.s32 %s263, %s264
        %s266 = smul.addr %s265, 8
        %s267 = scalar_lea.vmem %s0, %s266
        %s268 = smul.u32 16, %s22
      $region32: #{unet_generator_pallas.18} parent=27 // pred_fallthru
        _
      // Predicated region
      $region33: #{unet_generator_pallas.18} parent=27 // pred_check
        %p269 = pneg %p74
      $region34: #{unet_generator_pallas.18} parent=27 // pred_check_branch
        %271 = sbr.rel (%p269) target = $region36
      $region35: #{unet_generator_pallas.18} parent=27 // pred_region
        %p272 = scmp.lt.s32.totalorder %s21, 3
        %s273 = scalar_select %p272, %s21, 3
        %s274 = smul.addr %s273, 32
        %s275 = smul.addr %s274, 8
        %s276 = scalar_lea.vmem %s1, %s275
      $region36: #{unet_generator_pallas.18} parent=27 // pred_fallthru
        _
    $region28: #{unet_generator_pallas.18} parent=5 // pred_fallthru
      _
    %p277 = scmp.le.s32.totalorder 1, %s14
    %p278 = scmp.lt.s32.totalorder %s14, 5
    %p279 = pnand %p277, %p278
    %p280 = pneg %p279
    // Predicated region
    $region37: #{unet_generator_pallas.18} parent=5 // pred_check
      _
    $region38: #{unet_generator_pallas.18} parent=5 // pred_check_branch
      %282 = sbr.rel (%p279) target = $region40
    $region39: #{unet_generator_pallas.18} parent=5 // pred_region
      %s283 = ssub.s32 %s14, 1
      %s284 = smul.u32 16, %s24
      %p285 = scmp.lt.s32.totalorder %s23, 3
      %s286 = scalar_select %p285, %s23, 3
      %p287 = scmp.lt.s32.totalorder %s284, 15
      %s288 = scalar_select %p287, %s284, 15
      %s289 = smul.addr %s288, 2
      %s290 = smul.addr %s286, 32
      %s291 = sadd.s32 %s289, %s290
      %s292 = smul.addr %s291, 8
      %s293 = scalar_lea.vmem %s0, %s292
      %p294 = pneg %p54
      %p295 = pneg %p51
      %p296 = scmp.lt.s32.totalorder %s23, 3
      %s297 = scalar_select %p296, %s23, 3
      %s298 = smul.addr %s297, 32
      %s299 = smul.addr %s298, 8
      %s300 = scalar_lea.vmem %s1, %s299
      %p301 = pneg %p80
      %p302 = pneg %p77
      %p303 = pneg %p101
      %p304 = pneg %p98
      %p305 = pneg %p122
      %p306 = pneg %p119
      %p307 = pneg %p143
      %p308 = pneg %p140
      %p309 = pneg %p171
      %p310 = pneg %p168
      %s311 = smul.u32 16, %s24
      %p312 = scmp.lt.s32.totalorder %s23, 3
      %s313 = scalar_select %p312, %s23, 3
      %p314 = scmp.lt.s32.totalorder %s311, 15
      %s315 = scalar_select %p314, %s311, 15
      %s316 = smul.addr %s313, 16
      %s317 = sadd.s32 %s315, %s316
      %s318 = smul.addr %s317, 8
      %s319 = scalar_lea.vmem %s5, %s318
      %p320 = pneg %p199
      %p321 = pneg %p196
      %s322 = sadd.s32 %s23, %s24
      %p323 = scmp.lt.s32.totalorder %s322, 3
      %s324 = scalar_select %p323, %s322, 3
      %s325 = smul.addr %s324, 8
      %s326 = scalar_lea.vmem %s6, %s325
      %p327 = pneg %p227
      %p328 = pneg %p224
      %s329 = sadd.s32 %s23, %s24
      %p330 = scmp.lt.s32.totalorder %s329, 3
      %s331 = scalar_select %p330, %s329, 3
      %s332 = smul.addr %s331, 8
      %s333 = scalar_lea.vmem %s7, %s332
      %s334 = smul.u32 16, %s24
      %p335 = scmp.lt.s32.totalorder %s23, 3
      %s336 = scalar_select %p335, %s23, 3
      %p337 = scmp.lt.s32.totalorder %s334, 15
      %s338 = scalar_select %p337, %s334, 15
      %s339 = smul.addr %s338, 2
      %s340 = smul.addr %s336, 32
      %s341 = sadd.s32 %s339, %s340
      %s342 = smul.addr %s341, 8
      %s343 = scalar_lea.vmem %s0, %s342
      %s344 = smul.u32 16, %s24
      %p345 = scmp.lt.s32.totalorder %s23, 3
      %s346 = scalar_select %p345, %s23, 3
      %s347 = smul.addr %s346, 32
      %s348 = smul.addr %s347, 8
      %s349 = scalar_lea.vmem %s1, %s348
      %s350 = smul.u32 16, %s24
      %p351 = scmp.lt.s32.totalorder %s23, 3
      %s352 = scalar_select %p351, %s23, 3
      %p353 = scmp.lt.s32.totalorder %s350, 15
      %s354 = scalar_select %p353, %s350, 15
      %s355 = smul.addr %s352, 16
      %s356 = sadd.s32 %s354, %s355
      %s357 = smul.addr %s356, 8
      %s358 = scalar_lea.vmem %s5, %s357
      %s359 = smul.u32 16, %s24
      %s360 = sadd.s32 %s23, %s24
      %p361 = scmp.lt.s32.totalorder %s360, 3
      %s362 = scalar_select %p361, %s360, 3
      %s363 = smul.addr %s362, 8
      %s364 = scalar_lea.vmem %s6, %s363
      %s365 = sadd.s32 %s23, %s24
      %s366 = sadd.s32 %s23, %s24
      %p367 = scmp.lt.s32.totalorder %s366, 3
      %s368 = scalar_select %p367, %s366, 3
      %s369 = smul.addr %s368, 8
      %s370 = scalar_lea.vmem %s7, %s369
      %s371 = sadd.s32 %s23, %s24
      %v372 = vld [vmem:[%s343] sm:$0xff]
      %v373 = vld [vmem:[%s343 + $0x8] sm:$0xff]
      %v374 = vld [vmem:[%s343 + $0x10] sm:$0xff]
      %v375 = vld [vmem:[%s343 + $0x18] sm:$0xff]
      %v376 = vld [vmem:[%s343 + $0x20] sm:$0xff]
      %v377 = vld [vmem:[%s343 + $0x28] sm:$0xff]
      %v378 = vld [vmem:[%s343 + $0x30] sm:$0xff]
      %v379 = vld [vmem:[%s343 + $0x38] sm:$0xff]
      %v380 = vld [vmem:[%s343 + $0x40] sm:$0xff]
      %v381 = vld [vmem:[%s343 + $0x48] sm:$0xff]
      %v382 = vld [vmem:[%s343 + $0x50] sm:$0xff]
      %v383 = vld [vmem:[%s343 + $0x58] sm:$0xff]
      %v384 = vld [vmem:[%s343 + $0x60] sm:$0xff]
      %v385 = vld [vmem:[%s343 + $0x68] sm:$0xff]
      %v386 = vld [vmem:[%s343 + $0x70] sm:$0xff]
      %v387 = vld [vmem:[%s343 + $0x78] sm:$0xff]
      %v388 = vld [vmem:[%s343 + $0x80] sm:$0xff]
      %v389 = vld [vmem:[%s343 + $0x88] sm:$0xff]
      %v390 = vld [vmem:[%s343 + $0x90] sm:$0xff]
      %v391 = vld [vmem:[%s343 + $0x98] sm:$0xff]
      %v392 = vld [vmem:[%s343 + $0xa0] sm:$0xff]
      %v393 = vld [vmem:[%s343 + $0xa8] sm:$0xff]
      %v394 = vld [vmem:[%s343 + $0xb0] sm:$0xff]
      %v395 = vld [vmem:[%s343 + $0xb8] sm:$0xff]
      %v396 = vld [vmem:[%s343 + $0xc0] sm:$0xff]
      %v397 = vld [vmem:[%s343 + $0xc8] sm:$0xff]
      %v398 = vld [vmem:[%s343 + $0xd0] sm:$0xff]
      %v399 = vld [vmem:[%s343 + $0xd8] sm:$0xff]
      %v400 = vld [vmem:[%s343 + $0xe0] sm:$0xff]
      %v401 = vld [vmem:[%s343 + $0xe8] sm:$0xff]
      %v402 = vld [vmem:[%s343 + $0xf0] sm:$0xff]
      %v403 = vld [vmem:[%s343 + $0xf8] sm:$0xff]
      %v404 = vld [vmem:[%s2] sm:$0x3]
      %v406 = vperm.slane %v404, 0
      %v407 = vperm.slane %v404, 1
      %v410 = vmul.f32 %v372, %v406
      %v411 = vmul.f32 %v373, %v407
      %v412 = vmul.f32 %v374, %v406
      %v413 = vmul.f32 %v375, %v407
      %v414 = vmul.f32 %v376, %v406
      %v415 = vmul.f32 %v377, %v407
      %v416 = vmul.f32 %v378, %v406
      %v417 = vmul.f32 %v379, %v407
      %v418 = vmul.f32 %v380, %v406
      %v419 = vmul.f32 %v381, %v407
      %v420 = vmul.f32 %v382, %v406
      %v421 = vmul.f32 %v383, %v407
      %v422 = vmul.f32 %v384, %v406
      %v423 = vmul.f32 %v385, %v407
      %v424 = vmul.f32 %v386, %v406
      %v425 = vmul.f32 %v387, %v407
      %v426 = vmul.f32 %v388, %v406
      %v427 = vmul.f32 %v389, %v407
      %v428 = vmul.f32 %v390, %v406
      %v429 = vmul.f32 %v391, %v407
      %v430 = vmul.f32 %v392, %v406
      %v431 = vmul.f32 %v393, %v407
      %v432 = vmul.f32 %v394, %v406
      %v433 = vmul.f32 %v395, %v407
      %v434 = vmul.f32 %v396, %v406
      %v435 = vmul.f32 %v397, %v407
      %v436 = vmul.f32 %v398, %v406
      %v437 = vmul.f32 %v399, %v407
      %v438 = vmul.f32 %v400, %v406
      %v439 = vmul.f32 %v401, %v407
      %v440 = vmul.f32 %v402, %v406
      %v441 = vmul.f32 %v403, %v407
      %v442 = vld [vmem:[%s3] sm:$0x3]
      %v444 = vperm.slane %v442, 0
      %v445 = vperm.slane %v442, 1
      %v448 = vadd.f32 %v410, %v444
      %v449 = vadd.f32 %v411, %v445
      %v450 = vadd.f32 %v412, %v444
      %v451 = vadd.f32 %v413, %v445
      %v452 = vadd.f32 %v414, %v444
      %v453 = vadd.f32 %v415, %v445
      %v454 = vadd.f32 %v416, %v444
      %v455 = vadd.f32 %v417, %v445
      %v456 = vadd.f32 %v418, %v444
      %v457 = vadd.f32 %v419, %v445
      %v458 = vadd.f32 %v420, %v444
      %v459 = vadd.f32 %v421, %v445
      %v460 = vadd.f32 %v422, %v444
      %v461 = vadd.f32 %v423, %v445
      %v462 = vadd.f32 %v424, %v444
      %v463 = vadd.f32 %v425, %v445
      %v464 = vadd.f32 %v426, %v444
      %v465 = vadd.f32 %v427, %v445
      %v466 = vadd.f32 %v428, %v444
      %v467 = vadd.f32 %v429, %v445
      %v468 = vadd.f32 %v430, %v444
      %v469 = vadd.f32 %v431, %v445
      %v470 = vadd.f32 %v432, %v444
      %v471 = vadd.f32 %v433, %v445
      %v472 = vadd.f32 %v434, %v444
      %v473 = vadd.f32 %v435, %v445
      %v474 = vadd.f32 %v436, %v444
      %v475 = vadd.f32 %v437, %v445
      %v476 = vadd.f32 %v438, %v444
      %v477 = vadd.f32 %v439, %v445
      %v478 = vadd.f32 %v440, %v444
      %v479 = vadd.f32 %v441, %v445
      %v480 = vmax.f32 %v448, 0.0
      %v481 = vmax.f32 %v449, 0.0
      %v482 = vmax.f32 %v450, 0.0
      %v483 = vmax.f32 %v451, 0.0
      %v484 = vmax.f32 %v452, 0.0
      %v485 = vmax.f32 %v453, 0.0
      %v486 = vmax.f32 %v454, 0.0
      %v487 = vmax.f32 %v455, 0.0
      %v488 = vmax.f32 %v456, 0.0
      %v489 = vmax.f32 %v457, 0.0
      %v490 = vmax.f32 %v458, 0.0
      %v491 = vmax.f32 %v459, 0.0
      %v492 = vmax.f32 %v460, 0.0
      %v493 = vmax.f32 %v461, 0.0
      %v494 = vmax.f32 %v462, 0.0
      %v495 = vmax.f32 %v463, 0.0
      %v496 = vmax.f32 %v464, 0.0
      %v497 = vmax.f32 %v465, 0.0
      %v498 = vmax.f32 %v466, 0.0
      %v499 = vmax.f32 %v467, 0.0
      %v500 = vmax.f32 %v468, 0.0
      %v501 = vmax.f32 %v469, 0.0
      %v502 = vmax.f32 %v470, 0.0
      %v503 = vmax.f32 %v471, 0.0
      %v504 = vmax.f32 %v472, 0.0
      %v505 = vmax.f32 %v473, 0.0
      %v506 = vmax.f32 %v474, 0.0
      %v507 = vmax.f32 %v475, 0.0
      %v508 = vmax.f32 %v476, 0.0
      %v509 = vmax.f32 %v477, 0.0
      %v510 = vmax.f32 %v478, 0.0
      %v511 = vmax.f32 %v479, 0.0
      %v512 = vld [vmem:[%s349] sm:$0xff]
      %v513 = vld [vmem:[%s349 + $0x8] sm:$0xff]
      %v514 = vld [vmem:[%s349 + $0x10] sm:$0xff]
      %v515 = vld [vmem:[%s349 + $0x18] sm:$0xff]
      %v516 = vld [vmem:[%s349 + $0x20] sm:$0xff]
      %v517 = vld [vmem:[%s349 + $0x28] sm:$0xff]
      %v518 = vld [vmem:[%s349 + $0x30] sm:$0xff]
      %v519 = vld [vmem:[%s349 + $0x38] sm:$0xff]
      %v520 = vld [vmem:[%s349 + $0x40] sm:$0xff]
      %v521 = vld [vmem:[%s349 + $0x48] sm:$0xff]
      %v522 = vld [vmem:[%s349 + $0x50] sm:$0xff]
      %v523 = vld [vmem:[%s349 + $0x58] sm:$0xff]
      %v524 = vld [vmem:[%s349 + $0x60] sm:$0xff]
      %v525 = vld [vmem:[%s349 + $0x68] sm:$0xff]
      %v526 = vld [vmem:[%s349 + $0x70] sm:$0xff]
      %v527 = vld [vmem:[%s349 + $0x78] sm:$0xff]
      %v528 = vld [vmem:[%s349 + $0x80] sm:$0xff]
      %v529 = vld [vmem:[%s349 + $0x88] sm:$0xff]
      %v530 = vld [vmem:[%s349 + $0x90] sm:$0xff]
      %v531 = vld [vmem:[%s349 + $0x98] sm:$0xff]
      %v532 = vld [vmem:[%s349 + $0xa0] sm:$0xff]
      %v533 = vld [vmem:[%s349 + $0xa8] sm:$0xff]
      %v534 = vld [vmem:[%s349 + $0xb0] sm:$0xff]
      %v535 = vld [vmem:[%s349 + $0xb8] sm:$0xff]
      %v536 = vld [vmem:[%s349 + $0xc0] sm:$0xff]
      %v537 = vld [vmem:[%s349 + $0xc8] sm:$0xff]
      %v538 = vld [vmem:[%s349 + $0xd0] sm:$0xff]
      %v539 = vld [vmem:[%s349 + $0xd8] sm:$0xff]
      %v540 = vld [vmem:[%s349 + $0xe0] sm:$0xff]
      %v541 = vld [vmem:[%s349 + $0xe8] sm:$0xff]
      %v542 = vld [vmem:[%s349 + $0xf0] sm:$0xff]
      %v543 = vld [vmem:[%s349 + $0xf8] sm:$0xff]
      %v544 = vld [vmem:[%s4] sm:$0x1]
      %v546 = vperm.slane %v544, 0
      %548 = vmatpush.msra.mxu0 %v527
      %549 = vmatpush.msra.mxu0 %v526
      %550 = vmatpush.msra.mxu0 %v525
      %551 = vmatpush.msra.mxu0 %v524
      %552 = vmatpush.msra.mxu0 %v523
      %553 = vmatpush.msra.mxu0 %v522
      %554 = vmatpush.msra.mxu0 %v521
      %555 = vmatpush.msra.mxu0 %v520
      %556 = vmatpush.msra.mxu0 %v519
      %557 = vmatpush.msra.mxu0 %v518
      %558 = vmatpush.msra.mxu0 %v517
      %559 = vmatpush.msra.mxu0 %v516
      %560 = vmatpush.msra.mxu0 %v515
      %561 = vmatpush.msra.mxu0 %v514
      %562 = vmatpush.msra.mxu0 %v513
      %563 = vmatpush.msra.mxu0 %v512
      %564 = vmatmul.f32.gmra.mxu0 %v480
      %v565 = vpop.f32.mrf.mxu0
      %v566 = vadd.f32 %v546, %v565
      %567 = vmatmul.f32.gmra.mxu0 %v482
      %v568 = vpop.f32.mrf.mxu0
      %v569 = vadd.f32 %v546, %v568
      %570 = vmatmul.f32.gmra.mxu0 %v484
      %v571 = vpop.f32.mrf.mxu0
      %v572 = vadd.f32 %v546, %v571
      %573 = vmatmul.f32.gmra.mxu0 %v486
      %v574 = vpop.f32.mrf.mxu0
      %v575 = vadd.f32 %v546, %v574
      %576 = vmatmul.f32.gmra.mxu0 %v488
      %v577 = vpop.f32.mrf.mxu0
      %v578 = vadd.f32 %v546, %v577
      %579 = vmatmul.f32.gmra.mxu0 %v490
      %v580 = vpop.f32.mrf.mxu0
      %v581 = vadd.f32 %v546, %v580
      %582 = vmatmul.f32.gmra.mxu0 %v492
      %v583 = vpop.f32.mrf.mxu0
      %v584 = vadd.f32 %v546, %v583
      %585 = vmatmul.f32.gmra.mxu0 %v494
      %v586 = vpop.f32.mrf.mxu0
      %v587 = vadd.f32 %v546, %v586
      %588 = vmatmul.f32.gmra.mxu0 %v496
      %v589 = vpop.f32.mrf.mxu0
      %v590 = vadd.f32 %v546, %v589
      %591 = vmatmul.f32.gmra.mxu0 %v498
      %v592 = vpop.f32.mrf.mxu0
      %v593 = vadd.f32 %v546, %v592
      %594 = vmatmul.f32.gmra.mxu0 %v500
      %v595 = vpop.f32.mrf.mxu0
      %v596 = vadd.f32 %v546, %v595
      %597 = vmatmul.f32.gmra.mxu0 %v502
      %v598 = vpop.f32.mrf.mxu0
      %v599 = vadd.f32 %v546, %v598
      %600 = vmatmul.f32.gmra.mxu0 %v504
      %v601 = vpop.f32.mrf.mxu0
      %v602 = vadd.f32 %v546, %v601
      %603 = vmatmul.f32.gmra.mxu0 %v506
      %v604 = vpop.f32.mrf.mxu0
      %v605 = vadd.f32 %v546, %v604
      %606 = vmatmul.f32.gmra.mxu0 %v508
      %v607 = vpop.f32.mrf.mxu0
      %v608 = vadd.f32 %v546, %v607
      %609 = vmatmul.f32.gmra.mxu0 %v510
      %v610 = vpop.f32.mrf.mxu0
      %v611 = vadd.f32 %v546, %v610
      %612 = vdwg.mxu0
      %613 = vmatpush.msra.mxu0 %v543
      %614 = vmatpush.msra.mxu0 %v542
      %615 = vmatpush.msra.mxu0 %v541
      %616 = vmatpush.msra.mxu0 %v540
      %617 = vmatpush.msra.mxu0 %v539
      %618 = vmatpush.msra.mxu0 %v538
      %619 = vmatpush.msra.mxu0 %v537
      %620 = vmatpush.msra.mxu0 %v536
      %621 = vmatpush.msra.mxu0 %v535
      %622 = vmatpush.msra.mxu0 %v534
      %623 = vmatpush.msra.mxu0 %v533
      %624 = vmatpush.msra.mxu0 %v532
      %625 = vmatpush.msra.mxu0 %v531
      %626 = vmatpush.msra.mxu0 %v530
      %627 = vmatpush.msra.mxu0 %v529
      %628 = vmatpush.msra.mxu0 %v528
      %629 = vmatmul.f32.gmra.mxu0 %v481
      %v630 = vpop.f32.mrf.mxu0
      %v631 = vadd.f32 %v566, %v630
      %632 = vmatmul.f32.gmra.mxu0 %v483
      %v633 = vpop.f32.mrf.mxu0
      %v634 = vadd.f32 %v569, %v633
      %635 = vmatmul.f32.gmra.mxu0 %v485
      %v636 = vpop.f32.mrf.mxu0
      %v637 = vadd.f32 %v572, %v636
      %638 = vmatmul.f32.gmra.mxu0 %v487
      %v639 = vpop.f32.mrf.mxu0
      %v640 = vadd.f32 %v575, %v639
      %641 = vmatmul.f32.gmra.mxu0 %v489
      %v642 = vpop.f32.mrf.mxu0
      %v643 = vadd.f32 %v578, %v642
      %644 = vmatmul.f32.gmra.mxu0 %v491
      %v645 = vpop.f32.mrf.mxu0
      %v646 = vadd.f32 %v581, %v645
      %647 = vmatmul.f32.gmra.mxu0 %v493
      %v648 = vpop.f32.mrf.mxu0
      %v649 = vadd.f32 %v584, %v648
      %650 = vmatmul.f32.gmra.mxu0 %v495
      %v651 = vpop.f32.mrf.mxu0
      %v652 = vadd.f32 %v587, %v651
      %653 = vmatmul.f32.gmra.mxu0 %v497
      %v654 = vpop.f32.mrf.mxu0
      %v655 = vadd.f32 %v590, %v654
      %656 = vmatmul.f32.gmra.mxu0 %v499
      %v657 = vpop.f32.mrf.mxu0
      %v658 = vadd.f32 %v593, %v657
      %659 = vmatmul.f32.gmra.mxu0 %v501
      %v660 = vpop.f32.mrf.mxu0
      %v661 = vadd.f32 %v596, %v660
      %662 = vmatmul.f32.gmra.mxu0 %v503
      %v663 = vpop.f32.mrf.mxu0
      %v664 = vadd.f32 %v599, %v663
      %665 = vmatmul.f32.gmra.mxu0 %v505
      %v666 = vpop.f32.mrf.mxu0
      %v667 = vadd.f32 %v602, %v666
      %668 = vmatmul.f32.gmra.mxu0 %v507
      %v669 = vpop.f32.mrf.mxu0
      %v670 = vadd.f32 %v605, %v669
      %671 = vmatmul.f32.gmra.mxu0 %v509
      %v672 = vpop.f32.mrf.mxu0
      %v673 = vadd.f32 %v608, %v672
      %674 = vmatmul.f32.gmra.mxu0 %v511
      %v675 = vpop.f32.mrf.mxu0
      %v676 = vadd.f32 %v611, %v675
      %677 = vdwg.mxu0
      %678 = vst [vmem:[%s358] sm:$0xff] %v631
      %679 = vst [vmem:[%s358 + $0x8] sm:$0xff] %v634
      %680 = vst [vmem:[%s358 + $0x10] sm:$0xff] %v637
      %681 = vst [vmem:[%s358 + $0x18] sm:$0xff] %v640
      %682 = vst [vmem:[%s358 + $0x20] sm:$0xff] %v643
      %683 = vst [vmem:[%s358 + $0x28] sm:$0xff] %v646
      %684 = vst [vmem:[%s358 + $0x30] sm:$0xff] %v649
      %685 = vst [vmem:[%s358 + $0x38] sm:$0xff] %v652
      %686 = vst [vmem:[%s358 + $0x40] sm:$0xff] %v655
      %687 = vst [vmem:[%s358 + $0x48] sm:$0xff] %v658
      %688 = vst [vmem:[%s358 + $0x50] sm:$0xff] %v661
      %689 = vst [vmem:[%s358 + $0x58] sm:$0xff] %v664
      %690 = vst [vmem:[%s358 + $0x60] sm:$0xff] %v667
      %691 = vst [vmem:[%s358 + $0x68] sm:$0xff] %v670
      %692 = vst [vmem:[%s358 + $0x70] sm:$0xff] %v673
      %693 = vst [vmem:[%s358 + $0x78] sm:$0xff] %v676
      %v694 = vlaneseq
      %v695 = vshrl.u32 %v694, 7
      %v696 = vadd.f32 %v631, %v634
      %v697 = vadd.f32 %v696, %v637
      %v698 = vadd.f32 %v697, %v640
      %v699 = vadd.f32 %v698, %v643
      %v700 = vadd.f32 %v699, %v646
      %v701 = vadd.f32 %v700, %v649
      %v702 = vadd.f32 %v701, %v652
      %v703 = vadd.f32 %v702, %v655
      %v704 = vadd.f32 %v703, %v658
      %v705 = vadd.f32 %v704, %v661
      %v706 = vadd.f32 %v705, %v664
      %v707 = vadd.f32 %v706, %v667
      %v708 = vadd.f32 %v707, %v670
      %v709 = vadd.f32 %v708, %v673
      %v710 = vadd.f32 %v709, %v676
      %v711 = vrot.slane %v710, 4
      %v712 = vadd.f32 %v710, %v711
      %v713 = vrot.slane %v712, 2
      %v714 = vadd.f32 %v712, %v713
      %v715 = vrot.slane %v714, 1
      %v716 = vadd.f32 %v714, %v715
      %v717 = vmul.f32 %v631, %v631
      %v718 = vmul.f32 %v634, %v634
      %v719 = vmul.f32 %v637, %v637
      %v720 = vmul.f32 %v640, %v640
      %v721 = vmul.f32 %v643, %v643
      %v722 = vmul.f32 %v646, %v646
      %v723 = vmul.f32 %v649, %v649
      %v724 = vmul.f32 %v652, %v652
      %v725 = vmul.f32 %v655, %v655
      %v726 = vmul.f32 %v658, %v658
      %v727 = vmul.f32 %v661, %v661
      %v728 = vmul.f32 %v664, %v664
      %v729 = vmul.f32 %v667, %v667
      %v730 = vmul.f32 %v670, %v670
      %v731 = vmul.f32 %v673, %v673
      %v732 = vmul.f32 %v676, %v676
      %v733 = vadd.f32 %v717, %v718
      %v734 = vadd.f32 %v733, %v719
      %v735 = vadd.f32 %v734, %v720
      %v736 = vadd.f32 %v735, %v721
      %v737 = vadd.f32 %v736, %v722
      %v738 = vadd.f32 %v737, %v723
      %v739 = vadd.f32 %v738, %v724
      %v740 = vadd.f32 %v739, %v725
      %v741 = vadd.f32 %v740, %v726
      %v742 = vadd.f32 %v741, %v727
      %v743 = vadd.f32 %v742, %v728
      %v744 = vadd.f32 %v743, %v729
      %v745 = vadd.f32 %v744, %v730
      %v746 = vadd.f32 %v745, %v731
      %v747 = vadd.f32 %v746, %v732
      %v748 = vrot.slane %v747, 4
      %v749 = vadd.f32 %v747, %v748
      %v750 = vrot.slane %v749, 2
      %v751 = vadd.f32 %v749, %v750
      %v752 = vrot.slane %v751, 1
      %v753 = vadd.f32 %v751, %v752
      %vm754 = vcmp.eq.s32.totalorder %v695, 0
      %v755 = vsel %vm754, %v716, 0.0
      %756 = vst [vmem:[%s364] sm:$0xff] %v755
      %v757 = vsel %vm754, %v753, 0.0
      %758 = vst [vmem:[%s370] sm:$0xff] %v757
      %s759 = smul.u32 16, %s24
      %p760 = scmp.lt.s32.totalorder %s23, 3
      %s761 = scalar_select %p760, %s23, 3
      %p762 = scmp.lt.s32.totalorder %s759, 15
      %s763 = scalar_select %p762, %s759, 15
      %s764 = smul.addr %s761, 16
      %s765 = sadd.s32 %s763, %s764
      %s766 = smul.addr %s765, 8
      %s767 = scalar_lea.vmem %s5, %s766
      %s768 = sadd.s32 %s23, %s24
      %p769 = scmp.lt.s32.totalorder %s768, 3
      %s770 = scalar_select %p769, %s768, 3
      %s771 = smul.addr %s770, 8
      %s772 = scalar_lea.vmem %s6, %s771
      %s773 = sadd.s32 %s23, %s24
      %p774 = scmp.lt.s32.totalorder %s773, 3
      %s775 = scalar_select %p774, %s773, 3
      %s776 = smul.addr %s775, 8
      %s777 = scalar_lea.vmem %s7, %s776
      // Predicated region
      $region41: #{unet_generator_pallas.18} parent=39 // pred_check
        %p778 = pneg %p168
      $region42: #{unet_generator_pallas.18} parent=39 // pred_check_branch
        %780 = sbr.rel (%p778) target = $region44
      $region43: #{unet_generator_pallas.18} parent=39 // pred_region
        %s781 = smul.u32 16, %s24
      $region44: #{unet_generator_pallas.18} parent=39 // pred_fallthru
        _
      // Predicated region
      $region45: #{unet_generator_pallas.18} parent=39 // pred_check
        %p782 = pneg %p196
      $region46: #{unet_generator_pallas.18} parent=39 // pred_check_branch
        %784 = sbr.rel (%p782) target = $region48
      $region47: #{unet_generator_pallas.18} parent=39 // pred_region
        %s785 = sadd.s32 %s23, %s24
      $region48: #{unet_generator_pallas.18} parent=39 // pred_fallthru
        _
      // Predicated region
      $region49: #{unet_generator_pallas.18} parent=39 // pred_check
        %p786 = pneg %p224
      $region50: #{unet_generator_pallas.18} parent=39 // pred_check_branch
        %788 = sbr.rel (%p786) target = $region52
      $region51: #{unet_generator_pallas.18} parent=39 // pred_region
        %s789 = sadd.s32 %s23, %s24
      $region52: #{unet_generator_pallas.18} parent=39 // pred_fallthru
        _
    $region40: #{unet_generator_pallas.18} parent=5 // pred_fallthru
      _
    %p790 = scmp.le.s32.totalorder 2, %s14
    // Predicated region
    $region53: #{unet_generator_pallas.18} parent=5 // pred_check
      %p791 = pneg %p790
    $region54: #{unet_generator_pallas.18} parent=5 // pred_check_branch
      %793 = sbr.rel (%p791) target = $region56
    $region55: #{unet_generator_pallas.18} parent=5 // pred_region
      %s794 = ssub.s32 %s14, 2
      // Predicated region
      $region57: #{unet_generator_pallas.18} parent=55 // pred_check
        %p795 = pneg %p174
      $region58: #{unet_generator_pallas.18} parent=55 // pred_check_branch
        %797 = sbr.rel (%p795) target = $region60
      $region59: #{unet_generator_pallas.18} parent=55 // pred_region
        %s798 = smul.u32 16, %s26
        %p799 = scmp.lt.s32.totalorder %s25, 3
        %s800 = scalar_select %p799, %s25, 3
        %p801 = scmp.lt.s32.totalorder %s798, 15
        %s802 = scalar_select %p801, %s798, 15
        %s803 = smul.addr %s800, 16
        %s804 = sadd.s32 %s802, %s803
        %s805 = smul.addr %s804, 8
        %s806 = scalar_lea.vmem %s5, %s805
      $region60: #{unet_generator_pallas.18} parent=55 // pred_fallthru
        _
      // Predicated region
      $region61: #{unet_generator_pallas.18} parent=55 // pred_check
        %p807 = pneg %p202
      $region62: #{unet_generator_pallas.18} parent=55 // pred_check_branch
        %809 = sbr.rel (%p807) target = $region64
      $region63: #{unet_generator_pallas.18} parent=55 // pred_region
        %s810 = sadd.s32 %s25, %s26
        %p811 = scmp.lt.s32.totalorder %s810, 3
        %s812 = scalar_select %p811, %s810, 3
        %s813 = smul.addr %s812, 8
        %s814 = scalar_lea.vmem %s6, %s813
      $region64: #{unet_generator_pallas.18} parent=55 // pred_fallthru
        _
      // Predicated region
      $region65: #{unet_generator_pallas.18} parent=55 // pred_check
        %p815 = pneg %p230
      $region66: #{unet_generator_pallas.18} parent=55 // pred_check_branch
        %817 = sbr.rel (%p815) target = $region68
      $region67: #{unet_generator_pallas.18} parent=55 // pred_region
        %s818 = sadd.s32 %s25, %s26
        %p819 = scmp.lt.s32.totalorder %s818, 3
        %s820 = scalar_select %p819, %s818, 3
        %s821 = smul.addr %s820, 8
        %s822 = scalar_lea.vmem %s7, %s821
      $region68: #{unet_generator_pallas.18} parent=55 // pred_fallthru
        _
    $region56: #{unet_generator_pallas.18} parent=5 // pred_fallthru
      _
  $region6: #{unet_generator_pallas.18} parent=0 // loop_footer
    %s18 = sadd.s32 1, %s14
  $region7: #{unet_generator_pallas.18} parent=0 // loop_footer_branch
    %13 = sbr.rel target = $region3
  $region8: #{unet_generator_pallas.18} parent=0 // loop_exit
    _

// kernel: tile.141
$region0: #{tile.141}
  #allocation0 [shape = 's32[1]{0}', space=sflag, size = 0x4, scoped, tag = 'scoped memory for tile.141']
  %s0 = inlined_call_operand.vmem [shape: f32[32], index: 0, kind: input, shape index: {}]
  %s1 = inlined_call_operand.vmem [shape: f32[4,32], index: 1, kind: output, shape index: {}]
  // Predicated region
  $region2: #{tile.141} parent=0 // pred_check
    _
  $region3: #{tile.141} parent=0 // pred_check_branch
    %3 = sbr.rel (0) target = $region5
  $region4: #{tile.141} parent=0 // pred_region
    _
  $region5: #{tile.141} parent=0 // pred_fallthru
    _
  %v4 = vld [vmem:[%s0] ss:$0 sm:$0xff]
  %5 = vst [vmem:[%s1] sm:$0xf] %v4

// kernel: tile.146
$region0: #{tile.146}
  %s0 = inlined_call_operand.vmem [shape: f32[4,32], index: 0, kind: input, shape index: {}]
  %s1 = inlined_call_operand.vmem [shape: f32[1,128], index: 1, kind: output, shape index: {}]
  $region1: #{tile.146} parent=0
    #allocation0 [shape = 'u8[4096]{0}', space=vmem, size = 0x1000, scoped, tag = 'scoped mem for output reshape']
    #allocation1 [shape = 'u8[4096]{0}', space=vmem, size = 0x1000, scoped, tag = 'scoped mem for input reshape']
    %s3 = ssub.s32 16, 1
    %v4 = vld [vmem:[%s0] sm:%s3]
    %5 = vst [vmem:[#allocation1] sm:%s3] %v4
    %v6 = vld [vmem:[#allocation1] sm:$0x1]
    %vm7 = vcmask 261120
    %8 = vst.msk [vmem:[#allocation0] sm:$0x1] %vm7, %v6
    %s9 = scalar_lea.vmem [#allocation1], 3
    %v10 = vld [vmem:[%s9] sm:$0x1]
    %11 = vrot.lane.b32.xlu0 %v10, 96
    %v12 = vpop.permute.xlu0 %11
    %vm13 = vcmask 1048320
    %14 = vst.msk [vmem:[#allocation0] sm:$0x1] %vm13, %v12
    %s15 = scalar_lea.vmem [#allocation1], 2
    %v16 = vld [vmem:[%s15] sm:$0x1]
    %17 = vrot.lane.b32.xlu0 %v16, 64
    %v18 = vpop.permute.xlu0 %17
    %vm19 = vcmask 785920
    %20 = vst.msk [vmem:[#allocation0] sm:$0x1] %vm19, %v18
    %s21 = scalar_lea.vmem [#allocation1], 1
    %v22 = vld [vmem:[%s21] sm:$0x1]
    %23 = vrot.lane.b32.xlu0 %v22, 32
    %v24 = vpop.permute.xlu0 %23
    %vm25 = vcmask 523520
    %26 = vst.msk [vmem:[#allocation0] sm:$0x1] %vm25, %v24
    %s28 = ssub.s32 2, 1
    %v29 = vld [vmem:[#allocation0] sm:%s28]
    %s31 = ssub.s32 2, 1
    %32 = vst [vmem:[%s1] sm:%s31] %v29

// kernel: unet_generator_pallas.19
$region0: #{unet_generator_pallas.19}
  #allocation0 [shape = 'u32[]', space=smem, size = 0x4, offset = 0x4, fixed_abs, tag = 'smem constant byte address 0x4 - core index']
  #allocation1 [shape = 'u32[72,128]{1,0:T(1,128)}', space=vmem, size = 0x9000, scoped, tag = 'internal scratch']
  %s0 = inlined_call_operand.vmem [shape: f32[4,512,128], index: 0, kind: input, shape index: {}]
  %s1 = inlined_call_operand.vmem [shape: f32[4,128,128], index: 1, kind: input, shape index: {}]
  %s2 = inlined_call_operand.vmem [shape: f32[1,128], index: 2, kind: input, shape index: {}]
  %s3 = inlined_call_operand.vmem [shape: f32[1,128], index: 3, kind: input, shape index: {}]
  %s4 = inlined_call_operand.vmem [shape: f32[1,128], index: 4, kind: input, shape index: {}]
  %s5 = inlined_call_operand.vmem [shape: f32[4,512,128], index: 5, kind: output, shape index: {}]
  %s6 = sld [smem:[#allocation0]]
  $region53: #{unet_generator_pallas.19} parent=0
    _
  %s8 = ssub.s32 1, %s6
  %s9 = scalar_select 0, %s8, %s6
  loop: start=0, step=1, limit=6
  $region2: #{unet_generator_pallas.19} parent=0 // loop_pre_header
    _
  $region3: #{unet_generator_pallas.19} parent=0 // loop_header
    %s11 = sphi 0, %s15
    %p12 = scmp.ge.s32.totalorder %s11, 6
    %s18 = sphi 0, %s30
    %s19 = sphi 0, %s26
    %s20 = sphi 0, %s18
    %s21 = sphi 0, %s19
    %s22 = sphi 0, %s20
    %s23 = sphi 0, %s21
    %s35 = sphi 0, %s37
    %s38 = sphi 0, %s35
    %s39 = sphi 0, %s38
    %s55 = sphi 0, %s39
    %s61 = sphi 0, %s63
    %s64 = sphi 0, %s61
    %s65 = sphi 0, %s64
    %s81 = sphi 0, %s65
    %s85 = sphi 0, %s85
    %s87 = sphi 0, %s85
    %s88 = sphi 0, %s87
    %s102 = sphi 0, %s88
    %s106 = sphi 0, %s106
    %s108 = sphi 0, %s106
    %s109 = sphi 0, %s108
    %s123 = sphi 0, %s109
    %s127 = sphi 0, %s127
    %s129 = sphi 0, %s127
    %s130 = sphi 0, %s129
    %s144 = sphi 0, %s130
    %s152 = sphi 0, %s154
    %s155 = sphi 0, %s152
    %s156 = sphi 0, %s155
    %s172 = sphi 0, %s156
  $region4: #{unet_generator_pallas.19} parent=0 // loop_header_branch
    %14 = sbr.rel (%p12) target = $region8
  $region5: #{unet_generator_pallas.19} parent=0 // loop_body
    %s16 = ssub.s32 %s11, 1
    %s17 = ssub.s32 %s11, 2
    %s24 = sadd.s32 1, %s19
    %p25 = scmp.ge.s32.totalorder %s24, 1
    %s26 = scalar_select %p25, 0, %s24
    %s27 = sadd.s32 1, %s18
    %s28 = scalar_select %p25, %s27, %s18
    %p29 = scmp.ge.s32.totalorder %s28, 4
    %s30 = scalar_select %p29, 0, %s28
    %s31 = ssub.s32 %s18, %s30
    %s32 = ssub.s32 %s19, %s26
    %s33 = sor.u32 %s31, %s32
    %p34 = scmp.eq.s32.totalorder %s33, 0
    %s36 = sadd.s32 %s35, 1
    %s37 = scalar_select %p34, %s35, %s36
    %p40 = pneg %p34
    %p41 = scmp.eq.s32.totalorder %s11, 3
    %p42 = por %p40, %p41
    %p43 = scmp.ne.s32.totalorder %s35, %s38
    %p44 = scmp.eq.s32.totalorder %s11, 0
    %p45 = por %p43, %p44
    %p46 = scmp.ne.s32.totalorder %s35, %s38
    %p47 = scmp.eq.s32.totalorder %s16, 3
    %p48 = por %p46, %p47
    %p49 = scmp.ne.s32.totalorder %s38, %s39
    %p50 = scmp.eq.s32.totalorder %s16, 0
    %p51 = por %p49, %p50
    %p52 = scmp.ne.s32.totalorder %s38, %s39
    %p53 = scmp.eq.s32.totalorder %s17, 3
    %p54 = por %p52, %p53
    %p56 = scmp.ne.s32.totalorder %s39, %s55
    %p57 = scmp.eq.s32.totalorder %s17, 0
    %p58 = por %p56, %p57
    %s59 = ssub.s32 %s18, %s30
    %p60 = scmp.eq.s32.totalorder %s59, 0
    %s62 = sadd.s32 %s61, 1
    %s63 = scalar_select %p60, %s61, %s62
    %p66 = pneg %p60
    %p67 = scmp.eq.s32.totalorder %s11, 3
    %p68 = por %p66, %p67
    %p69 = scmp.ne.s32.totalorder %s61, %s64
    %p70 = scmp.eq.s32.totalorder %s11, 0
    %p71 = por %p69, %p70
    %p72 = scmp.ne.s32.totalorder %s61, %s64
    %p73 = scmp.eq.s32.totalorder %s16, 3
    %p74 = por %p72, %p73
    %p75 = scmp.ne.s32.totalorder %s64, %s65
    %p76 = scmp.eq.s32.totalorder %s16, 0
    %p77 = por %p75, %p76
    %p78 = scmp.ne.s32.totalorder %s64, %s65
    %p79 = scmp.eq.s32.totalorder %s17, 3
    %p80 = por %p78, %p79
    %p82 = scmp.ne.s32.totalorder %s65, %s81
    %p83 = scmp.eq.s32.totalorder %s17, 0
    %p84 = por %p82, %p83
    %s86 = sadd.s32 %s85, 1
    %p89 = scmp.eq.s32.totalorder %s11, 3
    %p90 = scmp.ne.s32.totalorder %s85, %s87
    %p91 = scmp.eq.s32.totalorder %s11, 0
    %p92 = por %p90, %p91
    %p93 = scmp.ne.s32.totalorder %s85, %s87
    %p94 = scmp.eq.s32.totalorder %s16, 3
    %p95 = por %p93, %p94
    %p96 = scmp.ne.s32.totalorder %s87, %s88
    %p97 = scmp.eq.s32.totalorder %s16, 0
    %p98 = por %p96, %p97
    %p99 = scmp.ne.s32.totalorder %s87, %s88
    %p100 = scmp.eq.s32.totalorder %s17, 3
    %p101 = por %p99, %p100
    %p103 = scmp.ne.s32.totalorder %s88, %s102
    %p104 = scmp.eq.s32.totalorder %s17, 0
    %p105 = por %p103, %p104
    %s107 = sadd.s32 %s106, 1
    %p110 = scmp.eq.s32.totalorder %s11, 3
    %p111 = scmp.ne.s32.totalorder %s106, %s108
    %p112 = scmp.eq.s32.totalorder %s11, 0
    %p113 = por %p111, %p112
    %p114 = scmp.ne.s32.totalorder %s106, %s108
    %p115 = scmp.eq.s32.totalorder %s16, 3
    %p116 = por %p114, %p115
    %p117 = scmp.ne.s32.totalorder %s108, %s109
    %p118 = scmp.eq.s32.totalorder %s16, 0
    %p119 = por %p117, %p118
    %p120 = scmp.ne.s32.totalorder %s108, %s109
    %p121 = scmp.eq.s32.totalorder %s17, 3
    %p122 = por %p120, %p121
    %p124 = scmp.ne.s32.totalorder %s109, %s123
    %p125 = scmp.eq.s32.totalorder %s17, 0
    %p126 = por %p124, %p125
    %s128 = sadd.s32 %s127, 1
    %p131 = scmp.eq.s32.totalorder %s11, 3
    %p132 = scmp.ne.s32.totalorder %s127, %s129
    %p133 = scmp.eq.s32.totalorder %s11, 0
    %p134 = por %p132, %p133
    %p135 = scmp.ne.s32.totalorder %s127, %s129
    %p136 = scmp.eq.s32.totalorder %s16, 3
    %p137 = por %p135, %p136
    %p138 = scmp.ne.s32.totalorder %s129, %s130
    %p139 = scmp.eq.s32.totalorder %s16, 0
    %p140 = por %p138, %p139
    %p141 = scmp.ne.s32.totalorder %s129, %s130
    %p142 = scmp.eq.s32.totalorder %s17, 3
    %p143 = por %p141, %p142
    %p145 = scmp.ne.s32.totalorder %s130, %s144
    %p146 = scmp.eq.s32.totalorder %s17, 0
    %p147 = por %p145, %p146
    %s148 = ssub.s32 %s18, %s30
    %s149 = ssub.s32 %s19, %s26
    %s150 = sor.u32 %s148, %s149
    %p151 = scmp.eq.s32.totalorder %s150, 0
    %s153 = sadd.s32 %s152, 1
    %s154 = scalar_select %p151, %s152, %s153
    %p157 = pneg %p151
    %p158 = scmp.eq.s32.totalorder %s11, 3
    %p159 = por %p157, %p158
    %p160 = scmp.ne.s32.totalorder %s152, %s155
    %p161 = scmp.eq.s32.totalorder %s11, 0
    %p162 = por %p160, %p161
    %p163 = scmp.ne.s32.totalorder %s152, %s155
    %p164 = scmp.eq.s32.totalorder %s16, 3
    %p165 = por %p163, %p164
    %p166 = scmp.ne.s32.totalorder %s155, %s156
    %p167 = scmp.eq.s32.totalorder %s16, 0
    %p168 = por %p166, %p167
    %p169 = scmp.ne.s32.totalorder %s155, %s156
    %p170 = scmp.eq.s32.totalorder %s17, 3
    %p171 = por %p169, %p170
    %p173 = scmp.ne.s32.totalorder %s156, %s172
    %p174 = scmp.eq.s32.totalorder %s17, 0
    %p175 = por %p173, %p174
    %p176 = scmp.le.s32.totalorder 1, %s11
    %p177 = scmp.lt.s32.totalorder %s11, 5
    %p178 = pnand %p176, %p177
    %p179 = pneg %p178
    // Predicated region
    $region9: #{unet_generator_pallas.19} parent=5 // pred_check
      _
    $region10: #{unet_generator_pallas.19} parent=5 // pred_check_branch
      %181 = sbr.rel (%p178) target = $region12
    $region11: #{unet_generator_pallas.19} parent=5 // pred_region
      %s182 = ssub.s32 %s11, 1
      // Predicated region
      $region13: #{unet_generator_pallas.19} parent=11 // pred_check
        %p183 = pneg %p98
      $region14: #{unet_generator_pallas.19} parent=11 // pred_check_branch
        %185 = sbr.rel (%p183) target = $region16
      $region15: #{unet_generator_pallas.19} parent=11 // pred_region
        _
      $region16: #{unet_generator_pallas.19} parent=11 // pred_fallthru
        _
      // Predicated region
      $region17: #{unet_generator_pallas.19} parent=11 // pred_check
        %p186 = pneg %p119
      $region18: #{unet_generator_pallas.19} parent=11 // pred_check_branch
        %188 = sbr.rel (%p186) target = $region20
      $region19: #{unet_generator_pallas.19} parent=11 // pred_region
        _
      $region20: #{unet_generator_pallas.19} parent=11 // pred_fallthru
        _
      // Predicated region
      $region21: #{unet_generator_pallas.19} parent=11 // pred_check
        %p189 = pneg %p140
      $region22: #{unet_generator_pallas.19} parent=11 // pred_check_branch
        %191 = sbr.rel (%p189) target = $region24
      $region23: #{unet_generator_pallas.19} parent=11 // pred_region
        _
      $region24: #{unet_generator_pallas.19} parent=11 // pred_fallthru
        _
    $region12: #{unet_generator_pallas.19} parent=5 // pred_fallthru
      _
    %p192 = scmp.lt.s32.totalorder %s11, 4
    // Predicated region
    $region25: #{unet_generator_pallas.19} parent=5 // pred_check
      %p193 = pneg %p192
    $region26: #{unet_generator_pallas.19} parent=5 // pred_check_branch
      %195 = sbr.rel (%p193) target = $region28
    $region27: #{unet_generator_pallas.19} parent=5 // pred_region
      // Predicated region
      $region29: #{unet_generator_pallas.19} parent=27 // pred_check
        %p196 = pneg %p45
      $region30: #{unet_generator_pallas.19} parent=27 // pred_check_branch
        %198 = sbr.rel (%p196) target = $region32
      $region31: #{unet_generator_pallas.19} parent=27 // pred_region
        %s199 = smul.u32 64, %s19
        %p200 = scmp.lt.s32.totalorder %s18, 3
        %s201 = scalar_select %p200, %s18, 3
        %p202 = scmp.lt.s32.totalorder %s199, 63
        %s203 = scalar_select %p202, %s199, 63
        %s204 = smul.addr %s201, 64
        %s205 = sadd.s32 %s203, %s204
        %s206 = smul.addr %s205, 8
        %s207 = scalar_lea.vmem %s0, %s206
        %s208 = smul.u32 64, %s19
      $region32: #{unet_generator_pallas.19} parent=27 // pred_fallthru
        _
      // Predicated region
      $region33: #{unet_generator_pallas.19} parent=27 // pred_check
        %p209 = pneg %p71
      $region34: #{unet_generator_pallas.19} parent=27 // pred_check_branch
        %211 = sbr.rel (%p209) target = $region36
      $region35: #{unet_generator_pallas.19} parent=27 // pred_region
        %p212 = scmp.lt.s32.totalorder %s18, 3
        %s213 = scalar_select %p212, %s18, 3
        %s214 = smul.addr %s213, 16
        %s215 = smul.addr %s214, 8
        %s216 = scalar_lea.vmem %s1, %s215
      $region36: #{unet_generator_pallas.19} parent=27 // pred_fallthru
        _
    $region28: #{unet_generator_pallas.19} parent=5 // pred_fallthru
      _
    %p217 = scmp.le.s32.totalorder 1, %s11
    %p218 = scmp.lt.s32.totalorder %s11, 5
    %p219 = pnand %p217, %p218
    %p220 = pneg %p219
    // Predicated region
    $region37: #{unet_generator_pallas.19} parent=5 // pred_check
      _
    $region38: #{unet_generator_pallas.19} parent=5 // pred_check_branch
      %222 = sbr.rel (%p219) target = $region40
    $region39: #{unet_generator_pallas.19} parent=5 // pred_region
      %s223 = ssub.s32 %s11, 1
      %s224 = smul.u32 64, %s21
      %p225 = scmp.lt.s32.totalorder %s20, 3
      %s226 = scalar_select %p225, %s20, 3
      %p227 = scmp.lt.s32.totalorder %s224, 63
      %s228 = scalar_select %p227, %s224, 63
      %s229 = smul.addr %s226, 64
      %s230 = sadd.s32 %s228, %s229
      %s231 = smul.addr %s230, 8
      %s232 = scalar_lea.vmem %s0, %s231
      %p233 = pneg %p51
      %p234 = pneg %p48
      %p235 = scmp.lt.s32.totalorder %s20, 3
      %s236 = scalar_select %p235, %s20, 3
      %s237 = smul.addr %s236, 16
      %s238 = smul.addr %s237, 8
      %s239 = scalar_lea.vmem %s1, %s238
      %p240 = pneg %p77
      %p241 = pneg %p74
      %p242 = pneg %p98
      %p243 = pneg %p95
      %p244 = pneg %p119
      %p245 = pneg %p116
      %p246 = pneg %p140
      %p247 = pneg %p137
      %p248 = pneg %p168
      %p249 = pneg %p165
      %s250 = smul.u32 64, %s21
      %p251 = scmp.lt.s32.totalorder %s20, 3
      %s252 = scalar_select %p251, %s20, 3
      %p253 = scmp.lt.s32.totalorder %s250, 63
      %s254 = scalar_select %p253, %s250, 63
      %s255 = smul.addr %s252, 64
      %s256 = sadd.s32 %s254, %s255
      %s257 = smul.addr %s256, 8
      %s258 = scalar_lea.vmem %s5, %s257
      %s259 = smul.u32 64, %s21
      %p260 = scmp.lt.s32.totalorder %s20, 3
      %s261 = scalar_select %p260, %s20, 3
      %p262 = scmp.lt.s32.totalorder %s259, 63
      %s263 = scalar_select %p262, %s259, 63
      %s264 = smul.addr %s261, 64
      %s265 = sadd.s32 %s263, %s264
      %s266 = smul.addr %s265, 8
      %s267 = scalar_lea.vmem %s0, %s266
      %s268 = smul.u32 64, %s21
      %p269 = scmp.lt.s32.totalorder %s20, 3
      %s270 = scalar_select %p269, %s20, 3
      %s271 = smul.addr %s270, 16
      %s272 = smul.addr %s271, 8
      %s273 = scalar_lea.vmem %s1, %s272
      %s274 = smul.u32 64, %s21
      %p275 = scmp.lt.s32.totalorder %s20, 3
      %s276 = scalar_select %p275, %s20, 3
      %p277 = scmp.lt.s32.totalorder %s274, 63
      %s278 = scalar_select %p277, %s274, 63
      %s279 = smul.addr %s276, 64
      %s280 = sadd.s32 %s278, %s279
      %s281 = smul.addr %s280, 8
      %s282 = scalar_lea.vmem %s5, %s281
      %s283 = smul.u32 64, %s21
      %v284 = vld [vmem:[%s267] sm:$0xff]
      %v285 = vld [vmem:[%s267 + $0x8] sm:$0xff]
      %v286 = vld [vmem:[%s267 + $0x10] sm:$0xff]
      %v287 = vld [vmem:[%s267 + $0x18] sm:$0xff]
      %v288 = vld [vmem:[%s267 + $0x20] sm:$0xff]
      %v289 = vld [vmem:[%s267 + $0x28] sm:$0xff]
      %v290 = vld [vmem:[%s267 + $0x30] sm:$0xff]
      %v291 = vld [vmem:[%s267 + $0x38] sm:$0xff]
      %v292 = vld [vmem:[%s267 + $0x40] sm:$0xff]
      %v293 = vld [vmem:[%s267 + $0x48] sm:$0xff]
      %v294 = vld [vmem:[%s267 + $0x50] sm:$0xff]
      %v295 = vld [vmem:[%s267 + $0x58] sm:$0xff]
      %v296 = vld [vmem:[%s267 + $0x60] sm:$0xff]
      %v297 = vld [vmem:[%s267 + $0x68] sm:$0xff]
      %v298 = vld [vmem:[%s267 + $0x70] sm:$0xff]
      %v299 = vld [vmem:[%s267 + $0x78] sm:$0xff]
      %v300 = vld [vmem:[%s267 + $0x80] sm:$0xff]
      %v301 = vld [vmem:[%s267 + $0x88] sm:$0xff]
      %v302 = vld [vmem:[%s267 + $0x90] sm:$0xff]
      %v303 = vld [vmem:[%s267 + $0x98] sm:$0xff]
      %v304 = vld [vmem:[%s267 + $0xa0] sm:$0xff]
      %v305 = vld [vmem:[%s267 + $0xa8] sm:$0xff]
      %v306 = vld [vmem:[%s267 + $0xb0] sm:$0xff]
      %v307 = vld [vmem:[%s267 + $0xb8] sm:$0xff]
      %v308 = vld [vmem:[%s267 + $0xc0] sm:$0xff]
      %v309 = vld [vmem:[%s267 + $0xc8] sm:$0xff]
      %v310 = vld [vmem:[%s267 + $0xd0] sm:$0xff]
      %v311 = vld [vmem:[%s267 + $0xd8] sm:$0xff]
      %v312 = vld [vmem:[%s267 + $0xe0] sm:$0xff]
      %v313 = vld [vmem:[%s267 + $0xe8] sm:$0xff]
      %v314 = vld [vmem:[%s267 + $0xf0] sm:$0xff]
      %v315 = vld [vmem:[%s267 + $0xf8] sm:$0xff]
      %v316 = vld [vmem:[%s267 + $0x100] sm:$0xff]
      %v317 = vld [vmem:[%s267 + $0x108] sm:$0xff]
      %v318 = vld [vmem:[%s267 + $0x110] sm:$0xff]
      %v319 = vld [vmem:[%s267 + $0x118] sm:$0xff]
      %v320 = vld [vmem:[%s267 + $0x120] sm:$0xff]
      %v321 = vld [vmem:[%s267 + $0x128] sm:$0xff]
      %v322 = vld [vmem:[%s267 + $0x130] sm:$0xff]
      %v323 = vld [vmem:[%s267 + $0x138] sm:$0xff]
      %v324 = vld [vmem:[%s267 + $0x140] sm:$0xff]
      %v325 = vld [vmem:[%s267 + $0x148] sm:$0xff]
      %v326 = vld [vmem:[%s267 + $0x150] sm:$0xff]
      %v327 = vld [vmem:[%s267 + $0x158] sm:$0xff]
      %v328 = vld [vmem:[%s267 + $0x160] sm:$0xff]
      %v329 = vld [vmem:[%s267 + $0x168] sm:$0xff]
      %v330 = vld [vmem:[%s267 + $0x170] sm:$0xff]
      %v331 = vld [vmem:[%s267 + $0x178] sm:$0xff]
      %v332 = vld [vmem:[%s267 + $0x180] sm:$0xff]
      %v333 = vld [vmem:[%s267 + $0x188] sm:$0xff]
      %v334 = vld [vmem:[%s267 + $0x190] sm:$0xff]
      %v335 = vld [vmem:[%s267 + $0x198] sm:$0xff]
      %v336 = vld [vmem:[%s267 + $0x1a0] sm:$0xff]
      %v337 = vld [vmem:[%s267 + $0x1a8] sm:$0xff]
      %v338 = vld [vmem:[%s267 + $0x1b0] sm:$0xff]
      %v339 = vld [vmem:[%s267 + $0x1b8] sm:$0xff]
      %v340 = vld [vmem:[%s267 + $0x1c0] sm:$0xff]
      %v341 = vld [vmem:[%s267 + $0x1c8] sm:$0xff]
      %v342 = vld [vmem:[%s267 + $0x1d0] sm:$0xff]
      %v343 = vld [vmem:[%s267 + $0x1d8] sm:$0xff]
      %v344 = vld [vmem:[%s267 + $0x1e0] sm:$0xff]
      %v345 = vld [vmem:[%s267 + $0x1e8] sm:$0xff]
      %v346 = vld [vmem:[%s267 + $0x1f0] sm:$0xff]
      %v347 = vld [vmem:[%s267 + $0x1f8] sm:$0xff]
      %v348 = vld [vmem:[%s2] sm:$0x1]
      %v350 = vperm.slane %v348, 0
      %v352 = vmul.f32 %v284, %v350
      %v353 = vmul.f32 %v285, %v350
      %v354 = vmul.f32 %v286, %v350
      %v355 = vmul.f32 %v287, %v350
      %v356 = vmul.f32 %v288, %v350
      %v357 = vmul.f32 %v289, %v350
      %v358 = vmul.f32 %v290, %v350
      %v359 = vmul.f32 %v291, %v350
      %v360 = vmul.f32 %v292, %v350
      %v361 = vmul.f32 %v293, %v350
      %v362 = vmul.f32 %v294, %v350
      %v363 = vmul.f32 %v295, %v350
      %v364 = vmul.f32 %v296, %v350
      %v365 = vmul.f32 %v297, %v350
      %v366 = vmul.f32 %v298, %v350
      %v367 = vmul.f32 %v299, %v350
      %v368 = vmul.f32 %v300, %v350
      %v369 = vmul.f32 %v301, %v350
      %v370 = vmul.f32 %v302, %v350
      %v371 = vmul.f32 %v303, %v350
      %v372 = vmul.f32 %v304, %v350
      %v373 = vmul.f32 %v305, %v350
      %v374 = vmul.f32 %v306, %v350
      %v375 = vmul.f32 %v307, %v350
      %v376 = vmul.f32 %v308, %v350
      %v377 = vmul.f32 %v309, %v350
      %v378 = vmul.f32 %v310, %v350
      %v379 = vmul.f32 %v311, %v350
      %v380 = vmul.f32 %v312, %v350
      %v381 = vmul.f32 %v313, %v350
      %v382 = vmul.f32 %v314, %v350
      %v383 = vmul.f32 %v315, %v350
      %v384 = vmul.f32 %v316, %v350
      %v385 = vmul.f32 %v317, %v350
      %v386 = vmul.f32 %v318, %v350
      %v387 = vmul.f32 %v319, %v350
      %v388 = vmul.f32 %v320, %v350
      %v389 = vmul.f32 %v321, %v350
      %v390 = vmul.f32 %v322, %v350
      %v391 = vmul.f32 %v323, %v350
      %v392 = vmul.f32 %v324, %v350
      %v393 = vmul.f32 %v325, %v350
      %v394 = vmul.f32 %v326, %v350
      %v395 = vmul.f32 %v327, %v350
      %v396 = vmul.f32 %v328, %v350
      %v397 = vmul.f32 %v329, %v350
      %v398 = vmul.f32 %v330, %v350
      %v399 = vmul.f32 %v331, %v350
      %v400 = vmul.f32 %v332, %v350
      %v401 = vmul.f32 %v333, %v350
      %v402 = vmul.f32 %v334, %v350
      %v403 = vmul.f32 %v335, %v350
      %v404 = vmul.f32 %v336, %v350
      %v405 = vmul.f32 %v337, %v350
      %v406 = vmul.f32 %v338, %v350
      %v407 = vmul.f32 %v339, %v350
      %v408 = vmul.f32 %v340, %v350
      %v409 = vmul.f32 %v341, %v350
      %v410 = vmul.f32 %v342, %v350
      %v411 = vmul.f32 %v343, %v350
      %v412 = vmul.f32 %v344, %v350
      %v413 = vmul.f32 %v345, %v350
      %v414 = vmul.f32 %v346, %v350
      %v415 = vmul.f32 %v347, %v350
      %v416 = vld [vmem:[%s3] sm:$0x1]
      %v418 = vperm.slane %v416, 0
      %v420 = vadd.f32 %v352, %v418
      %v421 = vadd.f32 %v353, %v418
      %v422 = vadd.f32 %v354, %v418
      %v423 = vadd.f32 %v355, %v418
      %v424 = vadd.f32 %v356, %v418
      %v425 = vadd.f32 %v357, %v418
      %v426 = vadd.f32 %v358, %v418
      %v427 = vadd.f32 %v359, %v418
      %v428 = vadd.f32 %v360, %v418
      %v429 = vadd.f32 %v361, %v418
      %v430 = vadd.f32 %v362, %v418
      %v431 = vadd.f32 %v363, %v418
      %v432 = vadd.f32 %v364, %v418
      %v433 = vadd.f32 %v365, %v418
      %v434 = vadd.f32 %v366, %v418
      %v435 = vadd.f32 %v367, %v418
      %v436 = vadd.f32 %v368, %v418
      %v437 = vadd.f32 %v369, %v418
      %v438 = vadd.f32 %v370, %v418
      %v439 = vadd.f32 %v371, %v418
      %v440 = vadd.f32 %v372, %v418
      %v441 = vadd.f32 %v373, %v418
      %v442 = vadd.f32 %v374, %v418
      %v443 = vadd.f32 %v375, %v418
      %v444 = vadd.f32 %v376, %v418
      %v445 = vadd.f32 %v377, %v418
      %v446 = vadd.f32 %v378, %v418
      %v447 = vadd.f32 %v379, %v418
      %v448 = vadd.f32 %v380, %v418
      %v449 = vadd.f32 %v381, %v418
      %v450 = vadd.f32 %v382, %v418
      %v451 = vadd.f32 %v383, %v418
      %v452 = vadd.f32 %v384, %v418
      %v453 = vadd.f32 %v385, %v418
      %v454 = vadd.f32 %v386, %v418
      %v455 = vadd.f32 %v387, %v418
      %v456 = vadd.f32 %v388, %v418
      %v457 = vadd.f32 %v389, %v418
      %v458 = vadd.f32 %v390, %v418
      %v459 = vadd.f32 %v391, %v418
      %v460 = vadd.f32 %v392, %v418
      %v461 = vadd.f32 %v393, %v418
      %v462 = vadd.f32 %v394, %v418
      %v463 = vadd.f32 %v395, %v418
      %v464 = vadd.f32 %v396, %v418
      %v465 = vadd.f32 %v397, %v418
      %v466 = vadd.f32 %v398, %v418
      %v467 = vadd.f32 %v399, %v418
      %v468 = vadd.f32 %v400, %v418
      %v469 = vadd.f32 %v401, %v418
      %v470 = vadd.f32 %v402, %v418
      %v471 = vadd.f32 %v403, %v418
      %v472 = vadd.f32 %v404, %v418
      %v473 = vadd.f32 %v405, %v418
      %v474 = vadd.f32 %v406, %v418
      %v475 = vadd.f32 %v407, %v418
      %v476 = vadd.f32 %v408, %v418
      %v477 = vadd.f32 %v409, %v418
      %v478 = vadd.f32 %v410, %v418
      %v479 = vadd.f32 %v411, %v418
      %v480 = vadd.f32 %v412, %v418
      %v481 = vadd.f32 %v413, %v418
      %v482 = vadd.f32 %v414, %v418
      %v483 = vadd.f32 %v415, %v418
      %v484 = vmax.f32 %v420, 0.0
      %v485 = vmax.f32 %v421, 0.0
      %v486 = vmax.f32 %v422, 0.0
      %v487 = vmax.f32 %v423, 0.0
      %v488 = vmax.f32 %v424, 0.0
      %v489 = vmax.f32 %v425, 0.0
      %v490 = vmax.f32 %v426, 0.0
      %v491 = vmax.f32 %v427, 0.0
      %v492 = vmax.f32 %v428, 0.0
      %v493 = vmax.f32 %v429, 0.0
      %v494 = vmax.f32 %v430, 0.0
      %v495 = vmax.f32 %v431, 0.0
      %v496 = vmax.f32 %v432, 0.0
      %v497 = vmax.f32 %v433, 0.0
      %v498 = vmax.f32 %v434, 0.0
      %v499 = vmax.f32 %v435, 0.0
      %v500 = vmax.f32 %v436, 0.0
      %v501 = vmax.f32 %v437, 0.0
      %v502 = vmax.f32 %v438, 0.0
      %v503 = vmax.f32 %v439, 0.0
      %v504 = vmax.f32 %v440, 0.0
      %v505 = vmax.f32 %v441, 0.0
      %v506 = vmax.f32 %v442, 0.0
      %v507 = vmax.f32 %v443, 0.0
      %v508 = vmax.f32 %v444, 0.0
      %v509 = vmax.f32 %v445, 0.0
      %v510 = vmax.f32 %v446, 0.0
      %v511 = vmax.f32 %v447, 0.0
      %v512 = vmax.f32 %v448, 0.0
      %v513 = vmax.f32 %v449, 0.0
      %v514 = vmax.f32 %v450, 0.0
      %v515 = vmax.f32 %v451, 0.0
      %v516 = vmax.f32 %v452, 0.0
      %v517 = vmax.f32 %v453, 0.0
      %v518 = vmax.f32 %v454, 0.0
      %v519 = vmax.f32 %v455, 0.0
      %v520 = vmax.f32 %v456, 0.0
      %v521 = vmax.f32 %v457, 0.0
      %v522 = vmax.f32 %v458, 0.0
      %v523 = vmax.f32 %v459, 0.0
      %v524 = vmax.f32 %v460, 0.0
      %v525 = vmax.f32 %v461, 0.0
      %v526 = vmax.f32 %v462, 0.0
      %v527 = vmax.f32 %v463, 0.0
      %v528 = vmax.f32 %v464, 0.0
      %v529 = vmax.f32 %v465, 0.0
      %v530 = vmax.f32 %v466, 0.0
      %v531 = vmax.f32 %v467, 0.0
      %v532 = vmax.f32 %v468, 0.0
      %v533 = vmax.f32 %v469, 0.0
      %v534 = vmax.f32 %v470, 0.0
      %v535 = vmax.f32 %v471, 0.0
      %v536 = vmax.f32 %v472, 0.0
      %v537 = vmax.f32 %v473, 0.0
      %v538 = vmax.f32 %v474, 0.0
      %v539 = vmax.f32 %v475, 0.0
      %v540 = vmax.f32 %v476, 0.0
      %v541 = vmax.f32 %v477, 0.0
      %v542 = vmax.f32 %v478, 0.0
      %v543 = vmax.f32 %v479, 0.0
      %v544 = vmax.f32 %v480, 0.0
      %v545 = vmax.f32 %v481, 0.0
      %v546 = vmax.f32 %v482, 0.0
      %v547 = vmax.f32 %v483, 0.0
      %v548 = vld [vmem:[%s273] sm:$0xff]
      %v549 = vld [vmem:[%s273 + $0x8] sm:$0xff]
      %v550 = vld [vmem:[%s273 + $0x10] sm:$0xff]
      %v551 = vld [vmem:[%s273 + $0x18] sm:$0xff]
      %v552 = vld [vmem:[%s273 + $0x20] sm:$0xff]
      %v553 = vld [vmem:[%s273 + $0x28] sm:$0xff]
      %v554 = vld [vmem:[%s273 + $0x30] sm:$0xff]
      %v555 = vld [vmem:[%s273 + $0x38] sm:$0xff]
      %v556 = vld [vmem:[%s273 + $0x40] sm:$0xff]
      %v557 = vld [vmem:[%s273 + $0x48] sm:$0xff]
      %v558 = vld [vmem:[%s273 + $0x50] sm:$0xff]
      %v559 = vld [vmem:[%s273 + $0x58] sm:$0xff]
      %v560 = vld [vmem:[%s273 + $0x60] sm:$0xff]
      %v561 = vld [vmem:[%s273 + $0x68] sm:$0xff]
      %v562 = vld [vmem:[%s273 + $0x70] sm:$0xff]
      %v563 = vld [vmem:[%s273 + $0x78] sm:$0xff]
      %v564 = vld [vmem:[%s4] sm:$0x1]
      %v566 = vperm.slane %v564, 0
      %568 = vmatpush.msra.mxu0 %v563
      %569 = vmatpush.msra.mxu0 %v562
      %570 = vmatpush.msra.mxu0 %v561
      %571 = vmatpush.msra.mxu0 %v560
      %572 = vmatpush.msra.mxu0 %v559
      %573 = vmatpush.msra.mxu0 %v558
      %574 = vmatpush.msra.mxu0 %v557
      %575 = vmatpush.msra.mxu0 %v556
      %576 = vmatpush.msra.mxu0 %v555
      %577 = vmatpush.msra.mxu0 %v554
      %578 = vmatpush.msra.mxu0 %v553
      %579 = vmatpush.msra.mxu0 %v552
      %580 = vmatpush.msra.mxu0 %v551
      %581 = vmatpush.msra.mxu0 %v550
      %582 = vmatpush.msra.mxu0 %v549
      %583 = vmatpush.msra.mxu0 %v548
      %584 = vmatmul.f32.gmra.mxu0 %v484
      %v585 = vpop.f32.mrf.mxu0
      %v586 = vadd.f32 %v566, %v585
      %587 = vmatmul.f32.gmra.mxu0 %v485
      %v588 = vpop.f32.mrf.mxu0
      %v589 = vadd.f32 %v566, %v588
      %590 = vmatmul.f32.gmra.mxu0 %v486
      %v591 = vpop.f32.mrf.mxu0
      %v592 = vadd.f32 %v566, %v591
      %593 = vmatmul.f32.gmra.mxu0 %v487
      %v594 = vpop.f32.mrf.mxu0
      %v595 = vadd.f32 %v566, %v594
      %596 = vmatmul.f32.gmra.mxu0 %v488
      %v597 = vpop.f32.mrf.mxu0
      %v598 = vadd.f32 %v566, %v597
      %599 = vmatmul.f32.gmra.mxu0 %v489
      %v600 = vpop.f32.mrf.mxu0
      %v601 = vadd.f32 %v566, %v600
      %602 = vmatmul.f32.gmra.mxu0 %v490
      %v603 = vpop.f32.mrf.mxu0
      %v604 = vadd.f32 %v566, %v603
      %605 = vmatmul.f32.gmra.mxu0 %v491
      %v606 = vpop.f32.mrf.mxu0
      %v607 = vadd.f32 %v566, %v606
      %608 = vmatmul.f32.gmra.mxu0 %v492
      %v609 = vpop.f32.mrf.mxu0
      %v610 = vadd.f32 %v566, %v609
      %611 = vmatmul.f32.gmra.mxu0 %v493
      %v612 = vpop.f32.mrf.mxu0
      %v613 = vadd.f32 %v566, %v612
      %614 = vmatmul.f32.gmra.mxu0 %v494
      %v615 = vpop.f32.mrf.mxu0
      %v616 = vadd.f32 %v566, %v615
      %617 = vmatmul.f32.gmra.mxu0 %v495
      %v618 = vpop.f32.mrf.mxu0
      %v619 = vadd.f32 %v566, %v618
      %620 = vmatmul.f32.gmra.mxu0 %v496
      %v621 = vpop.f32.mrf.mxu0
      %v622 = vadd.f32 %v566, %v621
      %623 = vmatmul.f32.gmra.mxu0 %v497
      %v624 = vpop.f32.mrf.mxu0
      %v625 = vadd.f32 %v566, %v624
      %626 = vmatmul.f32.gmra.mxu0 %v498
      %v627 = vpop.f32.mrf.mxu0
      %v628 = vadd.f32 %v566, %v627
      %629 = vmatmul.f32.gmra.mxu0 %v499
      %v630 = vpop.f32.mrf.mxu0
      %v631 = vadd.f32 %v566, %v630
      %632 = vmatmul.f32.gmra.mxu0 %v500
      %v633 = vpop.f32.mrf.mxu0
      %v634 = vadd.f32 %v566, %v633
      %635 = vmatmul.f32.gmra.mxu0 %v501
      %v636 = vpop.f32.mrf.mxu0
      %v637 = vadd.f32 %v566, %v636
      %638 = vmatmul.f32.gmra.mxu0 %v502
      %v639 = vpop.f32.mrf.mxu0
      %v640 = vadd.f32 %v566, %v639
      %641 = vmatmul.f32.gmra.mxu0 %v503
      %v642 = vpop.f32.mrf.mxu0
      %v643 = vadd.f32 %v566, %v642
      %644 = vmatmul.f32.gmra.mxu0 %v504
      %v645 = vpop.f32.mrf.mxu0
      %v646 = vadd.f32 %v566, %v645
      %647 = vmatmul.f32.gmra.mxu0 %v505
      %v648 = vpop.f32.mrf.mxu0
      %v649 = vadd.f32 %v566, %v648
      %650 = vmatmul.f32.gmra.mxu0 %v506
      %v651 = vpop.f32.mrf.mxu0
      %v652 = vadd.f32 %v566, %v651
      %653 = vmatmul.f32.gmra.mxu0 %v507
      %v654 = vpop.f32.mrf.mxu0
      %v655 = vadd.f32 %v566, %v654
      %656 = vmatmul.f32.gmra.mxu0 %v508
      %v657 = vpop.f32.mrf.mxu0
      %v658 = vadd.f32 %v566, %v657
      %659 = vmatmul.f32.gmra.mxu0 %v509
      %v660 = vpop.f32.mrf.mxu0
      %v661 = vadd.f32 %v566, %v660
      %662 = vmatmul.f32.gmra.mxu0 %v510
      %v663 = vpop.f32.mrf.mxu0
      %v664 = vadd.f32 %v566, %v663
      %665 = vmatmul.f32.gmra.mxu0 %v511
      %v666 = vpop.f32.mrf.mxu0
      %v667 = vadd.f32 %v566, %v666
      %668 = vmatmul.f32.gmra.mxu0 %v512
      %v669 = vpop.f32.mrf.mxu0
      %v670 = vadd.f32 %v566, %v669
      %671 = vmatmul.f32.gmra.mxu0 %v513
      %v672 = vpop.f32.mrf.mxu0
      %v673 = vadd.f32 %v566, %v672
      %674 = vmatmul.f32.gmra.mxu0 %v514
      %v675 = vpop.f32.mrf.mxu0
      %v676 = vadd.f32 %v566, %v675
      %677 = vmatmul.f32.gmra.mxu0 %v515
      %v678 = vpop.f32.mrf.mxu0
      %v679 = vadd.f32 %v566, %v678
      %680 = vmatmul.f32.gmra.mxu0 %v516
      %v681 = vpop.f32.mrf.mxu0
      %v682 = vadd.f32 %v566, %v681
      %683 = vmatmul.f32.gmra.mxu0 %v517
      %v684 = vpop.f32.mrf.mxu0
      %v685 = vadd.f32 %v566, %v684
      %686 = vmatmul.f32.gmra.mxu0 %v518
      %v687 = vpop.f32.mrf.mxu0
      %v688 = vadd.f32 %v566, %v687
      %689 = vmatmul.f32.gmra.mxu0 %v519
      %v690 = vpop.f32.mrf.mxu0
      %v691 = vadd.f32 %v566, %v690
      %692 = vmatmul.f32.gmra.mxu0 %v520
      %v693 = vpop.f32.mrf.mxu0
      %v694 = vadd.f32 %v566, %v693
      %695 = vmatmul.f32.gmra.mxu0 %v521
      %v696 = vpop.f32.mrf.mxu0
      %v697 = vadd.f32 %v566, %v696
      %698 = vmatmul.f32.gmra.mxu0 %v522
      %v699 = vpop.f32.mrf.mxu0
      %v700 = vadd.f32 %v566, %v699
      %701 = vmatmul.f32.gmra.mxu0 %v523
      %v702 = vpop.f32.mrf.mxu0
      %v703 = vadd.f32 %v566, %v702
      %704 = vmatmul.f32.gmra.mxu0 %v524
      %v705 = vpop.f32.mrf.mxu0
      %v706 = vadd.f32 %v566, %v705
      %707 = vmatmul.f32.gmra.mxu0 %v525
      %v708 = vpop.f32.mrf.mxu0
      %v709 = vadd.f32 %v566, %v708
      %710 = vmatmul.f32.gmra.mxu0 %v526
      %v711 = vpop.f32.mrf.mxu0
      %v712 = vadd.f32 %v566, %v711
      %713 = vmatmul.f32.gmra.mxu0 %v527
      %v714 = vpop.f32.mrf.mxu0
      %v715 = vadd.f32 %v566, %v714
      %716 = vmatmul.f32.gmra.mxu0 %v528
      %v717 = vpop.f32.mrf.mxu0
      %v718 = vadd.f32 %v566, %v717
      %719 = vmatmul.f32.gmra.mxu0 %v529
      %v720 = vpop.f32.mrf.mxu0
      %v721 = vadd.f32 %v566, %v720
      %722 = vmatmul.f32.gmra.mxu0 %v530
      %v723 = vpop.f32.mrf.mxu0
      %v724 = vadd.f32 %v566, %v723
      %725 = vmatmul.f32.gmra.mxu0 %v531
      %v726 = vpop.f32.mrf.mxu0
      %v727 = vadd.f32 %v566, %v726
      %728 = vmatmul.f32.gmra.mxu0 %v532
      %v729 = vpop.f32.mrf.mxu0
      %v730 = vadd.f32 %v566, %v729
      %731 = vmatmul.f32.gmra.mxu0 %v533
      %v732 = vpop.f32.mrf.mxu0
      %v733 = vadd.f32 %v566, %v732
      %734 = vmatmul.f32.gmra.mxu0 %v534
      %v735 = vpop.f32.mrf.mxu0
      %v736 = vadd.f32 %v566, %v735
      %737 = vmatmul.f32.gmra.mxu0 %v535
      %v738 = vpop.f32.mrf.mxu0
      %v739 = vadd.f32 %v566, %v738
      %740 = vmatmul.f32.gmra.mxu0 %v536
      %v741 = vpop.f32.mrf.mxu0
      %v742 = vadd.f32 %v566, %v741
      %743 = vmatmul.f32.gmra.mxu0 %v537
      %v744 = vpop.f32.mrf.mxu0
      %v745 = vadd.f32 %v566, %v744
      %746 = vmatmul.f32.gmra.mxu0 %v538
      %v747 = vpop.f32.mrf.mxu0
      %v748 = vadd.f32 %v566, %v747
      %749 = vmatmul.f32.gmra.mxu0 %v539
      %v750 = vpop.f32.mrf.mxu0
      %v751 = vadd.f32 %v566, %v750
      %752 = vmatmul.f32.gmra.mxu0 %v540
      %v753 = vpop.f32.mrf.mxu0
      %v754 = vadd.f32 %v566, %v753
      %755 = vmatmul.f32.gmra.mxu0 %v541
      %v756 = vpop.f32.mrf.mxu0
      %v757 = vadd.f32 %v566, %v756
      %758 = vmatmul.f32.gmra.mxu0 %v542
      %v759 = vpop.f32.mrf.mxu0
      %v760 = vadd.f32 %v566, %v759
      %761 = vmatmul.f32.gmra.mxu0 %v543
      %v762 = vpop.f32.mrf.mxu0
      %v763 = vadd.f32 %v566, %v762
      %764 = vmatmul.f32.gmra.mxu0 %v544
      %v765 = vpop.f32.mrf.mxu0
      %v766 = vadd.f32 %v566, %v765
      %767 = vmatmul.f32.gmra.mxu0 %v545
      %v768 = vpop.f32.mrf.mxu0
      %v769 = vadd.f32 %v566, %v768
      %770 = vmatmul.f32.gmra.mxu0 %v546
      %v771 = vpop.f32.mrf.mxu0
      %v772 = vadd.f32 %v566, %v771
      %773 = vmatmul.f32.gmra.mxu0 %v547
      %v774 = vpop.f32.mrf.mxu0
      %v775 = vadd.f32 %v566, %v774
      %776 = vdwg.mxu0
      %v777 = vtanh.pop %v586
      %v778 = vtanh.pop %v589
      %v779 = vtanh.pop %v592
      %v780 = vtanh.pop %v595
      %v781 = vtanh.pop %v598
      %v782 = vtanh.pop %v601
      %v783 = vtanh.pop %v604
      %v784 = vtanh.pop %v607
      %v785 = vtanh.pop %v610
      %v786 = vtanh.pop %v613
      %v787 = vtanh.pop %v616
      %v788 = vtanh.pop %v619
      %v789 = vtanh.pop %v622
      %v790 = vtanh.pop %v625
      %v791 = vtanh.pop %v628
      %v792 = vtanh.pop %v631
      %v793 = vtanh.pop %v634
      %v794 = vtanh.pop %v637
      %v795 = vtanh.pop %v640
      %v796 = vtanh.pop %v643
      %v797 = vtanh.pop %v646
      %v798 = vtanh.pop %v649
      %v799 = vtanh.pop %v652
      %v800 = vtanh.pop %v655
      %v801 = vtanh.pop %v658
      %v802 = vtanh.pop %v661
      %v803 = vtanh.pop %v664
      %v804 = vtanh.pop %v667
      %v805 = vtanh.pop %v670
      %v806 = vtanh.pop %v673
      %v807 = vtanh.pop %v676
      %v808 = vtanh.pop %v679
      %v809 = vtanh.pop %v682
      %v810 = vtanh.pop %v685
      %v811 = vtanh.pop %v688
      %v812 = vtanh.pop %v691
      %v813 = vtanh.pop %v694
      %v814 = vtanh.pop %v697
      %v815 = vtanh.pop %v700
      %v816 = vtanh.pop %v703
      %v817 = vtanh.pop %v706
      %v818 = vtanh.pop %v709
      %v819 = vtanh.pop %v712
      %v820 = vtanh.pop %v715
      %v821 = vtanh.pop %v718
      %v822 = vtanh.pop %v721
      %v823 = vtanh.pop %v724
      %v824 = vtanh.pop %v727
      %v825 = vtanh.pop %v730
      %v826 = vtanh.pop %v733
      %v827 = vtanh.pop %v736
      %v828 = vtanh.pop %v739
      %v829 = vtanh.pop %v742
      %v830 = vtanh.pop %v745
      %v831 = vtanh.pop %v748
      %v832 = vtanh.pop %v751
      %v833 = vtanh.pop %v754
      %v834 = vtanh.pop %v757
      %v835 = vtanh.pop %v760
      %v836 = vtanh.pop %v763
      %v837 = vtanh.pop %v766
      %v838 = vtanh.pop %v769
      %v839 = vtanh.pop %v772
      %v840 = vtanh.pop %v775
      %841 = vst [vmem:[%s282] sm:$0xff] %v777
      %842 = vst [vmem:[%s282 + $0x8] sm:$0xff] %v778
      %843 = vst [vmem:[%s282 + $0x10] sm:$0xff] %v779
      %844 = vst [vmem:[%s282 + $0x18] sm:$0xff] %v780
      %845 = vst [vmem:[%s282 + $0x20] sm:$0xff] %v781
      %846 = vst [vmem:[%s282 + $0x28] sm:$0xff] %v782
      %847 = vst [vmem:[%s282 + $0x30] sm:$0xff] %v783
      %848 = vst [vmem:[%s282 + $0x38] sm:$0xff] %v784
      %849 = vst [vmem:[%s282 + $0x40] sm:$0xff] %v785
      %850 = vst [vmem:[%s282 + $0x48] sm:$0xff] %v786
      %851 = vst [vmem:[%s282 + $0x50] sm:$0xff] %v787
      %852 = vst [vmem:[%s282 + $0x58] sm:$0xff] %v788
      %853 = vst [vmem:[%s282 + $0x60] sm:$0xff] %v789
      %854 = vst [vmem:[%s282 + $0x68] sm:$0xff] %v790
      %855 = vst [vmem:[%s282 + $0x70] sm:$0xff] %v791
      %856 = vst [vmem:[%s282 + $0x78] sm:$0xff] %v792
      %857 = vst [vmem:[%s282 + $0x80] sm:$0xff] %v793
      %858 = vst [vmem:[%s282 + $0x88] sm:$0xff] %v794
      %859 = vst [vmem:[%s282 + $0x90] sm:$0xff] %v795
      %860 = vst [vmem:[%s282 + $0x98] sm:$0xff] %v796
      %861 = vst [vmem:[%s282 + $0xa0] sm:$0xff] %v797
      %862 = vst [vmem:[%s282 + $0xa8] sm:$0xff] %v798
      %863 = vst [vmem:[%s282 + $0xb0] sm:$0xff] %v799
      %864 = vst [vmem:[%s282 + $0xb8] sm:$0xff] %v800
      %865 = vst [vmem:[%s282 + $0xc0] sm:$0xff] %v801
      %866 = vst [vmem:[%s282 + $0xc8] sm:$0xff] %v802
      %867 = vst [vmem:[%s282 + $0xd0] sm:$0xff] %v803
      %868 = vst [vmem:[%s282 + $0xd8] sm:$0xff] %v804
      %869 = vst [vmem:[%s282 + $0xe0] sm:$0xff] %v805
      %870 = vst [vmem:[%s282 + $0xe8] sm:$0xff] %v806
      %871 = vst [vmem:[%s282 + $0xf0] sm:$0xff] %v807
      %872 = vst [vmem:[%s282 + $0xf8] sm:$0xff] %v808
      %873 = vst [vmem:[%s282 + $0x100] sm:$0xff] %v809
      %874 = vst [vmem:[%s282 + $0x108] sm:$0xff] %v810
      %875 = vst [vmem:[%s282 + $0x110] sm:$0xff] %v811
      %876 = vst [vmem:[%s282 + $0x118] sm:$0xff] %v812
      %877 = vst [vmem:[%s282 + $0x120] sm:$0xff] %v813
      %878 = vst [vmem:[%s282 + $0x128] sm:$0xff] %v814
      %879 = vst [vmem:[%s282 + $0x130] sm:$0xff] %v815
      %880 = vst [vmem:[%s282 + $0x138] sm:$0xff] %v816
      %881 = vst [vmem:[%s282 + $0x140] sm:$0xff] %v817
      %882 = vst [vmem:[%s282 + $0x148] sm:$0xff] %v818
      %883 = vst [vmem:[%s282 + $0x150] sm:$0xff] %v819
      %884 = vst [vmem:[%s282 + $0x158] sm:$0xff] %v820
      %885 = vst [vmem:[%s282 + $0x160] sm:$0xff] %v821
      %886 = vst [vmem:[%s282 + $0x168] sm:$0xff] %v822
      %887 = vst [vmem:[%s282 + $0x170] sm:$0xff] %v823
      %888 = vst [vmem:[%s282 + $0x178] sm:$0xff] %v824
      %889 = vst [vmem:[%s282 + $0x180] sm:$0xff] %v825
      %890 = vst [vmem:[%s282 + $0x188] sm:$0xff] %v826
      %891 = vst [vmem:[%s282 + $0x190] sm:$0xff] %v827
      %892 = vst [vmem:[%s282 + $0x198] sm:$0xff] %v828
      %893 = vst [vmem:[%s282 + $0x1a0] sm:$0xff] %v829
      %894 = vst [vmem:[%s282 + $0x1a8] sm:$0xff] %v830
      %895 = vst [vmem:[%s282 + $0x1b0] sm:$0xff] %v831
      %896 = vst [vmem:[%s282 + $0x1b8] sm:$0xff] %v832
      %897 = vst [vmem:[%s282 + $0x1c0] sm:$0xff] %v833
      %898 = vst [vmem:[%s282 + $0x1c8] sm:$0xff] %v834
      %899 = vst [vmem:[%s282 + $0x1d0] sm:$0xff] %v835
      %900 = vst [vmem:[%s282 + $0x1d8] sm:$0xff] %v836
      %901 = vst [vmem:[%s282 + $0x1e0] sm:$0xff] %v837
      %902 = vst [vmem:[%s282 + $0x1e8] sm:$0xff] %v838
      %903 = vst [vmem:[%s282 + $0x1f0] sm:$0xff] %v839
      %904 = vst [vmem:[%s282 + $0x1f8] sm:$0xff] %v840
      %s905 = smul.u32 64, %s21
      %p906 = scmp.lt.s32.totalorder %s20, 3
      %s907 = scalar_select %p906, %s20, 3
      %p908 = scmp.lt.s32.totalorder %s905, 63
      %s909 = scalar_select %p908, %s905, 63
      %s910 = smul.addr %s907, 64
      %s911 = sadd.s32 %s909, %s910
      %s912 = smul.addr %s911, 8
      %s913 = scalar_lea.vmem %s5, %s912
      // Predicated region
      $region41: #{unet_generator_pallas.19} parent=39 // pred_check
        %p914 = pneg %p165
      $region42: #{unet_generator_pallas.19} parent=39 // pred_check_branch
        %916 = sbr.rel (%p914) target = $region44
      $region43: #{unet_generator_pallas.19} parent=39 // pred_region
        %s917 = smul.u32 64, %s21
      $region44: #{unet_generator_pallas.19} parent=39 // pred_fallthru
        _
    $region40: #{unet_generator_pallas.19} parent=5 // pred_fallthru
      _
    %p918 = scmp.le.s32.totalorder 2, %s11
    // Predicated region
    $region45: #{unet_generator_pallas.19} parent=5 // pred_check
      %p919 = pneg %p918
    $region46: #{unet_generator_pallas.19} parent=5 // pred_check_branch
      %921 = sbr.rel (%p919) target = $region48
    $region47: #{unet_generator_pallas.19} parent=5 // pred_region
      %s922 = ssub.s32 %s11, 2
      // Predicated region
      $region49: #{unet_generator_pallas.19} parent=47 // pred_check
        %p923 = pneg %p171
      $region50: #{unet_generator_pallas.19} parent=47 // pred_check_branch
        %925 = sbr.rel (%p923) target = $region52
      $region51: #{unet_generator_pallas.19} parent=47 // pred_region
        %s926 = smul.u32 64, %s23
        %p927 = scmp.lt.s32.totalorder %s22, 3
        %s928 = scalar_select %p927, %s22, 3
        %p929 = scmp.lt.s32.totalorder %s926, 63
        %s930 = scalar_select %p929, %s926, 63
        %s931 = smul.addr %s928, 64
        %s932 = sadd.s32 %s930, %s931
        %s933 = smul.addr %s932, 8
        %s934 = scalar_lea.vmem %s5, %s933
      $region52: #{unet_generator_pallas.19} parent=47 // pred_fallthru
        _
    $region48: #{unet_generator_pallas.19} parent=5 // pred_fallthru
      _
  $region6: #{unet_generator_pallas.19} parent=0 // loop_footer
    %s15 = sadd.s32 1, %s11
  $region7: #{unet_generator_pallas.19} parent=0 // loop_footer_branch
    %10 = sbr.rel target = $region3
  $region8: #{unet_generator_pallas.19} parent=0 // loop_exit
    _

</llo_original>
